<compile_context>
chip_gen: v7x
topology: tpu7x:2x2x1
jax: 0.10.0
libtpu: 0.0.40
codegen_flags: <defaults>
</compile_context>

<pallas_src>
import jax
import jax.numpy as jnp
from jax import lax
from jax.experimental import pallas as pl
from jax.experimental.pallas import tpu as pltpu

EPS = 1e-5


# --------------------------------------------------------------------------- kernels

def _im2col_3x3(patch_ref, src_ref, H, W, C):
    """Stage the 9 shifted taps of a zero-padded (H+2, W+2, C) window into the
    (H*W, 9*C) im2col scratch (one store per tap), ready for a single K=9*C matmul."""
    for di in range(3):
        for dj in range(3):
            t = di * 3 + dj
            patch_ref[:, t * C:(t + 1) * C] = (
                src_ref[di:di + H, dj:dj + W, :].reshape(H * W, C))


def _conv_tail(patch_ref, w_ref, y_ref, s_ref, ss_ref):
    """One MXU matmul + per-sample BN partial sums (sum, sum of squares)."""
    acc = jnp.dot(patch_ref[...], w_ref[...], preferred_element_type=jnp.float32)
    y_ref[...] = acc
    s_ref[...] = jnp.sum(acc, axis=0, keepdims=True)
    ss_ref[...] = jnp.sum(acc * acc, axis=0, keepdims=True)


def _conv1_kernel(xpad_ref, w_ref, y_ref, s_ref, ss_ref, patch_ref):
    # xpad_ref: (H+2, W+2, Cin) bf16 (pre-padded in the wrapper), w_ref: (9*Cin, Cmid) bf16
    Hp2, Wp2, C = xpad_ref.shape
    H, W = Hp2 - 2, Wp2 - 2
    _im2col_3x3(patch_ref, xpad_ref, H, W, C)
    _conv_tail(patch_ref, w_ref, y_ref, s_ref, ss_ref)


def _bn_relu_conv2_kernel(y1_ref, sc_ref, sh_ref, w_ref, y2_ref, s_ref, ss_ref,
                          hpad_ref, patch_ref):
    # y1_ref: (H*W, Cmid) f32 conv1 output; sc/sh: (1, Cmid) precomputed BN1 scale/shift
    # hpad_ref: (H+2, W+2, Cmid) bf16 scratch; patch_ref: (H*W, 9*Cmid) bf16 scratch
    Hp2, Wp2, C = hpad_ref.shape
    H, W = Hp2 - 2, Wp2 - 2

    # BN1 (batch stats folded into scale/shift) + ReLU in f32, cast to bf16 for the MXU.
    h = jnp.maximum(y1_ref[...] * sc_ref[...] + sh_ref[...], 0.0)
    hb = h.astype(hpad_ref.dtype).reshape(H, W, C)

    # Zero only the 1-wide halo ring; write the interior exactly once.
    zero_row = jnp.zeros((1, W + 2, C), hpad_ref.dtype)
    zero_col = jnp.zeros((H, 1, C), hpad_ref.dtype)
    hpad_ref[0:1, :, :] = zero_row
    hpad_ref[H + 1:H + 2, :, :] = zero_row
    hpad_ref[1:H + 1, 0:1, :] = zero_col
    hpad_ref[1:H + 1, W + 1:W + 2, :] = zero_col
    hpad_ref[1:H + 1, 1:W + 1, :] = hb

    _im2col_3x3(patch_ref, hpad_ref, H, W, C)
    _conv_tail(patch_ref, w_ref, y2_ref, s_ref, ss_ref)


def _bn_relu_kernel(y_ref, sc_ref, sh_ref, o_ref):
    # Final BN2+ReLU (needs global batch stats of conv2, so it is a separate pass).
    o_ref[...] = jnp.maximum(y_ref[...] * sc_ref[...] + sh_ref[...], 0.0).astype(o_ref.dtype)


# --------------------------------------------------------------------------- wrapper

def _bn_scale_shift(s, ss, gamma, beta, count):
    """Finalize training-mode BN from per-sample partial sums (tiny (N, C) reduction)."""
    mean = jnp.sum(s, axis=0) / count                                   # (1, C)
    var = jnp.maximum(jnp.sum(ss, axis=0) / count - mean * mean, 0.0)   # biased variance
    scale = gamma.reshape(1, -1) * lax.rsqrt(var + EPS)
    shift = beta.reshape(1, -1) - mean * scale
    C = scale.shape[-1]
    return scale.reshape(1, 1, C), shift.reshape(1, 1, C)


def _vmem_limit(*byte_counts):
    need = 2 * sum(byte_counts) + (2 << 20)          # double-buffered blocks + headroom
    return int(min(max(need, 16 << 20), 48 << 20))   # safe on v5e/v6e/v7x


def double_conv(x_nchw, w1, g1, b1, w2, g2, b2):
    """x_nchw: (N, Cin, H, W); w1: (Cmid, Cin, 3, 3); w2: (Cout, Cmid, 3, 3)."""
    N, Cin, H, W = x_nchw.shape
    Cmid = w1.shape[0]
    Cout = w2.shape[0]
    M = N * H * W
    cdt = jnp.bfloat16  # MXU input dtype (f32 accumulation inside the kernels)

    # Layout glue: NCHW -> NHWC, spatial zero-pad (padding=1), weights -> (9*Cin, Cout).
    x_nhwc = jnp.transpose(x_nchw, (0, 2, 3, 1))
    xpad = jnp.pad(x_nhwc, ((0, 0), (1, 1), (1, 1), (0, 0))).astype(cdt)
    w1f = jnp.transpose(w1, (2, 3, 1, 0)).reshape(9 * Cin, Cmid).astype(cdt)
    w2f = jnp.transpose(w2, (2, 3, 1, 0)).reshape(9 * Cmid, Cout).astype(cdt)

    par = pltpu.CompilerParams  # alias for brevity below

    # ---------------- stage 1: conv1 + per-sample BN1 partial sums -------------------
    b_xpad = (H + 2) * (W + 2) * Cin * 2
    b_w1 = 9 * Cin * Cmid * 2
    b_y1 = H * W * Cmid * 4
    y1, s1, ss1 = pl.pallas_call(
        _conv1_kernel,
        grid=(N,),
        in_specs=[
            pl.BlockSpec((None, H + 2, W + 2, Cin), lambda i: (i, 0, 0, 0)),
            pl.BlockSpec((9 * Cin, Cmid), lambda i: (0, 0)),
        ],
        out_specs=[
            pl.BlockSpec((None, H * W, Cmid), lambda i: (i, 0, 0)),
            pl.BlockSpec((None, 1, Cmid), lambda i: (i, 0, 0)),
            pl.BlockSpec((None, 1, Cmid), lambda i: (i, 0, 0)),
        ],
        out_shape=(
            jax.ShapeDtypeStruct((N, H * W, Cmid), jnp.float32),
            jax.ShapeDtypeStruct((N, 1, Cmid), jnp.float32),
            jax.ShapeDtypeStruct((N, 1, Cmid), jnp.float32),
        ),
        scratch_shapes=[pltpu.VMEM((H * W, 9 * Cin), cdt)],
        compiler_params=par(
            dimension_semantics=("parallel",),
            vmem_limit_bytes=_vmem_limit(b_xpad, b_w1, b_y1, H * W * 9 * Cin * 2)),
        cost_estimate=pl.CostEstimate(
            flops=2 * M * 9 * Cin * Cmid, transcendentals=0,
            bytes_accessed=N * (b_xpad + b_y1) + b_w1),
    )(xpad, w1f)

    scale1, shift1 = _bn_scale_shift(s1, ss1, g1, b1, M)

    # ---------------- stage 2: BN1+ReLU fused into conv2 + BN2 partial sums ----------
    b_w2 = 9 * Cmid * Cout * 2
    b_y2 = H * W * Cout * 4
    y2, s2, ss2 = pl.pallas_call(
        _bn_relu_conv2_kernel,
        grid=(N,),
        in_specs=[
            pl.BlockSpec((None, H * W, Cmid), lambda i: (i, 0, 0)),
            pl.BlockSpec((None, 1, Cmid), lambda i: (0, 0, 0)),
            pl.BlockSpec((None, 1, Cmid), lambda i: (0, 0, 0)),
            pl.BlockSpec((9 * Cmid, Cout), lambda i: (0, 0)),
        ],
        out_specs=[
            pl.BlockSpec((None, H * W, Cout), lambda i: (i, 0, 0)),
            pl.BlockSpec((None, 1, Cout), lambda i: (i, 0, 0)),
            pl.BlockSpec((None, 1, Cout), lambda i: (i, 0, 0)),
        ],
        out_shape=(
            jax.ShapeDtypeStruct((N, H * W, Cout), jnp.float32),
            jax.ShapeDtypeStruct((N, 1, Cout), jnp.float32),
            jax.ShapeDtypeStruct((N, 1, Cout), jnp.float32),
        ),
        scratch_shapes=[pltpu.VMEM((H + 2, W + 2, Cmid), cdt),
                        pltpu.VMEM((H * W, 9 * Cmid), cdt)],
        compiler_params=par(
            dimension_semantics=("parallel",),
            vmem_limit_bytes=_vmem_limit(
                b_y1, b_w2, b_y2,
                (H + 2) * (W + 2) * Cmid * 2 + H * W * 9 * Cmid * 2)),
        cost_estimate=pl.CostEstimate(
            flops=2 * M * 9 * Cmid * Cout + 3 * M * Cmid, transcendentals=0,
            bytes_accessed=N * (b_y1 + b_y2) + b_w2),
    )(y1, scale1, shift1, w2f)

    scale2, shift2 = _bn_scale_shift(s2, ss2, g2, b2, M)

    # ---------------- stage 3: BN2 + ReLU (elementwise finalize pass) ----------------
    out = pl.pallas_call(
        _bn_relu_kernel,
        grid=(N,),
        in_specs=[
            pl.BlockSpec((None, H * W, Cout), lambda i: (i, 0, 0)),
            pl.BlockSpec((None, 1, Cout), lambda i: (0, 0, 0)),
            pl.BlockSpec((None, 1, Cout), lambda i: (0, 0, 0)),
        ],
        out_specs=pl.BlockSpec((None, H * W, Cout), lambda i: (i, 0, 0)),
        out_shape=jax.ShapeDtypeStruct((N, H * W, Cout), x_nchw.dtype),
        compiler_params=par(
            dimension_semantics=("parallel",),
            vmem_limit_bytes=_vmem_limit(2 * b_y2)),
        cost_estimate=pl.CostEstimate(
            flops=3 * M * Cout, transcendentals=0,
            bytes_accessed=2 * N * b_y2),
    )(y2, scale2, shift2)

    return jnp.transpose(out.reshape(N, H, W, Cout), (0, 3, 1, 2))  # back to NCHW


# --------------------------------------------------------------------------- reference

def ref_double_conv(x, w1, g1, b1, w2, g2, b2):
    """Pure-JAX f32 reference mirroring the PyTorch forward (training-mode BN)."""
    def conv(x, w):
        return lax.conv_general_dilated(
            x, w, window_strides=(1, 1), padding=((1, 1), (1, 1)),
            dimension_numbers=("NCHW", "OIHW", "NCHW"))

    def bn_relu(y, g, b):
        mean = jnp.mean(y, axis=(0, 2, 3), keepdims=True)
        var = jnp.mean((y - mean) ** 2, axis=(0, 2, 3), keepdims=True)
        yn = (y - mean) * lax.rsqrt(var + EPS)
        yn = yn * g.reshape(1, -1, 1, 1) + b.reshape(1, -1, 1, 1)
        return jnp.maximum(yn, 0.0)

    y = bn_relu(conv(x, w1), g1, b1)
    return bn_relu(conv(y, w2), g2, b2)


if __name__ == "__main__":
    N, Cin, Cout, H, W = 2, 4, 8, 16, 16
    Cmid = Cout  # mid_channels defaults to out_channels

    key = jax.random.PRNGKey(0)
    kx, kw1, kw2 = jax.random.split(key, 3)
    x = jax.random.normal(kx, (N, Cin, H, W), jnp.float32)
    # Conv2d weights (deterministic synthetic init), PyTorch OIHW shape, bias=False.
    w1 = jax.random.normal(kw1, (Cmid, Cin, 3, 3), jnp.float32) * 0.2
    w2 = jax.random.normal(kw2, (Cout, Cmid, 3, 3), jnp.float32) * 0.2
    # BatchNorm2d default init: weight=1, bias=0.
    g1 = jnp.ones((Cmid,), jnp.float32)
    b1 = jnp.zeros((Cmid,), jnp.float32)
    g2 = jnp.ones((Cout,), jnp.float32)
    b2 = jnp.zeros((Cout,), jnp.float32)

    out = jax.block_until_ready(jax.jit(double_conv)(x, w1, g1, b1, w2, g2, b2))
    ref = jax.block_until_ready(ref_double_conv(x, w1, g1, b1, w2, g2, b2))

    assert out.shape == (N, Cout, H, W), out.shape
    err = jnp.abs(out - ref)
    # Kernel feeds bf16 to the MXU (f32 accumulation), so compare against the pure-f32
    # reference with a bf16-appropriate tolerance; structural bugs would give O(1) errors.
    assert float(jnp.max(err)) < 3e-2, float(jnp.max(err))
    assert float(jnp.mean(err)) < 1e-2, float(jnp.mean(err))

    print("KERNEL_OK")
</pallas_src>

<mosaic_0001>
module attributes {stable_mosaic.version = 11 : i64} {
  func.func @_conv1_kernel(%arg0: i32, %arg1: memref<1x18x18x4xbf16, #tpu.memory_space<vmem>>, %arg2: memref<36x8xbf16, #tpu.memory_space<vmem>>, %arg3: memref<1x256x8xf32, #tpu.memory_space<vmem>>, %arg4: memref<1x1x8xf32, #tpu.memory_space<vmem>>, %arg5: memref<1x1x8xf32, #tpu.memory_space<vmem>>, %arg6: memref<256x36xbf16, #tpu.memory_space<vmem>>) attributes {dimension_semantics = [#tpu.dimension_semantics<parallel>], iteration_bounds = array<i64: 2>, scalar_prefetch = 0 : i64, scratch_operands = 1 : i64, tpu.core_type = #tpu.core_type<tc>, window_params = [{transform_indices = @transform_0, window_bounds = array<i64: 1, 18, 18, 4>}, {pipeline_mode = #tpu.pipeline_mode<synchronous>, transform_indices = @transform_1, window_bounds = array<i64: 36, 8>}, {transform_indices = @transform_2, window_bounds = array<i64: 1, 256, 8>}, {transform_indices = @transform_3, window_bounds = array<i64: 1, 1, 8>}, {transform_indices = @transform_4, window_bounds = array<i64: 1, 1, 8>}]} {
    %c0 = arith.constant 0 : index
    %c0_0 = arith.constant 0 : index
    %c0_1 = arith.constant 0 : index
    %c0_2 = arith.constant 0 : index
    %0 = vector.load %arg1[%c0, %c0_0, %c0_1, %c0_2] : memref<1x18x18x4xbf16, #tpu.memory_space<vmem>>, vector<1x16x16x4xbf16>
    %1 = vector.shape_cast %0 : vector<1x16x16x4xbf16> to vector<16x16x4xbf16>
    %2 = vector.shape_cast %1 : vector<16x16x4xbf16> to vector<256x4xbf16>
    %c0_3 = arith.constant 0 : index
    %c0_4 = arith.constant 0 : index
    %3 = vector.load %arg6[%c0_3, %c0_4] : memref<256x36xbf16, #tpu.memory_space<vmem>>, vector<256x4xbf16>
    tpu.vector_store %arg6[%c0_3, %c0_4], %2 {strides = array<i32>} : memref<256x36xbf16, #tpu.memory_space<vmem>>, vector<256x4xbf16>,
    %c0_5 = arith.constant 0 : index
    %c0_6 = arith.constant 0 : index
    %c1 = arith.constant 1 : index
    %c0_7 = arith.constant 0 : index
    %4 = vector.load %arg1[%c0_5, %c0_6, %c1, %c0_7] : memref<1x18x18x4xbf16, #tpu.memory_space<vmem>>, vector<1x16x16x4xbf16>
    %5 = vector.shape_cast %4 : vector<1x16x16x4xbf16> to vector<16x16x4xbf16>
    %6 = vector.shape_cast %5 : vector<16x16x4xbf16> to vector<256x4xbf16>
    %c0_8 = arith.constant 0 : index
    %c4 = arith.constant 4 : index
    %7 = vector.load %arg6[%c0_8, %c4] : memref<256x36xbf16, #tpu.memory_space<vmem>>, vector<256x4xbf16>
    tpu.vector_store %arg6[%c0_8, %c4], %6 {strides = array<i32>} : memref<256x36xbf16, #tpu.memory_space<vmem>>, vector<256x4xbf16>,
    %c0_9 = arith.constant 0 : index
    %c0_10 = arith.constant 0 : index
    %c2 = arith.constant 2 : index
    %c0_11 = arith.constant 0 : index
    %8 = vector.load %arg1[%c0_9, %c0_10, %c2, %c0_11] : memref<1x18x18x4xbf16, #tpu.memory_space<vmem>>, vector<1x16x16x4xbf16>
    %9 = vector.shape_cast %8 : vector<1x16x16x4xbf16> to vector<16x16x4xbf16>
    %10 = vector.shape_cast %9 : vector<16x16x4xbf16> to vector<256x4xbf16>
    %c0_12 = arith.constant 0 : index
    %c8 = arith.constant 8 : index
    %11 = vector.load %arg6[%c0_12, %c8] : memref<256x36xbf16, #tpu.memory_space<vmem>>, vector<256x4xbf16>
    tpu.vector_store %arg6[%c0_12, %c8], %10 {strides = array<i32>} : memref<256x36xbf16, #tpu.memory_space<vmem>>, vector<256x4xbf16>,
    %c0_13 = arith.constant 0 : index
    %c1_14 = arith.constant 1 : index
    %c0_15 = arith.constant 0 : index
    %c0_16 = arith.constant 0 : index
    %12 = vector.load %arg1[%c0_13, %c1_14, %c0_15, %c0_16] : memref<1x18x18x4xbf16, #tpu.memory_space<vmem>>, vector<1x16x16x4xbf16>
    %13 = vector.shape_cast %12 : vector<1x16x16x4xbf16> to vector<16x16x4xbf16>
    %14 = vector.shape_cast %13 : vector<16x16x4xbf16> to vector<256x4xbf16>
    %c0_17 = arith.constant 0 : index
    %c12 = arith.constant 12 : index
    %15 = vector.load %arg6[%c0_17, %c12] : memref<256x36xbf16, #tpu.memory_space<vmem>>, vector<256x4xbf16>
    tpu.vector_store %arg6[%c0_17, %c12], %14 {strides = array<i32>} : memref<256x36xbf16, #tpu.memory_space<vmem>>, vector<256x4xbf16>,
    %c0_18 = arith.constant 0 : index
    %c1_19 = arith.constant 1 : index
    %c1_20 = arith.constant 1 : index
    %c0_21 = arith.constant 0 : index
    %16 = vector.load %arg1[%c0_18, %c1_19, %c1_20, %c0_21] : memref<1x18x18x4xbf16, #tpu.memory_space<vmem>>, vector<1x16x16x4xbf16>
    %17 = vector.shape_cast %16 : vector<1x16x16x4xbf16> to vector<16x16x4xbf16>
    %18 = vector.shape_cast %17 : vector<16x16x4xbf16> to vector<256x4xbf16>
    %c0_22 = arith.constant 0 : index
    %c16 = arith.constant 16 : index
    %19 = vector.load %arg6[%c0_22, %c16] : memref<256x36xbf16, #tpu.memory_space<vmem>>, vector<256x4xbf16>
    tpu.vector_store %arg6[%c0_22, %c16], %18 {strides = array<i32>} : memref<256x36xbf16, #tpu.memory_space<vmem>>, vector<256x4xbf16>,
    %c0_23 = arith.constant 0 : index
    %c1_24 = arith.constant 1 : index
    %c2_25 = arith.constant 2 : index
    %c0_26 = arith.constant 0 : index
    %20 = vector.load %arg1[%c0_23, %c1_24, %c2_25, %c0_26] : memref<1x18x18x4xbf16, #tpu.memory_space<vmem>>, vector<1x16x16x4xbf16>
    %21 = vector.shape_cast %20 : vector<1x16x16x4xbf16> to vector<16x16x4xbf16>
    %22 = vector.shape_cast %21 : vector<16x16x4xbf16> to vector<256x4xbf16>
    %c0_27 = arith.constant 0 : index
    %c20 = arith.constant 20 : index
    %23 = vector.load %arg6[%c0_27, %c20] : memref<256x36xbf16, #tpu.memory_space<vmem>>, vector<256x4xbf16>
    tpu.vector_store %arg6[%c0_27, %c20], %22 {strides = array<i32>} : memref<256x36xbf16, #tpu.memory_space<vmem>>, vector<256x4xbf16>,
    %c0_28 = arith.constant 0 : index
    %c2_29 = arith.constant 2 : index
    %c0_30 = arith.constant 0 : index
    %c0_31 = arith.constant 0 : index
    %24 = vector.load %arg1[%c0_28, %c2_29, %c0_30, %c0_31] : memref<1x18x18x4xbf16, #tpu.memory_space<vmem>>, vector<1x16x16x4xbf16>
    %25 = vector.shape_cast %24 : vector<1x16x16x4xbf16> to vector<16x16x4xbf16>
    %26 = vector.shape_cast %25 : vector<16x16x4xbf16> to vector<256x4xbf16>
    %c0_32 = arith.constant 0 : index
    %c24 = arith.constant 24 : index
    %27 = vector.load %arg6[%c0_32, %c24] : memref<256x36xbf16, #tpu.memory_space<vmem>>, vector<256x4xbf16>
    tpu.vector_store %arg6[%c0_32, %c24], %26 {strides = array<i32>} : memref<256x36xbf16, #tpu.memory_space<vmem>>, vector<256x4xbf16>,
    %c0_33 = arith.constant 0 : index
    %c2_34 = arith.constant 2 : index
    %c1_35 = arith.constant 1 : index
    %c0_36 = arith.constant 0 : index
    %28 = vector.load %arg1[%c0_33, %c2_34, %c1_35, %c0_36] : memref<1x18x18x4xbf16, #tpu.memory_space<vmem>>, vector<1x16x16x4xbf16>
    %29 = vector.shape_cast %28 : vector<1x16x16x4xbf16> to vector<16x16x4xbf16>
    %30 = vector.shape_cast %29 : vector<16x16x4xbf16> to vector<256x4xbf16>
    %c0_37 = arith.constant 0 : index
    %c28 = arith.constant 28 : index
    %31 = vector.load %arg6[%c0_37, %c28] : memref<256x36xbf16, #tpu.memory_space<vmem>>, vector<256x4xbf16>
    tpu.vector_store %arg6[%c0_37, %c28], %30 {strides = array<i32>} : memref<256x36xbf16, #tpu.memory_space<vmem>>, vector<256x4xbf16>,
    %c0_38 = arith.constant 0 : index
    %c2_39 = arith.constant 2 : index
    %c2_40 = arith.constant 2 : index
    %c0_41 = arith.constant 0 : index
    %32 = vector.load %arg1[%c0_38, %c2_39, %c2_40, %c0_41] : memref<1x18x18x4xbf16, #tpu.memory_space<vmem>>, vector<1x16x16x4xbf16>
    %33 = vector.shape_cast %32 : vector<1x16x16x4xbf16> to vector<16x16x4xbf16>
    %34 = vector.shape_cast %33 : vector<16x16x4xbf16> to vector<256x4xbf16>
    %c0_42 = arith.constant 0 : index
    %c32 = arith.constant 32 : index
    %35 = vector.load %arg6[%c0_42, %c32] : memref<256x36xbf16, #tpu.memory_space<vmem>>, vector<256x4xbf16>
    tpu.vector_store %arg6[%c0_42, %c32], %34 {strides = array<i32>} : memref<256x36xbf16, #tpu.memory_space<vmem>>, vector<256x4xbf16>,
    %c0_43 = arith.constant 0 : index
    %c0_44 = arith.constant 0 : index
    %36 = vector.load %arg6[%c0_43, %c0_44] : memref<256x36xbf16, #tpu.memory_space<vmem>>, vector<256x36xbf16>
    %c0_45 = arith.constant 0 : index
    %c0_46 = arith.constant 0 : index
    %37 = vector.load %arg2[%c0_45, %c0_46] : memref<36x8xbf16, #tpu.memory_space<vmem>>, vector<36x8xbf16>
    %cst = arith.constant dense<0.000000e+00> : vector<256x8xf32>
    %38 = tpu.matmul %36, %37, %cst {dimension_numbers = #tpu.dot_dimension_numbers<[1], [0], [0], [1], [0, 0, 1, 1], [], []>} : vector<256x36xbf16>, vector<36x8xbf16>, vector<256x8xf32> -> vector<256x8xf32>
    %c0_47 = arith.constant 0 : index
    %c0_48 = arith.constant 0 : index
    %c0_49 = arith.constant 0 : index
    %39 = vector.load %arg3[%c0_47, %c0_48, %c0_49] : memref<1x256x8xf32, #tpu.memory_space<vmem>>, vector<1x256x8xf32>
    %40 = vector.shape_cast %39 : vector<1x256x8xf32> to vector<256x8xf32>
    %41 = vector.shape_cast %38 : vector<256x8xf32> to vector<1x256x8xf32>
    tpu.vector_store %arg3[%c0_47, %c0_48, %c0_49], %41 {strides = array<i32>} : memref<1x256x8xf32, #tpu.memory_space<vmem>>, vector<1x256x8xf32>,
    %cst_50 = arith.constant dense<0.000000e+00> : vector<8xf32>
    %42 = vector.multi_reduction <add>, %38, %cst_50 [0] : vector<256x8xf32> to vector<8xf32>
    %43 = vector.shape_cast %42 : vector<8xf32> to vector<1x8xf32>
    %c0_51 = arith.constant 0 : index
    %c0_52 = arith.constant 0 : index
    %c0_53 = arith.constant 0 : index
    %44 = vector.load %arg4[%c0_51, %c0_52, %c0_53] : memref<1x1x8xf32, #tpu.memory_space<vmem>>, vector<1x1x8xf32>
    %45 = vector.shape_cast %44 : vector<1x1x8xf32> to vector<1x8xf32>
    %46 = vector.shape_cast %43 : vector<1x8xf32> to vector<1x1x8xf32>
    tpu.vector_store %arg4[%c0_51, %c0_52, %c0_53], %46 {strides = array<i32>} : memref<1x1x8xf32, #tpu.memory_space<vmem>>, vector<1x1x8xf32>,
    %47 = arith.mulf %38, %38 : vector<256x8xf32>
    %cst_54 = arith.constant dense<0.000000e+00> : vector<8xf32>
    %48 = vector.multi_reduction <add>, %47, %cst_54 [0] : vector<256x8xf32> to vector<8xf32>
    %49 = vector.shape_cast %48 : vector<8xf32> to vector<1x8xf32>
    %c0_55 = arith.constant 0 : index
    %c0_56 = arith.constant 0 : index
    %c0_57 = arith.constant 0 : index
    %50 = vector.load %arg5[%c0_55, %c0_56, %c0_57] : memref<1x1x8xf32, #tpu.memory_space<vmem>>, vector<1x1x8xf32>
    %51 = vector.shape_cast %50 : vector<1x1x8xf32> to vector<1x8xf32>
    %52 = vector.shape_cast %49 : vector<1x8xf32> to vector<1x1x8xf32>
    tpu.vector_store %arg5[%c0_55, %c0_56, %c0_57], %52 {strides = array<i32>} : memref<1x1x8xf32, #tpu.memory_space<vmem>>, vector<1x1x8xf32>,
    return
  }
  func.func @transform_0(%arg0: i32) -> (i32, i32, i32, i32) {
    %c0_i32 = arith.constant 0 : i32
    %c0_i32_0 = arith.constant 0 : i32
    %c0_i32_1 = arith.constant 0 : i32
    %c0_i32_2 = arith.constant 0 : i32
    return %arg0, %c0_i32, %c0_i32_0, %c0_i32_1 : i32, i32, i32, i32
  }
  func.func @transform_1(%arg0: i32) -> (i32, i32) {
    %c0_i32 = arith.constant 0 : i32
    %c0_i32_0 = arith.constant 0 : i32
    %c0_i32_1 = arith.constant 0 : i32
    return %c0_i32, %c0_i32_0 : i32, i32
  }
  func.func @transform_2(%arg0: i32) -> (i32, i32, i32) {
    %c0_i32 = arith.constant 0 : i32
    %c0_i32_0 = arith.constant 0 : i32
    %c0_i32_1 = arith.constant 0 : i32
    return %arg0, %c0_i32, %c0_i32_0 : i32, i32, i32
  }
  func.func @transform_3(%arg0: i32) -> (i32, i32, i32) {
    %c0_i32 = arith.constant 0 : i32
    %c0_i32_0 = arith.constant 0 : i32
    %c0_i32_1 = arith.constant 0 : i32
    return %arg0, %c0_i32, %c0_i32_0 : i32, i32, i32
  }
  func.func @transform_4(%arg0: i32) -> (i32, i32, i32) {
    %c0_i32 = arith.constant 0 : i32
    %c0_i32_0 = arith.constant 0 : i32
    %c0_i32_1 = arith.constant 0 : i32
    return %arg0, %c0_i32, %c0_i32_0 : i32, i32, i32
  }
}

module attributes {stable_mosaic.version = 11 : i64} {
  func.func @_bn_relu_conv2_kernel(%arg0: i32, %arg1: memref<1x256x8xf32, #tpu.memory_space<vmem>>, %arg2: memref<1x1x8xf32, #tpu.memory_space<vmem>>, %arg3: memref<1x1x8xf32, #tpu.memory_space<vmem>>, %arg4: memref<72x8xbf16, #tpu.memory_space<vmem>>, %arg5: memref<1x256x8xf32, #tpu.memory_space<vmem>>, %arg6: memref<1x1x8xf32, #tpu.memory_space<vmem>>, %arg7: memref<1x1x8xf32, #tpu.memory_space<vmem>>, %arg8: memref<18x18x8xbf16, #tpu.memory_space<vmem>>, %arg9: memref<256x72xbf16, #tpu.memory_space<vmem>>) attributes {dimension_semantics = [#tpu.dimension_semantics<parallel>], iteration_bounds = array<i64: 2>, scalar_prefetch = 0 : i64, scratch_operands = 2 : i64, tpu.core_type = #tpu.core_type<tc>, window_params = [{transform_indices = @transform_0, window_bounds = array<i64: 1, 256, 8>}, {pipeline_mode = #tpu.pipeline_mode<synchronous>, transform_indices = @transform_1, window_bounds = array<i64: 1, 1, 8>}, {pipeline_mode = #tpu.pipeline_mode<synchronous>, transform_indices = @transform_2, window_bounds = array<i64: 1, 1, 8>}, {pipeline_mode = #tpu.pipeline_mode<synchronous>, transform_indices = @transform_3, window_bounds = array<i64: 72, 8>}, {transform_indices = @transform_4, window_bounds = array<i64: 1, 256, 8>}, {transform_indices = @transform_5, window_bounds = array<i64: 1, 1, 8>}, {transform_indices = @transform_6, window_bounds = array<i64: 1, 1, 8>}]} {
    %c0 = arith.constant 0 : index
    %c0_0 = arith.constant 0 : index
    %c0_1 = arith.constant 0 : index
    %0 = vector.load %arg1[%c0, %c0_0, %c0_1] : memref<1x256x8xf32, #tpu.memory_space<vmem>>, vector<1x256x8xf32>
    %1 = vector.shape_cast %0 : vector<1x256x8xf32> to vector<256x8xf32>
    %c0_2 = arith.constant 0 : index
    %c0_3 = arith.constant 0 : index
    %c0_4 = arith.constant 0 : index
    %2 = vector.load %arg2[%c0_2, %c0_3, %c0_4] : memref<1x1x8xf32, #tpu.memory_space<vmem>>, vector<1x1x8xf32>
    %3 = vector.shape_cast %2 : vector<1x1x8xf32> to vector<1x8xf32>
    %4 = vector.broadcast %3 : vector<1x8xf32> to vector<256x8xf32>
    %5 = arith.mulf %1, %4 : vector<256x8xf32>
    %c0_5 = arith.constant 0 : index
    %c0_6 = arith.constant 0 : index
    %c0_7 = arith.constant 0 : index
    %6 = vector.load %arg3[%c0_5, %c0_6, %c0_7] : memref<1x1x8xf32, #tpu.memory_space<vmem>>, vector<1x1x8xf32>
    %7 = vector.shape_cast %6 : vector<1x1x8xf32> to vector<1x8xf32>
    %8 = vector.broadcast %7 : vector<1x8xf32> to vector<256x8xf32>
    %9 = arith.addf %5, %8 : vector<256x8xf32>
    %cst = arith.constant 0.000000e+00 : f32
    %10 = vector.broadcast %cst : f32 to vector<256x8xf32>
    %11 = arith.maximumf %9, %10 : vector<256x8xf32>
    %12 = arith.truncf %11 : vector<256x8xf32> to vector<256x8xbf16>
    %13 = vector.shape_cast %12 : vector<256x8xbf16> to vector<16x16x8xbf16>
    %cst_8 = arith.constant 0.000000e+00 : bf16
    %14 = vector.broadcast %cst_8 : bf16 to vector<1x18x8xbf16>
    %cst_9 = arith.constant 0.000000e+00 : bf16
    %15 = vector.broadcast %cst_9 : bf16 to vector<16x1x8xbf16>
    %c0_10 = arith.constant 0 : index
    %c0_11 = arith.constant 0 : index
    %c0_12 = arith.constant 0 : index
    %16 = vector.load %arg8[%c0_10, %c0_11, %c0_12] : memref<18x18x8xbf16, #tpu.memory_space<vmem>>, vector<1x18x8xbf16>
    tpu.vector_store %arg8[%c0_10, %c0_11, %c0_12], %14 {strides = array<i32>} : memref<18x18x8xbf16, #tpu.memory_space<vmem>>, vector<1x18x8xbf16>,
    %c17 = arith.constant 17 : index
    %c0_13 = arith.constant 0 : index
    %c0_14 = arith.constant 0 : index
    %17 = vector.load %arg8[%c17, %c0_13, %c0_14] : memref<18x18x8xbf16, #tpu.memory_space<vmem>>, vector<1x18x8xbf16>
    tpu.vector_store %arg8[%c17, %c0_13, %c0_14], %14 {strides = array<i32>} : memref<18x18x8xbf16, #tpu.memory_space<vmem>>, vector<1x18x8xbf16>,
    %c1 = arith.constant 1 : index
    %c0_15 = arith.constant 0 : index
    %c0_16 = arith.constant 0 : index
    %18 = vector.load %arg8[%c1, %c0_15, %c0_16] : memref<18x18x8xbf16, #tpu.memory_space<vmem>>, vector<16x1x8xbf16>
    tpu.vector_store %arg8[%c1, %c0_15, %c0_16], %15 {strides = array<i32>} : memref<18x18x8xbf16, #tpu.memory_space<vmem>>, vector<16x1x8xbf16>,
    %c1_17 = arith.constant 1 : index
    %c17_18 = arith.constant 17 : index
    %c0_19 = arith.constant 0 : index
    %19 = vector.load %arg8[%c1_17, %c17_18, %c0_19] : memref<18x18x8xbf16, #tpu.memory_space<vmem>>, vector<16x1x8xbf16>
    tpu.vector_store %arg8[%c1_17, %c17_18, %c0_19], %15 {strides = array<i32>} : memref<18x18x8xbf16, #tpu.memory_space<vmem>>, vector<16x1x8xbf16>,
    %c1_20 = arith.constant 1 : index
    %c1_21 = arith.constant 1 : index
    %c0_22 = arith.constant 0 : index
    %20 = vector.load %arg8[%c1_20, %c1_21, %c0_22] : memref<18x18x8xbf16, #tpu.memory_space<vmem>>, vector<16x16x8xbf16>
    tpu.vector_store %arg8[%c1_20, %c1_21, %c0_22], %13 {strides = array<i32>} : memref<18x18x8xbf16, #tpu.memory_space<vmem>>, vector<16x16x8xbf16>,
    %c0_23 = arith.constant 0 : index
    %c0_24 = arith.constant 0 : index
    %c0_25 = arith.constant 0 : index
    %21 = vector.load %arg8[%c0_23, %c0_24, %c0_25] : memref<18x18x8xbf16, #tpu.memory_space<vmem>>, vector<16x16x8xbf16>
    %22 = vector.shape_cast %21 : vector<16x16x8xbf16> to vector<256x8xbf16>
    %c0_26 = arith.constant 0 : index
    %c0_27 = arith.constant 0 : index
    %23 = vector.load %arg9[%c0_26, %c0_27] : memref<256x72xbf16, #tpu.memory_space<vmem>>, vector<256x8xbf16>
    tpu.vector_store %arg9[%c0_26, %c0_27], %22 {strides = array<i32>} : memref<256x72xbf16, #tpu.memory_space<vmem>>, vector<256x8xbf16>,
    %c0_28 = arith.constant 0 : index
    %c1_29 = arith.constant 1 : index
    %c0_30 = arith.constant 0 : index
    %24 = vector.load %arg8[%c0_28, %c1_29, %c0_30] : memref<18x18x8xbf16, #tpu.memory_space<vmem>>, vector<16x16x8xbf16>
    %25 = vector.shape_cast %24 : vector<16x16x8xbf16> to vector<256x8xbf16>
    %c0_31 = arith.constant 0 : index
    %c8 = arith.constant 8 : index
    %26 = vector.load %arg9[%c0_31, %c8] : memref<256x72xbf16, #tpu.memory_space<vmem>>, vector<256x8xbf16>
    tpu.vector_store %arg9[%c0_31, %c8], %25 {strides = array<i32>} : memref<256x72xbf16, #tpu.memory_space<vmem>>, vector<256x8xbf16>,
    %c0_32 = arith.constant 0 : index
    %c2 = arith.constant 2 : index
    %c0_33 = arith.constant 0 : index
    %27 = vector.load %arg8[%c0_32, %c2, %c0_33] : memref<18x18x8xbf16, #tpu.memory_space<vmem>>, vector<16x16x8xbf16>
    %28 = vector.shape_cast %27 : vector<16x16x8xbf16> to vector<256x8xbf16>
    %c0_34 = arith.constant 0 : index
    %c16 = arith.constant 16 : index
    %29 = vector.load %arg9[%c0_34, %c16] : memref<256x72xbf16, #tpu.memory_space<vmem>>, vector<256x8xbf16>
    tpu.vector_store %arg9[%c0_34, %c16], %28 {strides = array<i32>} : memref<256x72xbf16, #tpu.memory_space<vmem>>, vector<256x8xbf16>,
    %c1_35 = arith.constant 1 : index
    %c0_36 = arith.constant 0 : index
    %c0_37 = arith.constant 0 : index
    %30 = vector.load %arg8[%c1_35, %c0_36, %c0_37] : memref<18x18x8xbf16, #tpu.memory_space<vmem>>, vector<16x16x8xbf16>
    %31 = vector.shape_cast %30 : vector<16x16x8xbf16> to vector<256x8xbf16>
    %c0_38 = arith.constant 0 : index
    %c24 = arith.constant 24 : index
    %32 = vector.load %arg9[%c0_38, %c24] : memref<256x72xbf16, #tpu.memory_space<vmem>>, vector<256x8xbf16>
    tpu.vector_store %arg9[%c0_38, %c24], %31 {strides = array<i32>} : memref<256x72xbf16, #tpu.memory_space<vmem>>, vector<256x8xbf16>,
    %c1_39 = arith.constant 1 : index
    %c1_40 = arith.constant 1 : index
    %c0_41 = arith.constant 0 : index
    %33 = vector.load %arg8[%c1_39, %c1_40, %c0_41] : memref<18x18x8xbf16, #tpu.memory_space<vmem>>, vector<16x16x8xbf16>
    %34 = vector.shape_cast %33 : vector<16x16x8xbf16> to vector<256x8xbf16>
    %c0_42 = arith.constant 0 : index
    %c32 = arith.constant 32 : index
    %35 = vector.load %arg9[%c0_42, %c32] : memref<256x72xbf16, #tpu.memory_space<vmem>>, vector<256x8xbf16>
    tpu.vector_store %arg9[%c0_42, %c32], %34 {strides = array<i32>} : memref<256x72xbf16, #tpu.memory_space<vmem>>, vector<256x8xbf16>,
    %c1_43 = arith.constant 1 : index
    %c2_44 = arith.constant 2 : index
    %c0_45 = arith.constant 0 : index
    %36 = vector.load %arg8[%c1_43, %c2_44, %c0_45] : memref<18x18x8xbf16, #tpu.memory_space<vmem>>, vector<16x16x8xbf16>
    %37 = vector.shape_cast %36 : vector<16x16x8xbf16> to vector<256x8xbf16>
    %c0_46 = arith.constant 0 : index
    %c40 = arith.constant 40 : index
    %38 = vector.load %arg9[%c0_46, %c40] : memref<256x72xbf16, #tpu.memory_space<vmem>>, vector<256x8xbf16>
    tpu.vector_store %arg9[%c0_46, %c40], %37 {strides = array<i32>} : memref<256x72xbf16, #tpu.memory_space<vmem>>, vector<256x8xbf16>,
    %c2_47 = arith.constant 2 : index
    %c0_48 = arith.constant 0 : index
    %c0_49 = arith.constant 0 : index
    %39 = vector.load %arg8[%c2_47, %c0_48, %c0_49] : memref<18x18x8xbf16, #tpu.memory_space<vmem>>, vector<16x16x8xbf16>
    %40 = vector.shape_cast %39 : vector<16x16x8xbf16> to vector<256x8xbf16>
    %c0_50 = arith.constant 0 : index
    %c48 = arith.constant 48 : index
    %41 = vector.load %arg9[%c0_50, %c48] : memref<256x72xbf16, #tpu.memory_space<vmem>>, vector<256x8xbf16>
    tpu.vector_store %arg9[%c0_50, %c48], %40 {strides = array<i32>} : memref<256x72xbf16, #tpu.memory_space<vmem>>, vector<256x8xbf16>,
    %c2_51 = arith.constant 2 : index
    %c1_52 = arith.constant 1 : index
    %c0_53 = arith.constant 0 : index
    %42 = vector.load %arg8[%c2_51, %c1_52, %c0_53] : memref<18x18x8xbf16, #tpu.memory_space<vmem>>, vector<16x16x8xbf16>
    %43 = vector.shape_cast %42 : vector<16x16x8xbf16> to vector<256x8xbf16>
    %c0_54 = arith.constant 0 : index
    %c56 = arith.constant 56 : index
    %44 = vector.load %arg9[%c0_54, %c56] : memref<256x72xbf16, #tpu.memory_space<vmem>>, vector<256x8xbf16>
    tpu.vector_store %arg9[%c0_54, %c56], %43 {strides = array<i32>} : memref<256x72xbf16, #tpu.memory_space<vmem>>, vector<256x8xbf16>,
    %c2_55 = arith.constant 2 : index
    %c2_56 = arith.constant 2 : index
    %c0_57 = arith.constant 0 : index
    %45 = vector.load %arg8[%c2_55, %c2_56, %c0_57] : memref<18x18x8xbf16, #tpu.memory_space<vmem>>, vector<16x16x8xbf16>
    %46 = vector.shape_cast %45 : vector<16x16x8xbf16> to vector<256x8xbf16>
    %c0_58 = arith.constant 0 : index
    %c64 = arith.constant 64 : index
    %47 = vector.load %arg9[%c0_58, %c64] : memref<256x72xbf16, #tpu.memory_space<vmem>>, vector<256x8xbf16>
    tpu.vector_store %arg9[%c0_58, %c64], %46 {strides = array<i32>} : memref<256x72xbf16, #tpu.memory_space<vmem>>, vector<256x8xbf16>,
    %c0_59 = arith.constant 0 : index
    %c0_60 = arith.constant 0 : index
    %48 = vector.load %arg9[%c0_59, %c0_60] : memref<256x72xbf16, #tpu.memory_space<vmem>>, vector<256x72xbf16>
    %c0_61 = arith.constant 0 : index
    %c0_62 = arith.constant 0 : index
    %49 = vector.load %arg4[%c0_61, %c0_62] : memref<72x8xbf16, #tpu.memory_space<vmem>>, vector<72x8xbf16>
    %cst_63 = arith.constant dense<0.000000e+00> : vector<256x8xf32>
    %50 = tpu.matmul %48, %49, %cst_63 {dimension_numbers = #tpu.dot_dimension_numbers<[1], [0], [0], [1], [0, 0, 1, 1], [], []>} : vector<256x72xbf16>, vector<72x8xbf16>, vector<256x8xf32> -> vector<256x8xf32>
    %c0_64 = arith.constant 0 : index
    %c0_65 = arith.constant 0 : index
    %c0_66 = arith.constant 0 : index
    %51 = vector.load %arg5[%c0_64, %c0_65, %c0_66] : memref<1x256x8xf32, #tpu.memory_space<vmem>>, vector<1x256x8xf32>
    %52 = vector.shape_cast %51 : vector<1x256x8xf32> to vector<256x8xf32>
    %53 = vector.shape_cast %50 : vector<256x8xf32> to vector<1x256x8xf32>
    tpu.vector_store %arg5[%c0_64, %c0_65, %c0_66], %53 {strides = array<i32>} : memref<1x256x8xf32, #tpu.memory_space<vmem>>, vector<1x256x8xf32>,
    %cst_67 = arith.constant dense<0.000000e+00> : vector<8xf32>
    %54 = vector.multi_reduction <add>, %50, %cst_67 [0] : vector<256x8xf32> to vector<8xf32>
    %55 = vector.shape_cast %54 : vector<8xf32> to vector<1x8xf32>
    %c0_68 = arith.constant 0 : index
    %c0_69 = arith.constant 0 : index
    %c0_70 = arith.constant 0 : index
    %56 = vector.load %arg6[%c0_68, %c0_69, %c0_70] : memref<1x1x8xf32, #tpu.memory_space<vmem>>, vector<1x1x8xf32>
    %57 = vector.shape_cast %56 : vector<1x1x8xf32> to vector<1x8xf32>
    %58 = vector.shape_cast %55 : vector<1x8xf32> to vector<1x1x8xf32>
    tpu.vector_store %arg6[%c0_68, %c0_69, %c0_70], %58 {strides = array<i32>} : memref<1x1x8xf32, #tpu.memory_space<vmem>>, vector<1x1x8xf32>,
    %59 = arith.mulf %50, %50 : vector<256x8xf32>
    %cst_71 = arith.constant dense<0.000000e+00> : vector<8xf32>
    %60 = vector.multi_reduction <add>, %59, %cst_71 [0] : vector<256x8xf32> to vector<8xf32>
    %61 = vector.shape_cast %60 : vector<8xf32> to vector<1x8xf32>
    %c0_72 = arith.constant 0 : index
    %c0_73 = arith.constant 0 : index
    %c0_74 = arith.constant 0 : index
    %62 = vector.load %arg7[%c0_72, %c0_73, %c0_74] : memref<1x1x8xf32, #tpu.memory_space<vmem>>, vector<1x1x8xf32>
    %63 = vector.shape_cast %62 : vector<1x1x8xf32> to vector<1x8xf32>
    %64 = vector.shape_cast %61 : vector<1x8xf32> to vector<1x1x8xf32>
    tpu.vector_store %arg7[%c0_72, %c0_73, %c0_74], %64 {strides = array<i32>} : memref<1x1x8xf32, #tpu.memory_space<vmem>>, vector<1x1x8xf32>,
    return
  }
  func.func @transform_0(%arg0: i32) -> (i32, i32, i32) {
    %c0_i32 = arith.constant 0 : i32
    %c0_i32_0 = arith.constant 0 : i32
    %c0_i32_1 = arith.constant 0 : i32
    return %arg0, %c0_i32, %c0_i32_0 : i32, i32, i32
  }
  func.func @transform_1(%arg0: i32) -> (i32, i32, i32) {
    %c0_i32 = arith.constant 0 : i32
    %c0_i32_0 = arith.constant 0 : i32
    %c0_i32_1 = arith.constant 0 : i32
    %c0_i32_2 = arith.constant 0 : i32
    return %c0_i32, %c0_i32_0, %c0_i32_1 : i32, i32, i32
  }
  func.func @transform_2(%arg0: i32) -> (i32, i32, i32) {
    %c0_i32 = arith.constant 0 : i32
    %c0_i32_0 = arith.constant 0 : i32
    %c0_i32_1 = arith.constant 0 : i32
    %c0_i32_2 = arith.constant 0 : i32
    return %c0_i32, %c0_i32_0, %c0_i32_1 : i32, i32, i32
  }
  func.func @transform_3(%arg0: i32) -> (i32, i32) {
    %c0_i32 = arith.constant 0 : i32
    %c0_i32_0 = arith.constant 0 : i32
    %c0_i32_1 = arith.constant 0 : i32
    return %c0_i32, %c0_i32_0 : i32, i32
  }
  func.func @transform_4(%arg0: i32) -> (i32, i32, i32) {
    %c0_i32 = arith.constant 0 : i32
    %c0_i32_0 = arith.constant 0 : i32
    %c0_i32_1 = arith.constant 0 : i32
    return %arg0, %c0_i32, %c0_i32_0 : i32, i32, i32
  }
  func.func @transform_5(%arg0: i32) -> (i32, i32, i32) {
    %c0_i32 = arith.constant 0 : i32
    %c0_i32_0 = arith.constant 0 : i32
    %c0_i32_1 = arith.constant 0 : i32
    return %arg0, %c0_i32, %c0_i32_0 : i32, i32, i32
  }
  func.func @transform_6(%arg0: i32) -> (i32, i32, i32) {
    %c0_i32 = arith.constant 0 : i32
    %c0_i32_0 = arith.constant 0 : i32
    %c0_i32_1 = arith.constant 0 : i32
    return %arg0, %c0_i32, %c0_i32_0 : i32, i32, i32
  }
}

module attributes {stable_mosaic.version = 11 : i64} {
  func.func @_bn_relu_kernel(%arg0: i32, %arg1: memref<1x256x8xf32, #tpu.memory_space<vmem>>, %arg2: memref<1x1x8xf32, #tpu.memory_space<vmem>>, %arg3: memref<1x1x8xf32, #tpu.memory_space<vmem>>, %arg4: memref<1x256x8xf32, #tpu.memory_space<vmem>>) attributes {dimension_semantics = [#tpu.dimension_semantics<parallel>], iteration_bounds = array<i64: 2>, scalar_prefetch = 0 : i64, scratch_operands = 0 : i64, tpu.core_type = #tpu.core_type<tc>, window_params = [{transform_indices = @transform_0, window_bounds = array<i64: 1, 256, 8>}, {pipeline_mode = #tpu.pipeline_mode<synchronous>, transform_indices = @transform_1, window_bounds = array<i64: 1, 1, 8>}, {pipeline_mode = #tpu.pipeline_mode<synchronous>, transform_indices = @transform_2, window_bounds = array<i64: 1, 1, 8>}, {transform_indices = @transform_3, window_bounds = array<i64: 1, 256, 8>}]} {
    %c0 = arith.constant 0 : index
    %c0_0 = arith.constant 0 : index
    %c0_1 = arith.constant 0 : index
    %0 = vector.load %arg1[%c0, %c0_0, %c0_1] : memref<1x256x8xf32, #tpu.memory_space<vmem>>, vector<1x256x8xf32>
    %1 = vector.shape_cast %0 : vector<1x256x8xf32> to vector<256x8xf32>
    %c0_2 = arith.constant 0 : index
    %c0_3 = arith.constant 0 : index
    %c0_4 = arith.constant 0 : index
    %2 = vector.load %arg2[%c0_2, %c0_3, %c0_4] : memref<1x1x8xf32, #tpu.memory_space<vmem>>, vector<1x1x8xf32>
    %3 = vector.shape_cast %2 : vector<1x1x8xf32> to vector<1x8xf32>
    %4 = vector.broadcast %3 : vector<1x8xf32> to vector<256x8xf32>
    %5 = arith.mulf %1, %4 : vector<256x8xf32>
    %c0_5 = arith.constant 0 : index
    %c0_6 = arith.constant 0 : index
    %c0_7 = arith.constant 0 : index
    %6 = vector.load %arg3[%c0_5, %c0_6, %c0_7] : memref<1x1x8xf32, #tpu.memory_space<vmem>>, vector<1x1x8xf32>
    %7 = vector.shape_cast %6 : vector<1x1x8xf32> to vector<1x8xf32>
    %8 = vector.broadcast %7 : vector<1x8xf32> to vector<256x8xf32>
    %9 = arith.addf %5, %8 : vector<256x8xf32>
    %cst = arith.constant 0.000000e+00 : f32
    %10 = vector.broadcast %cst : f32 to vector<256x8xf32>
    %11 = arith.maximumf %9, %10 : vector<256x8xf32>
    %c0_8 = arith.constant 0 : index
    %c0_9 = arith.constant 0 : index
    %c0_10 = arith.constant 0 : index
    %12 = vector.load %arg4[%c0_8, %c0_9, %c0_10] : memref<1x256x8xf32, #tpu.memory_space<vmem>>, vector<1x256x8xf32>
    %13 = vector.shape_cast %12 : vector<1x256x8xf32> to vector<256x8xf32>
    %14 = vector.shape_cast %11 : vector<256x8xf32> to vector<1x256x8xf32>
    tpu.vector_store %arg4[%c0_8, %c0_9, %c0_10], %14 {strides = array<i32>} : memref<1x256x8xf32, #tpu.memory_space<vmem>>, vector<1x256x8xf32>,
    return
  }
  func.func @transform_0(%arg0: i32) -> (i32, i32, i32) {
    %c0_i32 = arith.constant 0 : i32
    %c0_i32_0 = arith.constant 0 : i32
    %c0_i32_1 = arith.constant 0 : i32
    return %arg0, %c0_i32, %c0_i32_0 : i32, i32, i32
  }
  func.func @transform_1(%arg0: i32) -> (i32, i32, i32) {
    %c0_i32 = arith.constant 0 : i32
    %c0_i32_0 = arith.constant 0 : i32
    %c0_i32_1 = arith.constant 0 : i32
    %c0_i32_2 = arith.constant 0 : i32
    return %c0_i32, %c0_i32_0, %c0_i32_1 : i32, i32, i32
  }
  func.func @transform_2(%arg0: i32) -> (i32, i32, i32) {
    %c0_i32 = arith.constant 0 : i32
    %c0_i32_0 = arith.constant 0 : i32
    %c0_i32_1 = arith.constant 0 : i32
    %c0_i32_2 = arith.constant 0 : i32
    return %c0_i32, %c0_i32_0, %c0_i32_1 : i32, i32, i32
  }
  func.func @transform_3(%arg0: i32) -> (i32, i32, i32) {
    %c0_i32 = arith.constant 0 : i32
    %c0_i32_0 = arith.constant 0 : i32
    %c0_i32_1 = arith.constant 0 : i32
    return %arg0, %c0_i32, %c0_i32_0 : i32, i32, i32
  }
}

</mosaic_0001>

<llo_original>
// kernel: double_conv.5
$region0: #{double_conv.5}
  #allocation0 [shape = 'u32[]', space=smem, size = 0x4, offset = 0x4, fixed_abs, tag = 'smem constant byte address 0x4 - core index']
  #allocation1 [shape = 'u32[144,128]{1,0:T(1,128)}', space=vmem, size = 0x12000, scoped, tag = 'internal scratch']
  %s0 = inlined_call_operand.vmem [shape: f32[2,256,8], index: 0, kind: input, shape index: {}]
  %s1 = inlined_call_operand.vmem [shape: f32[1,1,8], index: 1, kind: input, shape index: {}]
  %s2 = inlined_call_operand.vmem [shape: f32[1,1,8], index: 2, kind: input, shape index: {}]
  %s3 = inlined_call_operand.vmem [shape: f32[2,256,8], index: 3, kind: output, shape index: {}]
  %s4 = sld [smem:[#allocation0]]
  $region45: #{double_conv.5} parent=0
    _
  %s6 = ssub.s32 1, %s4
  %s7 = scalar_select 0, %s6, %s4
  loop: start=0, step=1, limit=4
  $region2: #{double_conv.5} parent=0 // loop_pre_header
    _
  $region3: #{double_conv.5} parent=0 // loop_header
    %s9 = sphi 0, %s13
    %p10 = scmp.ge.s32.totalorder %s9, 4
    %s19 = sphi 0, %s21
    %s22 = sphi 0, %s19
    %s23 = sphi 0, %s22
    %s39 = sphi 0, %s23
    %s43 = sphi 0, %s43
    %s45 = sphi 0, %s43
    %s46 = sphi 0, %s45
    %s60 = sphi 0, %s46
    %s64 = sphi 0, %s64
    %s66 = sphi 0, %s64
    %s67 = sphi 0, %s66
    %s81 = sphi 0, %s67
    %s87 = sphi 0, %s89
    %s90 = sphi 0, %s87
    %s91 = sphi 0, %s90
    %s107 = sphi 0, %s91
  $region4: #{double_conv.5} parent=0 // loop_header_branch
    %12 = sbr.rel (%p10) target = $region8
  $region5: #{double_conv.5} parent=0 // loop_body
    %s14 = ssub.s32 %s9, 1
    %s15 = ssub.s32 %s9, 2
    %s16 = sadd.s32 %s9, 1
    %s17 = ssub.s32 %s9, %s16
    %p18 = scmp.eq.s32.totalorder %s17, 0
    %s20 = sadd.s32 %s19, 1
    %s21 = scalar_select %p18, %s19, %s20
    %p24 = pneg %p18
    %p25 = scmp.eq.s32.totalorder %s9, 1
    %p26 = por %p24, %p25
    %p27 = scmp.ne.s32.totalorder %s19, %s22
    %p28 = scmp.eq.s32.totalorder %s9, 0
    %p29 = por %p27, %p28
    %p30 = scmp.ne.s32.totalorder %s19, %s22
    %p31 = scmp.eq.s32.totalorder %s14, 1
    %p32 = por %p30, %p31
    %p33 = scmp.ne.s32.totalorder %s22, %s23
    %p34 = scmp.eq.s32.totalorder %s14, 0
    %p35 = por %p33, %p34
    %p36 = scmp.ne.s32.totalorder %s22, %s23
    %p37 = scmp.eq.s32.totalorder %s15, 1
    %p38 = por %p36, %p37
    %p40 = scmp.ne.s32.totalorder %s23, %s39
    %p41 = scmp.eq.s32.totalorder %s15, 0
    %p42 = por %p40, %p41
    %s44 = sadd.s32 %s43, 1
    %p47 = scmp.eq.s32.totalorder %s9, 1
    %p48 = scmp.ne.s32.totalorder %s43, %s45
    %p49 = scmp.eq.s32.totalorder %s9, 0
    %p50 = por %p48, %p49
    %p51 = scmp.ne.s32.totalorder %s43, %s45
    %p52 = scmp.eq.s32.totalorder %s14, 1
    %p53 = por %p51, %p52
    %p54 = scmp.ne.s32.totalorder %s45, %s46
    %p55 = scmp.eq.s32.totalorder %s14, 0
    %p56 = por %p54, %p55
    %p57 = scmp.ne.s32.totalorder %s45, %s46
    %p58 = scmp.eq.s32.totalorder %s15, 1
    %p59 = por %p57, %p58
    %p61 = scmp.ne.s32.totalorder %s46, %s60
    %p62 = scmp.eq.s32.totalorder %s15, 0
    %p63 = por %p61, %p62
    %s65 = sadd.s32 %s64, 1
    %p68 = scmp.eq.s32.totalorder %s9, 1
    %p69 = scmp.ne.s32.totalorder %s64, %s66
    %p70 = scmp.eq.s32.totalorder %s9, 0
    %p71 = por %p69, %p70
    %p72 = scmp.ne.s32.totalorder %s64, %s66
    %p73 = scmp.eq.s32.totalorder %s14, 1
    %p74 = por %p72, %p73
    %p75 = scmp.ne.s32.totalorder %s66, %s67
    %p76 = scmp.eq.s32.totalorder %s14, 0
    %p77 = por %p75, %p76
    %p78 = scmp.ne.s32.totalorder %s66, %s67
    %p79 = scmp.eq.s32.totalorder %s15, 1
    %p80 = por %p78, %p79
    %p82 = scmp.ne.s32.totalorder %s67, %s81
    %p83 = scmp.eq.s32.totalorder %s15, 0
    %p84 = por %p82, %p83
    %s85 = ssub.s32 %s9, %s16
    %p86 = scmp.eq.s32.totalorder %s85, 0
    %s88 = sadd.s32 %s87, 1
    %s89 = scalar_select %p86, %s87, %s88
    %p92 = pneg %p86
    %p93 = scmp.eq.s32.totalorder %s9, 1
    %p94 = por %p92, %p93
    %p95 = scmp.ne.s32.totalorder %s87, %s90
    %p96 = scmp.eq.s32.totalorder %s9, 0
    %p97 = por %p95, %p96
    %p98 = scmp.ne.s32.totalorder %s87, %s90
    %p99 = scmp.eq.s32.totalorder %s14, 1
    %p100 = por %p98, %p99
    %p101 = scmp.ne.s32.totalorder %s90, %s91
    %p102 = scmp.eq.s32.totalorder %s14, 0
    %p103 = por %p101, %p102
    %p104 = scmp.ne.s32.totalorder %s90, %s91
    %p105 = scmp.eq.s32.totalorder %s15, 1
    %p106 = por %p104, %p105
    %p108 = scmp.ne.s32.totalorder %s91, %s107
    %p109 = scmp.eq.s32.totalorder %s15, 0
    %p110 = por %p108, %p109
    %p111 = scmp.le.s32.totalorder 1, %s9
    %p112 = scmp.lt.s32.totalorder %s9, 3
    %p113 = pnand %p111, %p112
    %p114 = pneg %p113
    // Predicated region
    $region9: #{double_conv.5} parent=5 // pred_check
      _
    $region10: #{double_conv.5} parent=5 // pred_check_branch
      %116 = sbr.rel (%p113) target = $region12
    $region11: #{double_conv.5} parent=5 // pred_region
      %s117 = ssub.s32 %s9, 1
      // Predicated region
      $region13: #{double_conv.5} parent=11 // pred_check
        %p118 = pneg %p56
      $region14: #{double_conv.5} parent=11 // pred_check_branch
        %120 = sbr.rel (%p118) target = $region16
      $region15: #{double_conv.5} parent=11 // pred_region
        _
      $region16: #{double_conv.5} parent=11 // pred_fallthru
        _
      // Predicated region
      $region17: #{double_conv.5} parent=11 // pred_check
        %p121 = pneg %p77
      $region18: #{double_conv.5} parent=11 // pred_check_branch
        %123 = sbr.rel (%p121) target = $region20
      $region19: #{double_conv.5} parent=11 // pred_region
        _
      $region20: #{double_conv.5} parent=11 // pred_fallthru
        _
    $region12: #{double_conv.5} parent=5 // pred_fallthru
      _
    %p124 = scmp.lt.s32.totalorder %s9, 2
    // Predicated region
    $region21: #{double_conv.5} parent=5 // pred_check
      %p125 = pneg %p124
    $region22: #{double_conv.5} parent=5 // pred_check_branch
      %127 = sbr.rel (%p125) target = $region24
    $region23: #{double_conv.5} parent=5 // pred_region
      // Predicated region
      $region25: #{double_conv.5} parent=23 // pred_check
        %p128 = pneg %p29
      $region26: #{double_conv.5} parent=23 // pred_check_branch
        %130 = sbr.rel (%p128) target = $region28
      $region27: #{double_conv.5} parent=23 // pred_region
        %p131 = scmp.lt.s32.totalorder %s9, 1
        %s132 = scalar_select %p131, %s9, 1
        %s133 = smul.addr %s132, 32
        %s134 = smul.addr %s133, 8
        %s135 = scalar_lea.vmem %s0, %s134
      $region28: #{double_conv.5} parent=23 // pred_fallthru
        _
    $region24: #{double_conv.5} parent=5 // pred_fallthru
      _
    %p136 = scmp.le.s32.totalorder 1, %s9
    %p137 = scmp.lt.s32.totalorder %s9, 3
    %p138 = pnand %p136, %p137
    %p139 = pneg %p138
    // Predicated region
    $region29: #{double_conv.5} parent=5 // pred_check
      _
    $region30: #{double_conv.5} parent=5 // pred_check_branch
      %141 = sbr.rel (%p138) target = $region32
    $region31: #{double_conv.5} parent=5 // pred_region
      %s142 = ssub.s32 %s9, 1
      %p143 = scmp.lt.s32.totalorder %s14, 1
      %s144 = scalar_select %p143, %s14, 1
      %s145 = smul.addr %s144, 32
      %s146 = smul.addr %s145, 8
      %s147 = scalar_lea.vmem %s0, %s146
      %p148 = pneg %p35
      %p149 = pneg %p32
      %p150 = pneg %p56
      %p151 = pneg %p53
      %p152 = pneg %p77
      %p153 = pneg %p74
      %p154 = pneg %p103
      %p155 = pneg %p100
      %p156 = scmp.lt.s32.totalorder %s14, 1
      %s157 = scalar_select %p156, %s14, 1
      %s158 = smul.addr %s157, 32
      %s159 = smul.addr %s158, 8
      %s160 = scalar_lea.vmem %s3, %s159
      %p161 = scmp.lt.s32.totalorder %s14, 1
      %s162 = scalar_select %p161, %s14, 1
      %s163 = smul.addr %s162, 32
      %s164 = smul.addr %s163, 8
      %s165 = scalar_lea.vmem %s0, %s164
      %p166 = scmp.lt.s32.totalorder %s14, 1
      %s167 = scalar_select %p166, %s14, 1
      %s168 = smul.addr %s167, 32
      %s169 = smul.addr %s168, 8
      %s170 = scalar_lea.vmem %s3, %s169
      %v171 = vld [vmem:[%s165] sm:$0xff]
      %v172 = vld [vmem:[%s165 + $0x8] sm:$0xff]
      %v173 = vld [vmem:[%s165 + $0x10] sm:$0xff]
      %v174 = vld [vmem:[%s165 + $0x18] sm:$0xff]
      %v175 = vld [vmem:[%s165 + $0x20] sm:$0xff]
      %v176 = vld [vmem:[%s165 + $0x28] sm:$0xff]
      %v177 = vld [vmem:[%s165 + $0x30] sm:$0xff]
      %v178 = vld [vmem:[%s165 + $0x38] sm:$0xff]
      %v179 = vld [vmem:[%s165 + $0x40] sm:$0xff]
      %v180 = vld [vmem:[%s165 + $0x48] sm:$0xff]
      %v181 = vld [vmem:[%s165 + $0x50] sm:$0xff]
      %v182 = vld [vmem:[%s165 + $0x58] sm:$0xff]
      %v183 = vld [vmem:[%s165 + $0x60] sm:$0xff]
      %v184 = vld [vmem:[%s165 + $0x68] sm:$0xff]
      %v185 = vld [vmem:[%s165 + $0x70] sm:$0xff]
      %v186 = vld [vmem:[%s165 + $0x78] sm:$0xff]
      %v187 = vld [vmem:[%s165 + $0x80] sm:$0xff]
      %v188 = vld [vmem:[%s165 + $0x88] sm:$0xff]
      %v189 = vld [vmem:[%s165 + $0x90] sm:$0xff]
      %v190 = vld [vmem:[%s165 + $0x98] sm:$0xff]
      %v191 = vld [vmem:[%s165 + $0xa0] sm:$0xff]
      %v192 = vld [vmem:[%s165 + $0xa8] sm:$0xff]
      %v193 = vld [vmem:[%s165 + $0xb0] sm:$0xff]
      %v194 = vld [vmem:[%s165 + $0xb8] sm:$0xff]
      %v195 = vld [vmem:[%s165 + $0xc0] sm:$0xff]
      %v196 = vld [vmem:[%s165 + $0xc8] sm:$0xff]
      %v197 = vld [vmem:[%s165 + $0xd0] sm:$0xff]
      %v198 = vld [vmem:[%s165 + $0xd8] sm:$0xff]
      %v199 = vld [vmem:[%s165 + $0xe0] sm:$0xff]
      %v200 = vld [vmem:[%s165 + $0xe8] sm:$0xff]
      %v201 = vld [vmem:[%s165 + $0xf0] sm:$0xff]
      %v202 = vld [vmem:[%s165 + $0xf8] sm:$0xff]
      %v203 = vld [vmem:[%s1] sm:$0x1]
      %v205 = vlaneseq
      %v206 = vshrl.u32 %v205, 7
      %v207 = vsub.s32 0, %v206
      %v208 = vrot.slane %v203, %v207
      %v210 = vmul.f32 %v171, %v208
      %v211 = vmul.f32 %v172, %v208
      %v212 = vmul.f32 %v173, %v208
      %v213 = vmul.f32 %v174, %v208
      %v214 = vmul.f32 %v175, %v208
      %v215 = vmul.f32 %v176, %v208
      %v216 = vmul.f32 %v177, %v208
      %v217 = vmul.f32 %v178, %v208
      %v218 = vmul.f32 %v179, %v208
      %v219 = vmul.f32 %v180, %v208
      %v220 = vmul.f32 %v181, %v208
      %v221 = vmul.f32 %v182, %v208
      %v222 = vmul.f32 %v183, %v208
      %v223 = vmul.f32 %v184, %v208
      %v224 = vmul.f32 %v185, %v208
      %v225 = vmul.f32 %v186, %v208
      %v226 = vmul.f32 %v187, %v208
      %v227 = vmul.f32 %v188, %v208
      %v228 = vmul.f32 %v189, %v208
      %v229 = vmul.f32 %v190, %v208
      %v230 = vmul.f32 %v191, %v208
      %v231 = vmul.f32 %v192, %v208
      %v232 = vmul.f32 %v193, %v208
      %v233 = vmul.f32 %v194, %v208
      %v234 = vmul.f32 %v195, %v208
      %v235 = vmul.f32 %v196, %v208
      %v236 = vmul.f32 %v197, %v208
      %v237 = vmul.f32 %v198, %v208
      %v238 = vmul.f32 %v199, %v208
      %v239 = vmul.f32 %v200, %v208
      %v240 = vmul.f32 %v201, %v208
      %v241 = vmul.f32 %v202, %v208
      %v242 = vld [vmem:[%s2] sm:$0x1]
      %v244 = vlaneseq
      %v245 = vshrl.u32 %v244, 7
      %v246 = vsub.s32 0, %v245
      %v247 = vrot.slane %v242, %v246
      %v249 = vadd.f32 %v210, %v247
      %v250 = vadd.f32 %v211, %v247
      %v251 = vadd.f32 %v212, %v247
      %v252 = vadd.f32 %v213, %v247
      %v253 = vadd.f32 %v214, %v247
      %v254 = vadd.f32 %v215, %v247
      %v255 = vadd.f32 %v216, %v247
      %v256 = vadd.f32 %v217, %v247
      %v257 = vadd.f32 %v218, %v247
      %v258 = vadd.f32 %v219, %v247
      %v259 = vadd.f32 %v220, %v247
      %v260 = vadd.f32 %v221, %v247
      %v261 = vadd.f32 %v222, %v247
      %v262 = vadd.f32 %v223, %v247
      %v263 = vadd.f32 %v224, %v247
      %v264 = vadd.f32 %v225, %v247
      %v265 = vadd.f32 %v226, %v247
      %v266 = vadd.f32 %v227, %v247
      %v267 = vadd.f32 %v228, %v247
      %v268 = vadd.f32 %v229, %v247
      %v269 = vadd.f32 %v230, %v247
      %v270 = vadd.f32 %v231, %v247
      %v271 = vadd.f32 %v232, %v247
      %v272 = vadd.f32 %v233, %v247
      %v273 = vadd.f32 %v234, %v247
      %v274 = vadd.f32 %v235, %v247
      %v275 = vadd.f32 %v236, %v247
      %v276 = vadd.f32 %v237, %v247
      %v277 = vadd.f32 %v238, %v247
      %v278 = vadd.f32 %v239, %v247
      %v279 = vadd.f32 %v240, %v247
      %v280 = vadd.f32 %v241, %v247
      %v281 = vmax.f32 %v249, 0.0
      %v282 = vmax.f32 %v250, 0.0
      %v283 = vmax.f32 %v251, 0.0
      %v284 = vmax.f32 %v252, 0.0
      %v285 = vmax.f32 %v253, 0.0
      %v286 = vmax.f32 %v254, 0.0
      %v287 = vmax.f32 %v255, 0.0
      %v288 = vmax.f32 %v256, 0.0
      %v289 = vmax.f32 %v257, 0.0
      %v290 = vmax.f32 %v258, 0.0
      %v291 = vmax.f32 %v259, 0.0
      %v292 = vmax.f32 %v260, 0.0
      %v293 = vmax.f32 %v261, 0.0
      %v294 = vmax.f32 %v262, 0.0
      %v295 = vmax.f32 %v263, 0.0
      %v296 = vmax.f32 %v264, 0.0
      %v297 = vmax.f32 %v265, 0.0
      %v298 = vmax.f32 %v266, 0.0
      %v299 = vmax.f32 %v267, 0.0
      %v300 = vmax.f32 %v268, 0.0
      %v301 = vmax.f32 %v269, 0.0
      %v302 = vmax.f32 %v270, 0.0
      %v303 = vmax.f32 %v271, 0.0
      %v304 = vmax.f32 %v272, 0.0
      %v305 = vmax.f32 %v273, 0.0
      %v306 = vmax.f32 %v274, 0.0
      %v307 = vmax.f32 %v275, 0.0
      %v308 = vmax.f32 %v276, 0.0
      %v309 = vmax.f32 %v277, 0.0
      %v310 = vmax.f32 %v278, 0.0
      %v311 = vmax.f32 %v279, 0.0
      %v312 = vmax.f32 %v280, 0.0
      %vm313 = vcmask 64512
      %314 = vst.msk [vmem:[%s170] sm:$0xff] %vm313, %v281
      %315 = vst.msk [vmem:[%s170 + $0x8] sm:$0xff] %vm313, %v282
      %316 = vst.msk [vmem:[%s170 + $0x10] sm:$0xff] %vm313, %v283
      %317 = vst.msk [vmem:[%s170 + $0x18] sm:$0xff] %vm313, %v284
      %318 = vst.msk [vmem:[%s170 + $0x20] sm:$0xff] %vm313, %v285
      %319 = vst.msk [vmem:[%s170 + $0x28] sm:$0xff] %vm313, %v286
      %320 = vst.msk [vmem:[%s170 + $0x30] sm:$0xff] %vm313, %v287
      %321 = vst.msk [vmem:[%s170 + $0x38] sm:$0xff] %vm313, %v288
      %322 = vst.msk [vmem:[%s170 + $0x40] sm:$0xff] %vm313, %v289
      %323 = vst.msk [vmem:[%s170 + $0x48] sm:$0xff] %vm313, %v290
      %324 = vst.msk [vmem:[%s170 + $0x50] sm:$0xff] %vm313, %v291
      %325 = vst.msk [vmem:[%s170 + $0x58] sm:$0xff] %vm313, %v292
      %326 = vst.msk [vmem:[%s170 + $0x60] sm:$0xff] %vm313, %v293
      %327 = vst.msk [vmem:[%s170 + $0x68] sm:$0xff] %vm313, %v294
      %328 = vst.msk [vmem:[%s170 + $0x70] sm:$0xff] %vm313, %v295
      %329 = vst.msk [vmem:[%s170 + $0x78] sm:$0xff] %vm313, %v296
      %330 = vst.msk [vmem:[%s170 + $0x80] sm:$0xff] %vm313, %v297
      %331 = vst.msk [vmem:[%s170 + $0x88] sm:$0xff] %vm313, %v298
      %332 = vst.msk [vmem:[%s170 + $0x90] sm:$0xff] %vm313, %v299
      %333 = vst.msk [vmem:[%s170 + $0x98] sm:$0xff] %vm313, %v300
      %334 = vst.msk [vmem:[%s170 + $0xa0] sm:$0xff] %vm313, %v301
      %335 = vst.msk [vmem:[%s170 + $0xa8] sm:$0xff] %vm313, %v302
      %336 = vst.msk [vmem:[%s170 + $0xb0] sm:$0xff] %vm313, %v303
      %337 = vst.msk [vmem:[%s170 + $0xb8] sm:$0xff] %vm313, %v304
      %338 = vst.msk [vmem:[%s170 + $0xc0] sm:$0xff] %vm313, %v305
      %339 = vst.msk [vmem:[%s170 + $0xc8] sm:$0xff] %vm313, %v306
      %340 = vst.msk [vmem:[%s170 + $0xd0] sm:$0xff] %vm313, %v307
      %341 = vst.msk [vmem:[%s170 + $0xd8] sm:$0xff] %vm313, %v308
      %342 = vst.msk [vmem:[%s170 + $0xe0] sm:$0xff] %vm313, %v309
      %343 = vst.msk [vmem:[%s170 + $0xe8] sm:$0xff] %vm313, %v310
      %344 = vst.msk [vmem:[%s170 + $0xf0] sm:$0xff] %vm313, %v311
      %345 = vst.msk [vmem:[%s170 + $0xf8] sm:$0xff] %vm313, %v312
      %p346 = scmp.lt.s32.totalorder %s14, 1
      %s347 = scalar_select %p346, %s14, 1
      %s348 = smul.addr %s347, 32
      %s349 = smul.addr %s348, 8
      %s350 = scalar_lea.vmem %s3, %s349
      // Predicated region
      $region33: #{double_conv.5} parent=31 // pred_check
        %p351 = pneg %p100
      $region34: #{double_conv.5} parent=31 // pred_check_branch
        %353 = sbr.rel (%p351) target = $region36
      $region35: #{double_conv.5} parent=31 // pred_region
        _
      $region36: #{double_conv.5} parent=31 // pred_fallthru
        _
    $region32: #{double_conv.5} parent=5 // pred_fallthru
      _
    %p354 = scmp.le.s32.totalorder 2, %s9
    // Predicated region
    $region37: #{double_conv.5} parent=5 // pred_check
      %p355 = pneg %p354
    $region38: #{double_conv.5} parent=5 // pred_check_branch
      %357 = sbr.rel (%p355) target = $region40
    $region39: #{double_conv.5} parent=5 // pred_region
      %s358 = ssub.s32 %s9, 2
      // Predicated region
      $region41: #{double_conv.5} parent=39 // pred_check
        %p359 = pneg %p106
      $region42: #{double_conv.5} parent=39 // pred_check_branch
        %361 = sbr.rel (%p359) target = $region44
      $region43: #{double_conv.5} parent=39 // pred_region
        %p362 = scmp.lt.s32.totalorder %s15, 1
        %s363 = scalar_select %p362, %s15, 1
        %s364 = smul.addr %s363, 32
        %s365 = smul.addr %s364, 8
        %s366 = scalar_lea.vmem %s3, %s365
      $region44: #{double_conv.5} parent=39 // pred_fallthru
        _
    $region40: #{double_conv.5} parent=5 // pred_fallthru
      _
  $region6: #{double_conv.5} parent=0 // loop_footer
    %s13 = sadd.s32 1, %s9
  $region7: #{double_conv.5} parent=0 // loop_footer_branch
    %8 = sbr.rel target = $region3
  $region8: #{double_conv.5} parent=0 // loop_exit
    _

// kernel: double_conv.3
$region0: #{double_conv.3}
  #allocation0 [shape = 'u32[]', space=smem, size = 0x4, offset = 0x4, fixed_abs, tag = 'smem constant byte address 0x4 - core index']
  #allocation1 [shape = 'u32[144,128]{1,0:T(1,128)}', space=vmem, size = 0x12000, scoped, tag = 'internal scratch']
  #allocation2 [shape = 'bf16[256,36]{1,0:T(16,128)(2,1)}', space=vmem, size = 0x10000, scoped, tag = 'scratch operand']
  %s0 = inlined_call_operand.vmem [shape: bf16[2,18,18,4], index: 0, kind: input, shape index: {}]
  %s1 = inlined_call_operand.vmem [shape: bf16[36,8], index: 1, kind: input, shape index: {}]
  %s2 = inlined_call_operand.vmem [shape: f32[2,256,8], index: 2, kind: output, shape index: {0}]
  %s3 = inlined_call_operand.vmem [shape: f32[2,1,8], index: 3, kind: output, shape index: {1}]
  %s4 = inlined_call_operand.vmem [shape: f32[2,1,8], index: 4, kind: output, shape index: {2}]
  %5 = xla_tuple %s2, %s3, %s4
  %s6 = sld [smem:[#allocation0]]
  $region57: #{double_conv.3} parent=0
    _
  %s8 = ssub.s32 1, %s6
  %s9 = scalar_select 0, %s8, %s6
  loop: start=0, step=1, limit=4
  $region2: #{double_conv.3} parent=0 // loop_pre_header
    _
  $region3: #{double_conv.3} parent=0 // loop_header
    %s11 = sphi 0, %s15
    %p12 = scmp.ge.s32.totalorder %s11, 4
    %s21 = sphi 0, %s23
    %s24 = sphi 0, %s21
    %s25 = sphi 0, %s24
    %s41 = sphi 0, %s25
    %s45 = sphi 0, %s45
    %s47 = sphi 0, %s45
    %s48 = sphi 0, %s47
    %s62 = sphi 0, %s48
    %s68 = sphi 0, %s70
    %s71 = sphi 0, %s68
    %s72 = sphi 0, %s71
    %s88 = sphi 0, %s72
    %s94 = sphi 0, %s96
    %s97 = sphi 0, %s94
    %s98 = sphi 0, %s97
    %s114 = sphi 0, %s98
    %s120 = sphi 0, %s122
    %s123 = sphi 0, %s120
    %s124 = sphi 0, %s123
    %s140 = sphi 0, %s124
  $region4: #{double_conv.3} parent=0 // loop_header_branch
    %14 = sbr.rel (%p12) target = $region8
  $region5: #{double_conv.3} parent=0 // loop_body
    %s16 = ssub.s32 %s11, 1
    %s17 = ssub.s32 %s11, 2
    %s18 = sadd.s32 %s11, 1
    %s19 = ssub.s32 %s11, %s18
    %p20 = scmp.eq.s32.totalorder %s19, 0
    %s22 = sadd.s32 %s21, 1
    %s23 = scalar_select %p20, %s21, %s22
    %p26 = pneg %p20
    %p27 = scmp.eq.s32.totalorder %s11, 1
    %p28 = por %p26, %p27
    %p29 = scmp.ne.s32.totalorder %s21, %s24
    %p30 = scmp.eq.s32.totalorder %s11, 0
    %p31 = por %p29, %p30
    %p32 = scmp.ne.s32.totalorder %s21, %s24
    %p33 = scmp.eq.s32.totalorder %s16, 1
    %p34 = por %p32, %p33
    %p35 = scmp.ne.s32.totalorder %s24, %s25
    %p36 = scmp.eq.s32.totalorder %s16, 0
    %p37 = por %p35, %p36
    %p38 = scmp.ne.s32.totalorder %s24, %s25
    %p39 = scmp.eq.s32.totalorder %s17, 1
    %p40 = por %p38, %p39
    %p42 = scmp.ne.s32.totalorder %s25, %s41
    %p43 = scmp.eq.s32.totalorder %s17, 0
    %p44 = por %p42, %p43
    %s46 = sadd.s32 %s45, 1
    %p49 = scmp.eq.s32.totalorder %s11, 1
    %p50 = scmp.ne.s32.totalorder %s45, %s47
    %p51 = scmp.eq.s32.totalorder %s11, 0
    %p52 = por %p50, %p51
    %p53 = scmp.ne.s32.totalorder %s45, %s47
    %p54 = scmp.eq.s32.totalorder %s16, 1
    %p55 = por %p53, %p54
    %p56 = scmp.ne.s32.totalorder %s47, %s48
    %p57 = scmp.eq.s32.totalorder %s16, 0
    %p58 = por %p56, %p57
    %p59 = scmp.ne.s32.totalorder %s47, %s48
    %p60 = scmp.eq.s32.totalorder %s17, 1
    %p61 = por %p59, %p60
    %p63 = scmp.ne.s32.totalorder %s48, %s62
    %p64 = scmp.eq.s32.totalorder %s17, 0
    %p65 = por %p63, %p64
    %s66 = ssub.s32 %s11, %s18
    %p67 = scmp.eq.s32.totalorder %s66, 0
    %s69 = sadd.s32 %s68, 1
    %s70 = scalar_select %p67, %s68, %s69
    %p73 = pneg %p67
    %p74 = scmp.eq.s32.totalorder %s11, 1
    %p75 = por %p73, %p74
    %p76 = scmp.ne.s32.totalorder %s68, %s71
    %p77 = scmp.eq.s32.totalorder %s11, 0
    %p78 = por %p76, %p77
    %p79 = scmp.ne.s32.totalorder %s68, %s71
    %p80 = scmp.eq.s32.totalorder %s16, 1
    %p81 = por %p79, %p80
    %p82 = scmp.ne.s32.totalorder %s71, %s72
    %p83 = scmp.eq.s32.totalorder %s16, 0
    %p84 = por %p82, %p83
    %p85 = scmp.ne.s32.totalorder %s71, %s72
    %p86 = scmp.eq.s32.totalorder %s17, 1
    %p87 = por %p85, %p86
    %p89 = scmp.ne.s32.totalorder %s72, %s88
    %p90 = scmp.eq.s32.totalorder %s17, 0
    %p91 = por %p89, %p90
    %s92 = ssub.s32 %s11, %s18
    %p93 = scmp.eq.s32.totalorder %s92, 0
    %s95 = sadd.s32 %s94, 1
    %s96 = scalar_select %p93, %s94, %s95
    %p99 = pneg %p93
    %p100 = scmp.eq.s32.totalorder %s11, 1
    %p101 = por %p99, %p100
    %p102 = scmp.ne.s32.totalorder %s94, %s97
    %p103 = scmp.eq.s32.totalorder %s11, 0
    %p104 = por %p102, %p103
    %p105 = scmp.ne.s32.totalorder %s94, %s97
    %p106 = scmp.eq.s32.totalorder %s16, 1
    %p107 = por %p105, %p106
    %p108 = scmp.ne.s32.totalorder %s97, %s98
    %p109 = scmp.eq.s32.totalorder %s16, 0
    %p110 = por %p108, %p109
    %p111 = scmp.ne.s32.totalorder %s97, %s98
    %p112 = scmp.eq.s32.totalorder %s17, 1
    %p113 = por %p111, %p112
    %p115 = scmp.ne.s32.totalorder %s98, %s114
    %p116 = scmp.eq.s32.totalorder %s17, 0
    %p117 = por %p115, %p116
    %s118 = ssub.s32 %s11, %s18
    %p119 = scmp.eq.s32.totalorder %s118, 0
    %s121 = sadd.s32 %s120, 1
    %s122 = scalar_select %p119, %s120, %s121
    %p125 = pneg %p119
    %p126 = scmp.eq.s32.totalorder %s11, 1
    %p127 = por %p125, %p126
    %p128 = scmp.ne.s32.totalorder %s120, %s123
    %p129 = scmp.eq.s32.totalorder %s11, 0
    %p130 = por %p128, %p129
    %p131 = scmp.ne.s32.totalorder %s120, %s123
    %p132 = scmp.eq.s32.totalorder %s16, 1
    %p133 = por %p131, %p132
    %p134 = scmp.ne.s32.totalorder %s123, %s124
    %p135 = scmp.eq.s32.totalorder %s16, 0
    %p136 = por %p134, %p135
    %p137 = scmp.ne.s32.totalorder %s123, %s124
    %p138 = scmp.eq.s32.totalorder %s17, 1
    %p139 = por %p137, %p138
    %p141 = scmp.ne.s32.totalorder %s124, %s140
    %p142 = scmp.eq.s32.totalorder %s17, 0
    %p143 = por %p141, %p142
    %p144 = scmp.le.s32.totalorder 1, %s11
    %p145 = scmp.lt.s32.totalorder %s11, 3
    %p146 = pnand %p144, %p145
    %p147 = pneg %p146
    // Predicated region
    $region9: #{double_conv.3} parent=5 // pred_check
      _
    $region10: #{double_conv.3} parent=5 // pred_check_branch
      %149 = sbr.rel (%p146) target = $region12
    $region11: #{double_conv.3} parent=5 // pred_region
      %s150 = ssub.s32 %s11, 1
      // Predicated region
      $region13: #{double_conv.3} parent=11 // pred_check
        %p151 = pneg %p58
      $region14: #{double_conv.3} parent=11 // pred_check_branch
        %153 = sbr.rel (%p151) target = $region16
      $region15: #{double_conv.3} parent=11 // pred_region
        _
      $region16: #{double_conv.3} parent=11 // pred_fallthru
        _
    $region12: #{double_conv.3} parent=5 // pred_fallthru
      _
    %p154 = scmp.lt.s32.totalorder %s11, 2
    // Predicated region
    $region17: #{double_conv.3} parent=5 // pred_check
      %p155 = pneg %p154
    $region18: #{double_conv.3} parent=5 // pred_check_branch
      %157 = sbr.rel (%p155) target = $region20
    $region19: #{double_conv.3} parent=5 // pred_region
      // Predicated region
      $region21: #{double_conv.3} parent=19 // pred_check
        %p158 = pneg %p31
      $region22: #{double_conv.3} parent=19 // pred_check_branch
        %160 = sbr.rel (%p158) target = $region24
      $region23: #{double_conv.3} parent=19 // pred_region
        %p161 = scmp.lt.s32.totalorder %s11, 1
        %s162 = scalar_select %p161, %s11, 1
        %s163 = smul.addr %s162, 54
        %s164 = smul.addr %s163, 4
        %s165 = scalar_lea.vmem %s0, %s164
      $region24: #{double_conv.3} parent=19 // pred_fallthru
        _
    $region20: #{double_conv.3} parent=5 // pred_fallthru
      _
    %p166 = scmp.le.s32.totalorder 1, %s11
    %p167 = scmp.lt.s32.totalorder %s11, 3
    %p168 = pnand %p166, %p167
    %p169 = pneg %p168
    // Predicated region
    $region25: #{double_conv.3} parent=5 // pred_check
      _
    $region26: #{double_conv.3} parent=5 // pred_check_branch
      %171 = sbr.rel (%p168) target = $region28
    $region27: #{double_conv.3} parent=5 // pred_region
      %s172 = ssub.s32 %s11, 1
      %p173 = scmp.lt.s32.totalorder %s16, 1
      %s174 = scalar_select %p173, %s16, 1
      %s175 = smul.addr %s174, 54
      %s176 = smul.addr %s175, 4
      %s177 = scalar_lea.vmem %s0, %s176
      %p178 = pneg %p37
      %p179 = pneg %p34
      %p180 = pneg %p58
      %p181 = pneg %p55
      %p182 = pneg %p84
      %p183 = pneg %p81
      %p184 = scmp.lt.s32.totalorder %s16, 1
      %s185 = scalar_select %p184, %s16, 1
      %s186 = smul.addr %s185, 32
      %s187 = smul.addr %s186, 8
      %s188 = scalar_lea.vmem %s2, %s187
      %p189 = pneg %p110
      %p190 = pneg %p107
      %p191 = scmp.lt.s32.totalorder %s16, 1
      %s192 = scalar_select %p191, %s16, 1
      %s193 = scalar_lea.vmem %s3, %s192
      %p194 = pneg %p136
      %p195 = pneg %p133
      %p196 = scmp.lt.s32.totalorder %s16, 1
      %s197 = scalar_select %p196, %s16, 1
      %s198 = scalar_lea.vmem %s4, %s197
      %p199 = scmp.lt.s32.totalorder %s16, 1
      %s200 = scalar_select %p199, %s16, 1
      %s201 = smul.addr %s200, 54
      %s202 = smul.addr %s201, 4
      %s203 = scalar_lea.vmem %s0, %s202
      %p204 = scmp.lt.s32.totalorder %s16, 1
      %s205 = scalar_select %p204, %s16, 1
      %s206 = smul.addr %s205, 32
      %s207 = smul.addr %s206, 8
      %s208 = scalar_lea.vmem %s2, %s207
      %p209 = scmp.lt.s32.totalorder %s16, 1
      %s210 = scalar_select %p209, %s16, 1
      %s211 = scalar_lea.vmem %s3, %s210
      %p212 = scmp.lt.s32.totalorder %s16, 1
      %s213 = scalar_select %p212, %s16, 1
      %s214 = scalar_lea.vmem %s4, %s213
      %v216 = vld [vmem:[%s203] sm:$0xf]
      %v217 = vld [vmem:[%s203 + $0x4] sm:$0xf]
      %v218 = vld [vmem:[%s203 + $0xc] sm:$0xf]
      %v219 = vld [vmem:[%s203 + $0x10] sm:$0xf]
      %v220 = vld [vmem:[%s203 + $0x18] sm:$0xf]
      %v221 = vld [vmem:[%s203 + $0x1c] sm:$0xf]
      %v222 = vld [vmem:[%s203 + $0x24] sm:$0xf]
      %v223 = vld [vmem:[%s203 + $0x28] sm:$0xf]
      %v224 = vld [vmem:[%s203 + $0x30] sm:$0xf]
      %v225 = vld [vmem:[%s203 + $0x34] sm:$0xf]
      %v226 = vld [vmem:[%s203 + $0x3c] sm:$0xf]
      %v227 = vld [vmem:[%s203 + $0x40] sm:$0xf]
      %v228 = vld [vmem:[%s203 + $0x48] sm:$0xf]
      %v229 = vld [vmem:[%s203 + $0x4c] sm:$0xf]
      %v230 = vld [vmem:[%s203 + $0x54] sm:$0xf]
      %v231 = vld [vmem:[%s203 + $0x58] sm:$0xf]
      %v232 = vld [vmem:[%s203 + $0x60] sm:$0xf]
      %v233 = vld [vmem:[%s203 + $0x64] sm:$0xf]
      %v234 = vld [vmem:[%s203 + $0x6c] sm:$0xf]
      %v235 = vld [vmem:[%s203 + $0x70] sm:$0xf]
      %v236 = vld [vmem:[%s203 + $0x78] sm:$0xf]
      %v237 = vld [vmem:[%s203 + $0x7c] sm:$0xf]
      %v238 = vld [vmem:[%s203 + $0x84] sm:$0xf]
      %v239 = vld [vmem:[%s203 + $0x88] sm:$0xf]
      %v240 = vld [vmem:[%s203 + $0x90] sm:$0xf]
      %v241 = vld [vmem:[%s203 + $0x94] sm:$0xf]
      %v242 = vld [vmem:[%s203 + $0x9c] sm:$0xf]
      %v243 = vld [vmem:[%s203 + $0xa0] sm:$0xf]
      %v244 = vld [vmem:[%s203 + $0xa8] sm:$0xf]
      %v245 = vld [vmem:[%s203 + $0xac] sm:$0xf]
      %v246 = vld [vmem:[%s203 + $0xb4] sm:$0xf]
      %v247 = vld [vmem:[%s203 + $0xb8] sm:$0xf]
      %v280 = vunpack.c.l.b16 %v216
      %v281 = vunpack.c.l.b16 %v217
      %v282 = vunpack.c.l.b16 %v218
      %v283 = vunpack.c.l.b16 %v219
      %v284 = vunpack.c.l.b16 %v220
      %v285 = vunpack.c.l.b16 %v221
      %v286 = vunpack.c.l.b16 %v222
      %v287 = vunpack.c.l.b16 %v223
      %v288 = vunpack.c.l.b16 %v224
      %v289 = vunpack.c.l.b16 %v225
      %v290 = vunpack.c.l.b16 %v226
      %v291 = vunpack.c.l.b16 %v227
      %v292 = vunpack.c.l.b16 %v228
      %v293 = vunpack.c.l.b16 %v229
      %v294 = vunpack.c.l.b16 %v230
      %v295 = vunpack.c.l.b16 %v231
      %v296 = vunpack.c.l.b16 %v232
      %v297 = vunpack.c.l.b16 %v233
      %v298 = vunpack.c.l.b16 %v234
      %v299 = vunpack.c.l.b16 %v235
      %v300 = vunpack.c.l.b16 %v236
      %v301 = vunpack.c.l.b16 %v237
      %v302 = vunpack.c.l.b16 %v238
      %v303 = vunpack.c.l.b16 %v239
      %v304 = vunpack.c.l.b16 %v240
      %v305 = vunpack.c.l.b16 %v241
      %v306 = vunpack.c.l.b16 %v242
      %v307 = vunpack.c.l.b16 %v243
      %v308 = vunpack.c.l.b16 %v244
      %v309 = vunpack.c.l.b16 %v245
      %v310 = vunpack.c.l.b16 %v246
      %v311 = vunpack.c.l.b16 %v247
      %v312 = vpack.c.b16 %v281, %v280
      %v313 = vpack.c.b16 %v283, %v282
      %v314 = vpack.c.b16 %v285, %v284
      %v315 = vpack.c.b16 %v287, %v286
      %v316 = vpack.c.b16 %v289, %v288
      %v317 = vpack.c.b16 %v291, %v290
      %v318 = vpack.c.b16 %v293, %v292
      %v319 = vpack.c.b16 %v295, %v294
      %v320 = vpack.c.b16 %v297, %v296
      %v321 = vpack.c.b16 %v299, %v298
      %v322 = vpack.c.b16 %v301, %v300
      %v323 = vpack.c.b16 %v303, %v302
      %v324 = vpack.c.b16 %v305, %v304
      %v325 = vpack.c.b16 %v307, %v306
      %v326 = vpack.c.b16 %v309, %v308
      %v327 = vpack.c.b16 %v311, %v310
      %vm344 = vcmask 31744
      %345 = vst.msk [vmem:[#allocation2] sm:$0xff] %vm344, %v312
      %346 = vst.msk [vmem:[#allocation2 + $0x8] sm:$0xff] %vm344, %v313
      %347 = vst.msk [vmem:[#allocation2 + $0x10] sm:$0xff] %vm344, %v314
      %348 = vst.msk [vmem:[#allocation2 + $0x18] sm:$0xff] %vm344, %v315
      %349 = vst.msk [vmem:[#allocation2 + $0x20] sm:$0xff] %vm344, %v316
      %350 = vst.msk [vmem:[#allocation2 + $0x28] sm:$0xff] %vm344, %v317
      %351 = vst.msk [vmem:[#allocation2 + $0x30] sm:$0xff] %vm344, %v318
      %352 = vst.msk [vmem:[#allocation2 + $0x38] sm:$0xff] %vm344, %v319
      %353 = vst.msk [vmem:[#allocation2 + $0x40] sm:$0xff] %vm344, %v320
      %354 = vst.msk [vmem:[#allocation2 + $0x48] sm:$0xff] %vm344, %v321
      %355 = vst.msk [vmem:[#allocation2 + $0x50] sm:$0xff] %vm344, %v322
      %356 = vst.msk [vmem:[#allocation2 + $0x58] sm:$0xff] %vm344, %v323
      %357 = vst.msk [vmem:[#allocation2 + $0x60] sm:$0xff] %vm344, %v324
      %358 = vst.msk [vmem:[#allocation2 + $0x68] sm:$0xff] %vm344, %v325
      %359 = vst.msk [vmem:[#allocation2 + $0x70] sm:$0xff] %vm344, %v326
      %360 = vst.msk [vmem:[#allocation2 + $0x78] sm:$0xff] %vm344, %v327
      %v361 = vld [vmem:[%s203] sm:$0xf]
      %v362 = vld [vmem:[%s203 + $0x4] sm:$0xf]
      %v363 = vld [vmem:[%s203 + $0x8] sm:$0x1]
      %v364 = vld [vmem:[%s203 + $0xc] sm:$0xf]
      %v365 = vld [vmem:[%s203 + $0x10] sm:$0xf]
      %v366 = vld [vmem:[%s203 + $0x14] sm:$0x1]
      %v367 = vld [vmem:[%s203 + $0x18] sm:$0xf]
      %v368 = vld [vmem:[%s203 + $0x1c] sm:$0xf]
      %v369 = vld [vmem:[%s203 + $0x20] sm:$0x1]
      %v370 = vld [vmem:[%s203 + $0x24] sm:$0xf]
      %v371 = vld [vmem:[%s203 + $0x28] sm:$0xf]
      %v372 = vld [vmem:[%s203 + $0x2c] sm:$0x1]
      %v373 = vld [vmem:[%s203 + $0x30] sm:$0xf]
      %v374 = vld [vmem:[%s203 + $0x34] sm:$0xf]
      %v375 = vld [vmem:[%s203 + $0x38] sm:$0x1]
      %v376 = vld [vmem:[%s203 + $0x3c] sm:$0xf]
      %v377 = vld [vmem:[%s203 + $0x40] sm:$0xf]
      %v378 = vld [vmem:[%s203 + $0x44] sm:$0x1]
      %v379 = vld [vmem:[%s203 + $0x48] sm:$0xf]
      %v380 = vld [vmem:[%s203 + $0x4c] sm:$0xf]
      %v381 = vld [vmem:[%s203 + $0x50] sm:$0x1]
      %v382 = vld [vmem:[%s203 + $0x54] sm:$0xf]
      %v383 = vld [vmem:[%s203 + $0x58] sm:$0xf]
      %v384 = vld [vmem:[%s203 + $0x5c] sm:$0x1]
      %v385 = vld [vmem:[%s203 + $0x60] sm:$0xf]
      %v386 = vld [vmem:[%s203 + $0x64] sm:$0xf]
      %v387 = vld [vmem:[%s203 + $0x68] sm:$0x1]
      %v388 = vld [vmem:[%s203 + $0x6c] sm:$0xf]
      %v389 = vld [vmem:[%s203 + $0x70] sm:$0xf]
      %v390 = vld [vmem:[%s203 + $0x74] sm:$0x1]
      %v391 = vld [vmem:[%s203 + $0x78] sm:$0xf]
      %v392 = vld [vmem:[%s203 + $0x7c] sm:$0xf]
      %v393 = vld [vmem:[%s203 + $0x80] sm:$0x1]
      %v394 = vld [vmem:[%s203 + $0x84] sm:$0xf]
      %v395 = vld [vmem:[%s203 + $0x88] sm:$0xf]
      %v396 = vld [vmem:[%s203 + $0x8c] sm:$0x1]
      %v397 = vld [vmem:[%s203 + $0x90] sm:$0xf]
      %v398 = vld [vmem:[%s203 + $0x94] sm:$0xf]
      %v399 = vld [vmem:[%s203 + $0x98] sm:$0x1]
      %v400 = vld [vmem:[%s203 + $0x9c] sm:$0xf]
      %v401 = vld [vmem:[%s203 + $0xa0] sm:$0xf]
      %v402 = vld [vmem:[%s203 + $0xa4] sm:$0x1]
      %v403 = vld [vmem:[%s203 + $0xa8] sm:$0xf]
      %v404 = vld [vmem:[%s203 + $0xac] sm:$0xf]
      %v405 = vld [vmem:[%s203 + $0xb0] sm:$0x1]
      %v406 = vld [vmem:[%s203 + $0xb4] sm:$0xf]
      %v407 = vld [vmem:[%s203 + $0xb8] sm:$0xf]
      %v408 = vld [vmem:[%s203 + $0xbc] sm:$0x1]
      %vm409 = vsmask.f32 3328
      %vm410 = vsmask.f32 7440
      %vm411 = vmor %vm409, %vm410
      %v413 = vshrl.u32 %v361, 16
      %v415 = vrot.slane %v413, 4
      %v416 = vshll.u32 %v361, 16
      %v418 = vrot.slane %v416, 5
      %v419 = vor.u32 %v415, %v418
      %v420 = vrot.slane %v419, 4
      %v422 = vshll.u32 %v362, 16
      %v424 = vrot.slane %v422, 5
      %v425 = vsel %vm411, %v420, %v424
      %v426 = vshrl.u32 %v362, 16
      %v428 = vrot.slane %v426, 4
      %v429 = vor.u32 %v428, %v424
      %v430 = vrot.slane %v429, 4
      %v432 = vshll.u32 %v363, 16
      %v434 = vrot.slane %v432, 5
      %v435 = vsel %vm411, %v430, %v434
      %v437 = vshrl.u32 %v364, 16
      %v439 = vrot.slane %v437, 4
      %v440 = vshll.u32 %v364, 16
      %v442 = vrot.slane %v440, 5
      %v443 = vor.u32 %v439, %v442
      %v444 = vrot.slane %v443, 4
      %v446 = vshll.u32 %v365, 16
      %v448 = vrot.slane %v446, 5
      %v449 = vsel %vm411, %v444, %v448
      %v450 = vshrl.u32 %v365, 16
      %v452 = vrot.slane %v450, 4
      %v453 = vor.u32 %v452, %v448
      %v454 = vrot.slane %v453, 4
      %v456 = vshll.u32 %v366, 16
      %v458 = vrot.slane %v456, 5
      %v459 = vsel %vm411, %v454, %v458
      %v461 = vshrl.u32 %v367, 16
      %v463 = vrot.slane %v461, 4
      %v464 = vshll.u32 %v367, 16
      %v466 = vrot.slane %v464, 5
      %v467 = vor.u32 %v463, %v466
      %v468 = vrot.slane %v467, 4
      %v470 = vshll.u32 %v368, 16
      %v472 = vrot.slane %v470, 5
      %v473 = vsel %vm411, %v468, %v472
      %v474 = vshrl.u32 %v368, 16
      %v476 = vrot.slane %v474, 4
      %v477 = vor.u32 %v476, %v472
      %v478 = vrot.slane %v477, 4
      %v480 = vshll.u32 %v369, 16
      %v482 = vrot.slane %v480, 5
      %v483 = vsel %vm411, %v478, %v482
      %v485 = vshrl.u32 %v370, 16
      %v487 = vrot.slane %v485, 4
      %v488 = vshll.u32 %v370, 16
      %v490 = vrot.slane %v488, 5
      %v491 = vor.u32 %v487, %v490
      %v492 = vrot.slane %v491, 4
      %v494 = vshll.u32 %v371, 16
      %v496 = vrot.slane %v494, 5
      %v497 = vsel %vm411, %v492, %v496
      %v498 = vshrl.u32 %v371, 16
      %v500 = vrot.slane %v498, 4
      %v501 = vor.u32 %v500, %v496
      %v502 = vrot.slane %v501, 4
      %v504 = vshll.u32 %v372, 16
      %v506 = vrot.slane %v504, 5
      %v507 = vsel %vm411, %v502, %v506
      %v509 = vshrl.u32 %v373, 16
      %v511 = vrot.slane %v509, 4
      %v512 = vshll.u32 %v373, 16
      %v514 = vrot.slane %v512, 5
      %v515 = vor.u32 %v511, %v514
      %v516 = vrot.slane %v515, 4
      %v518 = vshll.u32 %v374, 16
      %v520 = vrot.slane %v518, 5
      %v521 = vsel %vm411, %v516, %v520
      %v522 = vshrl.u32 %v374, 16
      %v524 = vrot.slane %v522, 4
      %v525 = vor.u32 %v524, %v520
      %v526 = vrot.slane %v525, 4
      %v528 = vshll.u32 %v375, 16
      %v530 = vrot.slane %v528, 5
      %v531 = vsel %vm411, %v526, %v530
      %v533 = vshrl.u32 %v376, 16
      %v535 = vrot.slane %v533, 4
      %v536 = vshll.u32 %v376, 16
      %v538 = vrot.slane %v536, 5
      %v539 = vor.u32 %v535, %v538
      %v540 = vrot.slane %v539, 4
      %v542 = vshll.u32 %v377, 16
      %v544 = vrot.slane %v542, 5
      %v545 = vsel %vm411, %v540, %v544
      %v546 = vshrl.u32 %v377, 16
      %v548 = vrot.slane %v546, 4
      %v549 = vor.u32 %v548, %v544
      %v550 = vrot.slane %v549, 4
      %v552 = vshll.u32 %v378, 16
      %v554 = vrot.slane %v552, 5
      %v555 = vsel %vm411, %v550, %v554
      %v557 = vshrl.u32 %v379, 16
      %v559 = vrot.slane %v557, 4
      %v560 = vshll.u32 %v379, 16
      %v562 = vrot.slane %v560, 5
      %v563 = vor.u32 %v559, %v562
      %v564 = vrot.slane %v563, 4
      %v566 = vshll.u32 %v380, 16
      %v568 = vrot.slane %v566, 5
      %v569 = vsel %vm411, %v564, %v568
      %v570 = vshrl.u32 %v380, 16
      %v572 = vrot.slane %v570, 4
      %v573 = vor.u32 %v572, %v568
      %v574 = vrot.slane %v573, 4
      %v576 = vshll.u32 %v381, 16
      %v578 = vrot.slane %v576, 5
      %v579 = vsel %vm411, %v574, %v578
      %v581 = vshrl.u32 %v382, 16
      %v583 = vrot.slane %v581, 4
      %v584 = vshll.u32 %v382, 16
      %v586 = vrot.slane %v584, 5
      %v587 = vor.u32 %v583, %v586
      %v588 = vrot.slane %v587, 4
      %v590 = vshll.u32 %v383, 16
      %v592 = vrot.slane %v590, 5
      %v593 = vsel %vm411, %v588, %v592
      %v594 = vshrl.u32 %v383, 16
      %v596 = vrot.slane %v594, 4
      %v597 = vor.u32 %v596, %v592
      %v598 = vrot.slane %v597, 4
      %v600 = vshll.u32 %v384, 16
      %v602 = vrot.slane %v600, 5
      %v603 = vsel %vm411, %v598, %v602
      %v605 = vshrl.u32 %v385, 16
      %v607 = vrot.slane %v605, 4
      %v608 = vshll.u32 %v385, 16
      %v610 = vrot.slane %v608, 5
      %v611 = vor.u32 %v607, %v610
      %v612 = vrot.slane %v611, 4
      %v614 = vshll.u32 %v386, 16
      %v616 = vrot.slane %v614, 5
      %v617 = vsel %vm411, %v612, %v616
      %v618 = vshrl.u32 %v386, 16
      %v620 = vrot.slane %v618, 4
      %v621 = vor.u32 %v620, %v616
      %v622 = vrot.slane %v621, 4
      %v624 = vshll.u32 %v387, 16
      %v626 = vrot.slane %v624, 5
      %v627 = vsel %vm411, %v622, %v626
      %v629 = vshrl.u32 %v388, 16
      %v631 = vrot.slane %v629, 4
      %v632 = vshll.u32 %v388, 16
      %v634 = vrot.slane %v632, 5
      %v635 = vor.u32 %v631, %v634
      %v636 = vrot.slane %v635, 4
      %v638 = vshll.u32 %v389, 16
      %v640 = vrot.slane %v638, 5
      %v641 = vsel %vm411, %v636, %v640
      %v642 = vshrl.u32 %v389, 16
      %v644 = vrot.slane %v642, 4
      %v645 = vor.u32 %v644, %v640
      %v646 = vrot.slane %v645, 4
      %v648 = vshll.u32 %v390, 16
      %v650 = vrot.slane %v648, 5
      %v651 = vsel %vm411, %v646, %v650
      %v653 = vshrl.u32 %v391, 16
      %v655 = vrot.slane %v653, 4
      %v656 = vshll.u32 %v391, 16
      %v658 = vrot.slane %v656, 5
      %v659 = vor.u32 %v655, %v658
      %v660 = vrot.slane %v659, 4
      %v662 = vshll.u32 %v392, 16
      %v664 = vrot.slane %v662, 5
      %v665 = vsel %vm411, %v660, %v664
      %v666 = vshrl.u32 %v392, 16
      %v668 = vrot.slane %v666, 4
      %v669 = vor.u32 %v668, %v664
      %v670 = vrot.slane %v669, 4
      %v672 = vshll.u32 %v393, 16
      %v674 = vrot.slane %v672, 5
      %v675 = vsel %vm411, %v670, %v674
      %v677 = vshrl.u32 %v394, 16
      %v679 = vrot.slane %v677, 4
      %v680 = vshll.u32 %v394, 16
      %v682 = vrot.slane %v680, 5
      %v683 = vor.u32 %v679, %v682
      %v684 = vrot.slane %v683, 4
      %v686 = vshll.u32 %v395, 16
      %v688 = vrot.slane %v686, 5
      %v689 = vsel %vm411, %v684, %v688
      %v690 = vshrl.u32 %v395, 16
      %v692 = vrot.slane %v690, 4
      %v693 = vor.u32 %v692, %v688
      %v694 = vrot.slane %v693, 4
      %v696 = vshll.u32 %v396, 16
      %v698 = vrot.slane %v696, 5
      %v699 = vsel %vm411, %v694, %v698
      %v701 = vshrl.u32 %v397, 16
      %v703 = vrot.slane %v701, 4
      %v704 = vshll.u32 %v397, 16
      %v706 = vrot.slane %v704, 5
      %v707 = vor.u32 %v703, %v706
      %v708 = vrot.slane %v707, 4
      %v710 = vshll.u32 %v398, 16
      %v712 = vrot.slane %v710, 5
      %v713 = vsel %vm411, %v708, %v712
      %v714 = vshrl.u32 %v398, 16
      %v716 = vrot.slane %v714, 4
      %v717 = vor.u32 %v716, %v712
      %v718 = vrot.slane %v717, 4
      %v720 = vshll.u32 %v399, 16
      %v722 = vrot.slane %v720, 5
      %v723 = vsel %vm411, %v718, %v722
      %v725 = vshrl.u32 %v400, 16
      %v727 = vrot.slane %v725, 4
      %v728 = vshll.u32 %v400, 16
      %v730 = vrot.slane %v728, 5
      %v731 = vor.u32 %v727, %v730
      %v732 = vrot.slane %v731, 4
      %v734 = vshll.u32 %v401, 16
      %v736 = vrot.slane %v734, 5
      %v737 = vsel %vm411, %v732, %v736
      %v738 = vshrl.u32 %v401, 16
      %v740 = vrot.slane %v738, 4
      %v741 = vor.u32 %v740, %v736
      %v742 = vrot.slane %v741, 4
      %v744 = vshll.u32 %v402, 16
      %v746 = vrot.slane %v744, 5
      %v747 = vsel %vm411, %v742, %v746
      %v749 = vshrl.u32 %v403, 16
      %v751 = vrot.slane %v749, 4
      %v752 = vshll.u32 %v403, 16
      %v754 = vrot.slane %v752, 5
      %v755 = vor.u32 %v751, %v754
      %v756 = vrot.slane %v755, 4
      %v758 = vshll.u32 %v404, 16
      %v760 = vrot.slane %v758, 5
      %v761 = vsel %vm411, %v756, %v760
      %v762 = vshrl.u32 %v404, 16
      %v764 = vrot.slane %v762, 4
      %v765 = vor.u32 %v764, %v760
      %v766 = vrot.slane %v765, 4
      %v768 = vshll.u32 %v405, 16
      %v770 = vrot.slane %v768, 5
      %v771 = vsel %vm411, %v766, %v770
      %v773 = vshrl.u32 %v406, 16
      %v775 = vrot.slane %v773, 4
      %v776 = vshll.u32 %v406, 16
      %v778 = vrot.slane %v776, 5
      %v779 = vor.u32 %v775, %v778
      %v780 = vrot.slane %v779, 4
      %v782 = vshll.u32 %v407, 16
      %v784 = vrot.slane %v782, 5
      %v785 = vsel %vm411, %v780, %v784
      %v786 = vshrl.u32 %v407, 16
      %v788 = vrot.slane %v786, 4
      %v789 = vor.u32 %v788, %v784
      %v790 = vrot.slane %v789, 4
      %v792 = vshll.u32 %v408, 16
      %v794 = vrot.slane %v792, 5
      %v795 = vsel %vm411, %v790, %v794
      %v796 = vunpack.c.l.b16 %v425
      %v797 = vunpack.c.l.b16 %v435
      %v798 = vunpack.c.l.b16 %v449
      %v799 = vunpack.c.l.b16 %v459
      %v800 = vunpack.c.l.b16 %v473
      %v801 = vunpack.c.l.b16 %v483
      %v802 = vunpack.c.l.b16 %v497
      %v803 = vunpack.c.l.b16 %v507
      %v804 = vunpack.c.l.b16 %v521
      %v805 = vunpack.c.l.b16 %v531
      %v806 = vunpack.c.l.b16 %v545
      %v807 = vunpack.c.l.b16 %v555
      %v808 = vunpack.c.l.b16 %v569
      %v809 = vunpack.c.l.b16 %v579
      %v810 = vunpack.c.l.b16 %v593
      %v811 = vunpack.c.l.b16 %v603
      %v812 = vunpack.c.l.b16 %v617
      %v813 = vunpack.c.l.b16 %v627
      %v814 = vunpack.c.l.b16 %v641
      %v815 = vunpack.c.l.b16 %v651
      %v816 = vunpack.c.l.b16 %v665
      %v817 = vunpack.c.l.b16 %v675
      %v818 = vunpack.c.l.b16 %v689
      %v819 = vunpack.c.l.b16 %v699
      %v820 = vunpack.c.l.b16 %v713
      %v821 = vunpack.c.l.b16 %v723
      %v822 = vunpack.c.l.b16 %v737
      %v823 = vunpack.c.l.b16 %v747
      %v824 = vunpack.c.l.b16 %v761
      %v825 = vunpack.c.l.b16 %v771
      %v826 = vunpack.c.l.b16 %v785
      %v827 = vunpack.c.l.b16 %v795
      %v828 = vpack.c.b16 %v797, %v796
      %v829 = vpack.c.b16 %v799, %v798
      %v830 = vpack.c.b16 %v801, %v800
      %v831 = vpack.c.b16 %v803, %v802
      %v832 = vpack.c.b16 %v805, %v804
      %v833 = vpack.c.b16 %v807, %v806
      %v834 = vpack.c.b16 %v809, %v808
      %v835 = vpack.c.b16 %v811, %v810
      %v836 = vpack.c.b16 %v813, %v812
      %v837 = vpack.c.b16 %v815, %v814
      %v838 = vpack.c.b16 %v817, %v816
      %v839 = vpack.c.b16 %v819, %v818
      %v840 = vpack.c.b16 %v821, %v820
      %v841 = vpack.c.b16 %v823, %v822
      %v842 = vpack.c.b16 %v825, %v824
      %v843 = vpack.c.b16 %v827, %v826
      %844 = vrot.lane.b32.xlu0 %v828, 4
      %v845 = vpop.permute.xlu0 %844
      %846 = vrot.lane.b32.xlu0 %v829, 4
      %v847 = vpop.permute.xlu0 %846
      %848 = vrot.lane.b32.xlu0 %v830, 4
      %v849 = vpop.permute.xlu0 %848
      %850 = vrot.lane.b32.xlu0 %v831, 4
      %v851 = vpop.permute.xlu0 %850
      %852 = vrot.lane.b32.xlu0 %v832, 4
      %v853 = vpop.permute.xlu0 %852
      %854 = vrot.lane.b32.xlu0 %v833, 4
      %v855 = vpop.permute.xlu0 %854
      %856 = vrot.lane.b32.xlu0 %v834, 4
      %v857 = vpop.permute.xlu0 %856
      %858 = vrot.lane.b32.xlu0 %v835, 4
      %v859 = vpop.permute.xlu0 %858
      %860 = vrot.lane.b32.xlu0 %v836, 4
      %v861 = vpop.permute.xlu0 %860
      %862 = vrot.lane.b32.xlu0 %v837, 4
      %v863 = vpop.permute.xlu0 %862
      %864 = vrot.lane.b32.xlu0 %v838, 4
      %v865 = vpop.permute.xlu0 %864
      %866 = vrot.lane.b32.xlu0 %v839, 4
      %v867 = vpop.permute.xlu0 %866
      %868 = vrot.lane.b32.xlu0 %v840, 4
      %v869 = vpop.permute.xlu0 %868
      %870 = vrot.lane.b32.xlu0 %v841, 4
      %v871 = vpop.permute.xlu0 %870
      %872 = vrot.lane.b32.xlu0 %v842, 4
      %v873 = vpop.permute.xlu0 %872
      %874 = vrot.lane.b32.xlu0 %v843, 4
      %v875 = vpop.permute.xlu0 %874
      %vm892 = vcmask 64544
      %893 = vst.msk [vmem:[#allocation2] sm:$0xff] %vm892, %v845
      %894 = vst.msk [vmem:[#allocation2 + $0x8] sm:$0xff] %vm892, %v847
      %895 = vst.msk [vmem:[#allocation2 + $0x10] sm:$0xff] %vm892, %v849
      %896 = vst.msk [vmem:[#allocation2 + $0x18] sm:$0xff] %vm892, %v851
      %897 = vst.msk [vmem:[#allocation2 + $0x20] sm:$0xff] %vm892, %v853
      %898 = vst.msk [vmem:[#allocation2 + $0x28] sm:$0xff] %vm892, %v855
      %899 = vst.msk [vmem:[#allocation2 + $0x30] sm:$0xff] %vm892, %v857
      %900 = vst.msk [vmem:[#allocation2 + $0x38] sm:$0xff] %vm892, %v859
      %901 = vst.msk [vmem:[#allocation2 + $0x40] sm:$0xff] %vm892, %v861
      %902 = vst.msk [vmem:[#allocation2 + $0x48] sm:$0xff] %vm892, %v863
      %903 = vst.msk [vmem:[#allocation2 + $0x50] sm:$0xff] %vm892, %v865
      %904 = vst.msk [vmem:[#allocation2 + $0x58] sm:$0xff] %vm892, %v867
      %905 = vst.msk [vmem:[#allocation2 + $0x60] sm:$0xff] %vm892, %v869
      %906 = vst.msk [vmem:[#allocation2 + $0x68] sm:$0xff] %vm892, %v871
      %907 = vst.msk [vmem:[#allocation2 + $0x70] sm:$0xff] %vm892, %v873
      %908 = vst.msk [vmem:[#allocation2 + $0x78] sm:$0xff] %vm892, %v875
      %v909 = vld [vmem:[%s203] sm:$0xe]
      %v910 = vld [vmem:[%s203 + $0x4] sm:$0xf]
      %v911 = vld [vmem:[%s203 + $0x8] sm:$0x1]
      %v912 = vld [vmem:[%s203 + $0xc] sm:$0xe]
      %v913 = vld [vmem:[%s203 + $0x10] sm:$0xf]
      %v914 = vld [vmem:[%s203 + $0x14] sm:$0x1]
      %v915 = vld [vmem:[%s203 + $0x18] sm:$0xe]
      %v916 = vld [vmem:[%s203 + $0x1c] sm:$0xf]
      %v917 = vld [vmem:[%s203 + $0x20] sm:$0x1]
      %v918 = vld [vmem:[%s203 + $0x24] sm:$0xe]
      %v919 = vld [vmem:[%s203 + $0x28] sm:$0xf]
      %v920 = vld [vmem:[%s203 + $0x2c] sm:$0x1]
      %v921 = vld [vmem:[%s203 + $0x30] sm:$0xe]
      %v922 = vld [vmem:[%s203 + $0x34] sm:$0xf]
      %v923 = vld [vmem:[%s203 + $0x38] sm:$0x1]
      %v924 = vld [vmem:[%s203 + $0x3c] sm:$0xe]
      %v925 = vld [vmem:[%s203 + $0x40] sm:$0xf]
      %v926 = vld [vmem:[%s203 + $0x44] sm:$0x1]
      %v927 = vld [vmem:[%s203 + $0x48] sm:$0xe]
      %v928 = vld [vmem:[%s203 + $0x4c] sm:$0xf]
      %v929 = vld [vmem:[%s203 + $0x50] sm:$0x1]
      %v930 = vld [vmem:[%s203 + $0x54] sm:$0xe]
      %v931 = vld [vmem:[%s203 + $0x58] sm:$0xf]
      %v932 = vld [vmem:[%s203 + $0x5c] sm:$0x1]
      %v933 = vld [vmem:[%s203 + $0x60] sm:$0xe]
      %v934 = vld [vmem:[%s203 + $0x64] sm:$0xf]
      %v935 = vld [vmem:[%s203 + $0x68] sm:$0x1]
      %v936 = vld [vmem:[%s203 + $0x6c] sm:$0xe]
      %v937 = vld [vmem:[%s203 + $0x70] sm:$0xf]
      %v938 = vld [vmem:[%s203 + $0x74] sm:$0x1]
      %v939 = vld [vmem:[%s203 + $0x78] sm:$0xe]
      %v940 = vld [vmem:[%s203 + $0x7c] sm:$0xf]
      %v941 = vld [vmem:[%s203 + $0x80] sm:$0x1]
      %v942 = vld [vmem:[%s203 + $0x84] sm:$0xe]
      %v943 = vld [vmem:[%s203 + $0x88] sm:$0xf]
      %v944 = vld [vmem:[%s203 + $0x8c] sm:$0x1]
      %v945 = vld [vmem:[%s203 + $0x90] sm:$0xe]
      %v946 = vld [vmem:[%s203 + $0x94] sm:$0xf]
      %v947 = vld [vmem:[%s203 + $0x98] sm:$0x1]
      %v948 = vld [vmem:[%s203 + $0x9c] sm:$0xe]
      %v949 = vld [vmem:[%s203 + $0xa0] sm:$0xf]
      %v950 = vld [vmem:[%s203 + $0xa4] sm:$0x1]
      %v951 = vld [vmem:[%s203 + $0xa8] sm:$0xe]
      %v952 = vld [vmem:[%s203 + $0xac] sm:$0xf]
      %v953 = vld [vmem:[%s203 + $0xb0] sm:$0x1]
      %v954 = vld [vmem:[%s203 + $0xb4] sm:$0xe]
      %v955 = vld [vmem:[%s203 + $0xb8] sm:$0xf]
      %v956 = vld [vmem:[%s203 + $0xbc] sm:$0x1]
      %vm1005 = vcmask 1042432
      %vm1006 = vcmask 1046532
      %vm1007 = vmor %vm1005, %vm1006
      %v1008 = vrot.slane %v909, 5
      %v1009 = vrot.slane %v1008, 4
      %v1010 = vrot.slane %v910, 5
      %v1011 = vsel %vm1007, %v1009, %v1010
      %v1012 = vrot.slane %v1010, 4
      %v1013 = vrot.slane %v911, 5
      %v1014 = vsel %vm1007, %v1012, %v1013
      %v1015 = vrot.slane %v912, 5
      %v1016 = vrot.slane %v1015, 4
      %v1017 = vrot.slane %v913, 5
      %v1018 = vsel %vm1007, %v1016, %v1017
      %v1019 = vrot.slane %v1017, 4
      %v1020 = vrot.slane %v914, 5
      %v1021 = vsel %vm1007, %v1019, %v1020
      %v1022 = vrot.slane %v915, 5
      %v1023 = vrot.slane %v1022, 4
      %v1024 = vrot.slane %v916, 5
      %v1025 = vsel %vm1007, %v1023, %v1024
      %v1026 = vrot.slane %v1024, 4
      %v1027 = vrot.slane %v917, 5
      %v1028 = vsel %vm1007, %v1026, %v1027
      %v1029 = vrot.slane %v918, 5
      %v1030 = vrot.slane %v1029, 4
      %v1031 = vrot.slane %v919, 5
      %v1032 = vsel %vm1007, %v1030, %v1031
      %v1033 = vrot.slane %v1031, 4
      %v1034 = vrot.slane %v920, 5
      %v1035 = vsel %vm1007, %v1033, %v1034
      %v1036 = vrot.slane %v921, 5
      %v1037 = vrot.slane %v1036, 4
      %v1038 = vrot.slane %v922, 5
      %v1039 = vsel %vm1007, %v1037, %v1038
      %v1040 = vrot.slane %v1038, 4
      %v1041 = vrot.slane %v923, 5
      %v1042 = vsel %vm1007, %v1040, %v1041
      %v1043 = vrot.slane %v924, 5
      %v1044 = vrot.slane %v1043, 4
      %v1045 = vrot.slane %v925, 5
      %v1046 = vsel %vm1007, %v1044, %v1045
      %v1047 = vrot.slane %v1045, 4
      %v1048 = vrot.slane %v926, 5
      %v1049 = vsel %vm1007, %v1047, %v1048
      %v1050 = vrot.slane %v927, 5
      %v1051 = vrot.slane %v1050, 4
      %v1052 = vrot.slane %v928, 5
      %v1053 = vsel %vm1007, %v1051, %v1052
      %v1054 = vrot.slane %v1052, 4
      %v1055 = vrot.slane %v929, 5
      %v1056 = vsel %vm1007, %v1054, %v1055
      %v1057 = vrot.slane %v930, 5
      %v1058 = vrot.slane %v1057, 4
      %v1059 = vrot.slane %v931, 5
      %v1060 = vsel %vm1007, %v1058, %v1059
      %v1061 = vrot.slane %v1059, 4
      %v1062 = vrot.slane %v932, 5
      %v1063 = vsel %vm1007, %v1061, %v1062
      %v1064 = vrot.slane %v933, 5
      %v1065 = vrot.slane %v1064, 4
      %v1066 = vrot.slane %v934, 5
      %v1067 = vsel %vm1007, %v1065, %v1066
      %v1068 = vrot.slane %v1066, 4
      %v1069 = vrot.slane %v935, 5
      %v1070 = vsel %vm1007, %v1068, %v1069
      %v1071 = vrot.slane %v936, 5
      %v1072 = vrot.slane %v1071, 4
      %v1073 = vrot.slane %v937, 5
      %v1074 = vsel %vm1007, %v1072, %v1073
      %v1075 = vrot.slane %v1073, 4
      %v1076 = vrot.slane %v938, 5
      %v1077 = vsel %vm1007, %v1075, %v1076
      %v1078 = vrot.slane %v939, 5
      %v1079 = vrot.slane %v1078, 4
      %v1080 = vrot.slane %v940, 5
      %v1081 = vsel %vm1007, %v1079, %v1080
      %v1082 = vrot.slane %v1080, 4
      %v1083 = vrot.slane %v941, 5
      %v1084 = vsel %vm1007, %v1082, %v1083
      %v1085 = vrot.slane %v942, 5
      %v1086 = vrot.slane %v1085, 4
      %v1087 = vrot.slane %v943, 5
      %v1088 = vsel %vm1007, %v1086, %v1087
      %v1089 = vrot.slane %v1087, 4
      %v1090 = vrot.slane %v944, 5
      %v1091 = vsel %vm1007, %v1089, %v1090
      %v1092 = vrot.slane %v945, 5
      %v1093 = vrot.slane %v1092, 4
      %v1094 = vrot.slane %v946, 5
      %v1095 = vsel %vm1007, %v1093, %v1094
      %v1096 = vrot.slane %v1094, 4
      %v1097 = vrot.slane %v947, 5
      %v1098 = vsel %vm1007, %v1096, %v1097
      %v1099 = vrot.slane %v948, 5
      %v1100 = vrot.slane %v1099, 4
      %v1101 = vrot.slane %v949, 5
      %v1102 = vsel %vm1007, %v1100, %v1101
      %v1103 = vrot.slane %v1101, 4
      %v1104 = vrot.slane %v950, 5
      %v1105 = vsel %vm1007, %v1103, %v1104
      %v1106 = vrot.slane %v951, 5
      %v1107 = vrot.slane %v1106, 4
      %v1108 = vrot.slane %v952, 5
      %v1109 = vsel %vm1007, %v1107, %v1108
      %v1110 = vrot.slane %v1108, 4
      %v1111 = vrot.slane %v953, 5
      %v1112 = vsel %vm1007, %v1110, %v1111
      %v1113 = vrot.slane %v954, 5
      %v1114 = vrot.slane %v1113, 4
      %v1115 = vrot.slane %v955, 5
      %v1116 = vsel %vm1007, %v1114, %v1115
      %v1117 = vrot.slane %v1115, 4
      %v1118 = vrot.slane %v956, 5
      %v1119 = vsel %vm1007, %v1117, %v1118
      %v1120 = vunpack.c.l.b16 %v1011
      %v1121 = vunpack.c.l.b16 %v1014
      %v1122 = vunpack.c.l.b16 %v1018
      %v1123 = vunpack.c.l.b16 %v1021
      %v1124 = vunpack.c.l.b16 %v1025
      %v1125 = vunpack.c.l.b16 %v1028
      %v1126 = vunpack.c.l.b16 %v1032
      %v1127 = vunpack.c.l.b16 %v1035
      %v1128 = vunpack.c.l.b16 %v1039
      %v1129 = vunpack.c.l.b16 %v1042
      %v1130 = vunpack.c.l.b16 %v1046
      %v1131 = vunpack.c.l.b16 %v1049
      %v1132 = vunpack.c.l.b16 %v1053
      %v1133 = vunpack.c.l.b16 %v1056
      %v1134 = vunpack.c.l.b16 %v1060
      %v1135 = vunpack.c.l.b16 %v1063
      %v1136 = vunpack.c.l.b16 %v1067
      %v1137 = vunpack.c.l.b16 %v1070
      %v1138 = vunpack.c.l.b16 %v1074
      %v1139 = vunpack.c.l.b16 %v1077
      %v1140 = vunpack.c.l.b16 %v1081
      %v1141 = vunpack.c.l.b16 %v1084
      %v1142 = vunpack.c.l.b16 %v1088
      %v1143 = vunpack.c.l.b16 %v1091
      %v1144 = vunpack.c.l.b16 %v1095
      %v1145 = vunpack.c.l.b16 %v1098
      %v1146 = vunpack.c.l.b16 %v1102
      %v1147 = vunpack.c.l.b16 %v1105
      %v1148 = vunpack.c.l.b16 %v1109
      %v1149 = vunpack.c.l.b16 %v1112
      %v1150 = vunpack.c.l.b16 %v1116
      %v1151 = vunpack.c.l.b16 %v1119
      %v1152 = vpack.c.b16 %v1121, %v1120
      %v1153 = vpack.c.b16 %v1123, %v1122
      %v1154 = vpack.c.b16 %v1125, %v1124
      %v1155 = vpack.c.b16 %v1127, %v1126
      %v1156 = vpack.c.b16 %v1129, %v1128
      %v1157 = vpack.c.b16 %v1131, %v1130
      %v1158 = vpack.c.b16 %v1133, %v1132
      %v1159 = vpack.c.b16 %v1135, %v1134
      %v1160 = vpack.c.b16 %v1137, %v1136
      %v1161 = vpack.c.b16 %v1139, %v1138
      %v1162 = vpack.c.b16 %v1141, %v1140
      %v1163 = vpack.c.b16 %v1143, %v1142
      %v1164 = vpack.c.b16 %v1145, %v1144
      %v1165 = vpack.c.b16 %v1147, %v1146
      %v1166 = vpack.c.b16 %v1149, %v1148
      %v1167 = vpack.c.b16 %v1151, %v1150
      %1168 = vrot.lane.b32.xlu0 %v1152, 8
      %v1169 = vpop.permute.xlu0 %1168
      %1170 = vrot.lane.b32.xlu0 %v1153, 8
      %v1171 = vpop.permute.xlu0 %1170
      %1172 = vrot.lane.b32.xlu0 %v1154, 8
      %v1173 = vpop.permute.xlu0 %1172
      %1174 = vrot.lane.b32.xlu0 %v1155, 8
      %v1175 = vpop.permute.xlu0 %1174
      %1176 = vrot.lane.b32.xlu0 %v1156, 8
      %v1177 = vpop.permute.xlu0 %1176
      %1178 = vrot.lane.b32.xlu0 %v1157, 8
      %v1179 = vpop.permute.xlu0 %1178
      %1180 = vrot.lane.b32.xlu0 %v1158, 8
      %v1181 = vpop.permute.xlu0 %1180
      %1182 = vrot.lane.b32.xlu0 %v1159, 8
      %v1183 = vpop.permute.xlu0 %1182
      %1184 = vrot.lane.b32.xlu0 %v1160, 8
      %v1185 = vpop.permute.xlu0 %1184
      %1186 = vrot.lane.b32.xlu0 %v1161, 8
      %v1187 = vpop.permute.xlu0 %1186
      %1188 = vrot.lane.b32.xlu0 %v1162, 8
      %v1189 = vpop.permute.xlu0 %1188
      %1190 = vrot.lane.b32.xlu0 %v1163, 8
      %v1191 = vpop.permute.xlu0 %1190
      %1192 = vrot.lane.b32.xlu0 %v1164, 8
      %v1193 = vpop.permute.xlu0 %1192
      %1194 = vrot.lane.b32.xlu0 %v1165, 8
      %v1195 = vpop.permute.xlu0 %1194
      %1196 = vrot.lane.b32.xlu0 %v1166, 8
      %v1197 = vpop.permute.xlu0 %1196
      %1198 = vrot.lane.b32.xlu0 %v1167, 8
      %v1199 = vpop.permute.xlu0 %1198
      %vm1216 = vcmask 97344
      %1217 = vst.msk [vmem:[#allocation2] sm:$0xff] %vm1216, %v1169
      %1218 = vst.msk [vmem:[#allocation2 + $0x8] sm:$0xff] %vm1216, %v1171
      %1219 = vst.msk [vmem:[#allocation2 + $0x10] sm:$0xff] %vm1216, %v1173
      %1220 = vst.msk [vmem:[#allocation2 + $0x18] sm:$0xff] %vm1216, %v1175
      %1221 = vst.msk [vmem:[#allocation2 + $0x20] sm:$0xff] %vm1216, %v1177
      %1222 = vst.msk [vmem:[#allocation2 + $0x28] sm:$0xff] %vm1216, %v1179
      %1223 = vst.msk [vmem:[#allocation2 + $0x30] sm:$0xff] %vm1216, %v1181
      %1224 = vst.msk [vmem:[#allocation2 + $0x38] sm:$0xff] %vm1216, %v1183
      %1225 = vst.msk [vmem:[#allocation2 + $0x40] sm:$0xff] %vm1216, %v1185
      %1226 = vst.msk [vmem:[#allocation2 + $0x48] sm:$0xff] %vm1216, %v1187
      %1227 = vst.msk [vmem:[#allocation2 + $0x50] sm:$0xff] %vm1216, %v1189
      %1228 = vst.msk [vmem:[#allocation2 + $0x58] sm:$0xff] %vm1216, %v1191
      %1229 = vst.msk [vmem:[#allocation2 + $0x60] sm:$0xff] %vm1216, %v1193
      %1230 = vst.msk [vmem:[#allocation2 + $0x68] sm:$0xff] %vm1216, %v1195
      %1231 = vst.msk [vmem:[#allocation2 + $0x70] sm:$0xff] %vm1216, %v1197
      %1232 = vst.msk [vmem:[#allocation2 + $0x78] sm:$0xff] %vm1216, %v1199
      %s1233 = scalar_lea.vmem %s203, 12
      %v1234 = vld [vmem:[%s1233] sm:$0xf]
      %v1235 = vld [vmem:[%s1233 + $0x4] sm:$0xf]
      %v1236 = vld [vmem:[%s1233 + $0xc] sm:$0xf]
      %v1237 = vld [vmem:[%s1233 + $0x10] sm:$0xf]
      %v1238 = vld [vmem:[%s1233 + $0x18] sm:$0xf]
      %v1239 = vld [vmem:[%s1233 + $0x1c] sm:$0xf]
      %v1240 = vld [vmem:[%s1233 + $0x24] sm:$0xf]
      %v1241 = vld [vmem:[%s1233 + $0x28] sm:$0xf]
      %v1242 = vld [vmem:[%s1233 + $0x30] sm:$0xf]
      %v1243 = vld [vmem:[%s1233 + $0x34] sm:$0xf]
      %v1244 = vld [vmem:[%s1233 + $0x3c] sm:$0xf]
      %v1245 = vld [vmem:[%s1233 + $0x40] sm:$0xf]
      %v1246 = vld [vmem:[%s1233 + $0x48] sm:$0xf]
      %v1247 = vld [vmem:[%s1233 + $0x4c] sm:$0xf]
      %v1248 = vld [vmem:[%s1233 + $0x54] sm:$0xf]
      %v1249 = vld [vmem:[%s1233 + $0x58] sm:$0xf]
      %v1250 = vld [vmem:[%s1233 + $0x60] sm:$0xf]
      %v1251 = vld [vmem:[%s1233 + $0x64] sm:$0xf]
      %v1252 = vld [vmem:[%s1233 + $0x6c] sm:$0xf]
      %v1253 = vld [vmem:[%s1233 + $0x70] sm:$0xf]
      %v1254 = vld [vmem:[%s1233 + $0x78] sm:$0xf]
      %v1255 = vld [vmem:[%s1233 + $0x7c] sm:$0xf]
      %v1256 = vld [vmem:[%s1233 + $0x84] sm:$0xf]
      %v1257 = vld [vmem:[%s1233 + $0x88] sm:$0xf]
      %v1258 = vld [vmem:[%s1233 + $0x90] sm:$0xf]
      %v1259 = vld [vmem:[%s1233 + $0x94] sm:$0xf]
      %v1260 = vld [vmem:[%s1233 + $0x9c] sm:$0xf]
      %v1261 = vld [vmem:[%s1233 + $0xa0] sm:$0xf]
      %v1262 = vld [vmem:[%s1233 + $0xa8] sm:$0xf]
      %v1263 = vld [vmem:[%s1233 + $0xac] sm:$0xf]
      %v1264 = vld [vmem:[%s1233 + $0xb4] sm:$0xf]
      %v1265 = vld [vmem:[%s1233 + $0xb8] sm:$0xf]
      %v1298 = vunpack.c.l.b16 %v1234
      %v1299 = vunpack.c.l.b16 %v1235
      %v1300 = vunpack.c.l.b16 %v1236
      %v1301 = vunpack.c.l.b16 %v1237
      %v1302 = vunpack.c.l.b16 %v1238
      %v1303 = vunpack.c.l.b16 %v1239
      %v1304 = vunpack.c.l.b16 %v1240
      %v1305 = vunpack.c.l.b16 %v1241
      %v1306 = vunpack.c.l.b16 %v1242
      %v1307 = vunpack.c.l.b16 %v1243
      %v1308 = vunpack.c.l.b16 %v1244
      %v1309 = vunpack.c.l.b16 %v1245
      %v1310 = vunpack.c.l.b16 %v1246
      %v1311 = vunpack.c.l.b16 %v1247
      %v1312 = vunpack.c.l.b16 %v1248
      %v1313 = vunpack.c.l.b16 %v1249
      %v1314 = vunpack.c.l.b16 %v1250
      %v1315 = vunpack.c.l.b16 %v1251
      %v1316 = vunpack.c.l.b16 %v1252
      %v1317 = vunpack.c.l.b16 %v1253
      %v1318 = vunpack.c.l.b16 %v1254
      %v1319 = vunpack.c.l.b16 %v1255
      %v1320 = vunpack.c.l.b16 %v1256
      %v1321 = vunpack.c.l.b16 %v1257
      %v1322 = vunpack.c.l.b16 %v1258
      %v1323 = vunpack.c.l.b16 %v1259
      %v1324 = vunpack.c.l.b16 %v1260
      %v1325 = vunpack.c.l.b16 %v1261
      %v1326 = vunpack.c.l.b16 %v1262
      %v1327 = vunpack.c.l.b16 %v1263
      %v1328 = vunpack.c.l.b16 %v1264
      %v1329 = vunpack.c.l.b16 %v1265
      %v1330 = vpack.c.b16 %v1299, %v1298
      %v1331 = vpack.c.b16 %v1301, %v1300
      %v1332 = vpack.c.b16 %v1303, %v1302
      %v1333 = vpack.c.b16 %v1305, %v1304
      %v1334 = vpack.c.b16 %v1307, %v1306
      %v1335 = vpack.c.b16 %v1309, %v1308
      %v1336 = vpack.c.b16 %v1311, %v1310
      %v1337 = vpack.c.b16 %v1313, %v1312
      %v1338 = vpack.c.b16 %v1315, %v1314
      %v1339 = vpack.c.b16 %v1317, %v1316
      %v1340 = vpack.c.b16 %v1319, %v1318
      %v1341 = vpack.c.b16 %v1321, %v1320
      %v1342 = vpack.c.b16 %v1323, %v1322
      %v1343 = vpack.c.b16 %v1325, %v1324
      %v1344 = vpack.c.b16 %v1327, %v1326
      %v1345 = vpack.c.b16 %v1329, %v1328
      %1346 = vrot.lane.b32.xlu0 %v1330, 12
      %v1347 = vpop.permute.xlu0 %1346
      %1348 = vrot.lane.b32.xlu0 %v1331, 12
      %v1349 = vpop.permute.xlu0 %1348
      %1350 = vrot.lane.b32.xlu0 %v1332, 12
      %v1351 = vpop.permute.xlu0 %1350
      %1352 = vrot.lane.b32.xlu0 %v1333, 12
      %v1353 = vpop.permute.xlu0 %1352
      %1354 = vrot.lane.b32.xlu0 %v1334, 12
      %v1355 = vpop.permute.xlu0 %1354
      %1356 = vrot.lane.b32.xlu0 %v1335, 12
      %v1357 = vpop.permute.xlu0 %1356
      %1358 = vrot.lane.b32.xlu0 %v1336, 12
      %v1359 = vpop.permute.xlu0 %1358
      %1360 = vrot.lane.b32.xlu0 %v1337, 12
      %v1361 = vpop.permute.xlu0 %1360
      %1362 = vrot.lane.b32.xlu0 %v1338, 12
      %v1363 = vpop.permute.xlu0 %1362
      %1364 = vrot.lane.b32.xlu0 %v1339, 12
      %v1365 = vpop.permute.xlu0 %1364
      %1366 = vrot.lane.b32.xlu0 %v1340, 12
      %v1367 = vpop.permute.xlu0 %1366
      %1368 = vrot.lane.b32.xlu0 %v1341, 12
      %v1369 = vpop.permute.xlu0 %1368
      %1370 = vrot.lane.b32.xlu0 %v1342, 12
      %v1371 = vpop.permute.xlu0 %1370
      %1372 = vrot.lane.b32.xlu0 %v1343, 12
      %v1373 = vpop.permute.xlu0 %1372
      %1374 = vrot.lane.b32.xlu0 %v1344, 12
      %v1375 = vpop.permute.xlu0 %1374
      %1376 = vrot.lane.b32.xlu0 %v1345, 12
      %v1377 = vpop.permute.xlu0 %1376
      %vm1394 = vcmask 130144
      %1395 = vst.msk [vmem:[#allocation2] sm:$0xff] %vm1394, %v1347
      %1396 = vst.msk [vmem:[#allocation2 + $0x8] sm:$0xff] %vm1394, %v1349
      %1397 = vst.msk [vmem:[#allocation2 + $0x10] sm:$0xff] %vm1394, %v1351
      %1398 = vst.msk [vmem:[#allocation2 + $0x18] sm:$0xff] %vm1394, %v1353
      %1399 = vst.msk [vmem:[#allocation2 + $0x20] sm:$0xff] %vm1394, %v1355
      %1400 = vst.msk [vmem:[#allocation2 + $0x28] sm:$0xff] %vm1394, %v1357
      %1401 = vst.msk [vmem:[#allocation2 + $0x30] sm:$0xff] %vm1394, %v1359
      %1402 = vst.msk [vmem:[#allocation2 + $0x38] sm:$0xff] %vm1394, %v1361
      %1403 = vst.msk [vmem:[#allocation2 + $0x40] sm:$0xff] %vm1394, %v1363
      %1404 = vst.msk [vmem:[#allocation2 + $0x48] sm:$0xff] %vm1394, %v1365
      %1405 = vst.msk [vmem:[#allocation2 + $0x50] sm:$0xff] %vm1394, %v1367
      %1406 = vst.msk [vmem:[#allocation2 + $0x58] sm:$0xff] %vm1394, %v1369
      %1407 = vst.msk [vmem:[#allocation2 + $0x60] sm:$0xff] %vm1394, %v1371
      %1408 = vst.msk [vmem:[#allocation2 + $0x68] sm:$0xff] %vm1394, %v1373
      %1409 = vst.msk [vmem:[#allocation2 + $0x70] sm:$0xff] %vm1394, %v1375
      %1410 = vst.msk [vmem:[#allocation2 + $0x78] sm:$0xff] %vm1394, %v1377
      %v1411 = vld [vmem:[%s1233] sm:$0xf]
      %v1412 = vld [vmem:[%s1233 + $0x4] sm:$0xf]
      %v1413 = vld [vmem:[%s1233 + $0x8] sm:$0x1]
      %v1414 = vld [vmem:[%s1233 + $0xc] sm:$0xf]
      %v1415 = vld [vmem:[%s1233 + $0x10] sm:$0xf]
      %v1416 = vld [vmem:[%s1233 + $0x14] sm:$0x1]
      %v1417 = vld [vmem:[%s1233 + $0x18] sm:$0xf]
      %v1418 = vld [vmem:[%s1233 + $0x1c] sm:$0xf]
      %v1419 = vld [vmem:[%s1233 + $0x20] sm:$0x1]
      %v1420 = vld [vmem:[%s1233 + $0x24] sm:$0xf]
      %v1421 = vld [vmem:[%s1233 + $0x28] sm:$0xf]
      %v1422 = vld [vmem:[%s1233 + $0x2c] sm:$0x1]
      %v1423 = vld [vmem:[%s1233 + $0x30] sm:$0xf]
      %v1424 = vld [vmem:[%s1233 + $0x34] sm:$0xf]
      %v1425 = vld [vmem:[%s1233 + $0x38] sm:$0x1]
      %v1426 = vld [vmem:[%s1233 + $0x3c] sm:$0xf]
      %v1427 = vld [vmem:[%s1233 + $0x40] sm:$0xf]
      %v1428 = vld [vmem:[%s1233 + $0x44] sm:$0x1]
      %v1429 = vld [vmem:[%s1233 + $0x48] sm:$0xf]
      %v1430 = vld [vmem:[%s1233 + $0x4c] sm:$0xf]
      %v1431 = vld [vmem:[%s1233 + $0x50] sm:$0x1]
      %v1432 = vld [vmem:[%s1233 + $0x54] sm:$0xf]
      %v1433 = vld [vmem:[%s1233 + $0x58] sm:$0xf]
      %v1434 = vld [vmem:[%s1233 + $0x5c] sm:$0x1]
      %v1435 = vld [vmem:[%s1233 + $0x60] sm:$0xf]
      %v1436 = vld [vmem:[%s1233 + $0x64] sm:$0xf]
      %v1437 = vld [vmem:[%s1233 + $0x68] sm:$0x1]
      %v1438 = vld [vmem:[%s1233 + $0x6c] sm:$0xf]
      %v1439 = vld [vmem:[%s1233 + $0x70] sm:$0xf]
      %v1440 = vld [vmem:[%s1233 + $0x74] sm:$0x1]
      %v1441 = vld [vmem:[%s1233 + $0x78] sm:$0xf]
      %v1442 = vld [vmem:[%s1233 + $0x7c] sm:$0xf]
      %v1443 = vld [vmem:[%s1233 + $0x80] sm:$0x1]
      %v1444 = vld [vmem:[%s1233 + $0x84] sm:$0xf]
      %v1445 = vld [vmem:[%s1233 + $0x88] sm:$0xf]
      %v1446 = vld [vmem:[%s1233 + $0x8c] sm:$0x1]
      %v1447 = vld [vmem:[%s1233 + $0x90] sm:$0xf]
      %v1448 = vld [vmem:[%s1233 + $0x94] sm:$0xf]
      %v1449 = vld [vmem:[%s1233 + $0x98] sm:$0x1]
      %v1450 = vld [vmem:[%s1233 + $0x9c] sm:$0xf]
      %v1451 = vld [vmem:[%s1233 + $0xa0] sm:$0xf]
      %v1452 = vld [vmem:[%s1233 + $0xa4] sm:$0x1]
      %v1453 = vld [vmem:[%s1233 + $0xa8] sm:$0xf]
      %v1454 = vld [vmem:[%s1233 + $0xac] sm:$0xf]
      %v1455 = vld [vmem:[%s1233 + $0xb0] sm:$0x1]
      %v1456 = vld [vmem:[%s1233 + $0xb4] sm:$0xf]
      %v1457 = vld [vmem:[%s1233 + $0xb8] sm:$0xf]
      %v1458 = vld [vmem:[%s1233 + $0xbc] sm:$0x1]
      %v1460 = vshrl.u32 %v1411, 16
      %v1462 = vrot.slane %v1460, 4
      %v1463 = vshll.u32 %v1411, 16
      %v1465 = vrot.slane %v1463, 5
      %v1466 = vor.u32 %v1462, %v1465
      %v1467 = vrot.slane %v1466, 4
      %v1469 = vshll.u32 %v1412, 16
      %v1471 = vrot.slane %v1469, 5
      %v1472 = vsel %vm411, %v1467, %v1471
      %v1473 = vshrl.u32 %v1412, 16
      %v1475 = vrot.slane %v1473, 4
      %v1476 = vor.u32 %v1475, %v1471
      %v1477 = vrot.slane %v1476, 4
      %v1479 = vshll.u32 %v1413, 16
      %v1481 = vrot.slane %v1479, 5
      %v1482 = vsel %vm411, %v1477, %v1481
      %v1484 = vshrl.u32 %v1414, 16
      %v1486 = vrot.slane %v1484, 4
      %v1487 = vshll.u32 %v1414, 16
      %v1489 = vrot.slane %v1487, 5
      %v1490 = vor.u32 %v1486, %v1489
      %v1491 = vrot.slane %v1490, 4
      %v1493 = vshll.u32 %v1415, 16
      %v1495 = vrot.slane %v1493, 5
      %v1496 = vsel %vm411, %v1491, %v1495
      %v1497 = vshrl.u32 %v1415, 16
      %v1499 = vrot.slane %v1497, 4
      %v1500 = vor.u32 %v1499, %v1495
      %v1501 = vrot.slane %v1500, 4
      %v1503 = vshll.u32 %v1416, 16
      %v1505 = vrot.slane %v1503, 5
      %v1506 = vsel %vm411, %v1501, %v1505
      %v1508 = vshrl.u32 %v1417, 16
      %v1510 = vrot.slane %v1508, 4
      %v1511 = vshll.u32 %v1417, 16
      %v1513 = vrot.slane %v1511, 5
      %v1514 = vor.u32 %v1510, %v1513
      %v1515 = vrot.slane %v1514, 4
      %v1517 = vshll.u32 %v1418, 16
      %v1519 = vrot.slane %v1517, 5
      %v1520 = vsel %vm411, %v1515, %v1519
      %v1521 = vshrl.u32 %v1418, 16
      %v1523 = vrot.slane %v1521, 4
      %v1524 = vor.u32 %v1523, %v1519
      %v1525 = vrot.slane %v1524, 4
      %v1527 = vshll.u32 %v1419, 16
      %v1529 = vrot.slane %v1527, 5
      %v1530 = vsel %vm411, %v1525, %v1529
      %v1532 = vshrl.u32 %v1420, 16
      %v1534 = vrot.slane %v1532, 4
      %v1535 = vshll.u32 %v1420, 16
      %v1537 = vrot.slane %v1535, 5
      %v1538 = vor.u32 %v1534, %v1537
      %v1539 = vrot.slane %v1538, 4
      %v1541 = vshll.u32 %v1421, 16
      %v1543 = vrot.slane %v1541, 5
      %v1544 = vsel %vm411, %v1539, %v1543
      %v1545 = vshrl.u32 %v1421, 16
      %v1547 = vrot.slane %v1545, 4
      %v1548 = vor.u32 %v1547, %v1543
      %v1549 = vrot.slane %v1548, 4
      %v1551 = vshll.u32 %v1422, 16
      %v1553 = vrot.slane %v1551, 5
      %v1554 = vsel %vm411, %v1549, %v1553
      %v1556 = vshrl.u32 %v1423, 16
      %v1558 = vrot.slane %v1556, 4
      %v1559 = vshll.u32 %v1423, 16
      %v1561 = vrot.slane %v1559, 5
      %v1562 = vor.u32 %v1558, %v1561
      %v1563 = vrot.slane %v1562, 4
      %v1565 = vshll.u32 %v1424, 16
      %v1567 = vrot.slane %v1565, 5
      %v1568 = vsel %vm411, %v1563, %v1567
      %v1569 = vshrl.u32 %v1424, 16
      %v1571 = vrot.slane %v1569, 4
      %v1572 = vor.u32 %v1571, %v1567
      %v1573 = vrot.slane %v1572, 4
      %v1575 = vshll.u32 %v1425, 16
      %v1577 = vrot.slane %v1575, 5
      %v1578 = vsel %vm411, %v1573, %v1577
      %v1580 = vshrl.u32 %v1426, 16
      %v1582 = vrot.slane %v1580, 4
      %v1583 = vshll.u32 %v1426, 16
      %v1585 = vrot.slane %v1583, 5
      %v1586 = vor.u32 %v1582, %v1585
      %v1587 = vrot.slane %v1586, 4
      %v1589 = vshll.u32 %v1427, 16
      %v1591 = vrot.slane %v1589, 5
      %v1592 = vsel %vm411, %v1587, %v1591
      %v1593 = vshrl.u32 %v1427, 16
      %v1595 = vrot.slane %v1593, 4
      %v1596 = vor.u32 %v1595, %v1591
      %v1597 = vrot.slane %v1596, 4
      %v1599 = vshll.u32 %v1428, 16
      %v1601 = vrot.slane %v1599, 5
      %v1602 = vsel %vm411, %v1597, %v1601
      %v1604 = vshrl.u32 %v1429, 16
      %v1606 = vrot.slane %v1604, 4
      %v1607 = vshll.u32 %v1429, 16
      %v1609 = vrot.slane %v1607, 5
      %v1610 = vor.u32 %v1606, %v1609
      %v1611 = vrot.slane %v1610, 4
      %v1613 = vshll.u32 %v1430, 16
      %v1615 = vrot.slane %v1613, 5
      %v1616 = vsel %vm411, %v1611, %v1615
      %v1617 = vshrl.u32 %v1430, 16
      %v1619 = vrot.slane %v1617, 4
      %v1620 = vor.u32 %v1619, %v1615
      %v1621 = vrot.slane %v1620, 4
      %v1623 = vshll.u32 %v1431, 16
      %v1625 = vrot.slane %v1623, 5
      %v1626 = vsel %vm411, %v1621, %v1625
      %v1628 = vshrl.u32 %v1432, 16
      %v1630 = vrot.slane %v1628, 4
      %v1631 = vshll.u32 %v1432, 16
      %v1633 = vrot.slane %v1631, 5
      %v1634 = vor.u32 %v1630, %v1633
      %v1635 = vrot.slane %v1634, 4
      %v1637 = vshll.u32 %v1433, 16
      %v1639 = vrot.slane %v1637, 5
      %v1640 = vsel %vm411, %v1635, %v1639
      %v1641 = vshrl.u32 %v1433, 16
      %v1643 = vrot.slane %v1641, 4
      %v1644 = vor.u32 %v1643, %v1639
      %v1645 = vrot.slane %v1644, 4
      %v1647 = vshll.u32 %v1434, 16
      %v1649 = vrot.slane %v1647, 5
      %v1650 = vsel %vm411, %v1645, %v1649
      %v1652 = vshrl.u32 %v1435, 16
      %v1654 = vrot.slane %v1652, 4
      %v1655 = vshll.u32 %v1435, 16
      %v1657 = vrot.slane %v1655, 5
      %v1658 = vor.u32 %v1654, %v1657
      %v1659 = vrot.slane %v1658, 4
      %v1661 = vshll.u32 %v1436, 16
      %v1663 = vrot.slane %v1661, 5
      %v1664 = vsel %vm411, %v1659, %v1663
      %v1665 = vshrl.u32 %v1436, 16
      %v1667 = vrot.slane %v1665, 4
      %v1668 = vor.u32 %v1667, %v1663
      %v1669 = vrot.slane %v1668, 4
      %v1671 = vshll.u32 %v1437, 16
      %v1673 = vrot.slane %v1671, 5
      %v1674 = vsel %vm411, %v1669, %v1673
      %v1676 = vshrl.u32 %v1438, 16
      %v1678 = vrot.slane %v1676, 4
      %v1679 = vshll.u32 %v1438, 16
      %v1681 = vrot.slane %v1679, 5
      %v1682 = vor.u32 %v1678, %v1681
      %v1683 = vrot.slane %v1682, 4
      %v1685 = vshll.u32 %v1439, 16
      %v1687 = vrot.slane %v1685, 5
      %v1688 = vsel %vm411, %v1683, %v1687
      %v1689 = vshrl.u32 %v1439, 16
      %v1691 = vrot.slane %v1689, 4
      %v1692 = vor.u32 %v1691, %v1687
      %v1693 = vrot.slane %v1692, 4
      %v1695 = vshll.u32 %v1440, 16
      %v1697 = vrot.slane %v1695, 5
      %v1698 = vsel %vm411, %v1693, %v1697
      %v1700 = vshrl.u32 %v1441, 16
      %v1702 = vrot.slane %v1700, 4
      %v1703 = vshll.u32 %v1441, 16
      %v1705 = vrot.slane %v1703, 5
      %v1706 = vor.u32 %v1702, %v1705
      %v1707 = vrot.slane %v1706, 4
      %v1709 = vshll.u32 %v1442, 16
      %v1711 = vrot.slane %v1709, 5
      %v1712 = vsel %vm411, %v1707, %v1711
      %v1713 = vshrl.u32 %v1442, 16
      %v1715 = vrot.slane %v1713, 4
      %v1716 = vor.u32 %v1715, %v1711
      %v1717 = vrot.slane %v1716, 4
      %v1719 = vshll.u32 %v1443, 16
      %v1721 = vrot.slane %v1719, 5
      %v1722 = vsel %vm411, %v1717, %v1721
      %v1724 = vshrl.u32 %v1444, 16
      %v1726 = vrot.slane %v1724, 4
      %v1727 = vshll.u32 %v1444, 16
      %v1729 = vrot.slane %v1727, 5
      %v1730 = vor.u32 %v1726, %v1729
      %v1731 = vrot.slane %v1730, 4
      %v1733 = vshll.u32 %v1445, 16
      %v1735 = vrot.slane %v1733, 5
      %v1736 = vsel %vm411, %v1731, %v1735
      %v1737 = vshrl.u32 %v1445, 16
      %v1739 = vrot.slane %v1737, 4
      %v1740 = vor.u32 %v1739, %v1735
      %v1741 = vrot.slane %v1740, 4
      %v1743 = vshll.u32 %v1446, 16
      %v1745 = vrot.slane %v1743, 5
      %v1746 = vsel %vm411, %v1741, %v1745
      %v1748 = vshrl.u32 %v1447, 16
      %v1750 = vrot.slane %v1748, 4
      %v1751 = vshll.u32 %v1447, 16
      %v1753 = vrot.slane %v1751, 5
      %v1754 = vor.u32 %v1750, %v1753
      %v1755 = vrot.slane %v1754, 4
      %v1757 = vshll.u32 %v1448, 16
      %v1759 = vrot.slane %v1757, 5
      %v1760 = vsel %vm411, %v1755, %v1759
      %v1761 = vshrl.u32 %v1448, 16
      %v1763 = vrot.slane %v1761, 4
      %v1764 = vor.u32 %v1763, %v1759
      %v1765 = vrot.slane %v1764, 4
      %v1767 = vshll.u32 %v1449, 16
      %v1769 = vrot.slane %v1767, 5
      %v1770 = vsel %vm411, %v1765, %v1769
      %v1772 = vshrl.u32 %v1450, 16
      %v1774 = vrot.slane %v1772, 4
      %v1775 = vshll.u32 %v1450, 16
      %v1777 = vrot.slane %v1775, 5
      %v1778 = vor.u32 %v1774, %v1777
      %v1779 = vrot.slane %v1778, 4
      %v1781 = vshll.u32 %v1451, 16
      %v1783 = vrot.slane %v1781, 5
      %v1784 = vsel %vm411, %v1779, %v1783
      %v1785 = vshrl.u32 %v1451, 16
      %v1787 = vrot.slane %v1785, 4
      %v1788 = vor.u32 %v1787, %v1783
      %v1789 = vrot.slane %v1788, 4
      %v1791 = vshll.u32 %v1452, 16
      %v1793 = vrot.slane %v1791, 5
      %v1794 = vsel %vm411, %v1789, %v1793
      %v1796 = vshrl.u32 %v1453, 16
      %v1798 = vrot.slane %v1796, 4
      %v1799 = vshll.u32 %v1453, 16
      %v1801 = vrot.slane %v1799, 5
      %v1802 = vor.u32 %v1798, %v1801
      %v1803 = vrot.slane %v1802, 4
      %v1805 = vshll.u32 %v1454, 16
      %v1807 = vrot.slane %v1805, 5
      %v1808 = vsel %vm411, %v1803, %v1807
      %v1809 = vshrl.u32 %v1454, 16
      %v1811 = vrot.slane %v1809, 4
      %v1812 = vor.u32 %v1811, %v1807
      %v1813 = vrot.slane %v1812, 4
      %v1815 = vshll.u32 %v1455, 16
      %v1817 = vrot.slane %v1815, 5
      %v1818 = vsel %vm411, %v1813, %v1817
      %v1820 = vshrl.u32 %v1456, 16
      %v1822 = vrot.slane %v1820, 4
      %v1823 = vshll.u32 %v1456, 16
      %v1825 = vrot.slane %v1823, 5
      %v1826 = vor.u32 %v1822, %v1825
      %v1827 = vrot.slane %v1826, 4
      %v1829 = vshll.u32 %v1457, 16
      %v1831 = vrot.slane %v1829, 5
      %v1832 = vsel %vm411, %v1827, %v1831
      %v1833 = vshrl.u32 %v1457, 16
      %v1835 = vrot.slane %v1833, 4
      %v1836 = vor.u32 %v1835, %v1831
      %v1837 = vrot.slane %v1836, 4
      %v1839 = vshll.u32 %v1458, 16
      %v1841 = vrot.slane %v1839, 5
      %v1842 = vsel %vm411, %v1837, %v1841
      %v1843 = vunpack.c.l.b16 %v1472
      %v1844 = vunpack.c.l.b16 %v1482
      %v1845 = vunpack.c.l.b16 %v1496
      %v1846 = vunpack.c.l.b16 %v1506
      %v1847 = vunpack.c.l.b16 %v1520
      %v1848 = vunpack.c.l.b16 %v1530
      %v1849 = vunpack.c.l.b16 %v1544
      %v1850 = vunpack.c.l.b16 %v1554
      %v1851 = vunpack.c.l.b16 %v1568
      %v1852 = vunpack.c.l.b16 %v1578
      %v1853 = vunpack.c.l.b16 %v1592
      %v1854 = vunpack.c.l.b16 %v1602
      %v1855 = vunpack.c.l.b16 %v1616
      %v1856 = vunpack.c.l.b16 %v1626
      %v1857 = vunpack.c.l.b16 %v1640
      %v1858 = vunpack.c.l.b16 %v1650
      %v1859 = vunpack.c.l.b16 %v1664
      %v1860 = vunpack.c.l.b16 %v1674
      %v1861 = vunpack.c.l.b16 %v1688
      %v1862 = vunpack.c.l.b16 %v1698
      %v1863 = vunpack.c.l.b16 %v1712
      %v1864 = vunpack.c.l.b16 %v1722
      %v1865 = vunpack.c.l.b16 %v1736
      %v1866 = vunpack.c.l.b16 %v1746
      %v1867 = vunpack.c.l.b16 %v1760
      %v1868 = vunpack.c.l.b16 %v1770
      %v1869 = vunpack.c.l.b16 %v1784
      %v1870 = vunpack.c.l.b16 %v1794
      %v1871 = vunpack.c.l.b16 %v1808
      %v1872 = vunpack.c.l.b16 %v1818
      %v1873 = vunpack.c.l.b16 %v1832
      %v1874 = vunpack.c.l.b16 %v1842
      %v1875 = vpack.c.b16 %v1844, %v1843
      %v1876 = vpack.c.b16 %v1846, %v1845
      %v1877 = vpack.c.b16 %v1848, %v1847
      %v1878 = vpack.c.b16 %v1850, %v1849
      %v1879 = vpack.c.b16 %v1852, %v1851
      %v1880 = vpack.c.b16 %v1854, %v1853
      %v1881 = vpack.c.b16 %v1856, %v1855
      %v1882 = vpack.c.b16 %v1858, %v1857
      %v1883 = vpack.c.b16 %v1860, %v1859
      %v1884 = vpack.c.b16 %v1862, %v1861
      %v1885 = vpack.c.b16 %v1864, %v1863
      %v1886 = vpack.c.b16 %v1866, %v1865
      %v1887 = vpack.c.b16 %v1868, %v1867
      %v1888 = vpack.c.b16 %v1870, %v1869
      %v1889 = vpack.c.b16 %v1872, %v1871
      %v1890 = vpack.c.b16 %v1874, %v1873
      %1891 = vrot.lane.b32.xlu0 %v1875, 16
      %v1892 = vpop.permute.xlu0 %1891
      %1893 = vrot.lane.b32.xlu0 %v1876, 16
      %v1894 = vpop.permute.xlu0 %1893
      %1895 = vrot.lane.b32.xlu0 %v1877, 16
      %v1896 = vpop.permute.xlu0 %1895
      %1897 = vrot.lane.b32.xlu0 %v1878, 16
      %v1898 = vpop.permute.xlu0 %1897
      %1899 = vrot.lane.b32.xlu0 %v1879, 16
      %v1900 = vpop.permute.xlu0 %1899
      %1901 = vrot.lane.b32.xlu0 %v1880, 16
      %v1902 = vpop.permute.xlu0 %1901
      %1903 = vrot.lane.b32.xlu0 %v1881, 16
      %v1904 = vpop.permute.xlu0 %1903
      %1905 = vrot.lane.b32.xlu0 %v1882, 16
      %v1906 = vpop.permute.xlu0 %1905
      %1907 = vrot.lane.b32.xlu0 %v1883, 16
      %v1908 = vpop.permute.xlu0 %1907
      %1909 = vrot.lane.b32.xlu0 %v1884, 16
      %v1910 = vpop.permute.xlu0 %1909
      %1911 = vrot.lane.b32.xlu0 %v1885, 16
      %v1912 = vpop.permute.xlu0 %1911
      %1913 = vrot.lane.b32.xlu0 %v1886, 16
      %v1914 = vpop.permute.xlu0 %1913
      %1915 = vrot.lane.b32.xlu0 %v1887, 16
      %v1916 = vpop.permute.xlu0 %1915
      %1917 = vrot.lane.b32.xlu0 %v1888, 16
      %v1918 = vpop.permute.xlu0 %1917
      %1919 = vrot.lane.b32.xlu0 %v1889, 16
      %v1920 = vpop.permute.xlu0 %1919
      %1921 = vrot.lane.b32.xlu0 %v1890, 16
      %v1922 = vpop.permute.xlu0 %1921
      %vm1939 = vcmask 162944
      %1940 = vst.msk [vmem:[#allocation2] sm:$0xff] %vm1939, %v1892
      %1941 = vst.msk [vmem:[#allocation2 + $0x8] sm:$0xff] %vm1939, %v1894
      %1942 = vst.msk [vmem:[#allocation2 + $0x10] sm:$0xff] %vm1939, %v1896
      %1943 = vst.msk [vmem:[#allocation2 + $0x18] sm:$0xff] %vm1939, %v1898
      %1944 = vst.msk [vmem:[#allocation2 + $0x20] sm:$0xff] %vm1939, %v1900
      %1945 = vst.msk [vmem:[#allocation2 + $0x28] sm:$0xff] %vm1939, %v1902
      %1946 = vst.msk [vmem:[#allocation2 + $0x30] sm:$0xff] %vm1939, %v1904
      %1947 = vst.msk [vmem:[#allocation2 + $0x38] sm:$0xff] %vm1939, %v1906
      %1948 = vst.msk [vmem:[#allocation2 + $0x40] sm:$0xff] %vm1939, %v1908
      %1949 = vst.msk [vmem:[#allocation2 + $0x48] sm:$0xff] %vm1939, %v1910
      %1950 = vst.msk [vmem:[#allocation2 + $0x50] sm:$0xff] %vm1939, %v1912
      %1951 = vst.msk [vmem:[#allocation2 + $0x58] sm:$0xff] %vm1939, %v1914
      %1952 = vst.msk [vmem:[#allocation2 + $0x60] sm:$0xff] %vm1939, %v1916
      %1953 = vst.msk [vmem:[#allocation2 + $0x68] sm:$0xff] %vm1939, %v1918
      %1954 = vst.msk [vmem:[#allocation2 + $0x70] sm:$0xff] %vm1939, %v1920
      %1955 = vst.msk [vmem:[#allocation2 + $0x78] sm:$0xff] %vm1939, %v1922
      %v1956 = vld [vmem:[%s1233] sm:$0xe]
      %v1957 = vld [vmem:[%s1233 + $0x4] sm:$0xf]
      %v1958 = vld [vmem:[%s1233 + $0x8] sm:$0x1]
      %v1959 = vld [vmem:[%s1233 + $0xc] sm:$0xe]
      %v1960 = vld [vmem:[%s1233 + $0x10] sm:$0xf]
      %v1961 = vld [vmem:[%s1233 + $0x14] sm:$0x1]
      %v1962 = vld [vmem:[%s1233 + $0x18] sm:$0xe]
      %v1963 = vld [vmem:[%s1233 + $0x1c] sm:$0xf]
      %v1964 = vld [vmem:[%s1233 + $0x20] sm:$0x1]
      %v1965 = vld [vmem:[%s1233 + $0x24] sm:$0xe]
      %v1966 = vld [vmem:[%s1233 + $0x28] sm:$0xf]
      %v1967 = vld [vmem:[%s1233 + $0x2c] sm:$0x1]
      %v1968 = vld [vmem:[%s1233 + $0x30] sm:$0xe]
      %v1969 = vld [vmem:[%s1233 + $0x34] sm:$0xf]
      %v1970 = vld [vmem:[%s1233 + $0x38] sm:$0x1]
      %v1971 = vld [vmem:[%s1233 + $0x3c] sm:$0xe]
      %v1972 = vld [vmem:[%s1233 + $0x40] sm:$0xf]
      %v1973 = vld [vmem:[%s1233 + $0x44] sm:$0x1]
      %v1974 = vld [vmem:[%s1233 + $0x48] sm:$0xe]
      %v1975 = vld [vmem:[%s1233 + $0x4c] sm:$0xf]
      %v1976 = vld [vmem:[%s1233 + $0x50] sm:$0x1]
      %v1977 = vld [vmem:[%s1233 + $0x54] sm:$0xe]
      %v1978 = vld [vmem:[%s1233 + $0x58] sm:$0xf]
      %v1979 = vld [vmem:[%s1233 + $0x5c] sm:$0x1]
      %v1980 = vld [vmem:[%s1233 + $0x60] sm:$0xe]
      %v1981 = vld [vmem:[%s1233 + $0x64] sm:$0xf]
      %v1982 = vld [vmem:[%s1233 + $0x68] sm:$0x1]
      %v1983 = vld [vmem:[%s1233 + $0x6c] sm:$0xe]
      %v1984 = vld [vmem:[%s1233 + $0x70] sm:$0xf]
      %v1985 = vld [vmem:[%s1233 + $0x74] sm:$0x1]
      %v1986 = vld [vmem:[%s1233 + $0x78] sm:$0xe]
      %v1987 = vld [vmem:[%s1233 + $0x7c] sm:$0xf]
      %v1988 = vld [vmem:[%s1233 + $0x80] sm:$0x1]
      %v1989 = vld [vmem:[%s1233 + $0x84] sm:$0xe]
      %v1990 = vld [vmem:[%s1233 + $0x88] sm:$0xf]
      %v1991 = vld [vmem:[%s1233 + $0x8c] sm:$0x1]
      %v1992 = vld [vmem:[%s1233 + $0x90] sm:$0xe]
      %v1993 = vld [vmem:[%s1233 + $0x94] sm:$0xf]
      %v1994 = vld [vmem:[%s1233 + $0x98] sm:$0x1]
      %v1995 = vld [vmem:[%s1233 + $0x9c] sm:$0xe]
      %v1996 = vld [vmem:[%s1233 + $0xa0] sm:$0xf]
      %v1997 = vld [vmem:[%s1233 + $0xa4] sm:$0x1]
      %v1998 = vld [vmem:[%s1233 + $0xa8] sm:$0xe]
      %v1999 = vld [vmem:[%s1233 + $0xac] sm:$0xf]
      %v2000 = vld [vmem:[%s1233 + $0xb0] sm:$0x1]
      %v2001 = vld [vmem:[%s1233 + $0xb4] sm:$0xe]
      %v2002 = vld [vmem:[%s1233 + $0xb8] sm:$0xf]
      %v2003 = vld [vmem:[%s1233 + $0xbc] sm:$0x1]
      %v2052 = vrot.slane %v1956, 5
      %v2053 = vrot.slane %v2052, 4
      %v2054 = vrot.slane %v1957, 5
      %v2055 = vsel %vm1007, %v2053, %v2054
      %v2056 = vrot.slane %v2054, 4
      %v2057 = vrot.slane %v1958, 5
      %v2058 = vsel %vm1007, %v2056, %v2057
      %v2059 = vrot.slane %v1959, 5
      %v2060 = vrot.slane %v2059, 4
      %v2061 = vrot.slane %v1960, 5
      %v2062 = vsel %vm1007, %v2060, %v2061
      %v2063 = vrot.slane %v2061, 4
      %v2064 = vrot.slane %v1961, 5
      %v2065 = vsel %vm1007, %v2063, %v2064
      %v2066 = vrot.slane %v1962, 5
      %v2067 = vrot.slane %v2066, 4
      %v2068 = vrot.slane %v1963, 5
      %v2069 = vsel %vm1007, %v2067, %v2068
      %v2070 = vrot.slane %v2068, 4
      %v2071 = vrot.slane %v1964, 5
      %v2072 = vsel %vm1007, %v2070, %v2071
      %v2073 = vrot.slane %v1965, 5
      %v2074 = vrot.slane %v2073, 4
      %v2075 = vrot.slane %v1966, 5
      %v2076 = vsel %vm1007, %v2074, %v2075
      %v2077 = vrot.slane %v2075, 4
      %v2078 = vrot.slane %v1967, 5
      %v2079 = vsel %vm1007, %v2077, %v2078
      %v2080 = vrot.slane %v1968, 5
      %v2081 = vrot.slane %v2080, 4
      %v2082 = vrot.slane %v1969, 5
      %v2083 = vsel %vm1007, %v2081, %v2082
      %v2084 = vrot.slane %v2082, 4
      %v2085 = vrot.slane %v1970, 5
      %v2086 = vsel %vm1007, %v2084, %v2085
      %v2087 = vrot.slane %v1971, 5
      %v2088 = vrot.slane %v2087, 4
      %v2089 = vrot.slane %v1972, 5
      %v2090 = vsel %vm1007, %v2088, %v2089
      %v2091 = vrot.slane %v2089, 4
      %v2092 = vrot.slane %v1973, 5
      %v2093 = vsel %vm1007, %v2091, %v2092
      %v2094 = vrot.slane %v1974, 5
      %v2095 = vrot.slane %v2094, 4
      %v2096 = vrot.slane %v1975, 5
      %v2097 = vsel %vm1007, %v2095, %v2096
      %v2098 = vrot.slane %v2096, 4
      %v2099 = vrot.slane %v1976, 5
      %v2100 = vsel %vm1007, %v2098, %v2099
      %v2101 = vrot.slane %v1977, 5
      %v2102 = vrot.slane %v2101, 4
      %v2103 = vrot.slane %v1978, 5
      %v2104 = vsel %vm1007, %v2102, %v2103
      %v2105 = vrot.slane %v2103, 4
      %v2106 = vrot.slane %v1979, 5
      %v2107 = vsel %vm1007, %v2105, %v2106
      %v2108 = vrot.slane %v1980, 5
      %v2109 = vrot.slane %v2108, 4
      %v2110 = vrot.slane %v1981, 5
      %v2111 = vsel %vm1007, %v2109, %v2110
      %v2112 = vrot.slane %v2110, 4
      %v2113 = vrot.slane %v1982, 5
      %v2114 = vsel %vm1007, %v2112, %v2113
      %v2115 = vrot.slane %v1983, 5
      %v2116 = vrot.slane %v2115, 4
      %v2117 = vrot.slane %v1984, 5
      %v2118 = vsel %vm1007, %v2116, %v2117
      %v2119 = vrot.slane %v2117, 4
      %v2120 = vrot.slane %v1985, 5
      %v2121 = vsel %vm1007, %v2119, %v2120
      %v2122 = vrot.slane %v1986, 5
      %v2123 = vrot.slane %v2122, 4
      %v2124 = vrot.slane %v1987, 5
      %v2125 = vsel %vm1007, %v2123, %v2124
      %v2126 = vrot.slane %v2124, 4
      %v2127 = vrot.slane %v1988, 5
      %v2128 = vsel %vm1007, %v2126, %v2127
      %v2129 = vrot.slane %v1989, 5
      %v2130 = vrot.slane %v2129, 4
      %v2131 = vrot.slane %v1990, 5
      %v2132 = vsel %vm1007, %v2130, %v2131
      %v2133 = vrot.slane %v2131, 4
      %v2134 = vrot.slane %v1991, 5
      %v2135 = vsel %vm1007, %v2133, %v2134
      %v2136 = vrot.slane %v1992, 5
      %v2137 = vrot.slane %v2136, 4
      %v2138 = vrot.slane %v1993, 5
      %v2139 = vsel %vm1007, %v2137, %v2138
      %v2140 = vrot.slane %v2138, 4
      %v2141 = vrot.slane %v1994, 5
      %v2142 = vsel %vm1007, %v2140, %v2141
      %v2143 = vrot.slane %v1995, 5
      %v2144 = vrot.slane %v2143, 4
      %v2145 = vrot.slane %v1996, 5
      %v2146 = vsel %vm1007, %v2144, %v2145
      %v2147 = vrot.slane %v2145, 4
      %v2148 = vrot.slane %v1997, 5
      %v2149 = vsel %vm1007, %v2147, %v2148
      %v2150 = vrot.slane %v1998, 5
      %v2151 = vrot.slane %v2150, 4
      %v2152 = vrot.slane %v1999, 5
      %v2153 = vsel %vm1007, %v2151, %v2152
      %v2154 = vrot.slane %v2152, 4
      %v2155 = vrot.slane %v2000, 5
      %v2156 = vsel %vm1007, %v2154, %v2155
      %v2157 = vrot.slane %v2001, 5
      %v2158 = vrot.slane %v2157, 4
      %v2159 = vrot.slane %v2002, 5
      %v2160 = vsel %vm1007, %v2158, %v2159
      %v2161 = vrot.slane %v2159, 4
      %v2162 = vrot.slane %v2003, 5
      %v2163 = vsel %vm1007, %v2161, %v2162
      %v2164 = vunpack.c.l.b16 %v2055
      %v2165 = vunpack.c.l.b16 %v2058
      %v2166 = vunpack.c.l.b16 %v2062
      %v2167 = vunpack.c.l.b16 %v2065
      %v2168 = vunpack.c.l.b16 %v2069
      %v2169 = vunpack.c.l.b16 %v2072
      %v2170 = vunpack.c.l.b16 %v2076
      %v2171 = vunpack.c.l.b16 %v2079
      %v2172 = vunpack.c.l.b16 %v2083
      %v2173 = vunpack.c.l.b16 %v2086
      %v2174 = vunpack.c.l.b16 %v2090
      %v2175 = vunpack.c.l.b16 %v2093
      %v2176 = vunpack.c.l.b16 %v2097
      %v2177 = vunpack.c.l.b16 %v2100
      %v2178 = vunpack.c.l.b16 %v2104
      %v2179 = vunpack.c.l.b16 %v2107
      %v2180 = vunpack.c.l.b16 %v2111
      %v2181 = vunpack.c.l.b16 %v2114
      %v2182 = vunpack.c.l.b16 %v2118
      %v2183 = vunpack.c.l.b16 %v2121
      %v2184 = vunpack.c.l.b16 %v2125
      %v2185 = vunpack.c.l.b16 %v2128
      %v2186 = vunpack.c.l.b16 %v2132
      %v2187 = vunpack.c.l.b16 %v2135
      %v2188 = vunpack.c.l.b16 %v2139
      %v2189 = vunpack.c.l.b16 %v2142
      %v2190 = vunpack.c.l.b16 %v2146
      %v2191 = vunpack.c.l.b16 %v2149
      %v2192 = vunpack.c.l.b16 %v2153
      %v2193 = vunpack.c.l.b16 %v2156
      %v2194 = vunpack.c.l.b16 %v2160
      %v2195 = vunpack.c.l.b16 %v2163
      %v2196 = vpack.c.b16 %v2165, %v2164
      %v2197 = vpack.c.b16 %v2167, %v2166
      %v2198 = vpack.c.b16 %v2169, %v2168
      %v2199 = vpack.c.b16 %v2171, %v2170
      %v2200 = vpack.c.b16 %v2173, %v2172
      %v2201 = vpack.c.b16 %v2175, %v2174
      %v2202 = vpack.c.b16 %v2177, %v2176
      %v2203 = vpack.c.b16 %v2179, %v2178
      %v2204 = vpack.c.b16 %v2181, %v2180
      %v2205 = vpack.c.b16 %v2183, %v2182
      %v2206 = vpack.c.b16 %v2185, %v2184
      %v2207 = vpack.c.b16 %v2187, %v2186
      %v2208 = vpack.c.b16 %v2189, %v2188
      %v2209 = vpack.c.b16 %v2191, %v2190
      %v2210 = vpack.c.b16 %v2193, %v2192
      %v2211 = vpack.c.b16 %v2195, %v2194
      %2212 = vrot.lane.b32.xlu0 %v2196, 20
      %v2213 = vpop.permute.xlu0 %2212
      %2214 = vrot.lane.b32.xlu0 %v2197, 20
      %v2215 = vpop.permute.xlu0 %2214
      %2216 = vrot.lane.b32.xlu0 %v2198, 20
      %v2217 = vpop.permute.xlu0 %2216
      %2218 = vrot.lane.b32.xlu0 %v2199, 20
      %v2219 = vpop.permute.xlu0 %2218
      %2220 = vrot.lane.b32.xlu0 %v2200, 20
      %v2221 = vpop.permute.xlu0 %2220
      %2222 = vrot.lane.b32.xlu0 %v2201, 20
      %v2223 = vpop.permute.xlu0 %2222
      %2224 = vrot.lane.b32.xlu0 %v2202, 20
      %v2225 = vpop.permute.xlu0 %2224
      %2226 = vrot.lane.b32.xlu0 %v2203, 20
      %v2227 = vpop.permute.xlu0 %2226
      %2228 = vrot.lane.b32.xlu0 %v2204, 20
      %v2229 = vpop.permute.xlu0 %2228
      %2230 = vrot.lane.b32.xlu0 %v2205, 20
      %v2231 = vpop.permute.xlu0 %2230
      %2232 = vrot.lane.b32.xlu0 %v2206, 20
      %v2233 = vpop.permute.xlu0 %2232
      %2234 = vrot.lane.b32.xlu0 %v2207, 20
      %v2235 = vpop.permute.xlu0 %2234
      %2236 = vrot.lane.b32.xlu0 %v2208, 20
      %v2237 = vpop.permute.xlu0 %2236
      %2238 = vrot.lane.b32.xlu0 %v2209, 20
      %v2239 = vpop.permute.xlu0 %2238
      %2240 = vrot.lane.b32.xlu0 %v2210, 20
      %v2241 = vpop.permute.xlu0 %2240
      %2242 = vrot.lane.b32.xlu0 %v2211, 20
      %v2243 = vpop.permute.xlu0 %2242
      %vm2260 = vcmask 195744
      %2261 = vst.msk [vmem:[#allocation2] sm:$0xff] %vm2260, %v2213
      %2262 = vst.msk [vmem:[#allocation2 + $0x8] sm:$0xff] %vm2260, %v2215
      %2263 = vst.msk [vmem:[#allocation2 + $0x10] sm:$0xff] %vm2260, %v2217
      %2264 = vst.msk [vmem:[#allocation2 + $0x18] sm:$0xff] %vm2260, %v2219
      %2265 = vst.msk [vmem:[#allocation2 + $0x20] sm:$0xff] %vm2260, %v2221
      %2266 = vst.msk [vmem:[#allocation2 + $0x28] sm:$0xff] %vm2260, %v2223
      %2267 = vst.msk [vmem:[#allocation2 + $0x30] sm:$0xff] %vm2260, %v2225
      %2268 = vst.msk [vmem:[#allocation2 + $0x38] sm:$0xff] %vm2260, %v2227
      %2269 = vst.msk [vmem:[#allocation2 + $0x40] sm:$0xff] %vm2260, %v2229
      %2270 = vst.msk [vmem:[#allocation2 + $0x48] sm:$0xff] %vm2260, %v2231
      %2271 = vst.msk [vmem:[#allocation2 + $0x50] sm:$0xff] %vm2260, %v2233
      %2272 = vst.msk [vmem:[#allocation2 + $0x58] sm:$0xff] %vm2260, %v2235
      %2273 = vst.msk [vmem:[#allocation2 + $0x60] sm:$0xff] %vm2260, %v2237
      %2274 = vst.msk [vmem:[#allocation2 + $0x68] sm:$0xff] %vm2260, %v2239
      %2275 = vst.msk [vmem:[#allocation2 + $0x70] sm:$0xff] %vm2260, %v2241
      %2276 = vst.msk [vmem:[#allocation2 + $0x78] sm:$0xff] %vm2260, %v2243
      %s2277 = scalar_lea.vmem %s203, 24
      %v2278 = vld [vmem:[%s2277] sm:$0xf]
      %v2279 = vld [vmem:[%s2277 + $0x4] sm:$0xf]
      %v2280 = vld [vmem:[%s2277 + $0xc] sm:$0xf]
      %v2281 = vld [vmem:[%s2277 + $0x10] sm:$0xf]
      %v2282 = vld [vmem:[%s2277 + $0x18] sm:$0xf]
      %v2283 = vld [vmem:[%s2277 + $0x1c] sm:$0xf]
      %v2284 = vld [vmem:[%s2277 + $0x24] sm:$0xf]
      %v2285 = vld [vmem:[%s2277 + $0x28] sm:$0xf]
      %v2286 = vld [vmem:[%s2277 + $0x30] sm:$0xf]
      %v2287 = vld [vmem:[%s2277 + $0x34] sm:$0xf]
      %v2288 = vld [vmem:[%s2277 + $0x3c] sm:$0xf]
      %v2289 = vld [vmem:[%s2277 + $0x40] sm:$0xf]
      %v2290 = vld [vmem:[%s2277 + $0x48] sm:$0xf]
      %v2291 = vld [vmem:[%s2277 + $0x4c] sm:$0xf]
      %v2292 = vld [vmem:[%s2277 + $0x54] sm:$0xf]
      %v2293 = vld [vmem:[%s2277 + $0x58] sm:$0xf]
      %v2294 = vld [vmem:[%s2277 + $0x60] sm:$0xf]
      %v2295 = vld [vmem:[%s2277 + $0x64] sm:$0xf]
      %v2296 = vld [vmem:[%s2277 + $0x6c] sm:$0xf]
      %v2297 = vld [vmem:[%s2277 + $0x70] sm:$0xf]
      %v2298 = vld [vmem:[%s2277 + $0x78] sm:$0xf]
      %v2299 = vld [vmem:[%s2277 + $0x7c] sm:$0xf]
      %v2300 = vld [vmem:[%s2277 + $0x84] sm:$0xf]
      %v2301 = vld [vmem:[%s2277 + $0x88] sm:$0xf]
      %v2302 = vld [vmem:[%s2277 + $0x90] sm:$0xf]
      %v2303 = vld [vmem:[%s2277 + $0x94] sm:$0xf]
      %v2304 = vld [vmem:[%s2277 + $0x9c] sm:$0xf]
      %v2305 = vld [vmem:[%s2277 + $0xa0] sm:$0xf]
      %v2306 = vld [vmem:[%s2277 + $0xa8] sm:$0xf]
      %v2307 = vld [vmem:[%s2277 + $0xac] sm:$0xf]
      %v2308 = vld [vmem:[%s2277 + $0xb4] sm:$0xf]
      %v2309 = vld [vmem:[%s2277 + $0xb8] sm:$0xf]
      %v2342 = vunpack.c.l.b16 %v2278
      %v2343 = vunpack.c.l.b16 %v2279
      %v2344 = vunpack.c.l.b16 %v2280
      %v2345 = vunpack.c.l.b16 %v2281
      %v2346 = vunpack.c.l.b16 %v2282
      %v2347 = vunpack.c.l.b16 %v2283
      %v2348 = vunpack.c.l.b16 %v2284
      %v2349 = vunpack.c.l.b16 %v2285
      %v2350 = vunpack.c.l.b16 %v2286
      %v2351 = vunpack.c.l.b16 %v2287
      %v2352 = vunpack.c.l.b16 %v2288
      %v2353 = vunpack.c.l.b16 %v2289
      %v2354 = vunpack.c.l.b16 %v2290
      %v2355 = vunpack.c.l.b16 %v2291
      %v2356 = vunpack.c.l.b16 %v2292
      %v2357 = vunpack.c.l.b16 %v2293
      %v2358 = vunpack.c.l.b16 %v2294
      %v2359 = vunpack.c.l.b16 %v2295
      %v2360 = vunpack.c.l.b16 %v2296
      %v2361 = vunpack.c.l.b16 %v2297
      %v2362 = vunpack.c.l.b16 %v2298
      %v2363 = vunpack.c.l.b16 %v2299
      %v2364 = vunpack.c.l.b16 %v2300
      %v2365 = vunpack.c.l.b16 %v2301
      %v2366 = vunpack.c.l.b16 %v2302
      %v2367 = vunpack.c.l.b16 %v2303
      %v2368 = vunpack.c.l.b16 %v2304
      %v2369 = vunpack.c.l.b16 %v2305
      %v2370 = vunpack.c.l.b16 %v2306
      %v2371 = vunpack.c.l.b16 %v2307
      %v2372 = vunpack.c.l.b16 %v2308
      %v2373 = vunpack.c.l.b16 %v2309
      %v2374 = vpack.c.b16 %v2343, %v2342
      %v2375 = vpack.c.b16 %v2345, %v2344
      %v2376 = vpack.c.b16 %v2347, %v2346
      %v2377 = vpack.c.b16 %v2349, %v2348
      %v2378 = vpack.c.b16 %v2351, %v2350
      %v2379 = vpack.c.b16 %v2353, %v2352
      %v2380 = vpack.c.b16 %v2355, %v2354
      %v2381 = vpack.c.b16 %v2357, %v2356
      %v2382 = vpack.c.b16 %v2359, %v2358
      %v2383 = vpack.c.b16 %v2361, %v2360
      %v2384 = vpack.c.b16 %v2363, %v2362
      %v2385 = vpack.c.b16 %v2365, %v2364
      %v2386 = vpack.c.b16 %v2367, %v2366
      %v2387 = vpack.c.b16 %v2369, %v2368
      %v2388 = vpack.c.b16 %v2371, %v2370
      %v2389 = vpack.c.b16 %v2373, %v2372
      %2390 = vrot.lane.b32.xlu0 %v2374, 24
      %v2391 = vpop.permute.xlu0 %2390
      %2392 = vrot.lane.b32.xlu0 %v2375, 24
      %v2393 = vpop.permute.xlu0 %2392
      %2394 = vrot.lane.b32.xlu0 %v2376, 24
      %v2395 = vpop.permute.xlu0 %2394
      %2396 = vrot.lane.b32.xlu0 %v2377, 24
      %v2397 = vpop.permute.xlu0 %2396
      %2398 = vrot.lane.b32.xlu0 %v2378, 24
      %v2399 = vpop.permute.xlu0 %2398
      %2400 = vrot.lane.b32.xlu0 %v2379, 24
      %v2401 = vpop.permute.xlu0 %2400
      %2402 = vrot.lane.b32.xlu0 %v2380, 24
      %v2403 = vpop.permute.xlu0 %2402
      %2404 = vrot.lane.b32.xlu0 %v2381, 24
      %v2405 = vpop.permute.xlu0 %2404
      %2406 = vrot.lane.b32.xlu0 %v2382, 24
      %v2407 = vpop.permute.xlu0 %2406
      %2408 = vrot.lane.b32.xlu0 %v2383, 24
      %v2409 = vpop.permute.xlu0 %2408
      %2410 = vrot.lane.b32.xlu0 %v2384, 24
      %v2411 = vpop.permute.xlu0 %2410
      %2412 = vrot.lane.b32.xlu0 %v2385, 24
      %v2413 = vpop.permute.xlu0 %2412
      %2414 = vrot.lane.b32.xlu0 %v2386, 24
      %v2415 = vpop.permute.xlu0 %2414
      %2416 = vrot.lane.b32.xlu0 %v2387, 24
      %v2417 = vpop.permute.xlu0 %2416
      %2418 = vrot.lane.b32.xlu0 %v2388, 24
      %v2419 = vpop.permute.xlu0 %2418
      %2420 = vrot.lane.b32.xlu0 %v2389, 24
      %v2421 = vpop.permute.xlu0 %2420
      %vm2438 = vcmask 228544
      %2439 = vst.msk [vmem:[#allocation2] sm:$0xff] %vm2438, %v2391
      %2440 = vst.msk [vmem:[#allocation2 + $0x8] sm:$0xff] %vm2438, %v2393
      %2441 = vst.msk [vmem:[#allocation2 + $0x10] sm:$0xff] %vm2438, %v2395
      %2442 = vst.msk [vmem:[#allocation2 + $0x18] sm:$0xff] %vm2438, %v2397
      %2443 = vst.msk [vmem:[#allocation2 + $0x20] sm:$0xff] %vm2438, %v2399
      %2444 = vst.msk [vmem:[#allocation2 + $0x28] sm:$0xff] %vm2438, %v2401
      %2445 = vst.msk [vmem:[#allocation2 + $0x30] sm:$0xff] %vm2438, %v2403
      %2446 = vst.msk [vmem:[#allocation2 + $0x38] sm:$0xff] %vm2438, %v2405
      %2447 = vst.msk [vmem:[#allocation2 + $0x40] sm:$0xff] %vm2438, %v2407
      %2448 = vst.msk [vmem:[#allocation2 + $0x48] sm:$0xff] %vm2438, %v2409
      %2449 = vst.msk [vmem:[#allocation2 + $0x50] sm:$0xff] %vm2438, %v2411
      %2450 = vst.msk [vmem:[#allocation2 + $0x58] sm:$0xff] %vm2438, %v2413
      %2451 = vst.msk [vmem:[#allocation2 + $0x60] sm:$0xff] %vm2438, %v2415
      %2452 = vst.msk [vmem:[#allocation2 + $0x68] sm:$0xff] %vm2438, %v2417
      %2453 = vst.msk [vmem:[#allocation2 + $0x70] sm:$0xff] %vm2438, %v2419
      %2454 = vst.msk [vmem:[#allocation2 + $0x78] sm:$0xff] %vm2438, %v2421
      %v2455 = vld [vmem:[%s2277] sm:$0xf]
      %v2456 = vld [vmem:[%s2277 + $0x4] sm:$0xf]
      %v2457 = vld [vmem:[%s2277 + $0x8] sm:$0x1]
      %v2458 = vld [vmem:[%s2277 + $0xc] sm:$0xf]
      %v2459 = vld [vmem:[%s2277 + $0x10] sm:$0xf]
      %v2460 = vld [vmem:[%s2277 + $0x14] sm:$0x1]
      %v2461 = vld [vmem:[%s2277 + $0x18] sm:$0xf]
      %v2462 = vld [vmem:[%s2277 + $0x1c] sm:$0xf]
      %v2463 = vld [vmem:[%s2277 + $0x20] sm:$0x1]
      %v2464 = vld [vmem:[%s2277 + $0x24] sm:$0xf]
      %v2465 = vld [vmem:[%s2277 + $0x28] sm:$0xf]
      %v2466 = vld [vmem:[%s2277 + $0x2c] sm:$0x1]
      %v2467 = vld [vmem:[%s2277 + $0x30] sm:$0xf]
      %v2468 = vld [vmem:[%s2277 + $0x34] sm:$0xf]
      %v2469 = vld [vmem:[%s2277 + $0x38] sm:$0x1]
      %v2470 = vld [vmem:[%s2277 + $0x3c] sm:$0xf]
      %v2471 = vld [vmem:[%s2277 + $0x40] sm:$0xf]
      %v2472 = vld [vmem:[%s2277 + $0x44] sm:$0x1]
      %v2473 = vld [vmem:[%s2277 + $0x48] sm:$0xf]
      %v2474 = vld [vmem:[%s2277 + $0x4c] sm:$0xf]
      %v2475 = vld [vmem:[%s2277 + $0x50] sm:$0x1]
      %v2476 = vld [vmem:[%s2277 + $0x54] sm:$0xf]
      %v2477 = vld [vmem:[%s2277 + $0x58] sm:$0xf]
      %v2478 = vld [vmem:[%s2277 + $0x5c] sm:$0x1]
      %v2479 = vld [vmem:[%s2277 + $0x60] sm:$0xf]
      %v2480 = vld [vmem:[%s2277 + $0x64] sm:$0xf]
      %v2481 = vld [vmem:[%s2277 + $0x68] sm:$0x1]
      %v2482 = vld [vmem:[%s2277 + $0x6c] sm:$0xf]
      %v2483 = vld [vmem:[%s2277 + $0x70] sm:$0xf]
      %v2484 = vld [vmem:[%s2277 + $0x74] sm:$0x1]
      %v2485 = vld [vmem:[%s2277 + $0x78] sm:$0xf]
      %v2486 = vld [vmem:[%s2277 + $0x7c] sm:$0xf]
      %v2487 = vld [vmem:[%s2277 + $0x80] sm:$0x1]
      %v2488 = vld [vmem:[%s2277 + $0x84] sm:$0xf]
      %v2489 = vld [vmem:[%s2277 + $0x88] sm:$0xf]
      %v2490 = vld [vmem:[%s2277 + $0x8c] sm:$0x1]
      %v2491 = vld [vmem:[%s2277 + $0x90] sm:$0xf]
      %v2492 = vld [vmem:[%s2277 + $0x94] sm:$0xf]
      %v2493 = vld [vmem:[%s2277 + $0x98] sm:$0x1]
      %v2494 = vld [vmem:[%s2277 + $0x9c] sm:$0xf]
      %v2495 = vld [vmem:[%s2277 + $0xa0] sm:$0xf]
      %v2496 = vld [vmem:[%s2277 + $0xa4] sm:$0x1]
      %v2497 = vld [vmem:[%s2277 + $0xa8] sm:$0xf]
      %v2498 = vld [vmem:[%s2277 + $0xac] sm:$0xf]
      %v2499 = vld [vmem:[%s2277 + $0xb0] sm:$0x1]
      %v2500 = vld [vmem:[%s2277 + $0xb4] sm:$0xf]
      %v2501 = vld [vmem:[%s2277 + $0xb8] sm:$0xf]
      %v2502 = vld [vmem:[%s2277 + $0xbc] sm:$0x1]
      %v2504 = vshrl.u32 %v2455, 16
      %v2506 = vrot.slane %v2504, 4
      %v2507 = vshll.u32 %v2455, 16
      %v2509 = vrot.slane %v2507, 5
      %v2510 = vor.u32 %v2506, %v2509
      %v2511 = vrot.slane %v2510, 4
      %v2513 = vshll.u32 %v2456, 16
      %v2515 = vrot.slane %v2513, 5
      %v2516 = vsel %vm411, %v2511, %v2515
      %v2517 = vshrl.u32 %v2456, 16
      %v2519 = vrot.slane %v2517, 4
      %v2520 = vor.u32 %v2519, %v2515
      %v2521 = vrot.slane %v2520, 4
      %v2523 = vshll.u32 %v2457, 16
      %v2525 = vrot.slane %v2523, 5
      %v2526 = vsel %vm411, %v2521, %v2525
      %v2528 = vshrl.u32 %v2458, 16
      %v2530 = vrot.slane %v2528, 4
      %v2531 = vshll.u32 %v2458, 16
      %v2533 = vrot.slane %v2531, 5
      %v2534 = vor.u32 %v2530, %v2533
      %v2535 = vrot.slane %v2534, 4
      %v2537 = vshll.u32 %v2459, 16
      %v2539 = vrot.slane %v2537, 5
      %v2540 = vsel %vm411, %v2535, %v2539
      %v2541 = vshrl.u32 %v2459, 16
      %v2543 = vrot.slane %v2541, 4
      %v2544 = vor.u32 %v2543, %v2539
      %v2545 = vrot.slane %v2544, 4
      %v2547 = vshll.u32 %v2460, 16
      %v2549 = vrot.slane %v2547, 5
      %v2550 = vsel %vm411, %v2545, %v2549
      %v2552 = vshrl.u32 %v2461, 16
      %v2554 = vrot.slane %v2552, 4
      %v2555 = vshll.u32 %v2461, 16
      %v2557 = vrot.slane %v2555, 5
      %v2558 = vor.u32 %v2554, %v2557
      %v2559 = vrot.slane %v2558, 4
      %v2561 = vshll.u32 %v2462, 16
      %v2563 = vrot.slane %v2561, 5
      %v2564 = vsel %vm411, %v2559, %v2563
      %v2565 = vshrl.u32 %v2462, 16
      %v2567 = vrot.slane %v2565, 4
      %v2568 = vor.u32 %v2567, %v2563
      %v2569 = vrot.slane %v2568, 4
      %v2571 = vshll.u32 %v2463, 16
      %v2573 = vrot.slane %v2571, 5
      %v2574 = vsel %vm411, %v2569, %v2573
      %v2576 = vshrl.u32 %v2464, 16
      %v2578 = vrot.slane %v2576, 4
      %v2579 = vshll.u32 %v2464, 16
      %v2581 = vrot.slane %v2579, 5
      %v2582 = vor.u32 %v2578, %v2581
      %v2583 = vrot.slane %v2582, 4
      %v2585 = vshll.u32 %v2465, 16
      %v2587 = vrot.slane %v2585, 5
      %v2588 = vsel %vm411, %v2583, %v2587
      %v2589 = vshrl.u32 %v2465, 16
      %v2591 = vrot.slane %v2589, 4
      %v2592 = vor.u32 %v2591, %v2587
      %v2593 = vrot.slane %v2592, 4
      %v2595 = vshll.u32 %v2466, 16
      %v2597 = vrot.slane %v2595, 5
      %v2598 = vsel %vm411, %v2593, %v2597
      %v2600 = vshrl.u32 %v2467, 16
      %v2602 = vrot.slane %v2600, 4
      %v2603 = vshll.u32 %v2467, 16
      %v2605 = vrot.slane %v2603, 5
      %v2606 = vor.u32 %v2602, %v2605
      %v2607 = vrot.slane %v2606, 4
      %v2609 = vshll.u32 %v2468, 16
      %v2611 = vrot.slane %v2609, 5
      %v2612 = vsel %vm411, %v2607, %v2611
      %v2613 = vshrl.u32 %v2468, 16
      %v2615 = vrot.slane %v2613, 4
      %v2616 = vor.u32 %v2615, %v2611
      %v2617 = vrot.slane %v2616, 4
      %v2619 = vshll.u32 %v2469, 16
      %v2621 = vrot.slane %v2619, 5
      %v2622 = vsel %vm411, %v2617, %v2621
      %v2624 = vshrl.u32 %v2470, 16
      %v2626 = vrot.slane %v2624, 4
      %v2627 = vshll.u32 %v2470, 16
      %v2629 = vrot.slane %v2627, 5
      %v2630 = vor.u32 %v2626, %v2629
      %v2631 = vrot.slane %v2630, 4
      %v2633 = vshll.u32 %v2471, 16
      %v2635 = vrot.slane %v2633, 5
      %v2636 = vsel %vm411, %v2631, %v2635
      %v2637 = vshrl.u32 %v2471, 16
      %v2639 = vrot.slane %v2637, 4
      %v2640 = vor.u32 %v2639, %v2635
      %v2641 = vrot.slane %v2640, 4
      %v2643 = vshll.u32 %v2472, 16
      %v2645 = vrot.slane %v2643, 5
      %v2646 = vsel %vm411, %v2641, %v2645
      %v2648 = vshrl.u32 %v2473, 16
      %v2650 = vrot.slane %v2648, 4
      %v2651 = vshll.u32 %v2473, 16
      %v2653 = vrot.slane %v2651, 5
      %v2654 = vor.u32 %v2650, %v2653
      %v2655 = vrot.slane %v2654, 4
      %v2657 = vshll.u32 %v2474, 16
      %v2659 = vrot.slane %v2657, 5
      %v2660 = vsel %vm411, %v2655, %v2659
      %v2661 = vshrl.u32 %v2474, 16
      %v2663 = vrot.slane %v2661, 4
      %v2664 = vor.u32 %v2663, %v2659
      %v2665 = vrot.slane %v2664, 4
      %v2667 = vshll.u32 %v2475, 16
      %v2669 = vrot.slane %v2667, 5
      %v2670 = vsel %vm411, %v2665, %v2669
      %v2672 = vshrl.u32 %v2476, 16
      %v2674 = vrot.slane %v2672, 4
      %v2675 = vshll.u32 %v2476, 16
      %v2677 = vrot.slane %v2675, 5
      %v2678 = vor.u32 %v2674, %v2677
      %v2679 = vrot.slane %v2678, 4
      %v2681 = vshll.u32 %v2477, 16
      %v2683 = vrot.slane %v2681, 5
      %v2684 = vsel %vm411, %v2679, %v2683
      %v2685 = vshrl.u32 %v2477, 16
      %v2687 = vrot.slane %v2685, 4
      %v2688 = vor.u32 %v2687, %v2683
      %v2689 = vrot.slane %v2688, 4
      %v2691 = vshll.u32 %v2478, 16
      %v2693 = vrot.slane %v2691, 5
      %v2694 = vsel %vm411, %v2689, %v2693
      %v2696 = vshrl.u32 %v2479, 16
      %v2698 = vrot.slane %v2696, 4
      %v2699 = vshll.u32 %v2479, 16
      %v2701 = vrot.slane %v2699, 5
      %v2702 = vor.u32 %v2698, %v2701
      %v2703 = vrot.slane %v2702, 4
      %v2705 = vshll.u32 %v2480, 16
      %v2707 = vrot.slane %v2705, 5
      %v2708 = vsel %vm411, %v2703, %v2707
      %v2709 = vshrl.u32 %v2480, 16
      %v2711 = vrot.slane %v2709, 4
      %v2712 = vor.u32 %v2711, %v2707
      %v2713 = vrot.slane %v2712, 4
      %v2715 = vshll.u32 %v2481, 16
      %v2717 = vrot.slane %v2715, 5
      %v2718 = vsel %vm411, %v2713, %v2717
      %v2720 = vshrl.u32 %v2482, 16
      %v2722 = vrot.slane %v2720, 4
      %v2723 = vshll.u32 %v2482, 16
      %v2725 = vrot.slane %v2723, 5
      %v2726 = vor.u32 %v2722, %v2725
      %v2727 = vrot.slane %v2726, 4
      %v2729 = vshll.u32 %v2483, 16
      %v2731 = vrot.slane %v2729, 5
      %v2732 = vsel %vm411, %v2727, %v2731
      %v2733 = vshrl.u32 %v2483, 16
      %v2735 = vrot.slane %v2733, 4
      %v2736 = vor.u32 %v2735, %v2731
      %v2737 = vrot.slane %v2736, 4
      %v2739 = vshll.u32 %v2484, 16
      %v2741 = vrot.slane %v2739, 5
      %v2742 = vsel %vm411, %v2737, %v2741
      %v2744 = vshrl.u32 %v2485, 16
      %v2746 = vrot.slane %v2744, 4
      %v2747 = vshll.u32 %v2485, 16
      %v2749 = vrot.slane %v2747, 5
      %v2750 = vor.u32 %v2746, %v2749
      %v2751 = vrot.slane %v2750, 4
      %v2753 = vshll.u32 %v2486, 16
      %v2755 = vrot.slane %v2753, 5
      %v2756 = vsel %vm411, %v2751, %v2755
      %v2757 = vshrl.u32 %v2486, 16
      %v2759 = vrot.slane %v2757, 4
      %v2760 = vor.u32 %v2759, %v2755
      %v2761 = vrot.slane %v2760, 4
      %v2763 = vshll.u32 %v2487, 16
      %v2765 = vrot.slane %v2763, 5
      %v2766 = vsel %vm411, %v2761, %v2765
      %v2768 = vshrl.u32 %v2488, 16
      %v2770 = vrot.slane %v2768, 4
      %v2771 = vshll.u32 %v2488, 16
      %v2773 = vrot.slane %v2771, 5
      %v2774 = vor.u32 %v2770, %v2773
      %v2775 = vrot.slane %v2774, 4
      %v2777 = vshll.u32 %v2489, 16
      %v2779 = vrot.slane %v2777, 5
      %v2780 = vsel %vm411, %v2775, %v2779
      %v2781 = vshrl.u32 %v2489, 16
      %v2783 = vrot.slane %v2781, 4
      %v2784 = vor.u32 %v2783, %v2779
      %v2785 = vrot.slane %v2784, 4
      %v2787 = vshll.u32 %v2490, 16
      %v2789 = vrot.slane %v2787, 5
      %v2790 = vsel %vm411, %v2785, %v2789
      %v2792 = vshrl.u32 %v2491, 16
      %v2794 = vrot.slane %v2792, 4
      %v2795 = vshll.u32 %v2491, 16
      %v2797 = vrot.slane %v2795, 5
      %v2798 = vor.u32 %v2794, %v2797
      %v2799 = vrot.slane %v2798, 4
      %v2801 = vshll.u32 %v2492, 16
      %v2803 = vrot.slane %v2801, 5
      %v2804 = vsel %vm411, %v2799, %v2803
      %v2805 = vshrl.u32 %v2492, 16
      %v2807 = vrot.slane %v2805, 4
      %v2808 = vor.u32 %v2807, %v2803
      %v2809 = vrot.slane %v2808, 4
      %v2811 = vshll.u32 %v2493, 16
      %v2813 = vrot.slane %v2811, 5
      %v2814 = vsel %vm411, %v2809, %v2813
      %v2816 = vshrl.u32 %v2494, 16
      %v2818 = vrot.slane %v2816, 4
      %v2819 = vshll.u32 %v2494, 16
      %v2821 = vrot.slane %v2819, 5
      %v2822 = vor.u32 %v2818, %v2821
      %v2823 = vrot.slane %v2822, 4
      %v2825 = vshll.u32 %v2495, 16
      %v2827 = vrot.slane %v2825, 5
      %v2828 = vsel %vm411, %v2823, %v2827
      %v2829 = vshrl.u32 %v2495, 16
      %v2831 = vrot.slane %v2829, 4
      %v2832 = vor.u32 %v2831, %v2827
      %v2833 = vrot.slane %v2832, 4
      %v2835 = vshll.u32 %v2496, 16
      %v2837 = vrot.slane %v2835, 5
      %v2838 = vsel %vm411, %v2833, %v2837
      %v2840 = vshrl.u32 %v2497, 16
      %v2842 = vrot.slane %v2840, 4
      %v2843 = vshll.u32 %v2497, 16
      %v2845 = vrot.slane %v2843, 5
      %v2846 = vor.u32 %v2842, %v2845
      %v2847 = vrot.slane %v2846, 4
      %v2849 = vshll.u32 %v2498, 16
      %v2851 = vrot.slane %v2849, 5
      %v2852 = vsel %vm411, %v2847, %v2851
      %v2853 = vshrl.u32 %v2498, 16
      %v2855 = vrot.slane %v2853, 4
      %v2856 = vor.u32 %v2855, %v2851
      %v2857 = vrot.slane %v2856, 4
      %v2859 = vshll.u32 %v2499, 16
      %v2861 = vrot.slane %v2859, 5
      %v2862 = vsel %vm411, %v2857, %v2861
      %v2864 = vshrl.u32 %v2500, 16
      %v2866 = vrot.slane %v2864, 4
      %v2867 = vshll.u32 %v2500, 16
      %v2869 = vrot.slane %v2867, 5
      %v2870 = vor.u32 %v2866, %v2869
      %v2871 = vrot.slane %v2870, 4
      %v2873 = vshll.u32 %v2501, 16
      %v2875 = vrot.slane %v2873, 5
      %v2876 = vsel %vm411, %v2871, %v2875
      %v2877 = vshrl.u32 %v2501, 16
      %v2879 = vrot.slane %v2877, 4
      %v2880 = vor.u32 %v2879, %v2875
      %v2881 = vrot.slane %v2880, 4
      %v2883 = vshll.u32 %v2502, 16
      %v2885 = vrot.slane %v2883, 5
      %v2886 = vsel %vm411, %v2881, %v2885
      %v2887 = vunpack.c.l.b16 %v2516
      %v2888 = vunpack.c.l.b16 %v2526
      %v2889 = vunpack.c.l.b16 %v2540
      %v2890 = vunpack.c.l.b16 %v2550
      %v2891 = vunpack.c.l.b16 %v2564
      %v2892 = vunpack.c.l.b16 %v2574
      %v2893 = vunpack.c.l.b16 %v2588
      %v2894 = vunpack.c.l.b16 %v2598
      %v2895 = vunpack.c.l.b16 %v2612
      %v2896 = vunpack.c.l.b16 %v2622
      %v2897 = vunpack.c.l.b16 %v2636
      %v2898 = vunpack.c.l.b16 %v2646
      %v2899 = vunpack.c.l.b16 %v2660
      %v2900 = vunpack.c.l.b16 %v2670
      %v2901 = vunpack.c.l.b16 %v2684
      %v2902 = vunpack.c.l.b16 %v2694
      %v2903 = vunpack.c.l.b16 %v2708
      %v2904 = vunpack.c.l.b16 %v2718
      %v2905 = vunpack.c.l.b16 %v2732
      %v2906 = vunpack.c.l.b16 %v2742
      %v2907 = vunpack.c.l.b16 %v2756
      %v2908 = vunpack.c.l.b16 %v2766
      %v2909 = vunpack.c.l.b16 %v2780
      %v2910 = vunpack.c.l.b16 %v2790
      %v2911 = vunpack.c.l.b16 %v2804
      %v2912 = vunpack.c.l.b16 %v2814
      %v2913 = vunpack.c.l.b16 %v2828
      %v2914 = vunpack.c.l.b16 %v2838
      %v2915 = vunpack.c.l.b16 %v2852
      %v2916 = vunpack.c.l.b16 %v2862
      %v2917 = vunpack.c.l.b16 %v2876
      %v2918 = vunpack.c.l.b16 %v2886
      %v2919 = vpack.c.b16 %v2888, %v2887
      %v2920 = vpack.c.b16 %v2890, %v2889
      %v2921 = vpack.c.b16 %v2892, %v2891
      %v2922 = vpack.c.b16 %v2894, %v2893
      %v2923 = vpack.c.b16 %v2896, %v2895
      %v2924 = vpack.c.b16 %v2898, %v2897
      %v2925 = vpack.c.b16 %v2900, %v2899
      %v2926 = vpack.c.b16 %v2902, %v2901
      %v2927 = vpack.c.b16 %v2904, %v2903
      %v2928 = vpack.c.b16 %v2906, %v2905
      %v2929 = vpack.c.b16 %v2908, %v2907
      %v2930 = vpack.c.b16 %v2910, %v2909
      %v2931 = vpack.c.b16 %v2912, %v2911
      %v2932 = vpack.c.b16 %v2914, %v2913
      %v2933 = vpack.c.b16 %v2916, %v2915
      %v2934 = vpack.c.b16 %v2918, %v2917
      %2935 = vrot.lane.b32.xlu0 %v2919, 28
      %v2936 = vpop.permute.xlu0 %2935
      %2937 = vrot.lane.b32.xlu0 %v2920, 28
      %v2938 = vpop.permute.xlu0 %2937
      %2939 = vrot.lane.b32.xlu0 %v2921, 28
      %v2940 = vpop.permute.xlu0 %2939
      %2941 = vrot.lane.b32.xlu0 %v2922, 28
      %v2942 = vpop.permute.xlu0 %2941
      %2943 = vrot.lane.b32.xlu0 %v2923, 28
      %v2944 = vpop.permute.xlu0 %2943
      %2945 = vrot.lane.b32.xlu0 %v2924, 28
      %v2946 = vpop.permute.xlu0 %2945
      %2947 = vrot.lane.b32.xlu0 %v2925, 28
      %v2948 = vpop.permute.xlu0 %2947
      %2949 = vrot.lane.b32.xlu0 %v2926, 28
      %v2950 = vpop.permute.xlu0 %2949
      %2951 = vrot.lane.b32.xlu0 %v2927, 28
      %v2952 = vpop.permute.xlu0 %2951
      %2953 = vrot.lane.b32.xlu0 %v2928, 28
      %v2954 = vpop.permute.xlu0 %2953
      %2955 = vrot.lane.b32.xlu0 %v2929, 28
      %v2956 = vpop.permute.xlu0 %2955
      %2957 = vrot.lane.b32.xlu0 %v2930, 28
      %v2958 = vpop.permute.xlu0 %2957
      %2959 = vrot.lane.b32.xlu0 %v2931, 28
      %v2960 = vpop.permute.xlu0 %2959
      %2961 = vrot.lane.b32.xlu0 %v2932, 28
      %v2962 = vpop.permute.xlu0 %2961
      %2963 = vrot.lane.b32.xlu0 %v2933, 28
      %v2964 = vpop.permute.xlu0 %2963
      %2965 = vrot.lane.b32.xlu0 %v2934, 28
      %v2966 = vpop.permute.xlu0 %2965
      %vm2983 = vcmask 261344
      %2984 = vst.msk [vmem:[#allocation2] sm:$0xff] %vm2983, %v2936
      %2985 = vst.msk [vmem:[#allocation2 + $0x8] sm:$0xff] %vm2983, %v2938
      %2986 = vst.msk [vmem:[#allocation2 + $0x10] sm:$0xff] %vm2983, %v2940
      %2987 = vst.msk [vmem:[#allocation2 + $0x18] sm:$0xff] %vm2983, %v2942
      %2988 = vst.msk [vmem:[#allocation2 + $0x20] sm:$0xff] %vm2983, %v2944
      %2989 = vst.msk [vmem:[#allocation2 + $0x28] sm:$0xff] %vm2983, %v2946
      %2990 = vst.msk [vmem:[#allocation2 + $0x30] sm:$0xff] %vm2983, %v2948
      %2991 = vst.msk [vmem:[#allocation2 + $0x38] sm:$0xff] %vm2983, %v2950
      %2992 = vst.msk [vmem:[#allocation2 + $0x40] sm:$0xff] %vm2983, %v2952
      %2993 = vst.msk [vmem:[#allocation2 + $0x48] sm:$0xff] %vm2983, %v2954
      %2994 = vst.msk [vmem:[#allocation2 + $0x50] sm:$0xff] %vm2983, %v2956
      %2995 = vst.msk [vmem:[#allocation2 + $0x58] sm:$0xff] %vm2983, %v2958
      %2996 = vst.msk [vmem:[#allocation2 + $0x60] sm:$0xff] %vm2983, %v2960
      %2997 = vst.msk [vmem:[#allocation2 + $0x68] sm:$0xff] %vm2983, %v2962
      %2998 = vst.msk [vmem:[#allocation2 + $0x70] sm:$0xff] %vm2983, %v2964
      %2999 = vst.msk [vmem:[#allocation2 + $0x78] sm:$0xff] %vm2983, %v2966
      %v3000 = vld [vmem:[%s2277] sm:$0xe]
      %v3001 = vld [vmem:[%s2277 + $0x4] sm:$0xf]
      %v3002 = vld [vmem:[%s2277 + $0x8] sm:$0x1]
      %v3003 = vld [vmem:[%s2277 + $0xc] sm:$0xe]
      %v3004 = vld [vmem:[%s2277 + $0x10] sm:$0xf]
      %v3005 = vld [vmem:[%s2277 + $0x14] sm:$0x1]
      %v3006 = vld [vmem:[%s2277 + $0x18] sm:$0xe]
      %v3007 = vld [vmem:[%s2277 + $0x1c] sm:$0xf]
      %v3008 = vld [vmem:[%s2277 + $0x20] sm:$0x1]
      %v3009 = vld [vmem:[%s2277 + $0x24] sm:$0xe]
      %v3010 = vld [vmem:[%s2277 + $0x28] sm:$0xf]
      %v3011 = vld [vmem:[%s2277 + $0x2c] sm:$0x1]
      %v3012 = vld [vmem:[%s2277 + $0x30] sm:$0xe]
      %v3013 = vld [vmem:[%s2277 + $0x34] sm:$0xf]
      %v3014 = vld [vmem:[%s2277 + $0x38] sm:$0x1]
      %v3015 = vld [vmem:[%s2277 + $0x3c] sm:$0xe]
      %v3016 = vld [vmem:[%s2277 + $0x40] sm:$0xf]
      %v3017 = vld [vmem:[%s2277 + $0x44] sm:$0x1]
      %v3018 = vld [vmem:[%s2277 + $0x48] sm:$0xe]
      %v3019 = vld [vmem:[%s2277 + $0x4c] sm:$0xf]
      %v3020 = vld [vmem:[%s2277 + $0x50] sm:$0x1]
      %v3021 = vld [vmem:[%s2277 + $0x54] sm:$0xe]
      %v3022 = vld [vmem:[%s2277 + $0x58] sm:$0xf]
      %v3023 = vld [vmem:[%s2277 + $0x5c] sm:$0x1]
      %v3024 = vld [vmem:[%s2277 + $0x60] sm:$0xe]
      %v3025 = vld [vmem:[%s2277 + $0x64] sm:$0xf]
      %v3026 = vld [vmem:[%s2277 + $0x68] sm:$0x1]
      %v3027 = vld [vmem:[%s2277 + $0x6c] sm:$0xe]
      %v3028 = vld [vmem:[%s2277 + $0x70] sm:$0xf]
      %v3029 = vld [vmem:[%s2277 + $0x74] sm:$0x1]
      %v3030 = vld [vmem:[%s2277 + $0x78] sm:$0xe]
      %v3031 = vld [vmem:[%s2277 + $0x7c] sm:$0xf]
      %v3032 = vld [vmem:[%s2277 + $0x80] sm:$0x1]
      %v3033 = vld [vmem:[%s2277 + $0x84] sm:$0xe]
      %v3034 = vld [vmem:[%s2277 + $0x88] sm:$0xf]
      %v3035 = vld [vmem:[%s2277 + $0x8c] sm:$0x1]
      %v3036 = vld [vmem:[%s2277 + $0x90] sm:$0xe]
      %v3037 = vld [vmem:[%s2277 + $0x94] sm:$0xf]
      %v3038 = vld [vmem:[%s2277 + $0x98] sm:$0x1]
      %v3039 = vld [vmem:[%s2277 + $0x9c] sm:$0xe]
      %v3040 = vld [vmem:[%s2277 + $0xa0] sm:$0xf]
      %v3041 = vld [vmem:[%s2277 + $0xa4] sm:$0x1]
      %v3042 = vld [vmem:[%s2277 + $0xa8] sm:$0xe]
      %v3043 = vld [vmem:[%s2277 + $0xac] sm:$0xf]
      %v3044 = vld [vmem:[%s2277 + $0xb0] sm:$0x1]
      %v3045 = vld [vmem:[%s2277 + $0xb4] sm:$0xe]
      %v3046 = vld [vmem:[%s2277 + $0xb8] sm:$0xf]
      %v3047 = vld [vmem:[%s2277 + $0xbc] sm:$0x1]
      %v3096 = vrot.slane %v3000, 5
      %v3097 = vrot.slane %v3096, 4
      %v3098 = vrot.slane %v3001, 5
      %v3099 = vsel %vm1007, %v3097, %v3098
      %v3100 = vrot.slane %v3098, 4
      %v3101 = vrot.slane %v3002, 5
      %v3102 = vsel %vm1007, %v3100, %v3101
      %v3103 = vrot.slane %v3003, 5
      %v3104 = vrot.slane %v3103, 4
      %v3105 = vrot.slane %v3004, 5
      %v3106 = vsel %vm1007, %v3104, %v3105
      %v3107 = vrot.slane %v3105, 4
      %v3108 = vrot.slane %v3005, 5
      %v3109 = vsel %vm1007, %v3107, %v3108
      %v3110 = vrot.slane %v3006, 5
      %v3111 = vrot.slane %v3110, 4
      %v3112 = vrot.slane %v3007, 5
      %v3113 = vsel %vm1007, %v3111, %v3112
      %v3114 = vrot.slane %v3112, 4
      %v3115 = vrot.slane %v3008, 5
      %v3116 = vsel %vm1007, %v3114, %v3115
      %v3117 = vrot.slane %v3009, 5
      %v3118 = vrot.slane %v3117, 4
      %v3119 = vrot.slane %v3010, 5
      %v3120 = vsel %vm1007, %v3118, %v3119
      %v3121 = vrot.slane %v3119, 4
      %v3122 = vrot.slane %v3011, 5
      %v3123 = vsel %vm1007, %v3121, %v3122
      %v3124 = vrot.slane %v3012, 5
      %v3125 = vrot.slane %v3124, 4
      %v3126 = vrot.slane %v3013, 5
      %v3127 = vsel %vm1007, %v3125, %v3126
      %v3128 = vrot.slane %v3126, 4
      %v3129 = vrot.slane %v3014, 5
      %v3130 = vsel %vm1007, %v3128, %v3129
      %v3131 = vrot.slane %v3015, 5
      %v3132 = vrot.slane %v3131, 4
      %v3133 = vrot.slane %v3016, 5
      %v3134 = vsel %vm1007, %v3132, %v3133
      %v3135 = vrot.slane %v3133, 4
      %v3136 = vrot.slane %v3017, 5
      %v3137 = vsel %vm1007, %v3135, %v3136
      %v3138 = vrot.slane %v3018, 5
      %v3139 = vrot.slane %v3138, 4
      %v3140 = vrot.slane %v3019, 5
      %v3141 = vsel %vm1007, %v3139, %v3140
      %v3142 = vrot.slane %v3140, 4
      %v3143 = vrot.slane %v3020, 5
      %v3144 = vsel %vm1007, %v3142, %v3143
      %v3145 = vrot.slane %v3021, 5
      %v3146 = vrot.slane %v3145, 4
      %v3147 = vrot.slane %v3022, 5
      %v3148 = vsel %vm1007, %v3146, %v3147
      %v3149 = vrot.slane %v3147, 4
      %v3150 = vrot.slane %v3023, 5
      %v3151 = vsel %vm1007, %v3149, %v3150
      %v3152 = vrot.slane %v3024, 5
      %v3153 = vrot.slane %v3152, 4
      %v3154 = vrot.slane %v3025, 5
      %v3155 = vsel %vm1007, %v3153, %v3154
      %v3156 = vrot.slane %v3154, 4
      %v3157 = vrot.slane %v3026, 5
      %v3158 = vsel %vm1007, %v3156, %v3157
      %v3159 = vrot.slane %v3027, 5
      %v3160 = vrot.slane %v3159, 4
      %v3161 = vrot.slane %v3028, 5
      %v3162 = vsel %vm1007, %v3160, %v3161
      %v3163 = vrot.slane %v3161, 4
      %v3164 = vrot.slane %v3029, 5
      %v3165 = vsel %vm1007, %v3163, %v3164
      %v3166 = vrot.slane %v3030, 5
      %v3167 = vrot.slane %v3166, 4
      %v3168 = vrot.slane %v3031, 5
      %v3169 = vsel %vm1007, %v3167, %v3168
      %v3170 = vrot.slane %v3168, 4
      %v3171 = vrot.slane %v3032, 5
      %v3172 = vsel %vm1007, %v3170, %v3171
      %v3173 = vrot.slane %v3033, 5
      %v3174 = vrot.slane %v3173, 4
      %v3175 = vrot.slane %v3034, 5
      %v3176 = vsel %vm1007, %v3174, %v3175
      %v3177 = vrot.slane %v3175, 4
      %v3178 = vrot.slane %v3035, 5
      %v3179 = vsel %vm1007, %v3177, %v3178
      %v3180 = vrot.slane %v3036, 5
      %v3181 = vrot.slane %v3180, 4
      %v3182 = vrot.slane %v3037, 5
      %v3183 = vsel %vm1007, %v3181, %v3182
      %v3184 = vrot.slane %v3182, 4
      %v3185 = vrot.slane %v3038, 5
      %v3186 = vsel %vm1007, %v3184, %v3185
      %v3187 = vrot.slane %v3039, 5
      %v3188 = vrot.slane %v3187, 4
      %v3189 = vrot.slane %v3040, 5
      %v3190 = vsel %vm1007, %v3188, %v3189
      %v3191 = vrot.slane %v3189, 4
      %v3192 = vrot.slane %v3041, 5
      %v3193 = vsel %vm1007, %v3191, %v3192
      %v3194 = vrot.slane %v3042, 5
      %v3195 = vrot.slane %v3194, 4
      %v3196 = vrot.slane %v3043, 5
      %v3197 = vsel %vm1007, %v3195, %v3196
      %v3198 = vrot.slane %v3196, 4
      %v3199 = vrot.slane %v3044, 5
      %v3200 = vsel %vm1007, %v3198, %v3199
      %v3201 = vrot.slane %v3045, 5
      %v3202 = vrot.slane %v3201, 4
      %v3203 = vrot.slane %v3046, 5
      %v3204 = vsel %vm1007, %v3202, %v3203
      %v3205 = vrot.slane %v3203, 4
      %v3206 = vrot.slane %v3047, 5
      %v3207 = vsel %vm1007, %v3205, %v3206
      %v3208 = vunpack.c.l.b16 %v3099
      %v3209 = vunpack.c.l.b16 %v3102
      %v3210 = vunpack.c.l.b16 %v3106
      %v3211 = vunpack.c.l.b16 %v3109
      %v3212 = vunpack.c.l.b16 %v3113
      %v3213 = vunpack.c.l.b16 %v3116
      %v3214 = vunpack.c.l.b16 %v3120
      %v3215 = vunpack.c.l.b16 %v3123
      %v3216 = vunpack.c.l.b16 %v3127
      %v3217 = vunpack.c.l.b16 %v3130
      %v3218 = vunpack.c.l.b16 %v3134
      %v3219 = vunpack.c.l.b16 %v3137
      %v3220 = vunpack.c.l.b16 %v3141
      %v3221 = vunpack.c.l.b16 %v3144
      %v3222 = vunpack.c.l.b16 %v3148
      %v3223 = vunpack.c.l.b16 %v3151
      %v3224 = vunpack.c.l.b16 %v3155
      %v3225 = vunpack.c.l.b16 %v3158
      %v3226 = vunpack.c.l.b16 %v3162
      %v3227 = vunpack.c.l.b16 %v3165
      %v3228 = vunpack.c.l.b16 %v3169
      %v3229 = vunpack.c.l.b16 %v3172
      %v3230 = vunpack.c.l.b16 %v3176
      %v3231 = vunpack.c.l.b16 %v3179
      %v3232 = vunpack.c.l.b16 %v3183
      %v3233 = vunpack.c.l.b16 %v3186
      %v3234 = vunpack.c.l.b16 %v3190
      %v3235 = vunpack.c.l.b16 %v3193
      %v3236 = vunpack.c.l.b16 %v3197
      %v3237 = vunpack.c.l.b16 %v3200
      %v3238 = vunpack.c.l.b16 %v3204
      %v3239 = vunpack.c.l.b16 %v3207
      %v3240 = vpack.c.b16 %v3209, %v3208
      %v3241 = vpack.c.b16 %v3211, %v3210
      %v3242 = vpack.c.b16 %v3213, %v3212
      %v3243 = vpack.c.b16 %v3215, %v3214
      %v3244 = vpack.c.b16 %v3217, %v3216
      %v3245 = vpack.c.b16 %v3219, %v3218
      %v3246 = vpack.c.b16 %v3221, %v3220
      %v3247 = vpack.c.b16 %v3223, %v3222
      %v3248 = vpack.c.b16 %v3225, %v3224
      %v3249 = vpack.c.b16 %v3227, %v3226
      %v3250 = vpack.c.b16 %v3229, %v3228
      %v3251 = vpack.c.b16 %v3231, %v3230
      %v3252 = vpack.c.b16 %v3233, %v3232
      %v3253 = vpack.c.b16 %v3235, %v3234
      %v3254 = vpack.c.b16 %v3237, %v3236
      %v3255 = vpack.c.b16 %v3239, %v3238
      %3256 = vrot.lane.b32.xlu0 %v3240, 32
      %v3257 = vpop.permute.xlu0 %3256
      %3258 = vrot.lane.b32.xlu0 %v3241, 32
      %v3259 = vpop.permute.xlu0 %3258
      %3260 = vrot.lane.b32.xlu0 %v3242, 32
      %v3261 = vpop.permute.xlu0 %3260
      %3262 = vrot.lane.b32.xlu0 %v3243, 32
      %v3263 = vpop.permute.xlu0 %3262
      %3264 = vrot.lane.b32.xlu0 %v3244, 32
      %v3265 = vpop.permute.xlu0 %3264
      %3266 = vrot.lane.b32.xlu0 %v3245, 32
      %v3267 = vpop.permute.xlu0 %3266
      %3268 = vrot.lane.b32.xlu0 %v3246, 32
      %v3269 = vpop.permute.xlu0 %3268
      %3270 = vrot.lane.b32.xlu0 %v3247, 32
      %v3271 = vpop.permute.xlu0 %3270
      %3272 = vrot.lane.b32.xlu0 %v3248, 32
      %v3273 = vpop.permute.xlu0 %3272
      %3274 = vrot.lane.b32.xlu0 %v3249, 32
      %v3275 = vpop.permute.xlu0 %3274
      %3276 = vrot.lane.b32.xlu0 %v3250, 32
      %v3277 = vpop.permute.xlu0 %3276
      %3278 = vrot.lane.b32.xlu0 %v3251, 32
      %v3279 = vpop.permute.xlu0 %3278
      %3280 = vrot.lane.b32.xlu0 %v3252, 32
      %v3281 = vpop.permute.xlu0 %3280
      %3282 = vrot.lane.b32.xlu0 %v3253, 32
      %v3283 = vpop.permute.xlu0 %3282
      %3284 = vrot.lane.b32.xlu0 %v3254, 32
      %v3285 = vpop.permute.xlu0 %3284
      %3286 = vrot.lane.b32.xlu0 %v3255, 32
      %v3287 = vpop.permute.xlu0 %3286
      %vm3304 = vcmask 294144
      %3305 = vst.msk [vmem:[#allocation2] sm:$0xff] %vm3304, %v3257
      %3306 = vst.msk [vmem:[#allocation2 + $0x8] sm:$0xff] %vm3304, %v3259
      %3307 = vst.msk [vmem:[#allocation2 + $0x10] sm:$0xff] %vm3304, %v3261
      %3308 = vst.msk [vmem:[#allocation2 + $0x18] sm:$0xff] %vm3304, %v3263
      %3309 = vst.msk [vmem:[#allocation2 + $0x20] sm:$0xff] %vm3304, %v3265
      %3310 = vst.msk [vmem:[#allocation2 + $0x28] sm:$0xff] %vm3304, %v3267
      %3311 = vst.msk [vmem:[#allocation2 + $0x30] sm:$0xff] %vm3304, %v3269
      %3312 = vst.msk [vmem:[#allocation2 + $0x38] sm:$0xff] %vm3304, %v3271
      %3313 = vst.msk [vmem:[#allocation2 + $0x40] sm:$0xff] %vm3304, %v3273
      %3314 = vst.msk [vmem:[#allocation2 + $0x48] sm:$0xff] %vm3304, %v3275
      %3315 = vst.msk [vmem:[#allocation2 + $0x50] sm:$0xff] %vm3304, %v3277
      %3316 = vst.msk [vmem:[#allocation2 + $0x58] sm:$0xff] %vm3304, %v3279
      %3317 = vst.msk [vmem:[#allocation2 + $0x60] sm:$0xff] %vm3304, %v3281
      %3318 = vst.msk [vmem:[#allocation2 + $0x68] sm:$0xff] %vm3304, %v3283
      %3319 = vst.msk [vmem:[#allocation2 + $0x70] sm:$0xff] %vm3304, %v3285
      %3320 = vst.msk [vmem:[#allocation2 + $0x78] sm:$0xff] %vm3304, %v3287
      %v3321 = vld [vmem:[#allocation2] sm:$0xff]
      %v3322 = vld [vmem:[#allocation2 + $0x8] sm:$0xff]
      %v3323 = vld [vmem:[#allocation2 + $0x10] sm:$0xff]
      %v3324 = vld [vmem:[#allocation2 + $0x18] sm:$0xff]
      %v3325 = vld [vmem:[#allocation2 + $0x20] sm:$0xff]
      %v3326 = vld [vmem:[#allocation2 + $0x28] sm:$0xff]
      %v3327 = vld [vmem:[#allocation2 + $0x30] sm:$0xff]
      %v3328 = vld [vmem:[#allocation2 + $0x38] sm:$0xff]
      %v3329 = vld [vmem:[#allocation2 + $0x40] sm:$0xff]
      %v3330 = vld [vmem:[#allocation2 + $0x48] sm:$0xff]
      %v3331 = vld [vmem:[#allocation2 + $0x50] sm:$0xff]
      %v3332 = vld [vmem:[#allocation2 + $0x58] sm:$0xff]
      %v3333 = vld [vmem:[#allocation2 + $0x60] sm:$0xff]
      %v3334 = vld [vmem:[#allocation2 + $0x68] sm:$0xff]
      %v3335 = vld [vmem:[#allocation2 + $0x70] sm:$0xff]
      %v3336 = vld [vmem:[#allocation2 + $0x78] sm:$0xff]
      %v3337 = vld [vmem:[%s1] sm:$0xf]
      %v3338 = vld [vmem:[%s1 + $0x4] sm:$0xf]
      %v3339 = vld [vmem:[%s1 + $0x8] sm:$0xf]
      %v3340 = vld [vmem:[%s1 + $0xc] sm:$0xf]
      %v3341 = vld [vmem:[%s1 + $0x10] sm:$0x3]
      %v3347 = vunpack.c.l.b16 %v3337
      %v3348 = vunpack.c.l.b16 %v3338
      %v3349 = vunpack.c.l.b16 %v3339
      %v3350 = vunpack.c.l.b16 %v3340
      %v3351 = vunpack.c.l.b16 %v3341
      %v3352 = vpack.c.b16 %v3348, %v3347
      %v3353 = vpack.c.b16 %v3350, %v3349
      %v3354 = vpack.c.b16 %v3351, %v3351
      %vm3357 = vcmask 293888
      %v3359 = vsel %vm3357, %v3321, 0
      %v3362 = vsel %vm3357, %v3322, 0
      %v3365 = vsel %vm3357, %v3323, 0
      %v3368 = vsel %vm3357, %v3324, 0
      %v3371 = vsel %vm3357, %v3325, 0
      %v3374 = vsel %vm3357, %v3326, 0
      %v3377 = vsel %vm3357, %v3327, 0
      %v3380 = vsel %vm3357, %v3328, 0
      %v3383 = vsel %vm3357, %v3329, 0
      %v3386 = vsel %vm3357, %v3330, 0
      %v3389 = vsel %vm3357, %v3331, 0
      %v3392 = vsel %vm3357, %v3332, 0
      %v3395 = vsel %vm3357, %v3333, 0
      %v3398 = vsel %vm3357, %v3334, 0
      %v3401 = vsel %vm3357, %v3335, 0
      %v3404 = vsel %vm3357, %v3336, 0
      %vm3406 = vcmask 1041408
      %v3408 = vsel %vm3406, %v3354, 0
      %3410 = vmatprep.subr.bf16.mxu0 0
      %3411 = vmatpush1.bf16.msra.mxu0 %v3352
      %3412 = vmatprep.subr.bf16.mxu0 0
      %3413 = vmatpush1.bf16.msra.mxu0 %v3353
      %3414 = vmatprep.subr.bf16.mxu0 0
      %3415 = vmatpush1.bf16.msra.mxu0 %v3408
      %3416 = vmatprep.subr.bf16.mxu0 0
      %3417 = vmatpush1.bf16.msra.mxu0 0
      %3418 = vmatprep.subr.bf16.mxu0 0
      %3419 = vmatpush1.bf16.msra.mxu0 0
      %3420 = vmatprep.subr.bf16.mxu0 0
      %3421 = vmatpush1.bf16.msra.mxu0 0
      %3422 = vmatprep.subr.bf16.mxu0 0
      %3423 = vmatpush1.bf16.msra.mxu0 0
      %3424 = vmatprep.subr.bf16.mxu0 0
      %3425 = vmatpush1.bf16.msra.mxu0 0
      %3426 = vmatprep.subr.bf16.mxu0 0
      %3427 = vmatpush1.bf16.msra.mxu0 0
      %3428 = vmatprep.subr.bf16.mxu0 0
      %3429 = vmatpush1.bf16.msra.mxu0 0
      %3430 = vmatprep.subr.bf16.mxu0 0
      %3431 = vmatpush1.bf16.msra.mxu0 0
      %3432 = vmatprep.subr.bf16.mxu0 0
      %3433 = vmatpush1.bf16.msra.mxu0 0
      %3434 = vmatprep.subr.bf16.mxu0 0
      %3435 = vmatpush1.bf16.msra.mxu0 0
      %3436 = vmatprep.subr.bf16.mxu0 0
      %3437 = vmatpush1.bf16.msra.mxu0 0
      %3438 = vmatprep.subr.bf16.mxu0 0
      %3439 = vmatpush1.bf16.msra.mxu0 0
      %3440 = vmatprep.subr.bf16.mxu0 0
      %3441 = vmatpush1.bf16.msra.mxu0 0
      %3442 = vmatprep.mubr.bf16.mxu0 0
      %3443 = vmatmul.mubr.bf16.gmra.mrb[0].mxu0 %v3359
      %v3444 = vpop.f32.mrb[0].mxu0
      %v3445 = vadd.f32 0.0, %v3444
      %v3446 = vpop.f32.mrb[0].mxu0
      %v3447 = vpop.f32.mrb[0].mxu0
      %v3448 = vadd.f32 0.0, %v3447
      %v3449 = vpop.f32.mrb[0].mxu0
      %3450 = vmatprep.mubr.bf16.mxu0 0
      %3451 = vmatmul.mubr.bf16.gmra.mrb[0].mxu0 %v3362
      %v3452 = vpop.f32.mrb[0].mxu0
      %v3453 = vadd.f32 0.0, %v3452
      %v3454 = vpop.f32.mrb[0].mxu0
      %v3455 = vpop.f32.mrb[0].mxu0
      %v3456 = vadd.f32 0.0, %v3455
      %v3457 = vpop.f32.mrb[0].mxu0
      %3458 = vmatprep.mubr.bf16.mxu0 0
      %3459 = vmatmul.mubr.bf16.gmra.mrb[0].mxu0 %v3365
      %v3460 = vpop.f32.mrb[0].mxu0
      %v3461 = vadd.f32 0.0, %v3460
      %v3462 = vpop.f32.mrb[0].mxu0
      %v3463 = vpop.f32.mrb[0].mxu0
      %v3464 = vadd.f32 0.0, %v3463
      %v3465 = vpop.f32.mrb[0].mxu0
      %3466 = vmatprep.mubr.bf16.mxu0 0
      %3467 = vmatmul.mubr.bf16.gmra.mrb[0].mxu0 %v3368
      %v3468 = vpop.f32.mrb[0].mxu0
      %v3469 = vadd.f32 0.0, %v3468
      %v3470 = vpop.f32.mrb[0].mxu0
      %v3471 = vpop.f32.mrb[0].mxu0
      %v3472 = vadd.f32 0.0, %v3471
      %v3473 = vpop.f32.mrb[0].mxu0
      %3474 = vmatprep.mubr.bf16.mxu0 0
      %3475 = vmatmul.mubr.bf16.gmra.mrb[0].mxu0 %v3371
      %v3476 = vpop.f32.mrb[0].mxu0
      %v3477 = vadd.f32 0.0, %v3476
      %v3478 = vpop.f32.mrb[0].mxu0
      %v3479 = vpop.f32.mrb[0].mxu0
      %v3480 = vadd.f32 0.0, %v3479
      %v3481 = vpop.f32.mrb[0].mxu0
      %3482 = vmatprep.mubr.bf16.mxu0 0
      %3483 = vmatmul.mubr.bf16.gmra.mrb[0].mxu0 %v3374
      %v3484 = vpop.f32.mrb[0].mxu0
      %v3485 = vadd.f32 0.0, %v3484
      %v3486 = vpop.f32.mrb[0].mxu0
      %v3487 = vpop.f32.mrb[0].mxu0
      %v3488 = vadd.f32 0.0, %v3487
      %v3489 = vpop.f32.mrb[0].mxu0
      %3490 = vmatprep.mubr.bf16.mxu0 0
      %3491 = vmatmul.mubr.bf16.gmra.mrb[0].mxu0 %v3377
      %v3492 = vpop.f32.mrb[0].mxu0
      %v3493 = vadd.f32 0.0, %v3492
      %v3494 = vpop.f32.mrb[0].mxu0
      %v3495 = vpop.f32.mrb[0].mxu0
      %v3496 = vadd.f32 0.0, %v3495
      %v3497 = vpop.f32.mrb[0].mxu0
      %3498 = vmatprep.mubr.bf16.mxu0 0
      %3499 = vmatmul.mubr.bf16.gmra.mrb[0].mxu0 %v3380
      %v3500 = vpop.f32.mrb[0].mxu0
      %v3501 = vadd.f32 0.0, %v3500
      %v3502 = vpop.f32.mrb[0].mxu0
      %v3503 = vpop.f32.mrb[0].mxu0
      %v3504 = vadd.f32 0.0, %v3503
      %v3505 = vpop.f32.mrb[0].mxu0
      %3506 = vmatprep.mubr.bf16.mxu0 0
      %3507 = vmatmul.mubr.bf16.gmra.mrb[0].mxu0 %v3383
      %v3508 = vpop.f32.mrb[0].mxu0
      %v3509 = vadd.f32 0.0, %v3508
      %v3510 = vpop.f32.mrb[0].mxu0
      %v3511 = vpop.f32.mrb[0].mxu0
      %v3512 = vadd.f32 0.0, %v3511
      %v3513 = vpop.f32.mrb[0].mxu0
      %3514 = vmatprep.mubr.bf16.mxu0 0
      %3515 = vmatmul.mubr.bf16.gmra.mrb[0].mxu0 %v3386
      %v3516 = vpop.f32.mrb[0].mxu0
      %v3517 = vadd.f32 0.0, %v3516
      %v3518 = vpop.f32.mrb[0].mxu0
      %v3519 = vpop.f32.mrb[0].mxu0
      %v3520 = vadd.f32 0.0, %v3519
      %v3521 = vpop.f32.mrb[0].mxu0
      %3522 = vmatprep.mubr.bf16.mxu0 0
      %3523 = vmatmul.mubr.bf16.gmra.mrb[0].mxu0 %v3389
      %v3524 = vpop.f32.mrb[0].mxu0
      %v3525 = vadd.f32 0.0, %v3524
      %v3526 = vpop.f32.mrb[0].mxu0
      %v3527 = vpop.f32.mrb[0].mxu0
      %v3528 = vadd.f32 0.0, %v3527
      %v3529 = vpop.f32.mrb[0].mxu0
      %3530 = vmatprep.mubr.bf16.mxu0 0
      %3531 = vmatmul.mubr.bf16.gmra.mrb[0].mxu0 %v3392
      %v3532 = vpop.f32.mrb[0].mxu0
      %v3533 = vadd.f32 0.0, %v3532
      %v3534 = vpop.f32.mrb[0].mxu0
      %v3535 = vpop.f32.mrb[0].mxu0
      %v3536 = vadd.f32 0.0, %v3535
      %v3537 = vpop.f32.mrb[0].mxu0
      %3538 = vmatprep.mubr.bf16.mxu0 0
      %3539 = vmatmul.mubr.bf16.gmra.mrb[0].mxu0 %v3395
      %v3540 = vpop.f32.mrb[0].mxu0
      %v3541 = vadd.f32 0.0, %v3540
      %v3542 = vpop.f32.mrb[0].mxu0
      %v3543 = vpop.f32.mrb[0].mxu0
      %v3544 = vadd.f32 0.0, %v3543
      %v3545 = vpop.f32.mrb[0].mxu0
      %3546 = vmatprep.mubr.bf16.mxu0 0
      %3547 = vmatmul.mubr.bf16.gmra.mrb[0].mxu0 %v3398
      %v3548 = vpop.f32.mrb[0].mxu0
      %v3549 = vadd.f32 0.0, %v3548
      %v3550 = vpop.f32.mrb[0].mxu0
      %v3551 = vpop.f32.mrb[0].mxu0
      %v3552 = vadd.f32 0.0, %v3551
      %v3553 = vpop.f32.mrb[0].mxu0
      %3554 = vmatprep.mubr.bf16.mxu0 0
      %3555 = vmatmul.mubr.bf16.gmra.mrb[0].mxu0 %v3401
      %v3556 = vpop.f32.mrb[0].mxu0
      %v3557 = vadd.f32 0.0, %v3556
      %v3558 = vpop.f32.mrb[0].mxu0
      %v3559 = vpop.f32.mrb[0].mxu0
      %v3560 = vadd.f32 0.0, %v3559
      %v3561 = vpop.f32.mrb[0].mxu0
      %3562 = vmatprep.mubr.bf16.mxu0 0
      %3563 = vmatmul.mubr.bf16.gmra.mrb[0].mxu0 %v3404
      %v3564 = vpop.f32.mrb[0].mxu0
      %v3565 = vadd.f32 0.0, %v3564
      %v3566 = vpop.f32.mrb[0].mxu0
      %v3567 = vpop.f32.mrb[0].mxu0
      %v3568 = vadd.f32 0.0, %v3567
      %v3569 = vpop.f32.mrb[0].mxu0
      %3570 = vdwg.mxu0
      %vm3571 = vcmask 64512
      %3572 = vst.msk [vmem:[%s208] sm:$0xff] %vm3571, %v3445
      %3573 = vst.msk [vmem:[%s208 + $0x8] sm:$0xff] %vm3571, %v3448
      %3574 = vst.msk [vmem:[%s208 + $0x10] sm:$0xff] %vm3571, %v3453
      %3575 = vst.msk [vmem:[%s208 + $0x18] sm:$0xff] %vm3571, %v3456
      %3576 = vst.msk [vmem:[%s208 + $0x20] sm:$0xff] %vm3571, %v3461
      %3577 = vst.msk [vmem:[%s208 + $0x28] sm:$0xff] %vm3571, %v3464
      %3578 = vst.msk [vmem:[%s208 + $0x30] sm:$0xff] %vm3571, %v3469
      %3579 = vst.msk [vmem:[%s208 + $0x38] sm:$0xff] %vm3571, %v3472
      %3580 = vst.msk [vmem:[%s208 + $0x40] sm:$0xff] %vm3571, %v3477
      %3581 = vst.msk [vmem:[%s208 + $0x48] sm:$0xff] %vm3571, %v3480
      %3582 = vst.msk [vmem:[%s208 + $0x50] sm:$0xff] %vm3571, %v3485
      %3583 = vst.msk [vmem:[%s208 + $0x58] sm:$0xff] %vm3571, %v3488
      %3584 = vst.msk [vmem:[%s208 + $0x60] sm:$0xff] %vm3571, %v3493
      %3585 = vst.msk [vmem:[%s208 + $0x68] sm:$0xff] %vm3571, %v3496
      %3586 = vst.msk [vmem:[%s208 + $0x70] sm:$0xff] %vm3571, %v3501
      %3587 = vst.msk [vmem:[%s208 + $0x78] sm:$0xff] %vm3571, %v3504
      %3588 = vst.msk [vmem:[%s208 + $0x80] sm:$0xff] %vm3571, %v3509
      %3589 = vst.msk [vmem:[%s208 + $0x88] sm:$0xff] %vm3571, %v3512
      %3590 = vst.msk [vmem:[%s208 + $0x90] sm:$0xff] %vm3571, %v3517
      %3591 = vst.msk [vmem:[%s208 + $0x98] sm:$0xff] %vm3571, %v3520
      %3592 = vst.msk [vmem:[%s208 + $0xa0] sm:$0xff] %vm3571, %v3525
      %3593 = vst.msk [vmem:[%s208 + $0xa8] sm:$0xff] %vm3571, %v3528
      %3594 = vst.msk [vmem:[%s208 + $0xb0] sm:$0xff] %vm3571, %v3533
      %3595 = vst.msk [vmem:[%s208 + $0xb8] sm:$0xff] %vm3571, %v3536
      %3596 = vst.msk [vmem:[%s208 + $0xc0] sm:$0xff] %vm3571, %v3541
      %3597 = vst.msk [vmem:[%s208 + $0xc8] sm:$0xff] %vm3571, %v3544
      %3598 = vst.msk [vmem:[%s208 + $0xd0] sm:$0xff] %vm3571, %v3549
      %3599 = vst.msk [vmem:[%s208 + $0xd8] sm:$0xff] %vm3571, %v3552
      %3600 = vst.msk [vmem:[%s208 + $0xe0] sm:$0xff] %vm3571, %v3557
      %3601 = vst.msk [vmem:[%s208 + $0xe8] sm:$0xff] %vm3571, %v3560
      %3602 = vst.msk [vmem:[%s208 + $0xf0] sm:$0xff] %vm3571, %v3565
      %3603 = vst.msk [vmem:[%s208 + $0xf8] sm:$0xff] %vm3571, %v3568
      %v3604 = vsel %vm3571, %v3445, 0.0
      %v3605 = vsel %vm3571, %v3448, 0.0
      %v3606 = vadd.f32 %v3604, %v3605
      %v3607 = vsel %vm3571, %v3453, 0.0
      %v3608 = vadd.f32 %v3606, %v3607
      %v3609 = vsel %vm3571, %v3456, 0.0
      %v3610 = vadd.f32 %v3608, %v3609
      %v3611 = vsel %vm3571, %v3461, 0.0
      %v3612 = vadd.f32 %v3610, %v3611
      %v3613 = vsel %vm3571, %v3464, 0.0
      %v3614 = vadd.f32 %v3612, %v3613
      %v3615 = vsel %vm3571, %v3469, 0.0
      %v3616 = vadd.f32 %v3614, %v3615
      %v3617 = vsel %vm3571, %v3472, 0.0
      %v3618 = vadd.f32 %v3616, %v3617
      %v3619 = vsel %vm3571, %v3477, 0.0
      %v3620 = vadd.f32 %v3618, %v3619
      %v3621 = vsel %vm3571, %v3480, 0.0
      %v3622 = vadd.f32 %v3620, %v3621
      %v3623 = vsel %vm3571, %v3485, 0.0
      %v3624 = vadd.f32 %v3622, %v3623
      %v3625 = vsel %vm3571, %v3488, 0.0
      %v3626 = vadd.f32 %v3624, %v3625
      %v3627 = vsel %vm3571, %v3493, 0.0
      %v3628 = vadd.f32 %v3626, %v3627
      %v3629 = vsel %vm3571, %v3496, 0.0
      %v3630 = vadd.f32 %v3628, %v3629
      %v3631 = vsel %vm3571, %v3501, 0.0
      %v3632 = vadd.f32 %v3630, %v3631
      %v3633 = vsel %vm3571, %v3504, 0.0
      %v3634 = vadd.f32 %v3632, %v3633
      %v3635 = vsel %vm3571, %v3509, 0.0
      %v3636 = vadd.f32 %v3634, %v3635
      %v3637 = vsel %vm3571, %v3512, 0.0
      %v3638 = vadd.f32 %v3636, %v3637
      %v3639 = vsel %vm3571, %v3517, 0.0
      %v3640 = vadd.f32 %v3638, %v3639
      %v3641 = vsel %vm3571, %v3520, 0.0
      %v3642 = vadd.f32 %v3640, %v3641
      %v3643 = vsel %vm3571, %v3525, 0.0
      %v3644 = vadd.f32 %v3642, %v3643
      %v3645 = vsel %vm3571, %v3528, 0.0
      %v3646 = vadd.f32 %v3644, %v3645
      %v3647 = vsel %vm3571, %v3533, 0.0
      %v3648 = vadd.f32 %v3646, %v3647
      %v3649 = vsel %vm3571, %v3536, 0.0
      %v3650 = vadd.f32 %v3648, %v3649
      %v3651 = vsel %vm3571, %v3541, 0.0
      %v3652 = vadd.f32 %v3650, %v3651
      %v3653 = vsel %vm3571, %v3544, 0.0
      %v3654 = vadd.f32 %v3652, %v3653
      %v3655 = vsel %vm3571, %v3549, 0.0
      %v3656 = vadd.f32 %v3654, %v3655
      %v3657 = vsel %vm3571, %v3552, 0.0
      %v3658 = vadd.f32 %v3656, %v3657
      %v3659 = vsel %vm3571, %v3557, 0.0
      %v3660 = vadd.f32 %v3658, %v3659
      %v3661 = vsel %vm3571, %v3560, 0.0
      %v3662 = vadd.f32 %v3660, %v3661
      %v3663 = vsel %vm3571, %v3565, 0.0
      %v3664 = vadd.f32 %v3662, %v3663
      %v3665 = vsel %vm3571, %v3568, 0.0
      %v3666 = vadd.f32 %v3664, %v3665
      %v3667 = vrot.slane %v3666, 4
      %v3668 = vadd.f32 %v3666, %v3667
      %v3669 = vrot.slane %v3668, 2
      %v3670 = vadd.f32 %v3668, %v3669
      %v3671 = vrot.slane %v3670, 1
      %v3672 = vadd.f32 %v3670, %v3671
      %vm3673 = vcmask 57344
      %3674 = vst.msk [vmem:[%s211] sm:$0x1] %vm3673, %v3672
      %v3675 = vmul.f32 %v3445, %v3445
      %v3676 = vmul.f32 %v3448, %v3448
      %v3677 = vmul.f32 %v3453, %v3453
      %v3678 = vmul.f32 %v3456, %v3456
      %v3679 = vmul.f32 %v3461, %v3461
      %v3680 = vmul.f32 %v3464, %v3464
      %v3681 = vmul.f32 %v3469, %v3469
      %v3682 = vmul.f32 %v3472, %v3472
      %v3683 = vmul.f32 %v3477, %v3477
      %v3684 = vmul.f32 %v3480, %v3480
      %v3685 = vmul.f32 %v3485, %v3485
      %v3686 = vmul.f32 %v3488, %v3488
      %v3687 = vmul.f32 %v3493, %v3493
      %v3688 = vmul.f32 %v3496, %v3496
      %v3689 = vmul.f32 %v3501, %v3501
      %v3690 = vmul.f32 %v3504, %v3504
      %v3691 = vmul.f32 %v3509, %v3509
      %v3692 = vmul.f32 %v3512, %v3512
      %v3693 = vmul.f32 %v3517, %v3517
      %v3694 = vmul.f32 %v3520, %v3520
      %v3695 = vmul.f32 %v3525, %v3525
      %v3696 = vmul.f32 %v3528, %v3528
      %v3697 = vmul.f32 %v3533, %v3533
      %v3698 = vmul.f32 %v3536, %v3536
      %v3699 = vmul.f32 %v3541, %v3541
      %v3700 = vmul.f32 %v3544, %v3544
      %v3701 = vmul.f32 %v3549, %v3549
      %v3702 = vmul.f32 %v3552, %v3552
      %v3703 = vmul.f32 %v3557, %v3557
      %v3704 = vmul.f32 %v3560, %v3560
      %v3705 = vmul.f32 %v3565, %v3565
      %v3706 = vmul.f32 %v3568, %v3568
      %v3707 = vsel %vm3571, %v3675, 0.0
      %v3708 = vsel %vm3571, %v3676, 0.0
      %v3709 = vadd.f32 %v3707, %v3708
      %v3710 = vsel %vm3571, %v3677, 0.0
      %v3711 = vadd.f32 %v3709, %v3710
      %v3712 = vsel %vm3571, %v3678, 0.0
      %v3713 = vadd.f32 %v3711, %v3712
      %v3714 = vsel %vm3571, %v3679, 0.0
      %v3715 = vadd.f32 %v3713, %v3714
      %v3716 = vsel %vm3571, %v3680, 0.0
      %v3717 = vadd.f32 %v3715, %v3716
      %v3718 = vsel %vm3571, %v3681, 0.0
      %v3719 = vadd.f32 %v3717, %v3718
      %v3720 = vsel %vm3571, %v3682, 0.0
      %v3721 = vadd.f32 %v3719, %v3720
      %v3722 = vsel %vm3571, %v3683, 0.0
      %v3723 = vadd.f32 %v3721, %v3722
      %v3724 = vsel %vm3571, %v3684, 0.0
      %v3725 = vadd.f32 %v3723, %v3724
      %v3726 = vsel %vm3571, %v3685, 0.0
      %v3727 = vadd.f32 %v3725, %v3726
      %v3728 = vsel %vm3571, %v3686, 0.0
      %v3729 = vadd.f32 %v3727, %v3728
      %v3730 = vsel %vm3571, %v3687, 0.0
      %v3731 = vadd.f32 %v3729, %v3730
      %v3732 = vsel %vm3571, %v3688, 0.0
      %v3733 = vadd.f32 %v3731, %v3732
      %v3734 = vsel %vm3571, %v3689, 0.0
      %v3735 = vadd.f32 %v3733, %v3734
      %v3736 = vsel %vm3571, %v3690, 0.0
      %v3737 = vadd.f32 %v3735, %v3736
      %v3738 = vsel %vm3571, %v3691, 0.0
      %v3739 = vadd.f32 %v3737, %v3738
      %v3740 = vsel %vm3571, %v3692, 0.0
      %v3741 = vadd.f32 %v3739, %v3740
      %v3742 = vsel %vm3571, %v3693, 0.0
      %v3743 = vadd.f32 %v3741, %v3742
      %v3744 = vsel %vm3571, %v3694, 0.0
      %v3745 = vadd.f32 %v3743, %v3744
      %v3746 = vsel %vm3571, %v3695, 0.0
      %v3747 = vadd.f32 %v3745, %v3746
      %v3748 = vsel %vm3571, %v3696, 0.0
      %v3749 = vadd.f32 %v3747, %v3748
      %v3750 = vsel %vm3571, %v3697, 0.0
      %v3751 = vadd.f32 %v3749, %v3750
      %v3752 = vsel %vm3571, %v3698, 0.0
      %v3753 = vadd.f32 %v3751, %v3752
      %v3754 = vsel %vm3571, %v3699, 0.0
      %v3755 = vadd.f32 %v3753, %v3754
      %v3756 = vsel %vm3571, %v3700, 0.0
      %v3757 = vadd.f32 %v3755, %v3756
      %v3758 = vsel %vm3571, %v3701, 0.0
      %v3759 = vadd.f32 %v3757, %v3758
      %v3760 = vsel %vm3571, %v3702, 0.0
      %v3761 = vadd.f32 %v3759, %v3760
      %v3762 = vsel %vm3571, %v3703, 0.0
      %v3763 = vadd.f32 %v3761, %v3762
      %v3764 = vsel %vm3571, %v3704, 0.0
      %v3765 = vadd.f32 %v3763, %v3764
      %v3766 = vsel %vm3571, %v3705, 0.0
      %v3767 = vadd.f32 %v3765, %v3766
      %v3768 = vsel %vm3571, %v3706, 0.0
      %v3769 = vadd.f32 %v3767, %v3768
      %v3770 = vrot.slane %v3769, 4
      %v3771 = vadd.f32 %v3769, %v3770
      %v3772 = vrot.slane %v3771, 2
      %v3773 = vadd.f32 %v3771, %v3772
      %v3774 = vrot.slane %v3773, 1
      %v3775 = vadd.f32 %v3773, %v3774
      %3776 = vst.msk [vmem:[%s214] sm:$0x1] %vm3673, %v3775
      %p3777 = scmp.lt.s32.totalorder %s16, 1
      %s3778 = scalar_select %p3777, %s16, 1
      %s3779 = smul.addr %s3778, 32
      %s3780 = smul.addr %s3779, 8
      %s3781 = scalar_lea.vmem %s2, %s3780
      %p3782 = scmp.lt.s32.totalorder %s16, 1
      %s3783 = scalar_select %p3782, %s16, 1
      %s3784 = scalar_lea.vmem %s3, %s3783
      %p3785 = scmp.lt.s32.totalorder %s16, 1
      %s3786 = scalar_select %p3785, %s16, 1
      %s3787 = scalar_lea.vmem %s4, %s3786
      // Predicated region
      $region29: #{double_conv.3} parent=27 // pred_check
        %p3788 = pneg %p81
      $region30: #{double_conv.3} parent=27 // pred_check_branch
        %3790 = sbr.rel (%p3788) target = $region32
      $region31: #{double_conv.3} parent=27 // pred_region
        _
      $region32: #{double_conv.3} parent=27 // pred_fallthru
        _
      // Predicated region
      $region33: #{double_conv.3} parent=27 // pred_check
        %p3791 = pneg %p107
      $region34: #{double_conv.3} parent=27 // pred_check_branch
        %3793 = sbr.rel (%p3791) target = $region36
      $region35: #{double_conv.3} parent=27 // pred_region
        _
      $region36: #{double_conv.3} parent=27 // pred_fallthru
        _
      // Predicated region
      $region37: #{double_conv.3} parent=27 // pred_check
        %p3794 = pneg %p133
      $region38: #{double_conv.3} parent=27 // pred_check_branch
        %3796 = sbr.rel (%p3794) target = $region40
      $region39: #{double_conv.3} parent=27 // pred_region
        _
      $region40: #{double_conv.3} parent=27 // pred_fallthru
        _
    $region28: #{double_conv.3} parent=5 // pred_fallthru
      _
    %p3797 = scmp.le.s32.totalorder 2, %s11
    // Predicated region
    $region41: #{double_conv.3} parent=5 // pred_check
      %p3798 = pneg %p3797
    $region42: #{double_conv.3} parent=5 // pred_check_branch
      %3800 = sbr.rel (%p3798) target = $region44
    $region43: #{double_conv.3} parent=5 // pred_region
      %s3801 = ssub.s32 %s11, 2
      // Predicated region
      $region45: #{double_conv.3} parent=43 // pred_check
        %p3802 = pneg %p87
      $region46: #{double_conv.3} parent=43 // pred_check_branch
        %3804 = sbr.rel (%p3802) target = $region48
      $region47: #{double_conv.3} parent=43 // pred_region
        %p3805 = scmp.lt.s32.totalorder %s17, 1
        %s3806 = scalar_select %p3805, %s17, 1
        %s3807 = smul.addr %s3806, 32
        %s3808 = smul.addr %s3807, 8
        %s3809 = scalar_lea.vmem %s2, %s3808
      $region48: #{double_conv.3} parent=43 // pred_fallthru
        _
      // Predicated region
      $region49: #{double_conv.3} parent=43 // pred_check
        %p3810 = pneg %p113
      $region50: #{double_conv.3} parent=43 // pred_check_branch
        %3812 = sbr.rel (%p3810) target = $region52
      $region51: #{double_conv.3} parent=43 // pred_region
        %p3813 = scmp.lt.s32.totalorder %s17, 1
        %s3814 = scalar_select %p3813, %s17, 1
        %s3815 = scalar_lea.vmem %s3, %s3814
      $region52: #{double_conv.3} parent=43 // pred_fallthru
        _
      // Predicated region
      $region53: #{double_conv.3} parent=43 // pred_check
        %p3816 = pneg %p139
      $region54: #{double_conv.3} parent=43 // pred_check_branch
        %3818 = sbr.rel (%p3816) target = $region56
      $region55: #{double_conv.3} parent=43 // pred_region
        %p3819 = scmp.lt.s32.totalorder %s17, 1
        %s3820 = scalar_select %p3819, %s17, 1
        %s3821 = scalar_lea.vmem %s4, %s3820
      $region56: #{double_conv.3} parent=43 // pred_fallthru
        _
    $region44: #{double_conv.3} parent=5 // pred_fallthru
      _
  $region6: #{double_conv.3} parent=0 // loop_footer
    %s15 = sadd.s32 1, %s11
  $region7: #{double_conv.3} parent=0 // loop_footer_branch
    %10 = sbr.rel target = $region3
  $region8: #{double_conv.3} parent=0 // loop_exit
    _

// kernel: double_conv.4
$region0: #{double_conv.4}
  #allocation0 [shape = 'u32[]', space=smem, size = 0x4, offset = 0x4, fixed_abs, tag = 'smem constant byte address 0x4 - core index']
  #allocation1 [shape = 'u32[144,128]{1,0:T(1,128)}', space=vmem, size = 0x12000, scoped, tag = 'internal scratch']
  #allocation2 [shape = 'bf16[18,18,8]{2,1,0:T(8,128)(2,1)}', space=vmem, size = 0x1b000, scoped, tag = 'scratch operand']
  #allocation3 [shape = 'bf16[256,72]{1,0:T(16,128)(2,1)}', space=vmem, size = 0x10000, scoped, tag = 'scratch operand']
  %s0 = inlined_call_operand.vmem [shape: f32[2,256,8], index: 0, kind: input, shape index: {}]
  %s1 = inlined_call_operand.vmem [shape: f32[1,1,8], index: 1, kind: input, shape index: {}]
  %s2 = inlined_call_operand.vmem [shape: f32[1,1,8], index: 2, kind: input, shape index: {}]
  %s3 = inlined_call_operand.vmem [shape: bf16[72,8], index: 3, kind: input, shape index: {}]
  %s4 = inlined_call_operand.vmem [shape: f32[2,256,8], index: 4, kind: output, shape index: {0}]
  %s5 = inlined_call_operand.vmem [shape: f32[2,1,8], index: 5, kind: output, shape index: {1}]
  %s6 = inlined_call_operand.vmem [shape: f32[2,1,8], index: 6, kind: output, shape index: {2}]
  %7 = xla_tuple %s4, %s5, %s6
  %s8 = sld [smem:[#allocation0]]
  $region65: #{double_conv.4} parent=0
    _
  %s10 = ssub.s32 1, %s8
  %s11 = scalar_select 0, %s10, %s8
  loop: start=0, step=1, limit=4
  $region2: #{double_conv.4} parent=0 // loop_pre_header
    _
  $region3: #{double_conv.4} parent=0 // loop_header
    %s13 = sphi 0, %s17
    %p14 = scmp.ge.s32.totalorder %s13, 4
    %s23 = sphi 0, %s25
    %s26 = sphi 0, %s23
    %s27 = sphi 0, %s26
    %s43 = sphi 0, %s27
    %s47 = sphi 0, %s47
    %s49 = sphi 0, %s47
    %s50 = sphi 0, %s49
    %s64 = sphi 0, %s50
    %s68 = sphi 0, %s68
    %s70 = sphi 0, %s68
    %s71 = sphi 0, %s70
    %s85 = sphi 0, %s71
    %s89 = sphi 0, %s89
    %s91 = sphi 0, %s89
    %s92 = sphi 0, %s91
    %s106 = sphi 0, %s92
    %s112 = sphi 0, %s114
    %s115 = sphi 0, %s112
    %s116 = sphi 0, %s115
    %s132 = sphi 0, %s116
    %s138 = sphi 0, %s140
    %s141 = sphi 0, %s138
    %s142 = sphi 0, %s141
    %s158 = sphi 0, %s142
    %s164 = sphi 0, %s166
    %s167 = sphi 0, %s164
    %s168 = sphi 0, %s167
    %s184 = sphi 0, %s168
  $region4: #{double_conv.4} parent=0 // loop_header_branch
    %16 = sbr.rel (%p14) target = $region8
  $region5: #{double_conv.4} parent=0 // loop_body
    %s18 = ssub.s32 %s13, 1
    %s19 = ssub.s32 %s13, 2
    %s20 = sadd.s32 %s13, 1
    %s21 = ssub.s32 %s13, %s20
    %p22 = scmp.eq.s32.totalorder %s21, 0
    %s24 = sadd.s32 %s23, 1
    %s25 = scalar_select %p22, %s23, %s24
    %p28 = pneg %p22
    %p29 = scmp.eq.s32.totalorder %s13, 1
    %p30 = por %p28, %p29
    %p31 = scmp.ne.s32.totalorder %s23, %s26
    %p32 = scmp.eq.s32.totalorder %s13, 0
    %p33 = por %p31, %p32
    %p34 = scmp.ne.s32.totalorder %s23, %s26
    %p35 = scmp.eq.s32.totalorder %s18, 1
    %p36 = por %p34, %p35
    %p37 = scmp.ne.s32.totalorder %s26, %s27
    %p38 = scmp.eq.s32.totalorder %s18, 0
    %p39 = por %p37, %p38
    %p40 = scmp.ne.s32.totalorder %s26, %s27
    %p41 = scmp.eq.s32.totalorder %s19, 1
    %p42 = por %p40, %p41
    %p44 = scmp.ne.s32.totalorder %s27, %s43
    %p45 = scmp.eq.s32.totalorder %s19, 0
    %p46 = por %p44, %p45
    %s48 = sadd.s32 %s47, 1
    %p51 = scmp.eq.s32.totalorder %s13, 1
    %p52 = scmp.ne.s32.totalorder %s47, %s49
    %p53 = scmp.eq.s32.totalorder %s13, 0
    %p54 = por %p52, %p53
    %p55 = scmp.ne.s32.totalorder %s47, %s49
    %p56 = scmp.eq.s32.totalorder %s18, 1
    %p57 = por %p55, %p56
    %p58 = scmp.ne.s32.totalorder %s49, %s50
    %p59 = scmp.eq.s32.totalorder %s18, 0
    %p60 = por %p58, %p59
    %p61 = scmp.ne.s32.totalorder %s49, %s50
    %p62 = scmp.eq.s32.totalorder %s19, 1
    %p63 = por %p61, %p62
    %p65 = scmp.ne.s32.totalorder %s50, %s64
    %p66 = scmp.eq.s32.totalorder %s19, 0
    %p67 = por %p65, %p66
    %s69 = sadd.s32 %s68, 1
    %p72 = scmp.eq.s32.totalorder %s13, 1
    %p73 = scmp.ne.s32.totalorder %s68, %s70
    %p74 = scmp.eq.s32.totalorder %s13, 0
    %p75 = por %p73, %p74
    %p76 = scmp.ne.s32.totalorder %s68, %s70
    %p77 = scmp.eq.s32.totalorder %s18, 1
    %p78 = por %p76, %p77
    %p79 = scmp.ne.s32.totalorder %s70, %s71
    %p80 = scmp.eq.s32.totalorder %s18, 0
    %p81 = por %p79, %p80
    %p82 = scmp.ne.s32.totalorder %s70, %s71
    %p83 = scmp.eq.s32.totalorder %s19, 1
    %p84 = por %p82, %p83
    %p86 = scmp.ne.s32.totalorder %s71, %s85
    %p87 = scmp.eq.s32.totalorder %s19, 0
    %p88 = por %p86, %p87
    %s90 = sadd.s32 %s89, 1
    %p93 = scmp.eq.s32.totalorder %s13, 1
    %p94 = scmp.ne.s32.totalorder %s89, %s91
    %p95 = scmp.eq.s32.totalorder %s13, 0
    %p96 = por %p94, %p95
    %p97 = scmp.ne.s32.totalorder %s89, %s91
    %p98 = scmp.eq.s32.totalorder %s18, 1
    %p99 = por %p97, %p98
    %p100 = scmp.ne.s32.totalorder %s91, %s92
    %p101 = scmp.eq.s32.totalorder %s18, 0
    %p102 = por %p100, %p101
    %p103 = scmp.ne.s32.totalorder %s91, %s92
    %p104 = scmp.eq.s32.totalorder %s19, 1
    %p105 = por %p103, %p104
    %p107 = scmp.ne.s32.totalorder %s92, %s106
    %p108 = scmp.eq.s32.totalorder %s19, 0
    %p109 = por %p107, %p108
    %s110 = ssub.s32 %s13, %s20
    %p111 = scmp.eq.s32.totalorder %s110, 0
    %s113 = sadd.s32 %s112, 1
    %s114 = scalar_select %p111, %s112, %s113
    %p117 = pneg %p111
    %p118 = scmp.eq.s32.totalorder %s13, 1
    %p119 = por %p117, %p118
    %p120 = scmp.ne.s32.totalorder %s112, %s115
    %p121 = scmp.eq.s32.totalorder %s13, 0
    %p122 = por %p120, %p121
    %p123 = scmp.ne.s32.totalorder %s112, %s115
    %p124 = scmp.eq.s32.totalorder %s18, 1
    %p125 = por %p123, %p124
    %p126 = scmp.ne.s32.totalorder %s115, %s116
    %p127 = scmp.eq.s32.totalorder %s18, 0
    %p128 = por %p126, %p127
    %p129 = scmp.ne.s32.totalorder %s115, %s116
    %p130 = scmp.eq.s32.totalorder %s19, 1
    %p131 = por %p129, %p130
    %p133 = scmp.ne.s32.totalorder %s116, %s132
    %p134 = scmp.eq.s32.totalorder %s19, 0
    %p135 = por %p133, %p134
    %s136 = ssub.s32 %s13, %s20
    %p137 = scmp.eq.s32.totalorder %s136, 0
    %s139 = sadd.s32 %s138, 1
    %s140 = scalar_select %p137, %s138, %s139
    %p143 = pneg %p137
    %p144 = scmp.eq.s32.totalorder %s13, 1
    %p145 = por %p143, %p144
    %p146 = scmp.ne.s32.totalorder %s138, %s141
    %p147 = scmp.eq.s32.totalorder %s13, 0
    %p148 = por %p146, %p147
    %p149 = scmp.ne.s32.totalorder %s138, %s141
    %p150 = scmp.eq.s32.totalorder %s18, 1
    %p151 = por %p149, %p150
    %p152 = scmp.ne.s32.totalorder %s141, %s142
    %p153 = scmp.eq.s32.totalorder %s18, 0
    %p154 = por %p152, %p153
    %p155 = scmp.ne.s32.totalorder %s141, %s142
    %p156 = scmp.eq.s32.totalorder %s19, 1
    %p157 = por %p155, %p156
    %p159 = scmp.ne.s32.totalorder %s142, %s158
    %p160 = scmp.eq.s32.totalorder %s19, 0
    %p161 = por %p159, %p160
    %s162 = ssub.s32 %s13, %s20
    %p163 = scmp.eq.s32.totalorder %s162, 0
    %s165 = sadd.s32 %s164, 1
    %s166 = scalar_select %p163, %s164, %s165
    %p169 = pneg %p163
    %p170 = scmp.eq.s32.totalorder %s13, 1
    %p171 = por %p169, %p170
    %p172 = scmp.ne.s32.totalorder %s164, %s167
    %p173 = scmp.eq.s32.totalorder %s13, 0
    %p174 = por %p172, %p173
    %p175 = scmp.ne.s32.totalorder %s164, %s167
    %p176 = scmp.eq.s32.totalorder %s18, 1
    %p177 = por %p175, %p176
    %p178 = scmp.ne.s32.totalorder %s167, %s168
    %p179 = scmp.eq.s32.totalorder %s18, 0
    %p180 = por %p178, %p179
    %p181 = scmp.ne.s32.totalorder %s167, %s168
    %p182 = scmp.eq.s32.totalorder %s19, 1
    %p183 = por %p181, %p182
    %p185 = scmp.ne.s32.totalorder %s168, %s184
    %p186 = scmp.eq.s32.totalorder %s19, 0
    %p187 = por %p185, %p186
    %p188 = scmp.le.s32.totalorder 1, %s13
    %p189 = scmp.lt.s32.totalorder %s13, 3
    %p190 = pnand %p188, %p189
    %p191 = pneg %p190
    // Predicated region
    $region9: #{double_conv.4} parent=5 // pred_check
      _
    $region10: #{double_conv.4} parent=5 // pred_check_branch
      %193 = sbr.rel (%p190) target = $region12
    $region11: #{double_conv.4} parent=5 // pred_region
      %s194 = ssub.s32 %s13, 1
      // Predicated region
      $region13: #{double_conv.4} parent=11 // pred_check
        %p195 = pneg %p60
      $region14: #{double_conv.4} parent=11 // pred_check_branch
        %197 = sbr.rel (%p195) target = $region16
      $region15: #{double_conv.4} parent=11 // pred_region
        _
      $region16: #{double_conv.4} parent=11 // pred_fallthru
        _
      // Predicated region
      $region17: #{double_conv.4} parent=11 // pred_check
        %p198 = pneg %p81
      $region18: #{double_conv.4} parent=11 // pred_check_branch
        %200 = sbr.rel (%p198) target = $region20
      $region19: #{double_conv.4} parent=11 // pred_region
        _
      $region20: #{double_conv.4} parent=11 // pred_fallthru
        _
      // Predicated region
      $region21: #{double_conv.4} parent=11 // pred_check
        %p201 = pneg %p102
      $region22: #{double_conv.4} parent=11 // pred_check_branch
        %203 = sbr.rel (%p201) target = $region24
      $region23: #{double_conv.4} parent=11 // pred_region
        _
      $region24: #{double_conv.4} parent=11 // pred_fallthru
        _
    $region12: #{double_conv.4} parent=5 // pred_fallthru
      _
    %p204 = scmp.lt.s32.totalorder %s13, 2
    // Predicated region
    $region25: #{double_conv.4} parent=5 // pred_check
      %p205 = pneg %p204
    $region26: #{double_conv.4} parent=5 // pred_check_branch
      %207 = sbr.rel (%p205) target = $region28
    $region27: #{double_conv.4} parent=5 // pred_region
      // Predicated region
      $region29: #{double_conv.4} parent=27 // pred_check
        %p208 = pneg %p33
      $region30: #{double_conv.4} parent=27 // pred_check_branch
        %210 = sbr.rel (%p208) target = $region32
      $region31: #{double_conv.4} parent=27 // pred_region
        %p211 = scmp.lt.s32.totalorder %s13, 1
        %s212 = scalar_select %p211, %s13, 1
        %s213 = smul.addr %s212, 32
        %s214 = smul.addr %s213, 8
        %s215 = scalar_lea.vmem %s0, %s214
      $region32: #{double_conv.4} parent=27 // pred_fallthru
        _
    $region28: #{double_conv.4} parent=5 // pred_fallthru
      _
    %p216 = scmp.le.s32.totalorder 1, %s13
    %p217 = scmp.lt.s32.totalorder %s13, 3
    %p218 = pnand %p216, %p217
    %p219 = pneg %p218
    // Predicated region
    $region33: #{double_conv.4} parent=5 // pred_check
      _
    $region34: #{double_conv.4} parent=5 // pred_check_branch
      %221 = sbr.rel (%p218) target = $region36
    $region35: #{double_conv.4} parent=5 // pred_region
      %s222 = ssub.s32 %s13, 1
      %p223 = scmp.lt.s32.totalorder %s18, 1
      %s224 = scalar_select %p223, %s18, 1
      %s225 = smul.addr %s224, 32
      %s226 = smul.addr %s225, 8
      %s227 = scalar_lea.vmem %s0, %s226
      %p228 = pneg %p39
      %p229 = pneg %p36
      %p230 = pneg %p60
      %p231 = pneg %p57
      %p232 = pneg %p81
      %p233 = pneg %p78
      %p234 = pneg %p102
      %p235 = pneg %p99
      %p236 = pneg %p128
      %p237 = pneg %p125
      %p238 = scmp.lt.s32.totalorder %s18, 1
      %s239 = scalar_select %p238, %s18, 1
      %s240 = smul.addr %s239, 32
      %s241 = smul.addr %s240, 8
      %s242 = scalar_lea.vmem %s4, %s241
      %p243 = pneg %p154
      %p244 = pneg %p151
      %p245 = scmp.lt.s32.totalorder %s18, 1
      %s246 = scalar_select %p245, %s18, 1
      %s247 = scalar_lea.vmem %s5, %s246
      %p248 = pneg %p180
      %p249 = pneg %p177
      %p250 = scmp.lt.s32.totalorder %s18, 1
      %s251 = scalar_select %p250, %s18, 1
      %s252 = scalar_lea.vmem %s6, %s251
      %p253 = scmp.lt.s32.totalorder %s18, 1
      %s254 = scalar_select %p253, %s18, 1
      %s255 = smul.addr %s254, 32
      %s256 = smul.addr %s255, 8
      %s257 = scalar_lea.vmem %s0, %s256
      %p258 = scmp.lt.s32.totalorder %s18, 1
      %s259 = scalar_select %p258, %s18, 1
      %s260 = smul.addr %s259, 32
      %s261 = smul.addr %s260, 8
      %s262 = scalar_lea.vmem %s4, %s261
      %p263 = scmp.lt.s32.totalorder %s18, 1
      %s264 = scalar_select %p263, %s18, 1
      %s265 = scalar_lea.vmem %s5, %s264
      %p266 = scmp.lt.s32.totalorder %s18, 1
      %s267 = scalar_select %p266, %s18, 1
      %s268 = scalar_lea.vmem %s6, %s267
      %v270 = vld [vmem:[%s257] sm:$0xff]
      %v271 = vld [vmem:[%s257 + $0x8] sm:$0xff]
      %v272 = vld [vmem:[%s257 + $0x10] sm:$0xff]
      %v273 = vld [vmem:[%s257 + $0x18] sm:$0xff]
      %v274 = vld [vmem:[%s257 + $0x20] sm:$0xff]
      %v275 = vld [vmem:[%s257 + $0x28] sm:$0xff]
      %v276 = vld [vmem:[%s257 + $0x30] sm:$0xff]
      %v277 = vld [vmem:[%s257 + $0x38] sm:$0xff]
      %v278 = vld [vmem:[%s257 + $0x40] sm:$0xff]
      %v279 = vld [vmem:[%s257 + $0x48] sm:$0xff]
      %v280 = vld [vmem:[%s257 + $0x50] sm:$0xff]
      %v281 = vld [vmem:[%s257 + $0x58] sm:$0xff]
      %v282 = vld [vmem:[%s257 + $0x60] sm:$0xff]
      %v283 = vld [vmem:[%s257 + $0x68] sm:$0xff]
      %v284 = vld [vmem:[%s257 + $0x70] sm:$0xff]
      %v285 = vld [vmem:[%s257 + $0x78] sm:$0xff]
      %v286 = vld [vmem:[%s257 + $0x80] sm:$0xff]
      %v287 = vld [vmem:[%s257 + $0x88] sm:$0xff]
      %v288 = vld [vmem:[%s257 + $0x90] sm:$0xff]
      %v289 = vld [vmem:[%s257 + $0x98] sm:$0xff]
      %v290 = vld [vmem:[%s257 + $0xa0] sm:$0xff]
      %v291 = vld [vmem:[%s257 + $0xa8] sm:$0xff]
      %v292 = vld [vmem:[%s257 + $0xb0] sm:$0xff]
      %v293 = vld [vmem:[%s257 + $0xb8] sm:$0xff]
      %v294 = vld [vmem:[%s257 + $0xc0] sm:$0xff]
      %v295 = vld [vmem:[%s257 + $0xc8] sm:$0xff]
      %v296 = vld [vmem:[%s257 + $0xd0] sm:$0xff]
      %v297 = vld [vmem:[%s257 + $0xd8] sm:$0xff]
      %v298 = vld [vmem:[%s257 + $0xe0] sm:$0xff]
      %v299 = vld [vmem:[%s257 + $0xe8] sm:$0xff]
      %v300 = vld [vmem:[%s257 + $0xf0] sm:$0xff]
      %v301 = vld [vmem:[%s257 + $0xf8] sm:$0xff]
      %v302 = vld [vmem:[%s1] sm:$0x1]
      %v304 = vlaneseq
      %v305 = vshrl.u32 %v304, 7
      %v306 = vsub.s32 0, %v305
      %v307 = vrot.slane %v302, %v306
      %v309 = vmul.f32 %v270, %v307
      %v310 = vmul.f32 %v271, %v307
      %v311 = vmul.f32 %v272, %v307
      %v312 = vmul.f32 %v273, %v307
      %v313 = vmul.f32 %v274, %v307
      %v314 = vmul.f32 %v275, %v307
      %v315 = vmul.f32 %v276, %v307
      %v316 = vmul.f32 %v277, %v307
      %v317 = vmul.f32 %v278, %v307
      %v318 = vmul.f32 %v279, %v307
      %v319 = vmul.f32 %v280, %v307
      %v320 = vmul.f32 %v281, %v307
      %v321 = vmul.f32 %v282, %v307
      %v322 = vmul.f32 %v283, %v307
      %v323 = vmul.f32 %v284, %v307
      %v324 = vmul.f32 %v285, %v307
      %v325 = vmul.f32 %v286, %v307
      %v326 = vmul.f32 %v287, %v307
      %v327 = vmul.f32 %v288, %v307
      %v328 = vmul.f32 %v289, %v307
      %v329 = vmul.f32 %v290, %v307
      %v330 = vmul.f32 %v291, %v307
      %v331 = vmul.f32 %v292, %v307
      %v332 = vmul.f32 %v293, %v307
      %v333 = vmul.f32 %v294, %v307
      %v334 = vmul.f32 %v295, %v307
      %v335 = vmul.f32 %v296, %v307
      %v336 = vmul.f32 %v297, %v307
      %v337 = vmul.f32 %v298, %v307
      %v338 = vmul.f32 %v299, %v307
      %v339 = vmul.f32 %v300, %v307
      %v340 = vmul.f32 %v301, %v307
      %v341 = vld [vmem:[%s2] sm:$0x1]
      %v343 = vlaneseq
      %v344 = vshrl.u32 %v343, 7
      %v345 = vsub.s32 0, %v344
      %v346 = vrot.slane %v341, %v345
      %v348 = vadd.f32 %v309, %v346
      %v349 = vadd.f32 %v310, %v346
      %v350 = vadd.f32 %v311, %v346
      %v351 = vadd.f32 %v312, %v346
      %v352 = vadd.f32 %v313, %v346
      %v353 = vadd.f32 %v314, %v346
      %v354 = vadd.f32 %v315, %v346
      %v355 = vadd.f32 %v316, %v346
      %v356 = vadd.f32 %v317, %v346
      %v357 = vadd.f32 %v318, %v346
      %v358 = vadd.f32 %v319, %v346
      %v359 = vadd.f32 %v320, %v346
      %v360 = vadd.f32 %v321, %v346
      %v361 = vadd.f32 %v322, %v346
      %v362 = vadd.f32 %v323, %v346
      %v363 = vadd.f32 %v324, %v346
      %v364 = vadd.f32 %v325, %v346
      %v365 = vadd.f32 %v326, %v346
      %v366 = vadd.f32 %v327, %v346
      %v367 = vadd.f32 %v328, %v346
      %v368 = vadd.f32 %v329, %v346
      %v369 = vadd.f32 %v330, %v346
      %v370 = vadd.f32 %v331, %v346
      %v371 = vadd.f32 %v332, %v346
      %v372 = vadd.f32 %v333, %v346
      %v373 = vadd.f32 %v334, %v346
      %v374 = vadd.f32 %v335, %v346
      %v375 = vadd.f32 %v336, %v346
      %v376 = vadd.f32 %v337, %v346
      %v377 = vadd.f32 %v338, %v346
      %v378 = vadd.f32 %v339, %v346
      %v379 = vadd.f32 %v340, %v346
      %v380 = vmax.f32 %v348, 0.0
      %v381 = vmax.f32 %v349, 0.0
      %v382 = vmax.f32 %v350, 0.0
      %v383 = vmax.f32 %v351, 0.0
      %v384 = vmax.f32 %v352, 0.0
      %v385 = vmax.f32 %v353, 0.0
      %v386 = vmax.f32 %v354, 0.0
      %v387 = vmax.f32 %v355, 0.0
      %v388 = vmax.f32 %v356, 0.0
      %v389 = vmax.f32 %v357, 0.0
      %v390 = vmax.f32 %v358, 0.0
      %v391 = vmax.f32 %v359, 0.0
      %v392 = vmax.f32 %v360, 0.0
      %v393 = vmax.f32 %v361, 0.0
      %v394 = vmax.f32 %v362, 0.0
      %v395 = vmax.f32 %v363, 0.0
      %v396 = vmax.f32 %v364, 0.0
      %v397 = vmax.f32 %v365, 0.0
      %v398 = vmax.f32 %v366, 0.0
      %v399 = vmax.f32 %v367, 0.0
      %v400 = vmax.f32 %v368, 0.0
      %v401 = vmax.f32 %v369, 0.0
      %v402 = vmax.f32 %v370, 0.0
      %v403 = vmax.f32 %v371, 0.0
      %v404 = vmax.f32 %v372, 0.0
      %v405 = vmax.f32 %v373, 0.0
      %v406 = vmax.f32 %v374, 0.0
      %v407 = vmax.f32 %v375, 0.0
      %v408 = vmax.f32 %v376, 0.0
      %v409 = vmax.f32 %v377, 0.0
      %v410 = vmax.f32 %v378, 0.0
      %v411 = vmax.f32 %v379, 0.0
      %v412 = vpack.c.bf16 %v381, %v380
      %v413 = vpack.c.bf16 %v383, %v382
      %v414 = vpack.c.bf16 %v385, %v384
      %v415 = vpack.c.bf16 %v387, %v386
      %v416 = vpack.c.bf16 %v389, %v388
      %v417 = vpack.c.bf16 %v391, %v390
      %v418 = vpack.c.bf16 %v393, %v392
      %v419 = vpack.c.bf16 %v395, %v394
      %v420 = vpack.c.bf16 %v397, %v396
      %v421 = vpack.c.bf16 %v399, %v398
      %v422 = vpack.c.bf16 %v401, %v400
      %v423 = vpack.c.bf16 %v403, %v402
      %v424 = vpack.c.bf16 %v405, %v404
      %v425 = vpack.c.bf16 %v407, %v406
      %v426 = vpack.c.bf16 %v409, %v408
      %v427 = vpack.c.bf16 %v411, %v410
      %vm428 = vcmask 60416
      %429 = vst.msk [vmem:[#allocation2] sm:$0xf] %vm428, 0
      %430 = vst.msk [vmem:[#allocation2 + $0x4] sm:$0xf] %vm428, 0
      %vm431 = vcmask 57344
      %432 = vst.msk [vmem:[#allocation2 + $0x8] sm:$0x1] %vm431, 0
      %s433 = scalar_lea.vmem [#allocation2], 204
      %434 = vst.msk [vmem:[%s433] sm:$0xf] %vm428, 0
      %435 = vst.msk [vmem:[%s433 + $0x4] sm:$0xf] %vm428, 0
      %436 = vst.msk [vmem:[%s433 + $0x8] sm:$0x1] %vm431, 0
      %s437 = scalar_lea.vmem [#allocation2], 12
      %vm438 = vcmask 57344
      %vm439 = vsmask.f32 256
      %vm440 = vmand %vm438, %vm439
      %v441 = vld [vmem:[%s437] sm:$0x1]
      %v442 = vsel %vm440, 0, %v441
      %443 = vst [vmem:[%s437] sm:$0x1] %v442
      %v444 = vld [vmem:[%s437 + $0xc] sm:$0x1]
      %v445 = vsel %vm440, 0, %v444
      %446 = vst [vmem:[%s437 + $0xc] sm:$0x1] %v445
      %v447 = vld [vmem:[%s437 + $0x18] sm:$0x1]
      %v448 = vsel %vm440, 0, %v447
      %449 = vst [vmem:[%s437 + $0x18] sm:$0x1] %v448
      %v450 = vld [vmem:[%s437 + $0x24] sm:$0x1]
      %v451 = vsel %vm440, 0, %v450
      %452 = vst [vmem:[%s437 + $0x24] sm:$0x1] %v451
      %v453 = vld [vmem:[%s437 + $0x30] sm:$0x1]
      %v454 = vsel %vm440, 0, %v453
      %455 = vst [vmem:[%s437 + $0x30] sm:$0x1] %v454
      %v456 = vld [vmem:[%s437 + $0x3c] sm:$0x1]
      %v457 = vsel %vm440, 0, %v456
      %458 = vst [vmem:[%s437 + $0x3c] sm:$0x1] %v457
      %v459 = vld [vmem:[%s437 + $0x48] sm:$0x1]
      %v460 = vsel %vm440, 0, %v459
      %461 = vst [vmem:[%s437 + $0x48] sm:$0x1] %v460
      %v462 = vld [vmem:[%s437 + $0x54] sm:$0x1]
      %v463 = vsel %vm440, 0, %v462
      %464 = vst [vmem:[%s437 + $0x54] sm:$0x1] %v463
      %v465 = vld [vmem:[%s437 + $0x60] sm:$0x1]
      %v466 = vsel %vm440, 0, %v465
      %467 = vst [vmem:[%s437 + $0x60] sm:$0x1] %v466
      %v468 = vld [vmem:[%s437 + $0x6c] sm:$0x1]
      %v469 = vsel %vm440, 0, %v468
      %470 = vst [vmem:[%s437 + $0x6c] sm:$0x1] %v469
      %v471 = vld [vmem:[%s437 + $0x78] sm:$0x1]
      %v472 = vsel %vm440, 0, %v471
      %473 = vst [vmem:[%s437 + $0x78] sm:$0x1] %v472
      %v474 = vld [vmem:[%s437 + $0x84] sm:$0x1]
      %v475 = vsel %vm440, 0, %v474
      %476 = vst [vmem:[%s437 + $0x84] sm:$0x1] %v475
      %v477 = vld [vmem:[%s437 + $0x90] sm:$0x1]
      %v478 = vsel %vm440, 0, %v477
      %479 = vst [vmem:[%s437 + $0x90] sm:$0x1] %v478
      %v480 = vld [vmem:[%s437 + $0x9c] sm:$0x1]
      %v481 = vsel %vm440, 0, %v480
      %482 = vst [vmem:[%s437 + $0x9c] sm:$0x1] %v481
      %v483 = vld [vmem:[%s437 + $0xa8] sm:$0x1]
      %v484 = vsel %vm440, 0, %v483
      %485 = vst [vmem:[%s437 + $0xa8] sm:$0x1] %v484
      %v486 = vld [vmem:[%s437 + $0xb4] sm:$0x1]
      %v487 = vsel %vm440, 0, %v486
      %488 = vst [vmem:[%s437 + $0xb4] sm:$0x1] %v487
      %vm489 = vsmask.f32 7938
      %vm490 = vmand %vm438, %vm489
      %v491 = vld [vmem:[%s437 + $0x8] sm:$0x1]
      %v492 = vsel %vm490, 0, %v491
      %493 = vst [vmem:[%s437 + $0x8] sm:$0x1] %v492
      %v494 = vld [vmem:[%s437 + $0x14] sm:$0x1]
      %v495 = vsel %vm490, 0, %v494
      %496 = vst [vmem:[%s437 + $0x14] sm:$0x1] %v495
      %v497 = vld [vmem:[%s437 + $0x20] sm:$0x1]
      %v498 = vsel %vm490, 0, %v497
      %499 = vst [vmem:[%s437 + $0x20] sm:$0x1] %v498
      %v500 = vld [vmem:[%s437 + $0x2c] sm:$0x1]
      %v501 = vsel %vm490, 0, %v500
      %502 = vst [vmem:[%s437 + $0x2c] sm:$0x1] %v501
      %v503 = vld [vmem:[%s437 + $0x38] sm:$0x1]
      %v504 = vsel %vm490, 0, %v503
      %505 = vst [vmem:[%s437 + $0x38] sm:$0x1] %v504
      %v506 = vld [vmem:[%s437 + $0x44] sm:$0x1]
      %v507 = vsel %vm490, 0, %v506
      %508 = vst [vmem:[%s437 + $0x44] sm:$0x1] %v507
      %v509 = vld [vmem:[%s437 + $0x50] sm:$0x1]
      %v510 = vsel %vm490, 0, %v509
      %511 = vst [vmem:[%s437 + $0x50] sm:$0x1] %v510
      %v512 = vld [vmem:[%s437 + $0x5c] sm:$0x1]
      %v513 = vsel %vm490, 0, %v512
      %514 = vst [vmem:[%s437 + $0x5c] sm:$0x1] %v513
      %v515 = vld [vmem:[%s437 + $0x68] sm:$0x1]
      %v516 = vsel %vm490, 0, %v515
      %517 = vst [vmem:[%s437 + $0x68] sm:$0x1] %v516
      %v518 = vld [vmem:[%s437 + $0x74] sm:$0x1]
      %v519 = vsel %vm490, 0, %v518
      %520 = vst [vmem:[%s437 + $0x74] sm:$0x1] %v519
      %v521 = vld [vmem:[%s437 + $0x80] sm:$0x1]
      %v522 = vsel %vm490, 0, %v521
      %523 = vst [vmem:[%s437 + $0x80] sm:$0x1] %v522
      %v524 = vld [vmem:[%s437 + $0x8c] sm:$0x1]
      %v525 = vsel %vm490, 0, %v524
      %526 = vst [vmem:[%s437 + $0x8c] sm:$0x1] %v525
      %v527 = vld [vmem:[%s437 + $0x98] sm:$0x1]
      %v528 = vsel %vm490, 0, %v527
      %529 = vst [vmem:[%s437 + $0x98] sm:$0x1] %v528
      %v530 = vld [vmem:[%s437 + $0xa4] sm:$0x1]
      %v531 = vsel %vm490, 0, %v530
      %532 = vst [vmem:[%s437 + $0xa4] sm:$0x1] %v531
      %v533 = vld [vmem:[%s437 + $0xb0] sm:$0x1]
      %v534 = vsel %vm490, 0, %v533
      %535 = vst [vmem:[%s437 + $0xb0] sm:$0x1] %v534
      %v536 = vld [vmem:[%s437 + $0xbc] sm:$0x1]
      %v537 = vsel %vm490, 0, %v536
      %538 = vst [vmem:[%s437 + $0xbc] sm:$0x1] %v537
      %v555 = vunpack.c.l.b16 %v412
      %v556 = vunpack.c.h.b16 %v412
      %v557 = vunpack.c.l.b16 %v413
      %v558 = vunpack.c.h.b16 %v413
      %v559 = vunpack.c.l.b16 %v414
      %v560 = vunpack.c.h.b16 %v414
      %v561 = vunpack.c.l.b16 %v415
      %v562 = vunpack.c.h.b16 %v415
      %v563 = vunpack.c.l.b16 %v416
      %v564 = vunpack.c.h.b16 %v416
      %v565 = vunpack.c.l.b16 %v417
      %v566 = vunpack.c.h.b16 %v417
      %v567 = vunpack.c.l.b16 %v418
      %v568 = vunpack.c.h.b16 %v418
      %v569 = vunpack.c.l.b16 %v419
      %v570 = vunpack.c.h.b16 %v419
      %v571 = vunpack.c.l.b16 %v420
      %v572 = vunpack.c.h.b16 %v420
      %v573 = vunpack.c.l.b16 %v421
      %v574 = vunpack.c.h.b16 %v421
      %v575 = vunpack.c.l.b16 %v422
      %v576 = vunpack.c.h.b16 %v422
      %v577 = vunpack.c.l.b16 %v423
      %v578 = vunpack.c.h.b16 %v423
      %v579 = vunpack.c.l.b16 %v424
      %v580 = vunpack.c.h.b16 %v424
      %v581 = vunpack.c.l.b16 %v425
      %v582 = vunpack.c.h.b16 %v425
      %v583 = vunpack.c.l.b16 %v426
      %v584 = vunpack.c.h.b16 %v426
      %v585 = vunpack.c.l.b16 %v427
      %v586 = vunpack.c.h.b16 %v427
      %v587 = vpack.c.b16 %v555, %v555
      %v588 = vpack.c.b16 %v556, %v556
      %v589 = vpack.c.b16 %v557, %v557
      %v590 = vpack.c.b16 %v558, %v558
      %v591 = vpack.c.b16 %v559, %v559
      %v592 = vpack.c.b16 %v560, %v560
      %v593 = vpack.c.b16 %v561, %v561
      %v594 = vpack.c.b16 %v562, %v562
      %v595 = vpack.c.b16 %v563, %v563
      %v596 = vpack.c.b16 %v564, %v564
      %v597 = vpack.c.b16 %v565, %v565
      %v598 = vpack.c.b16 %v566, %v566
      %v599 = vpack.c.b16 %v567, %v567
      %v600 = vpack.c.b16 %v568, %v568
      %v601 = vpack.c.b16 %v569, %v569
      %v602 = vpack.c.b16 %v570, %v570
      %v603 = vpack.c.b16 %v571, %v571
      %v604 = vpack.c.b16 %v572, %v572
      %v605 = vpack.c.b16 %v573, %v573
      %v606 = vpack.c.b16 %v574, %v574
      %v607 = vpack.c.b16 %v575, %v575
      %v608 = vpack.c.b16 %v576, %v576
      %v609 = vpack.c.b16 %v577, %v577
      %v610 = vpack.c.b16 %v578, %v578
      %v611 = vpack.c.b16 %v579, %v579
      %v612 = vpack.c.b16 %v580, %v580
      %v613 = vpack.c.b16 %v581, %v581
      %v614 = vpack.c.b16 %v582, %v582
      %v615 = vpack.c.b16 %v583, %v583
      %v616 = vpack.c.b16 %v584, %v584
      %v617 = vpack.c.b16 %v585, %v585
      %v618 = vpack.c.b16 %v586, %v586
      %vm619 = vsmask.f32 4368
      %vm620 = vmor %vm439, %vm619
      %v622 = vshrl.u32 %v587, 16
      %v624 = vrot.slane %v622, 7
      %v625 = vshll.u32 %v587, 16
      %v627 = vor.u32 %v624, %v625
      %v628 = vrot.slane %v624, 4
      %v630 = vshrl.u32 %v588, 16
      %v632 = vrot.slane %v630, 7
      %v633 = vshll.u32 %v588, 16
      %v635 = vor.u32 %v632, %v633
      %v636 = vsel %vm620, %v628, %v635
      %v637 = vrot.slane %v632, 4
      %v639 = vshrl.u32 %v589, 16
      %v641 = vrot.slane %v639, 7
      %v642 = vshll.u32 %v589, 16
      %v644 = vor.u32 %v641, %v642
      %v645 = vrot.slane %v641, 4
      %v647 = vshrl.u32 %v590, 16
      %v649 = vrot.slane %v647, 7
      %v650 = vshll.u32 %v590, 16
      %v652 = vor.u32 %v649, %v650
      %v653 = vsel %vm620, %v645, %v652
      %v654 = vrot.slane %v649, 4
      %v656 = vshrl.u32 %v591, 16
      %v658 = vrot.slane %v656, 7
      %v659 = vshll.u32 %v591, 16
      %v661 = vor.u32 %v658, %v659
      %v662 = vrot.slane %v658, 4
      %v664 = vshrl.u32 %v592, 16
      %v666 = vrot.slane %v664, 7
      %v667 = vshll.u32 %v592, 16
      %v669 = vor.u32 %v666, %v667
      %v670 = vsel %vm620, %v662, %v669
      %v671 = vrot.slane %v666, 4
      %v673 = vshrl.u32 %v593, 16
      %v675 = vrot.slane %v673, 7
      %v676 = vshll.u32 %v593, 16
      %v678 = vor.u32 %v675, %v676
      %v679 = vrot.slane %v675, 4
      %v681 = vshrl.u32 %v594, 16
      %v683 = vrot.slane %v681, 7
      %v684 = vshll.u32 %v594, 16
      %v686 = vor.u32 %v683, %v684
      %v687 = vsel %vm620, %v679, %v686
      %v688 = vrot.slane %v683, 4
      %v690 = vshrl.u32 %v595, 16
      %v692 = vrot.slane %v690, 7
      %v693 = vshll.u32 %v595, 16
      %v695 = vor.u32 %v692, %v693
      %v696 = vrot.slane %v692, 4
      %v698 = vshrl.u32 %v596, 16
      %v700 = vrot.slane %v698, 7
      %v701 = vshll.u32 %v596, 16
      %v703 = vor.u32 %v700, %v701
      %v704 = vsel %vm620, %v696, %v703
      %v705 = vrot.slane %v700, 4
      %v707 = vshrl.u32 %v597, 16
      %v709 = vrot.slane %v707, 7
      %v710 = vshll.u32 %v597, 16
      %v712 = vor.u32 %v709, %v710
      %v713 = vrot.slane %v709, 4
      %v715 = vshrl.u32 %v598, 16
      %v717 = vrot.slane %v715, 7
      %v718 = vshll.u32 %v598, 16
      %v720 = vor.u32 %v717, %v718
      %v721 = vsel %vm620, %v713, %v720
      %v722 = vrot.slane %v717, 4
      %v724 = vshrl.u32 %v599, 16
      %v726 = vrot.slane %v724, 7
      %v727 = vshll.u32 %v599, 16
      %v729 = vor.u32 %v726, %v727
      %v730 = vrot.slane %v726, 4
      %v732 = vshrl.u32 %v600, 16
      %v734 = vrot.slane %v732, 7
      %v735 = vshll.u32 %v600, 16
      %v737 = vor.u32 %v734, %v735
      %v738 = vsel %vm620, %v730, %v737
      %v739 = vrot.slane %v734, 4
      %v741 = vshrl.u32 %v601, 16
      %v743 = vrot.slane %v741, 7
      %v744 = vshll.u32 %v601, 16
      %v746 = vor.u32 %v743, %v744
      %v747 = vrot.slane %v743, 4
      %v749 = vshrl.u32 %v602, 16
      %v751 = vrot.slane %v749, 7
      %v752 = vshll.u32 %v602, 16
      %v754 = vor.u32 %v751, %v752
      %v755 = vsel %vm620, %v747, %v754
      %v756 = vrot.slane %v751, 4
      %v758 = vshrl.u32 %v603, 16
      %v760 = vrot.slane %v758, 7
      %v761 = vshll.u32 %v603, 16
      %v763 = vor.u32 %v760, %v761
      %v764 = vrot.slane %v760, 4
      %v766 = vshrl.u32 %v604, 16
      %v768 = vrot.slane %v766, 7
      %v769 = vshll.u32 %v604, 16
      %v771 = vor.u32 %v768, %v769
      %v772 = vsel %vm620, %v764, %v771
      %v773 = vrot.slane %v768, 4
      %v775 = vshrl.u32 %v605, 16
      %v777 = vrot.slane %v775, 7
      %v778 = vshll.u32 %v605, 16
      %v780 = vor.u32 %v777, %v778
      %v781 = vrot.slane %v777, 4
      %v783 = vshrl.u32 %v606, 16
      %v785 = vrot.slane %v783, 7
      %v786 = vshll.u32 %v606, 16
      %v788 = vor.u32 %v785, %v786
      %v789 = vsel %vm620, %v781, %v788
      %v790 = vrot.slane %v785, 4
      %v792 = vshrl.u32 %v607, 16
      %v794 = vrot.slane %v792, 7
      %v795 = vshll.u32 %v607, 16
      %v797 = vor.u32 %v794, %v795
      %v798 = vrot.slane %v794, 4
      %v800 = vshrl.u32 %v608, 16
      %v802 = vrot.slane %v800, 7
      %v803 = vshll.u32 %v608, 16
      %v805 = vor.u32 %v802, %v803
      %v806 = vsel %vm620, %v798, %v805
      %v807 = vrot.slane %v802, 4
      %v809 = vshrl.u32 %v609, 16
      %v811 = vrot.slane %v809, 7
      %v812 = vshll.u32 %v609, 16
      %v814 = vor.u32 %v811, %v812
      %v815 = vrot.slane %v811, 4
      %v817 = vshrl.u32 %v610, 16
      %v819 = vrot.slane %v817, 7
      %v820 = vshll.u32 %v610, 16
      %v822 = vor.u32 %v819, %v820
      %v823 = vsel %vm620, %v815, %v822
      %v824 = vrot.slane %v819, 4
      %v826 = vshrl.u32 %v611, 16
      %v828 = vrot.slane %v826, 7
      %v829 = vshll.u32 %v611, 16
      %v831 = vor.u32 %v828, %v829
      %v832 = vrot.slane %v828, 4
      %v834 = vshrl.u32 %v612, 16
      %v836 = vrot.slane %v834, 7
      %v837 = vshll.u32 %v612, 16
      %v839 = vor.u32 %v836, %v837
      %v840 = vsel %vm620, %v832, %v839
      %v841 = vrot.slane %v836, 4
      %v843 = vshrl.u32 %v613, 16
      %v845 = vrot.slane %v843, 7
      %v846 = vshll.u32 %v613, 16
      %v848 = vor.u32 %v845, %v846
      %v849 = vrot.slane %v845, 4
      %v851 = vshrl.u32 %v614, 16
      %v853 = vrot.slane %v851, 7
      %v854 = vshll.u32 %v614, 16
      %v856 = vor.u32 %v853, %v854
      %v857 = vsel %vm620, %v849, %v856
      %v858 = vrot.slane %v853, 4
      %v860 = vshrl.u32 %v615, 16
      %v862 = vrot.slane %v860, 7
      %v863 = vshll.u32 %v615, 16
      %v865 = vor.u32 %v862, %v863
      %v866 = vrot.slane %v862, 4
      %v868 = vshrl.u32 %v616, 16
      %v870 = vrot.slane %v868, 7
      %v871 = vshll.u32 %v616, 16
      %v873 = vor.u32 %v870, %v871
      %v874 = vsel %vm620, %v866, %v873
      %v875 = vrot.slane %v870, 4
      %v877 = vshrl.u32 %v617, 16
      %v879 = vrot.slane %v877, 7
      %v880 = vshll.u32 %v617, 16
      %v882 = vor.u32 %v879, %v880
      %v883 = vrot.slane %v879, 4
      %v885 = vshrl.u32 %v618, 16
      %v887 = vrot.slane %v885, 7
      %v888 = vshll.u32 %v618, 16
      %v890 = vor.u32 %v887, %v888
      %v891 = vsel %vm620, %v883, %v890
      %v892 = vrot.slane %v887, 4
      %vm941 = vcmask 60416
      %vm942 = vmand %vm941, %vm489
      %v943 = vld [vmem:[%s437] sm:$0xf]
      %v944 = vsel %vm942, %v627, %v943
      %945 = vst [vmem:[%s437] sm:$0xf] %v944
      %946 = vst.msk [vmem:[%s437 + $0x4] sm:$0xf] %vm428, %v636
      %v947 = vld [vmem:[%s437 + $0x8] sm:$0x1]
      %v948 = vsel %vm440, %v637, %v947
      %949 = vst [vmem:[%s437 + $0x8] sm:$0x1] %v948
      %v950 = vld [vmem:[%s437 + $0xc] sm:$0xf]
      %v951 = vsel %vm942, %v644, %v950
      %952 = vst [vmem:[%s437 + $0xc] sm:$0xf] %v951
      %953 = vst.msk [vmem:[%s437 + $0x10] sm:$0xf] %vm428, %v653
      %v954 = vld [vmem:[%s437 + $0x14] sm:$0x1]
      %v955 = vsel %vm440, %v654, %v954
      %956 = vst [vmem:[%s437 + $0x14] sm:$0x1] %v955
      %v957 = vld [vmem:[%s437 + $0x18] sm:$0xf]
      %v958 = vsel %vm942, %v661, %v957
      %959 = vst [vmem:[%s437 + $0x18] sm:$0xf] %v958
      %960 = vst.msk [vmem:[%s437 + $0x1c] sm:$0xf] %vm428, %v670
      %v961 = vld [vmem:[%s437 + $0x20] sm:$0x1]
      %v962 = vsel %vm440, %v671, %v961
      %963 = vst [vmem:[%s437 + $0x20] sm:$0x1] %v962
      %v964 = vld [vmem:[%s437 + $0x24] sm:$0xf]
      %v965 = vsel %vm942, %v678, %v964
      %966 = vst [vmem:[%s437 + $0x24] sm:$0xf] %v965
      %967 = vst.msk [vmem:[%s437 + $0x28] sm:$0xf] %vm428, %v687
      %v968 = vld [vmem:[%s437 + $0x2c] sm:$0x1]
      %v969 = vsel %vm440, %v688, %v968
      %970 = vst [vmem:[%s437 + $0x2c] sm:$0x1] %v969
      %v971 = vld [vmem:[%s437 + $0x30] sm:$0xf]
      %v972 = vsel %vm942, %v695, %v971
      %973 = vst [vmem:[%s437 + $0x30] sm:$0xf] %v972
      %974 = vst.msk [vmem:[%s437 + $0x34] sm:$0xf] %vm428, %v704
      %v975 = vld [vmem:[%s437 + $0x38] sm:$0x1]
      %v976 = vsel %vm440, %v705, %v975
      %977 = vst [vmem:[%s437 + $0x38] sm:$0x1] %v976
      %v978 = vld [vmem:[%s437 + $0x3c] sm:$0xf]
      %v979 = vsel %vm942, %v712, %v978
      %980 = vst [vmem:[%s437 + $0x3c] sm:$0xf] %v979
      %981 = vst.msk [vmem:[%s437 + $0x40] sm:$0xf] %vm428, %v721
      %v982 = vld [vmem:[%s437 + $0x44] sm:$0x1]
      %v983 = vsel %vm440, %v722, %v982
      %984 = vst [vmem:[%s437 + $0x44] sm:$0x1] %v983
      %v985 = vld [vmem:[%s437 + $0x48] sm:$0xf]
      %v986 = vsel %vm942, %v729, %v985
      %987 = vst [vmem:[%s437 + $0x48] sm:$0xf] %v986
      %988 = vst.msk [vmem:[%s437 + $0x4c] sm:$0xf] %vm428, %v738
      %v989 = vld [vmem:[%s437 + $0x50] sm:$0x1]
      %v990 = vsel %vm440, %v739, %v989
      %991 = vst [vmem:[%s437 + $0x50] sm:$0x1] %v990
      %v992 = vld [vmem:[%s437 + $0x54] sm:$0xf]
      %v993 = vsel %vm942, %v746, %v992
      %994 = vst [vmem:[%s437 + $0x54] sm:$0xf] %v993
      %995 = vst.msk [vmem:[%s437 + $0x58] sm:$0xf] %vm428, %v755
      %v996 = vld [vmem:[%s437 + $0x5c] sm:$0x1]
      %v997 = vsel %vm440, %v756, %v996
      %998 = vst [vmem:[%s437 + $0x5c] sm:$0x1] %v997
      %v999 = vld [vmem:[%s437 + $0x60] sm:$0xf]
      %v1000 = vsel %vm942, %v763, %v999
      %1001 = vst [vmem:[%s437 + $0x60] sm:$0xf] %v1000
      %1002 = vst.msk [vmem:[%s437 + $0x64] sm:$0xf] %vm428, %v772
      %v1003 = vld [vmem:[%s437 + $0x68] sm:$0x1]
      %v1004 = vsel %vm440, %v773, %v1003
      %1005 = vst [vmem:[%s437 + $0x68] sm:$0x1] %v1004
      %v1006 = vld [vmem:[%s437 + $0x6c] sm:$0xf]
      %v1007 = vsel %vm942, %v780, %v1006
      %1008 = vst [vmem:[%s437 + $0x6c] sm:$0xf] %v1007
      %1009 = vst.msk [vmem:[%s437 + $0x70] sm:$0xf] %vm428, %v789
      %v1010 = vld [vmem:[%s437 + $0x74] sm:$0x1]
      %v1011 = vsel %vm440, %v790, %v1010
      %1012 = vst [vmem:[%s437 + $0x74] sm:$0x1] %v1011
      %v1013 = vld [vmem:[%s437 + $0x78] sm:$0xf]
      %v1014 = vsel %vm942, %v797, %v1013
      %1015 = vst [vmem:[%s437 + $0x78] sm:$0xf] %v1014
      %1016 = vst.msk [vmem:[%s437 + $0x7c] sm:$0xf] %vm428, %v806
      %v1017 = vld [vmem:[%s437 + $0x80] sm:$0x1]
      %v1018 = vsel %vm440, %v807, %v1017
      %1019 = vst [vmem:[%s437 + $0x80] sm:$0x1] %v1018
      %v1020 = vld [vmem:[%s437 + $0x84] sm:$0xf]
      %v1021 = vsel %vm942, %v814, %v1020
      %1022 = vst [vmem:[%s437 + $0x84] sm:$0xf] %v1021
      %1023 = vst.msk [vmem:[%s437 + $0x88] sm:$0xf] %vm428, %v823
      %v1024 = vld [vmem:[%s437 + $0x8c] sm:$0x1]
      %v1025 = vsel %vm440, %v824, %v1024
      %1026 = vst [vmem:[%s437 + $0x8c] sm:$0x1] %v1025
      %v1027 = vld [vmem:[%s437 + $0x90] sm:$0xf]
      %v1028 = vsel %vm942, %v831, %v1027
      %1029 = vst [vmem:[%s437 + $0x90] sm:$0xf] %v1028
      %1030 = vst.msk [vmem:[%s437 + $0x94] sm:$0xf] %vm428, %v840
      %v1031 = vld [vmem:[%s437 + $0x98] sm:$0x1]
      %v1032 = vsel %vm440, %v841, %v1031
      %1033 = vst [vmem:[%s437 + $0x98] sm:$0x1] %v1032
      %v1034 = vld [vmem:[%s437 + $0x9c] sm:$0xf]
      %v1035 = vsel %vm942, %v848, %v1034
      %1036 = vst [vmem:[%s437 + $0x9c] sm:$0xf] %v1035
      %1037 = vst.msk [vmem:[%s437 + $0xa0] sm:$0xf] %vm428, %v857
      %v1038 = vld [vmem:[%s437 + $0xa4] sm:$0x1]
      %v1039 = vsel %vm440, %v858, %v1038
      %1040 = vst [vmem:[%s437 + $0xa4] sm:$0x1] %v1039
      %v1041 = vld [vmem:[%s437 + $0xa8] sm:$0xf]
      %v1042 = vsel %vm942, %v865, %v1041
      %1043 = vst [vmem:[%s437 + $0xa8] sm:$0xf] %v1042
      %1044 = vst.msk [vmem:[%s437 + $0xac] sm:$0xf] %vm428, %v874
      %v1045 = vld [vmem:[%s437 + $0xb0] sm:$0x1]
      %v1046 = vsel %vm440, %v875, %v1045
      %1047 = vst [vmem:[%s437 + $0xb0] sm:$0x1] %v1046
      %v1048 = vld [vmem:[%s437 + $0xb4] sm:$0xf]
      %v1049 = vsel %vm942, %v882, %v1048
      %1050 = vst [vmem:[%s437 + $0xb4] sm:$0xf] %v1049
      %1051 = vst.msk [vmem:[%s437 + $0xb8] sm:$0xf] %vm428, %v891
      %v1052 = vld [vmem:[%s437 + $0xbc] sm:$0x1]
      %v1053 = vsel %vm440, %v892, %v1052
      %1054 = vst [vmem:[%s437 + $0xbc] sm:$0x1] %v1053
      %v1055 = vld [vmem:[#allocation2] sm:$0xf]
      %v1056 = vld [vmem:[#allocation2 + $0x4] sm:$0xf]
      %v1057 = vld [vmem:[#allocation2 + $0xc] sm:$0xf]
      %v1058 = vld [vmem:[#allocation2 + $0x10] sm:$0xf]
      %v1059 = vld [vmem:[#allocation2 + $0x18] sm:$0xf]
      %v1060 = vld [vmem:[#allocation2 + $0x1c] sm:$0xf]
      %v1061 = vld [vmem:[#allocation2 + $0x24] sm:$0xf]
      %v1062 = vld [vmem:[#allocation2 + $0x28] sm:$0xf]
      %v1063 = vld [vmem:[#allocation2 + $0x30] sm:$0xf]
      %v1064 = vld [vmem:[#allocation2 + $0x34] sm:$0xf]
      %v1065 = vld [vmem:[#allocation2 + $0x3c] sm:$0xf]
      %v1066 = vld [vmem:[#allocation2 + $0x40] sm:$0xf]
      %v1067 = vld [vmem:[#allocation2 + $0x48] sm:$0xf]
      %v1068 = vld [vmem:[#allocation2 + $0x4c] sm:$0xf]
      %v1069 = vld [vmem:[#allocation2 + $0x54] sm:$0xf]
      %v1070 = vld [vmem:[#allocation2 + $0x58] sm:$0xf]
      %v1071 = vld [vmem:[#allocation2 + $0x60] sm:$0xf]
      %v1072 = vld [vmem:[#allocation2 + $0x64] sm:$0xf]
      %v1073 = vld [vmem:[#allocation2 + $0x6c] sm:$0xf]
      %v1074 = vld [vmem:[#allocation2 + $0x70] sm:$0xf]
      %v1075 = vld [vmem:[#allocation2 + $0x78] sm:$0xf]
      %v1076 = vld [vmem:[#allocation2 + $0x7c] sm:$0xf]
      %v1077 = vld [vmem:[#allocation2 + $0x84] sm:$0xf]
      %v1078 = vld [vmem:[#allocation2 + $0x88] sm:$0xf]
      %v1079 = vld [vmem:[#allocation2 + $0x90] sm:$0xf]
      %v1080 = vld [vmem:[#allocation2 + $0x94] sm:$0xf]
      %v1081 = vld [vmem:[#allocation2 + $0x9c] sm:$0xf]
      %v1082 = vld [vmem:[#allocation2 + $0xa0] sm:$0xf]
      %v1083 = vld [vmem:[#allocation2 + $0xa8] sm:$0xf]
      %v1084 = vld [vmem:[#allocation2 + $0xac] sm:$0xf]
      %v1085 = vld [vmem:[#allocation2 + $0xb4] sm:$0xf]
      %v1086 = vld [vmem:[#allocation2 + $0xb8] sm:$0xf]
      %v1119 = vunpack.c.l.b16 %v1055
      %v1120 = vunpack.c.l.b16 %v1056
      %v1121 = vunpack.c.l.b16 %v1057
      %v1122 = vunpack.c.l.b16 %v1058
      %v1123 = vunpack.c.l.b16 %v1059
      %v1124 = vunpack.c.l.b16 %v1060
      %v1125 = vunpack.c.l.b16 %v1061
      %v1126 = vunpack.c.l.b16 %v1062
      %v1127 = vunpack.c.l.b16 %v1063
      %v1128 = vunpack.c.l.b16 %v1064
      %v1129 = vunpack.c.l.b16 %v1065
      %v1130 = vunpack.c.l.b16 %v1066
      %v1131 = vunpack.c.l.b16 %v1067
      %v1132 = vunpack.c.l.b16 %v1068
      %v1133 = vunpack.c.l.b16 %v1069
      %v1134 = vunpack.c.l.b16 %v1070
      %v1135 = vunpack.c.l.b16 %v1071
      %v1136 = vunpack.c.l.b16 %v1072
      %v1137 = vunpack.c.l.b16 %v1073
      %v1138 = vunpack.c.l.b16 %v1074
      %v1139 = vunpack.c.l.b16 %v1075
      %v1140 = vunpack.c.l.b16 %v1076
      %v1141 = vunpack.c.l.b16 %v1077
      %v1142 = vunpack.c.l.b16 %v1078
      %v1143 = vunpack.c.l.b16 %v1079
      %v1144 = vunpack.c.l.b16 %v1080
      %v1145 = vunpack.c.l.b16 %v1081
      %v1146 = vunpack.c.l.b16 %v1082
      %v1147 = vunpack.c.l.b16 %v1083
      %v1148 = vunpack.c.l.b16 %v1084
      %v1149 = vunpack.c.l.b16 %v1085
      %v1150 = vunpack.c.l.b16 %v1086
      %v1151 = vpack.c.b16 %v1120, %v1119
      %v1152 = vpack.c.b16 %v1122, %v1121
      %v1153 = vpack.c.b16 %v1124, %v1123
      %v1154 = vpack.c.b16 %v1126, %v1125
      %v1155 = vpack.c.b16 %v1128, %v1127
      %v1156 = vpack.c.b16 %v1130, %v1129
      %v1157 = vpack.c.b16 %v1132, %v1131
      %v1158 = vpack.c.b16 %v1134, %v1133
      %v1159 = vpack.c.b16 %v1136, %v1135
      %v1160 = vpack.c.b16 %v1138, %v1137
      %v1161 = vpack.c.b16 %v1140, %v1139
      %v1162 = vpack.c.b16 %v1142, %v1141
      %v1163 = vpack.c.b16 %v1144, %v1143
      %v1164 = vpack.c.b16 %v1146, %v1145
      %v1165 = vpack.c.b16 %v1148, %v1147
      %v1166 = vpack.c.b16 %v1150, %v1149
      %vm1183 = vcmask 64512
      %1184 = vst.msk [vmem:[#allocation3] sm:$0xff] %vm1183, %v1151
      %1185 = vst.msk [vmem:[#allocation3 + $0x8] sm:$0xff] %vm1183, %v1152
      %1186 = vst.msk [vmem:[#allocation3 + $0x10] sm:$0xff] %vm1183, %v1153
      %1187 = vst.msk [vmem:[#allocation3 + $0x18] sm:$0xff] %vm1183, %v1154
      %1188 = vst.msk [vmem:[#allocation3 + $0x20] sm:$0xff] %vm1183, %v1155
      %1189 = vst.msk [vmem:[#allocation3 + $0x28] sm:$0xff] %vm1183, %v1156
      %1190 = vst.msk [vmem:[#allocation3 + $0x30] sm:$0xff] %vm1183, %v1157
      %1191 = vst.msk [vmem:[#allocation3 + $0x38] sm:$0xff] %vm1183, %v1158
      %1192 = vst.msk [vmem:[#allocation3 + $0x40] sm:$0xff] %vm1183, %v1159
      %1193 = vst.msk [vmem:[#allocation3 + $0x48] sm:$0xff] %vm1183, %v1160
      %1194 = vst.msk [vmem:[#allocation3 + $0x50] sm:$0xff] %vm1183, %v1161
      %1195 = vst.msk [vmem:[#allocation3 + $0x58] sm:$0xff] %vm1183, %v1162
      %1196 = vst.msk [vmem:[#allocation3 + $0x60] sm:$0xff] %vm1183, %v1163
      %1197 = vst.msk [vmem:[#allocation3 + $0x68] sm:$0xff] %vm1183, %v1164
      %1198 = vst.msk [vmem:[#allocation3 + $0x70] sm:$0xff] %vm1183, %v1165
      %1199 = vst.msk [vmem:[#allocation3 + $0x78] sm:$0xff] %vm1183, %v1166
      %v1200 = vld [vmem:[#allocation2] sm:$0xf]
      %v1201 = vld [vmem:[#allocation2 + $0x4] sm:$0xf]
      %v1202 = vld [vmem:[#allocation2 + $0x8] sm:$0x1]
      %v1203 = vld [vmem:[#allocation2 + $0xc] sm:$0xf]
      %v1204 = vld [vmem:[#allocation2 + $0x10] sm:$0xf]
      %v1205 = vld [vmem:[#allocation2 + $0x14] sm:$0x1]
      %v1206 = vld [vmem:[#allocation2 + $0x18] sm:$0xf]
      %v1207 = vld [vmem:[#allocation2 + $0x1c] sm:$0xf]
      %v1208 = vld [vmem:[#allocation2 + $0x20] sm:$0x1]
      %v1209 = vld [vmem:[#allocation2 + $0x24] sm:$0xf]
      %v1210 = vld [vmem:[#allocation2 + $0x28] sm:$0xf]
      %v1211 = vld [vmem:[#allocation2 + $0x2c] sm:$0x1]
      %v1212 = vld [vmem:[#allocation2 + $0x30] sm:$0xf]
      %v1213 = vld [vmem:[#allocation2 + $0x34] sm:$0xf]
      %v1214 = vld [vmem:[#allocation2 + $0x38] sm:$0x1]
      %v1215 = vld [vmem:[#allocation2 + $0x3c] sm:$0xf]
      %v1216 = vld [vmem:[#allocation2 + $0x40] sm:$0xf]
      %v1217 = vld [vmem:[#allocation2 + $0x44] sm:$0x1]
      %v1218 = vld [vmem:[#allocation2 + $0x48] sm:$0xf]
      %v1219 = vld [vmem:[#allocation2 + $0x4c] sm:$0xf]
      %v1220 = vld [vmem:[#allocation2 + $0x50] sm:$0x1]
      %v1221 = vld [vmem:[#allocation2 + $0x54] sm:$0xf]
      %v1222 = vld [vmem:[#allocation2 + $0x58] sm:$0xf]
      %v1223 = vld [vmem:[#allocation2 + $0x5c] sm:$0x1]
      %v1224 = vld [vmem:[#allocation2 + $0x60] sm:$0xf]
      %v1225 = vld [vmem:[#allocation2 + $0x64] sm:$0xf]
      %v1226 = vld [vmem:[#allocation2 + $0x68] sm:$0x1]
      %v1227 = vld [vmem:[#allocation2 + $0x6c] sm:$0xf]
      %v1228 = vld [vmem:[#allocation2 + $0x70] sm:$0xf]
      %v1229 = vld [vmem:[#allocation2 + $0x74] sm:$0x1]
      %v1230 = vld [vmem:[#allocation2 + $0x78] sm:$0xf]
      %v1231 = vld [vmem:[#allocation2 + $0x7c] sm:$0xf]
      %v1232 = vld [vmem:[#allocation2 + $0x80] sm:$0x1]
      %v1233 = vld [vmem:[#allocation2 + $0x84] sm:$0xf]
      %v1234 = vld [vmem:[#allocation2 + $0x88] sm:$0xf]
      %v1235 = vld [vmem:[#allocation2 + $0x8c] sm:$0x1]
      %v1236 = vld [vmem:[#allocation2 + $0x90] sm:$0xf]
      %v1237 = vld [vmem:[#allocation2 + $0x94] sm:$0xf]
      %v1238 = vld [vmem:[#allocation2 + $0x98] sm:$0x1]
      %v1239 = vld [vmem:[#allocation2 + $0x9c] sm:$0xf]
      %v1240 = vld [vmem:[#allocation2 + $0xa0] sm:$0xf]
      %v1241 = vld [vmem:[#allocation2 + $0xa4] sm:$0x1]
      %v1242 = vld [vmem:[#allocation2 + $0xa8] sm:$0xf]
      %v1243 = vld [vmem:[#allocation2 + $0xac] sm:$0xf]
      %v1244 = vld [vmem:[#allocation2 + $0xb0] sm:$0x1]
      %v1245 = vld [vmem:[#allocation2 + $0xb4] sm:$0xf]
      %v1246 = vld [vmem:[#allocation2 + $0xb8] sm:$0xf]
      %v1247 = vld [vmem:[#allocation2 + $0xbc] sm:$0x1]
      %vm1248 = vsmask.f32 3328
      %vm1249 = vsmask.f32 7440
      %vm1250 = vmor %vm1248, %vm1249
      %v1252 = vshrl.u32 %v1200, 16
      %v1254 = vrot.slane %v1252, 4
      %v1255 = vshll.u32 %v1200, 16
      %v1257 = vrot.slane %v1255, 5
      %v1258 = vor.u32 %v1254, %v1257
      %v1259 = vrot.slane %v1258, 4
      %v1261 = vshll.u32 %v1201, 16
      %v1263 = vrot.slane %v1261, 5
      %v1264 = vsel %vm1250, %v1259, %v1263
      %v1265 = vshrl.u32 %v1201, 16
      %v1267 = vrot.slane %v1265, 4
      %v1268 = vor.u32 %v1267, %v1263
      %v1269 = vrot.slane %v1268, 4
      %v1271 = vshll.u32 %v1202, 16
      %v1273 = vrot.slane %v1271, 5
      %v1274 = vsel %vm1250, %v1269, %v1273
      %v1276 = vshrl.u32 %v1203, 16
      %v1278 = vrot.slane %v1276, 4
      %v1279 = vshll.u32 %v1203, 16
      %v1281 = vrot.slane %v1279, 5
      %v1282 = vor.u32 %v1278, %v1281
      %v1283 = vrot.slane %v1282, 4
      %v1285 = vshll.u32 %v1204, 16
      %v1287 = vrot.slane %v1285, 5
      %v1288 = vsel %vm1250, %v1283, %v1287
      %v1289 = vshrl.u32 %v1204, 16
      %v1291 = vrot.slane %v1289, 4
      %v1292 = vor.u32 %v1291, %v1287
      %v1293 = vrot.slane %v1292, 4
      %v1295 = vshll.u32 %v1205, 16
      %v1297 = vrot.slane %v1295, 5
      %v1298 = vsel %vm1250, %v1293, %v1297
      %v1300 = vshrl.u32 %v1206, 16
      %v1302 = vrot.slane %v1300, 4
      %v1303 = vshll.u32 %v1206, 16
      %v1305 = vrot.slane %v1303, 5
      %v1306 = vor.u32 %v1302, %v1305
      %v1307 = vrot.slane %v1306, 4
      %v1309 = vshll.u32 %v1207, 16
      %v1311 = vrot.slane %v1309, 5
      %v1312 = vsel %vm1250, %v1307, %v1311
      %v1313 = vshrl.u32 %v1207, 16
      %v1315 = vrot.slane %v1313, 4
      %v1316 = vor.u32 %v1315, %v1311
      %v1317 = vrot.slane %v1316, 4
      %v1319 = vshll.u32 %v1208, 16
      %v1321 = vrot.slane %v1319, 5
      %v1322 = vsel %vm1250, %v1317, %v1321
      %v1324 = vshrl.u32 %v1209, 16
      %v1326 = vrot.slane %v1324, 4
      %v1327 = vshll.u32 %v1209, 16
      %v1329 = vrot.slane %v1327, 5
      %v1330 = vor.u32 %v1326, %v1329
      %v1331 = vrot.slane %v1330, 4
      %v1333 = vshll.u32 %v1210, 16
      %v1335 = vrot.slane %v1333, 5
      %v1336 = vsel %vm1250, %v1331, %v1335
      %v1337 = vshrl.u32 %v1210, 16
      %v1339 = vrot.slane %v1337, 4
      %v1340 = vor.u32 %v1339, %v1335
      %v1341 = vrot.slane %v1340, 4
      %v1343 = vshll.u32 %v1211, 16
      %v1345 = vrot.slane %v1343, 5
      %v1346 = vsel %vm1250, %v1341, %v1345
      %v1348 = vshrl.u32 %v1212, 16
      %v1350 = vrot.slane %v1348, 4
      %v1351 = vshll.u32 %v1212, 16
      %v1353 = vrot.slane %v1351, 5
      %v1354 = vor.u32 %v1350, %v1353
      %v1355 = vrot.slane %v1354, 4
      %v1357 = vshll.u32 %v1213, 16
      %v1359 = vrot.slane %v1357, 5
      %v1360 = vsel %vm1250, %v1355, %v1359
      %v1361 = vshrl.u32 %v1213, 16
      %v1363 = vrot.slane %v1361, 4
      %v1364 = vor.u32 %v1363, %v1359
      %v1365 = vrot.slane %v1364, 4
      %v1367 = vshll.u32 %v1214, 16
      %v1369 = vrot.slane %v1367, 5
      %v1370 = vsel %vm1250, %v1365, %v1369
      %v1372 = vshrl.u32 %v1215, 16
      %v1374 = vrot.slane %v1372, 4
      %v1375 = vshll.u32 %v1215, 16
      %v1377 = vrot.slane %v1375, 5
      %v1378 = vor.u32 %v1374, %v1377
      %v1379 = vrot.slane %v1378, 4
      %v1381 = vshll.u32 %v1216, 16
      %v1383 = vrot.slane %v1381, 5
      %v1384 = vsel %vm1250, %v1379, %v1383
      %v1385 = vshrl.u32 %v1216, 16
      %v1387 = vrot.slane %v1385, 4
      %v1388 = vor.u32 %v1387, %v1383
      %v1389 = vrot.slane %v1388, 4
      %v1391 = vshll.u32 %v1217, 16
      %v1393 = vrot.slane %v1391, 5
      %v1394 = vsel %vm1250, %v1389, %v1393
      %v1396 = vshrl.u32 %v1218, 16
      %v1398 = vrot.slane %v1396, 4
      %v1399 = vshll.u32 %v1218, 16
      %v1401 = vrot.slane %v1399, 5
      %v1402 = vor.u32 %v1398, %v1401
      %v1403 = vrot.slane %v1402, 4
      %v1405 = vshll.u32 %v1219, 16
      %v1407 = vrot.slane %v1405, 5
      %v1408 = vsel %vm1250, %v1403, %v1407
      %v1409 = vshrl.u32 %v1219, 16
      %v1411 = vrot.slane %v1409, 4
      %v1412 = vor.u32 %v1411, %v1407
      %v1413 = vrot.slane %v1412, 4
      %v1415 = vshll.u32 %v1220, 16
      %v1417 = vrot.slane %v1415, 5
      %v1418 = vsel %vm1250, %v1413, %v1417
      %v1420 = vshrl.u32 %v1221, 16
      %v1422 = vrot.slane %v1420, 4
      %v1423 = vshll.u32 %v1221, 16
      %v1425 = vrot.slane %v1423, 5
      %v1426 = vor.u32 %v1422, %v1425
      %v1427 = vrot.slane %v1426, 4
      %v1429 = vshll.u32 %v1222, 16
      %v1431 = vrot.slane %v1429, 5
      %v1432 = vsel %vm1250, %v1427, %v1431
      %v1433 = vshrl.u32 %v1222, 16
      %v1435 = vrot.slane %v1433, 4
      %v1436 = vor.u32 %v1435, %v1431
      %v1437 = vrot.slane %v1436, 4
      %v1439 = vshll.u32 %v1223, 16
      %v1441 = vrot.slane %v1439, 5
      %v1442 = vsel %vm1250, %v1437, %v1441
      %v1444 = vshrl.u32 %v1224, 16
      %v1446 = vrot.slane %v1444, 4
      %v1447 = vshll.u32 %v1224, 16
      %v1449 = vrot.slane %v1447, 5
      %v1450 = vor.u32 %v1446, %v1449
      %v1451 = vrot.slane %v1450, 4
      %v1453 = vshll.u32 %v1225, 16
      %v1455 = vrot.slane %v1453, 5
      %v1456 = vsel %vm1250, %v1451, %v1455
      %v1457 = vshrl.u32 %v1225, 16
      %v1459 = vrot.slane %v1457, 4
      %v1460 = vor.u32 %v1459, %v1455
      %v1461 = vrot.slane %v1460, 4
      %v1463 = vshll.u32 %v1226, 16
      %v1465 = vrot.slane %v1463, 5
      %v1466 = vsel %vm1250, %v1461, %v1465
      %v1468 = vshrl.u32 %v1227, 16
      %v1470 = vrot.slane %v1468, 4
      %v1471 = vshll.u32 %v1227, 16
      %v1473 = vrot.slane %v1471, 5
      %v1474 = vor.u32 %v1470, %v1473
      %v1475 = vrot.slane %v1474, 4
      %v1477 = vshll.u32 %v1228, 16
      %v1479 = vrot.slane %v1477, 5
      %v1480 = vsel %vm1250, %v1475, %v1479
      %v1481 = vshrl.u32 %v1228, 16
      %v1483 = vrot.slane %v1481, 4
      %v1484 = vor.u32 %v1483, %v1479
      %v1485 = vrot.slane %v1484, 4
      %v1487 = vshll.u32 %v1229, 16
      %v1489 = vrot.slane %v1487, 5
      %v1490 = vsel %vm1250, %v1485, %v1489
      %v1492 = vshrl.u32 %v1230, 16
      %v1494 = vrot.slane %v1492, 4
      %v1495 = vshll.u32 %v1230, 16
      %v1497 = vrot.slane %v1495, 5
      %v1498 = vor.u32 %v1494, %v1497
      %v1499 = vrot.slane %v1498, 4
      %v1501 = vshll.u32 %v1231, 16
      %v1503 = vrot.slane %v1501, 5
      %v1504 = vsel %vm1250, %v1499, %v1503
      %v1505 = vshrl.u32 %v1231, 16
      %v1507 = vrot.slane %v1505, 4
      %v1508 = vor.u32 %v1507, %v1503
      %v1509 = vrot.slane %v1508, 4
      %v1511 = vshll.u32 %v1232, 16
      %v1513 = vrot.slane %v1511, 5
      %v1514 = vsel %vm1250, %v1509, %v1513
      %v1516 = vshrl.u32 %v1233, 16
      %v1518 = vrot.slane %v1516, 4
      %v1519 = vshll.u32 %v1233, 16
      %v1521 = vrot.slane %v1519, 5
      %v1522 = vor.u32 %v1518, %v1521
      %v1523 = vrot.slane %v1522, 4
      %v1525 = vshll.u32 %v1234, 16
      %v1527 = vrot.slane %v1525, 5
      %v1528 = vsel %vm1250, %v1523, %v1527
      %v1529 = vshrl.u32 %v1234, 16
      %v1531 = vrot.slane %v1529, 4
      %v1532 = vor.u32 %v1531, %v1527
      %v1533 = vrot.slane %v1532, 4
      %v1535 = vshll.u32 %v1235, 16
      %v1537 = vrot.slane %v1535, 5
      %v1538 = vsel %vm1250, %v1533, %v1537
      %v1540 = vshrl.u32 %v1236, 16
      %v1542 = vrot.slane %v1540, 4
      %v1543 = vshll.u32 %v1236, 16
      %v1545 = vrot.slane %v1543, 5
      %v1546 = vor.u32 %v1542, %v1545
      %v1547 = vrot.slane %v1546, 4
      %v1549 = vshll.u32 %v1237, 16
      %v1551 = vrot.slane %v1549, 5
      %v1552 = vsel %vm1250, %v1547, %v1551
      %v1553 = vshrl.u32 %v1237, 16
      %v1555 = vrot.slane %v1553, 4
      %v1556 = vor.u32 %v1555, %v1551
      %v1557 = vrot.slane %v1556, 4
      %v1559 = vshll.u32 %v1238, 16
      %v1561 = vrot.slane %v1559, 5
      %v1562 = vsel %vm1250, %v1557, %v1561
      %v1564 = vshrl.u32 %v1239, 16
      %v1566 = vrot.slane %v1564, 4
      %v1567 = vshll.u32 %v1239, 16
      %v1569 = vrot.slane %v1567, 5
      %v1570 = vor.u32 %v1566, %v1569
      %v1571 = vrot.slane %v1570, 4
      %v1573 = vshll.u32 %v1240, 16
      %v1575 = vrot.slane %v1573, 5
      %v1576 = vsel %vm1250, %v1571, %v1575
      %v1577 = vshrl.u32 %v1240, 16
      %v1579 = vrot.slane %v1577, 4
      %v1580 = vor.u32 %v1579, %v1575
      %v1581 = vrot.slane %v1580, 4
      %v1583 = vshll.u32 %v1241, 16
      %v1585 = vrot.slane %v1583, 5
      %v1586 = vsel %vm1250, %v1581, %v1585
      %v1588 = vshrl.u32 %v1242, 16
      %v1590 = vrot.slane %v1588, 4
      %v1591 = vshll.u32 %v1242, 16
      %v1593 = vrot.slane %v1591, 5
      %v1594 = vor.u32 %v1590, %v1593
      %v1595 = vrot.slane %v1594, 4
      %v1597 = vshll.u32 %v1243, 16
      %v1599 = vrot.slane %v1597, 5
      %v1600 = vsel %vm1250, %v1595, %v1599
      %v1601 = vshrl.u32 %v1243, 16
      %v1603 = vrot.slane %v1601, 4
      %v1604 = vor.u32 %v1603, %v1599
      %v1605 = vrot.slane %v1604, 4
      %v1607 = vshll.u32 %v1244, 16
      %v1609 = vrot.slane %v1607, 5
      %v1610 = vsel %vm1250, %v1605, %v1609
      %v1612 = vshrl.u32 %v1245, 16
      %v1614 = vrot.slane %v1612, 4
      %v1615 = vshll.u32 %v1245, 16
      %v1617 = vrot.slane %v1615, 5
      %v1618 = vor.u32 %v1614, %v1617
      %v1619 = vrot.slane %v1618, 4
      %v1621 = vshll.u32 %v1246, 16
      %v1623 = vrot.slane %v1621, 5
      %v1624 = vsel %vm1250, %v1619, %v1623
      %v1625 = vshrl.u32 %v1246, 16
      %v1627 = vrot.slane %v1625, 4
      %v1628 = vor.u32 %v1627, %v1623
      %v1629 = vrot.slane %v1628, 4
      %v1631 = vshll.u32 %v1247, 16
      %v1633 = vrot.slane %v1631, 5
      %v1634 = vsel %vm1250, %v1629, %v1633
      %v1635 = vunpack.c.l.b16 %v1264
      %v1636 = vunpack.c.l.b16 %v1274
      %v1637 = vunpack.c.l.b16 %v1288
      %v1638 = vunpack.c.l.b16 %v1298
      %v1639 = vunpack.c.l.b16 %v1312
      %v1640 = vunpack.c.l.b16 %v1322
      %v1641 = vunpack.c.l.b16 %v1336
      %v1642 = vunpack.c.l.b16 %v1346
      %v1643 = vunpack.c.l.b16 %v1360
      %v1644 = vunpack.c.l.b16 %v1370
      %v1645 = vunpack.c.l.b16 %v1384
      %v1646 = vunpack.c.l.b16 %v1394
      %v1647 = vunpack.c.l.b16 %v1408
      %v1648 = vunpack.c.l.b16 %v1418
      %v1649 = vunpack.c.l.b16 %v1432
      %v1650 = vunpack.c.l.b16 %v1442
      %v1651 = vunpack.c.l.b16 %v1456
      %v1652 = vunpack.c.l.b16 %v1466
      %v1653 = vunpack.c.l.b16 %v1480
      %v1654 = vunpack.c.l.b16 %v1490
      %v1655 = vunpack.c.l.b16 %v1504
      %v1656 = vunpack.c.l.b16 %v1514
      %v1657 = vunpack.c.l.b16 %v1528
      %v1658 = vunpack.c.l.b16 %v1538
      %v1659 = vunpack.c.l.b16 %v1552
      %v1660 = vunpack.c.l.b16 %v1562
      %v1661 = vunpack.c.l.b16 %v1576
      %v1662 = vunpack.c.l.b16 %v1586
      %v1663 = vunpack.c.l.b16 %v1600
      %v1664 = vunpack.c.l.b16 %v1610
      %v1665 = vunpack.c.l.b16 %v1624
      %v1666 = vunpack.c.l.b16 %v1634
      %v1667 = vpack.c.b16 %v1636, %v1635
      %v1668 = vpack.c.b16 %v1638, %v1637
      %v1669 = vpack.c.b16 %v1640, %v1639
      %v1670 = vpack.c.b16 %v1642, %v1641
      %v1671 = vpack.c.b16 %v1644, %v1643
      %v1672 = vpack.c.b16 %v1646, %v1645
      %v1673 = vpack.c.b16 %v1648, %v1647
      %v1674 = vpack.c.b16 %v1650, %v1649
      %v1675 = vpack.c.b16 %v1652, %v1651
      %v1676 = vpack.c.b16 %v1654, %v1653
      %v1677 = vpack.c.b16 %v1656, %v1655
      %v1678 = vpack.c.b16 %v1658, %v1657
      %v1679 = vpack.c.b16 %v1660, %v1659
      %v1680 = vpack.c.b16 %v1662, %v1661
      %v1681 = vpack.c.b16 %v1664, %v1663
      %v1682 = vpack.c.b16 %v1666, %v1665
      %1683 = vrot.lane.b32.xlu0 %v1667, 8
      %v1684 = vpop.permute.xlu0 %1683
      %1685 = vrot.lane.b32.xlu0 %v1668, 8
      %v1686 = vpop.permute.xlu0 %1685
      %1687 = vrot.lane.b32.xlu0 %v1669, 8
      %v1688 = vpop.permute.xlu0 %1687
      %1689 = vrot.lane.b32.xlu0 %v1670, 8
      %v1690 = vpop.permute.xlu0 %1689
      %1691 = vrot.lane.b32.xlu0 %v1671, 8
      %v1692 = vpop.permute.xlu0 %1691
      %1693 = vrot.lane.b32.xlu0 %v1672, 8
      %v1694 = vpop.permute.xlu0 %1693
      %1695 = vrot.lane.b32.xlu0 %v1673, 8
      %v1696 = vpop.permute.xlu0 %1695
      %1697 = vrot.lane.b32.xlu0 %v1674, 8
      %v1698 = vpop.permute.xlu0 %1697
      %1699 = vrot.lane.b32.xlu0 %v1675, 8
      %v1700 = vpop.permute.xlu0 %1699
      %1701 = vrot.lane.b32.xlu0 %v1676, 8
      %v1702 = vpop.permute.xlu0 %1701
      %1703 = vrot.lane.b32.xlu0 %v1677, 8
      %v1704 = vpop.permute.xlu0 %1703
      %1705 = vrot.lane.b32.xlu0 %v1678, 8
      %v1706 = vpop.permute.xlu0 %1705
      %1707 = vrot.lane.b32.xlu0 %v1679, 8
      %v1708 = vpop.permute.xlu0 %1707
      %1709 = vrot.lane.b32.xlu0 %v1680, 8
      %v1710 = vpop.permute.xlu0 %1709
      %1711 = vrot.lane.b32.xlu0 %v1681, 8
      %v1712 = vpop.permute.xlu0 %1711
      %1713 = vrot.lane.b32.xlu0 %v1682, 8
      %v1714 = vpop.permute.xlu0 %1713
      %vm1731 = vcmask 130112
      %1732 = vst.msk [vmem:[#allocation3] sm:$0xff] %vm1731, %v1684
      %1733 = vst.msk [vmem:[#allocation3 + $0x8] sm:$0xff] %vm1731, %v1686
      %1734 = vst.msk [vmem:[#allocation3 + $0x10] sm:$0xff] %vm1731, %v1688
      %1735 = vst.msk [vmem:[#allocation3 + $0x18] sm:$0xff] %vm1731, %v1690
      %1736 = vst.msk [vmem:[#allocation3 + $0x20] sm:$0xff] %vm1731, %v1692
      %1737 = vst.msk [vmem:[#allocation3 + $0x28] sm:$0xff] %vm1731, %v1694
      %1738 = vst.msk [vmem:[#allocation3 + $0x30] sm:$0xff] %vm1731, %v1696
      %1739 = vst.msk [vmem:[#allocation3 + $0x38] sm:$0xff] %vm1731, %v1698
      %1740 = vst.msk [vmem:[#allocation3 + $0x40] sm:$0xff] %vm1731, %v1700
      %1741 = vst.msk [vmem:[#allocation3 + $0x48] sm:$0xff] %vm1731, %v1702
      %1742 = vst.msk [vmem:[#allocation3 + $0x50] sm:$0xff] %vm1731, %v1704
      %1743 = vst.msk [vmem:[#allocation3 + $0x58] sm:$0xff] %vm1731, %v1706
      %1744 = vst.msk [vmem:[#allocation3 + $0x60] sm:$0xff] %vm1731, %v1708
      %1745 = vst.msk [vmem:[#allocation3 + $0x68] sm:$0xff] %vm1731, %v1710
      %1746 = vst.msk [vmem:[#allocation3 + $0x70] sm:$0xff] %vm1731, %v1712
      %1747 = vst.msk [vmem:[#allocation3 + $0x78] sm:$0xff] %vm1731, %v1714
      %v1748 = vld [vmem:[#allocation2] sm:$0xe]
      %v1749 = vld [vmem:[#allocation2 + $0x4] sm:$0xf]
      %v1750 = vld [vmem:[#allocation2 + $0x8] sm:$0x1]
      %v1751 = vld [vmem:[#allocation2 + $0xc] sm:$0xe]
      %v1752 = vld [vmem:[#allocation2 + $0x10] sm:$0xf]
      %v1753 = vld [vmem:[#allocation2 + $0x14] sm:$0x1]
      %v1754 = vld [vmem:[#allocation2 + $0x18] sm:$0xe]
      %v1755 = vld [vmem:[#allocation2 + $0x1c] sm:$0xf]
      %v1756 = vld [vmem:[#allocation2 + $0x20] sm:$0x1]
      %v1757 = vld [vmem:[#allocation2 + $0x24] sm:$0xe]
      %v1758 = vld [vmem:[#allocation2 + $0x28] sm:$0xf]
      %v1759 = vld [vmem:[#allocation2 + $0x2c] sm:$0x1]
      %v1760 = vld [vmem:[#allocation2 + $0x30] sm:$0xe]
      %v1761 = vld [vmem:[#allocation2 + $0x34] sm:$0xf]
      %v1762 = vld [vmem:[#allocation2 + $0x38] sm:$0x1]
      %v1763 = vld [vmem:[#allocation2 + $0x3c] sm:$0xe]
      %v1764 = vld [vmem:[#allocation2 + $0x40] sm:$0xf]
      %v1765 = vld [vmem:[#allocation2 + $0x44] sm:$0x1]
      %v1766 = vld [vmem:[#allocation2 + $0x48] sm:$0xe]
      %v1767 = vld [vmem:[#allocation2 + $0x4c] sm:$0xf]
      %v1768 = vld [vmem:[#allocation2 + $0x50] sm:$0x1]
      %v1769 = vld [vmem:[#allocation2 + $0x54] sm:$0xe]
      %v1770 = vld [vmem:[#allocation2 + $0x58] sm:$0xf]
      %v1771 = vld [vmem:[#allocation2 + $0x5c] sm:$0x1]
      %v1772 = vld [vmem:[#allocation2 + $0x60] sm:$0xe]
      %v1773 = vld [vmem:[#allocation2 + $0x64] sm:$0xf]
      %v1774 = vld [vmem:[#allocation2 + $0x68] sm:$0x1]
      %v1775 = vld [vmem:[#allocation2 + $0x6c] sm:$0xe]
      %v1776 = vld [vmem:[#allocation2 + $0x70] sm:$0xf]
      %v1777 = vld [vmem:[#allocation2 + $0x74] sm:$0x1]
      %v1778 = vld [vmem:[#allocation2 + $0x78] sm:$0xe]
      %v1779 = vld [vmem:[#allocation2 + $0x7c] sm:$0xf]
      %v1780 = vld [vmem:[#allocation2 + $0x80] sm:$0x1]
      %v1781 = vld [vmem:[#allocation2 + $0x84] sm:$0xe]
      %v1782 = vld [vmem:[#allocation2 + $0x88] sm:$0xf]
      %v1783 = vld [vmem:[#allocation2 + $0x8c] sm:$0x1]
      %v1784 = vld [vmem:[#allocation2 + $0x90] sm:$0xe]
      %v1785 = vld [vmem:[#allocation2 + $0x94] sm:$0xf]
      %v1786 = vld [vmem:[#allocation2 + $0x98] sm:$0x1]
      %v1787 = vld [vmem:[#allocation2 + $0x9c] sm:$0xe]
      %v1788 = vld [vmem:[#allocation2 + $0xa0] sm:$0xf]
      %v1789 = vld [vmem:[#allocation2 + $0xa4] sm:$0x1]
      %v1790 = vld [vmem:[#allocation2 + $0xa8] sm:$0xe]
      %v1791 = vld [vmem:[#allocation2 + $0xac] sm:$0xf]
      %v1792 = vld [vmem:[#allocation2 + $0xb0] sm:$0x1]
      %v1793 = vld [vmem:[#allocation2 + $0xb4] sm:$0xe]
      %v1794 = vld [vmem:[#allocation2 + $0xb8] sm:$0xf]
      %v1795 = vld [vmem:[#allocation2 + $0xbc] sm:$0x1]
      %vm1844 = vcmask 1042432
      %vm1845 = vcmask 1046532
      %vm1846 = vmor %vm1844, %vm1845
      %v1847 = vrot.slane %v1748, 5
      %v1848 = vrot.slane %v1847, 4
      %v1849 = vrot.slane %v1749, 5
      %v1850 = vsel %vm1846, %v1848, %v1849
      %v1851 = vrot.slane %v1849, 4
      %v1852 = vrot.slane %v1750, 5
      %v1853 = vsel %vm1846, %v1851, %v1852
      %v1854 = vrot.slane %v1751, 5
      %v1855 = vrot.slane %v1854, 4
      %v1856 = vrot.slane %v1752, 5
      %v1857 = vsel %vm1846, %v1855, %v1856
      %v1858 = vrot.slane %v1856, 4
      %v1859 = vrot.slane %v1753, 5
      %v1860 = vsel %vm1846, %v1858, %v1859
      %v1861 = vrot.slane %v1754, 5
      %v1862 = vrot.slane %v1861, 4
      %v1863 = vrot.slane %v1755, 5
      %v1864 = vsel %vm1846, %v1862, %v1863
      %v1865 = vrot.slane %v1863, 4
      %v1866 = vrot.slane %v1756, 5
      %v1867 = vsel %vm1846, %v1865, %v1866
      %v1868 = vrot.slane %v1757, 5
      %v1869 = vrot.slane %v1868, 4
      %v1870 = vrot.slane %v1758, 5
      %v1871 = vsel %vm1846, %v1869, %v1870
      %v1872 = vrot.slane %v1870, 4
      %v1873 = vrot.slane %v1759, 5
      %v1874 = vsel %vm1846, %v1872, %v1873
      %v1875 = vrot.slane %v1760, 5
      %v1876 = vrot.slane %v1875, 4
      %v1877 = vrot.slane %v1761, 5
      %v1878 = vsel %vm1846, %v1876, %v1877
      %v1879 = vrot.slane %v1877, 4
      %v1880 = vrot.slane %v1762, 5
      %v1881 = vsel %vm1846, %v1879, %v1880
      %v1882 = vrot.slane %v1763, 5
      %v1883 = vrot.slane %v1882, 4
      %v1884 = vrot.slane %v1764, 5
      %v1885 = vsel %vm1846, %v1883, %v1884
      %v1886 = vrot.slane %v1884, 4
      %v1887 = vrot.slane %v1765, 5
      %v1888 = vsel %vm1846, %v1886, %v1887
      %v1889 = vrot.slane %v1766, 5
      %v1890 = vrot.slane %v1889, 4
      %v1891 = vrot.slane %v1767, 5
      %v1892 = vsel %vm1846, %v1890, %v1891
      %v1893 = vrot.slane %v1891, 4
      %v1894 = vrot.slane %v1768, 5
      %v1895 = vsel %vm1846, %v1893, %v1894
      %v1896 = vrot.slane %v1769, 5
      %v1897 = vrot.slane %v1896, 4
      %v1898 = vrot.slane %v1770, 5
      %v1899 = vsel %vm1846, %v1897, %v1898
      %v1900 = vrot.slane %v1898, 4
      %v1901 = vrot.slane %v1771, 5
      %v1902 = vsel %vm1846, %v1900, %v1901
      %v1903 = vrot.slane %v1772, 5
      %v1904 = vrot.slane %v1903, 4
      %v1905 = vrot.slane %v1773, 5
      %v1906 = vsel %vm1846, %v1904, %v1905
      %v1907 = vrot.slane %v1905, 4
      %v1908 = vrot.slane %v1774, 5
      %v1909 = vsel %vm1846, %v1907, %v1908
      %v1910 = vrot.slane %v1775, 5
      %v1911 = vrot.slane %v1910, 4
      %v1912 = vrot.slane %v1776, 5
      %v1913 = vsel %vm1846, %v1911, %v1912
      %v1914 = vrot.slane %v1912, 4
      %v1915 = vrot.slane %v1777, 5
      %v1916 = vsel %vm1846, %v1914, %v1915
      %v1917 = vrot.slane %v1778, 5
      %v1918 = vrot.slane %v1917, 4
      %v1919 = vrot.slane %v1779, 5
      %v1920 = vsel %vm1846, %v1918, %v1919
      %v1921 = vrot.slane %v1919, 4
      %v1922 = vrot.slane %v1780, 5
      %v1923 = vsel %vm1846, %v1921, %v1922
      %v1924 = vrot.slane %v1781, 5
      %v1925 = vrot.slane %v1924, 4
      %v1926 = vrot.slane %v1782, 5
      %v1927 = vsel %vm1846, %v1925, %v1926
      %v1928 = vrot.slane %v1926, 4
      %v1929 = vrot.slane %v1783, 5
      %v1930 = vsel %vm1846, %v1928, %v1929
      %v1931 = vrot.slane %v1784, 5
      %v1932 = vrot.slane %v1931, 4
      %v1933 = vrot.slane %v1785, 5
      %v1934 = vsel %vm1846, %v1932, %v1933
      %v1935 = vrot.slane %v1933, 4
      %v1936 = vrot.slane %v1786, 5
      %v1937 = vsel %vm1846, %v1935, %v1936
      %v1938 = vrot.slane %v1787, 5
      %v1939 = vrot.slane %v1938, 4
      %v1940 = vrot.slane %v1788, 5
      %v1941 = vsel %vm1846, %v1939, %v1940
      %v1942 = vrot.slane %v1940, 4
      %v1943 = vrot.slane %v1789, 5
      %v1944 = vsel %vm1846, %v1942, %v1943
      %v1945 = vrot.slane %v1790, 5
      %v1946 = vrot.slane %v1945, 4
      %v1947 = vrot.slane %v1791, 5
      %v1948 = vsel %vm1846, %v1946, %v1947
      %v1949 = vrot.slane %v1947, 4
      %v1950 = vrot.slane %v1792, 5
      %v1951 = vsel %vm1846, %v1949, %v1950
      %v1952 = vrot.slane %v1793, 5
      %v1953 = vrot.slane %v1952, 4
      %v1954 = vrot.slane %v1794, 5
      %v1955 = vsel %vm1846, %v1953, %v1954
      %v1956 = vrot.slane %v1954, 4
      %v1957 = vrot.slane %v1795, 5
      %v1958 = vsel %vm1846, %v1956, %v1957
      %v1959 = vunpack.c.l.b16 %v1850
      %v1960 = vunpack.c.l.b16 %v1853
      %v1961 = vunpack.c.l.b16 %v1857
      %v1962 = vunpack.c.l.b16 %v1860
      %v1963 = vunpack.c.l.b16 %v1864
      %v1964 = vunpack.c.l.b16 %v1867
      %v1965 = vunpack.c.l.b16 %v1871
      %v1966 = vunpack.c.l.b16 %v1874
      %v1967 = vunpack.c.l.b16 %v1878
      %v1968 = vunpack.c.l.b16 %v1881
      %v1969 = vunpack.c.l.b16 %v1885
      %v1970 = vunpack.c.l.b16 %v1888
      %v1971 = vunpack.c.l.b16 %v1892
      %v1972 = vunpack.c.l.b16 %v1895
      %v1973 = vunpack.c.l.b16 %v1899
      %v1974 = vunpack.c.l.b16 %v1902
      %v1975 = vunpack.c.l.b16 %v1906
      %v1976 = vunpack.c.l.b16 %v1909
      %v1977 = vunpack.c.l.b16 %v1913
      %v1978 = vunpack.c.l.b16 %v1916
      %v1979 = vunpack.c.l.b16 %v1920
      %v1980 = vunpack.c.l.b16 %v1923
      %v1981 = vunpack.c.l.b16 %v1927
      %v1982 = vunpack.c.l.b16 %v1930
      %v1983 = vunpack.c.l.b16 %v1934
      %v1984 = vunpack.c.l.b16 %v1937
      %v1985 = vunpack.c.l.b16 %v1941
      %v1986 = vunpack.c.l.b16 %v1944
      %v1987 = vunpack.c.l.b16 %v1948
      %v1988 = vunpack.c.l.b16 %v1951
      %v1989 = vunpack.c.l.b16 %v1955
      %v1990 = vunpack.c.l.b16 %v1958
      %v1991 = vpack.c.b16 %v1960, %v1959
      %v1992 = vpack.c.b16 %v1962, %v1961
      %v1993 = vpack.c.b16 %v1964, %v1963
      %v1994 = vpack.c.b16 %v1966, %v1965
      %v1995 = vpack.c.b16 %v1968, %v1967
      %v1996 = vpack.c.b16 %v1970, %v1969
      %v1997 = vpack.c.b16 %v1972, %v1971
      %v1998 = vpack.c.b16 %v1974, %v1973
      %v1999 = vpack.c.b16 %v1976, %v1975
      %v2000 = vpack.c.b16 %v1978, %v1977
      %v2001 = vpack.c.b16 %v1980, %v1979
      %v2002 = vpack.c.b16 %v1982, %v1981
      %v2003 = vpack.c.b16 %v1984, %v1983
      %v2004 = vpack.c.b16 %v1986, %v1985
      %v2005 = vpack.c.b16 %v1988, %v1987
      %v2006 = vpack.c.b16 %v1990, %v1989
      %2007 = vrot.lane.b32.xlu0 %v1991, 16
      %v2008 = vpop.permute.xlu0 %2007
      %2009 = vrot.lane.b32.xlu0 %v1992, 16
      %v2010 = vpop.permute.xlu0 %2009
      %2011 = vrot.lane.b32.xlu0 %v1993, 16
      %v2012 = vpop.permute.xlu0 %2011
      %2013 = vrot.lane.b32.xlu0 %v1994, 16
      %v2014 = vpop.permute.xlu0 %2013
      %2015 = vrot.lane.b32.xlu0 %v1995, 16
      %v2016 = vpop.permute.xlu0 %2015
      %2017 = vrot.lane.b32.xlu0 %v1996, 16
      %v2018 = vpop.permute.xlu0 %2017
      %2019 = vrot.lane.b32.xlu0 %v1997, 16
      %v2020 = vpop.permute.xlu0 %2019
      %2021 = vrot.lane.b32.xlu0 %v1998, 16
      %v2022 = vpop.permute.xlu0 %2021
      %2023 = vrot.lane.b32.xlu0 %v1999, 16
      %v2024 = vpop.permute.xlu0 %2023
      %2025 = vrot.lane.b32.xlu0 %v2000, 16
      %v2026 = vpop.permute.xlu0 %2025
      %2027 = vrot.lane.b32.xlu0 %v2001, 16
      %v2028 = vpop.permute.xlu0 %2027
      %2029 = vrot.lane.b32.xlu0 %v2002, 16
      %v2030 = vpop.permute.xlu0 %2029
      %2031 = vrot.lane.b32.xlu0 %v2003, 16
      %v2032 = vpop.permute.xlu0 %2031
      %2033 = vrot.lane.b32.xlu0 %v2004, 16
      %v2034 = vpop.permute.xlu0 %2033
      %2035 = vrot.lane.b32.xlu0 %v2005, 16
      %v2036 = vpop.permute.xlu0 %2035
      %2037 = vrot.lane.b32.xlu0 %v2006, 16
      %v2038 = vpop.permute.xlu0 %2037
      %vm2055 = vcmask 195712
      %2056 = vst.msk [vmem:[#allocation3] sm:$0xff] %vm2055, %v2008
      %2057 = vst.msk [vmem:[#allocation3 + $0x8] sm:$0xff] %vm2055, %v2010
      %2058 = vst.msk [vmem:[#allocation3 + $0x10] sm:$0xff] %vm2055, %v2012
      %2059 = vst.msk [vmem:[#allocation3 + $0x18] sm:$0xff] %vm2055, %v2014
      %2060 = vst.msk [vmem:[#allocation3 + $0x20] sm:$0xff] %vm2055, %v2016
      %2061 = vst.msk [vmem:[#allocation3 + $0x28] sm:$0xff] %vm2055, %v2018
      %2062 = vst.msk [vmem:[#allocation3 + $0x30] sm:$0xff] %vm2055, %v2020
      %2063 = vst.msk [vmem:[#allocation3 + $0x38] sm:$0xff] %vm2055, %v2022
      %2064 = vst.msk [vmem:[#allocation3 + $0x40] sm:$0xff] %vm2055, %v2024
      %2065 = vst.msk [vmem:[#allocation3 + $0x48] sm:$0xff] %vm2055, %v2026
      %2066 = vst.msk [vmem:[#allocation3 + $0x50] sm:$0xff] %vm2055, %v2028
      %2067 = vst.msk [vmem:[#allocation3 + $0x58] sm:$0xff] %vm2055, %v2030
      %2068 = vst.msk [vmem:[#allocation3 + $0x60] sm:$0xff] %vm2055, %v2032
      %2069 = vst.msk [vmem:[#allocation3 + $0x68] sm:$0xff] %vm2055, %v2034
      %2070 = vst.msk [vmem:[#allocation3 + $0x70] sm:$0xff] %vm2055, %v2036
      %2071 = vst.msk [vmem:[#allocation3 + $0x78] sm:$0xff] %vm2055, %v2038
      %v2072 = vld [vmem:[%s437] sm:$0xf]
      %v2073 = vld [vmem:[%s437 + $0x4] sm:$0xf]
      %v2074 = vld [vmem:[%s437 + $0xc] sm:$0xf]
      %v2075 = vld [vmem:[%s437 + $0x10] sm:$0xf]
      %v2076 = vld [vmem:[%s437 + $0x18] sm:$0xf]
      %v2077 = vld [vmem:[%s437 + $0x1c] sm:$0xf]
      %v2078 = vld [vmem:[%s437 + $0x24] sm:$0xf]
      %v2079 = vld [vmem:[%s437 + $0x28] sm:$0xf]
      %v2080 = vld [vmem:[%s437 + $0x30] sm:$0xf]
      %v2081 = vld [vmem:[%s437 + $0x34] sm:$0xf]
      %v2082 = vld [vmem:[%s437 + $0x3c] sm:$0xf]
      %v2083 = vld [vmem:[%s437 + $0x40] sm:$0xf]
      %v2084 = vld [vmem:[%s437 + $0x48] sm:$0xf]
      %v2085 = vld [vmem:[%s437 + $0x4c] sm:$0xf]
      %v2086 = vld [vmem:[%s437 + $0x54] sm:$0xf]
      %v2087 = vld [vmem:[%s437 + $0x58] sm:$0xf]
      %v2088 = vld [vmem:[%s437 + $0x60] sm:$0xf]
      %v2089 = vld [vmem:[%s437 + $0x64] sm:$0xf]
      %v2090 = vld [vmem:[%s437 + $0x6c] sm:$0xf]
      %v2091 = vld [vmem:[%s437 + $0x70] sm:$0xf]
      %v2092 = vld [vmem:[%s437 + $0x78] sm:$0xf]
      %v2093 = vld [vmem:[%s437 + $0x7c] sm:$0xf]
      %v2094 = vld [vmem:[%s437 + $0x84] sm:$0xf]
      %v2095 = vld [vmem:[%s437 + $0x88] sm:$0xf]
      %v2096 = vld [vmem:[%s437 + $0x90] sm:$0xf]
      %v2097 = vld [vmem:[%s437 + $0x94] sm:$0xf]
      %v2098 = vld [vmem:[%s437 + $0x9c] sm:$0xf]
      %v2099 = vld [vmem:[%s437 + $0xa0] sm:$0xf]
      %v2100 = vld [vmem:[%s437 + $0xa8] sm:$0xf]
      %v2101 = vld [vmem:[%s437 + $0xac] sm:$0xf]
      %v2102 = vld [vmem:[%s437 + $0xb4] sm:$0xf]
      %v2103 = vld [vmem:[%s437 + $0xb8] sm:$0xf]
      %v2136 = vunpack.c.l.b16 %v2072
      %v2137 = vunpack.c.l.b16 %v2073
      %v2138 = vunpack.c.l.b16 %v2074
      %v2139 = vunpack.c.l.b16 %v2075
      %v2140 = vunpack.c.l.b16 %v2076
      %v2141 = vunpack.c.l.b16 %v2077
      %v2142 = vunpack.c.l.b16 %v2078
      %v2143 = vunpack.c.l.b16 %v2079
      %v2144 = vunpack.c.l.b16 %v2080
      %v2145 = vunpack.c.l.b16 %v2081
      %v2146 = vunpack.c.l.b16 %v2082
      %v2147 = vunpack.c.l.b16 %v2083
      %v2148 = vunpack.c.l.b16 %v2084
      %v2149 = vunpack.c.l.b16 %v2085
      %v2150 = vunpack.c.l.b16 %v2086
      %v2151 = vunpack.c.l.b16 %v2087
      %v2152 = vunpack.c.l.b16 %v2088
      %v2153 = vunpack.c.l.b16 %v2089
      %v2154 = vunpack.c.l.b16 %v2090
      %v2155 = vunpack.c.l.b16 %v2091
      %v2156 = vunpack.c.l.b16 %v2092
      %v2157 = vunpack.c.l.b16 %v2093
      %v2158 = vunpack.c.l.b16 %v2094
      %v2159 = vunpack.c.l.b16 %v2095
      %v2160 = vunpack.c.l.b16 %v2096
      %v2161 = vunpack.c.l.b16 %v2097
      %v2162 = vunpack.c.l.b16 %v2098
      %v2163 = vunpack.c.l.b16 %v2099
      %v2164 = vunpack.c.l.b16 %v2100
      %v2165 = vunpack.c.l.b16 %v2101
      %v2166 = vunpack.c.l.b16 %v2102
      %v2167 = vunpack.c.l.b16 %v2103
      %v2168 = vpack.c.b16 %v2137, %v2136
      %v2169 = vpack.c.b16 %v2139, %v2138
      %v2170 = vpack.c.b16 %v2141, %v2140
      %v2171 = vpack.c.b16 %v2143, %v2142
      %v2172 = vpack.c.b16 %v2145, %v2144
      %v2173 = vpack.c.b16 %v2147, %v2146
      %v2174 = vpack.c.b16 %v2149, %v2148
      %v2175 = vpack.c.b16 %v2151, %v2150
      %v2176 = vpack.c.b16 %v2153, %v2152
      %v2177 = vpack.c.b16 %v2155, %v2154
      %v2178 = vpack.c.b16 %v2157, %v2156
      %v2179 = vpack.c.b16 %v2159, %v2158
      %v2180 = vpack.c.b16 %v2161, %v2160
      %v2181 = vpack.c.b16 %v2163, %v2162
      %v2182 = vpack.c.b16 %v2165, %v2164
      %v2183 = vpack.c.b16 %v2167, %v2166
      %2184 = vrot.lane.b32.xlu0 %v2168, 24
      %v2185 = vpop.permute.xlu0 %2184
      %2186 = vrot.lane.b32.xlu0 %v2169, 24
      %v2187 = vpop.permute.xlu0 %2186
      %2188 = vrot.lane.b32.xlu0 %v2170, 24
      %v2189 = vpop.permute.xlu0 %2188
      %2190 = vrot.lane.b32.xlu0 %v2171, 24
      %v2191 = vpop.permute.xlu0 %2190
      %2192 = vrot.lane.b32.xlu0 %v2172, 24
      %v2193 = vpop.permute.xlu0 %2192
      %2194 = vrot.lane.b32.xlu0 %v2173, 24
      %v2195 = vpop.permute.xlu0 %2194
      %2196 = vrot.lane.b32.xlu0 %v2174, 24
      %v2197 = vpop.permute.xlu0 %2196
      %2198 = vrot.lane.b32.xlu0 %v2175, 24
      %v2199 = vpop.permute.xlu0 %2198
      %2200 = vrot.lane.b32.xlu0 %v2176, 24
      %v2201 = vpop.permute.xlu0 %2200
      %2202 = vrot.lane.b32.xlu0 %v2177, 24
      %v2203 = vpop.permute.xlu0 %2202
      %2204 = vrot.lane.b32.xlu0 %v2178, 24
      %v2205 = vpop.permute.xlu0 %2204
      %2206 = vrot.lane.b32.xlu0 %v2179, 24
      %v2207 = vpop.permute.xlu0 %2206
      %2208 = vrot.lane.b32.xlu0 %v2180, 24
      %v2209 = vpop.permute.xlu0 %2208
      %2210 = vrot.lane.b32.xlu0 %v2181, 24
      %v2211 = vpop.permute.xlu0 %2210
      %2212 = vrot.lane.b32.xlu0 %v2182, 24
      %v2213 = vpop.permute.xlu0 %2212
      %2214 = vrot.lane.b32.xlu0 %v2183, 24
      %v2215 = vpop.permute.xlu0 %2214
      %vm2232 = vcmask 261312
      %2233 = vst.msk [vmem:[#allocation3] sm:$0xff] %vm2232, %v2185
      %2234 = vst.msk [vmem:[#allocation3 + $0x8] sm:$0xff] %vm2232, %v2187
      %2235 = vst.msk [vmem:[#allocation3 + $0x10] sm:$0xff] %vm2232, %v2189
      %2236 = vst.msk [vmem:[#allocation3 + $0x18] sm:$0xff] %vm2232, %v2191
      %2237 = vst.msk [vmem:[#allocation3 + $0x20] sm:$0xff] %vm2232, %v2193
      %2238 = vst.msk [vmem:[#allocation3 + $0x28] sm:$0xff] %vm2232, %v2195
      %2239 = vst.msk [vmem:[#allocation3 + $0x30] sm:$0xff] %vm2232, %v2197
      %2240 = vst.msk [vmem:[#allocation3 + $0x38] sm:$0xff] %vm2232, %v2199
      %2241 = vst.msk [vmem:[#allocation3 + $0x40] sm:$0xff] %vm2232, %v2201
      %2242 = vst.msk [vmem:[#allocation3 + $0x48] sm:$0xff] %vm2232, %v2203
      %2243 = vst.msk [vmem:[#allocation3 + $0x50] sm:$0xff] %vm2232, %v2205
      %2244 = vst.msk [vmem:[#allocation3 + $0x58] sm:$0xff] %vm2232, %v2207
      %2245 = vst.msk [vmem:[#allocation3 + $0x60] sm:$0xff] %vm2232, %v2209
      %2246 = vst.msk [vmem:[#allocation3 + $0x68] sm:$0xff] %vm2232, %v2211
      %2247 = vst.msk [vmem:[#allocation3 + $0x70] sm:$0xff] %vm2232, %v2213
      %2248 = vst.msk [vmem:[#allocation3 + $0x78] sm:$0xff] %vm2232, %v2215
      %v2249 = vld [vmem:[%s437] sm:$0xf]
      %v2250 = vld [vmem:[%s437 + $0x4] sm:$0xf]
      %v2251 = vld [vmem:[%s437 + $0x8] sm:$0x1]
      %v2252 = vld [vmem:[%s437 + $0xc] sm:$0xf]
      %v2253 = vld [vmem:[%s437 + $0x10] sm:$0xf]
      %v2254 = vld [vmem:[%s437 + $0x14] sm:$0x1]
      %v2255 = vld [vmem:[%s437 + $0x18] sm:$0xf]
      %v2256 = vld [vmem:[%s437 + $0x1c] sm:$0xf]
      %v2257 = vld [vmem:[%s437 + $0x20] sm:$0x1]
      %v2258 = vld [vmem:[%s437 + $0x24] sm:$0xf]
      %v2259 = vld [vmem:[%s437 + $0x28] sm:$0xf]
      %v2260 = vld [vmem:[%s437 + $0x2c] sm:$0x1]
      %v2261 = vld [vmem:[%s437 + $0x30] sm:$0xf]
      %v2262 = vld [vmem:[%s437 + $0x34] sm:$0xf]
      %v2263 = vld [vmem:[%s437 + $0x38] sm:$0x1]
      %v2264 = vld [vmem:[%s437 + $0x3c] sm:$0xf]
      %v2265 = vld [vmem:[%s437 + $0x40] sm:$0xf]
      %v2266 = vld [vmem:[%s437 + $0x44] sm:$0x1]
      %v2267 = vld [vmem:[%s437 + $0x48] sm:$0xf]
      %v2268 = vld [vmem:[%s437 + $0x4c] sm:$0xf]
      %v2269 = vld [vmem:[%s437 + $0x50] sm:$0x1]
      %v2270 = vld [vmem:[%s437 + $0x54] sm:$0xf]
      %v2271 = vld [vmem:[%s437 + $0x58] sm:$0xf]
      %v2272 = vld [vmem:[%s437 + $0x5c] sm:$0x1]
      %v2273 = vld [vmem:[%s437 + $0x60] sm:$0xf]
      %v2274 = vld [vmem:[%s437 + $0x64] sm:$0xf]
      %v2275 = vld [vmem:[%s437 + $0x68] sm:$0x1]
      %v2276 = vld [vmem:[%s437 + $0x6c] sm:$0xf]
      %v2277 = vld [vmem:[%s437 + $0x70] sm:$0xf]
      %v2278 = vld [vmem:[%s437 + $0x74] sm:$0x1]
      %v2279 = vld [vmem:[%s437 + $0x78] sm:$0xf]
      %v2280 = vld [vmem:[%s437 + $0x7c] sm:$0xf]
      %v2281 = vld [vmem:[%s437 + $0x80] sm:$0x1]
      %v2282 = vld [vmem:[%s437 + $0x84] sm:$0xf]
      %v2283 = vld [vmem:[%s437 + $0x88] sm:$0xf]
      %v2284 = vld [vmem:[%s437 + $0x8c] sm:$0x1]
      %v2285 = vld [vmem:[%s437 + $0x90] sm:$0xf]
      %v2286 = vld [vmem:[%s437 + $0x94] sm:$0xf]
      %v2287 = vld [vmem:[%s437 + $0x98] sm:$0x1]
      %v2288 = vld [vmem:[%s437 + $0x9c] sm:$0xf]
      %v2289 = vld [vmem:[%s437 + $0xa0] sm:$0xf]
      %v2290 = vld [vmem:[%s437 + $0xa4] sm:$0x1]
      %v2291 = vld [vmem:[%s437 + $0xa8] sm:$0xf]
      %v2292 = vld [vmem:[%s437 + $0xac] sm:$0xf]
      %v2293 = vld [vmem:[%s437 + $0xb0] sm:$0x1]
      %v2294 = vld [vmem:[%s437 + $0xb4] sm:$0xf]
      %v2295 = vld [vmem:[%s437 + $0xb8] sm:$0xf]
      %v2296 = vld [vmem:[%s437 + $0xbc] sm:$0x1]
      %v2298 = vshrl.u32 %v2249, 16
      %v2300 = vrot.slane %v2298, 4
      %v2301 = vshll.u32 %v2249, 16
      %v2303 = vrot.slane %v2301, 5
      %v2304 = vor.u32 %v2300, %v2303
      %v2305 = vrot.slane %v2304, 4
      %v2307 = vshll.u32 %v2250, 16
      %v2309 = vrot.slane %v2307, 5
      %v2310 = vsel %vm1250, %v2305, %v2309
      %v2311 = vshrl.u32 %v2250, 16
      %v2313 = vrot.slane %v2311, 4
      %v2314 = vor.u32 %v2313, %v2309
      %v2315 = vrot.slane %v2314, 4
      %v2317 = vshll.u32 %v2251, 16
      %v2319 = vrot.slane %v2317, 5
      %v2320 = vsel %vm1250, %v2315, %v2319
      %v2322 = vshrl.u32 %v2252, 16
      %v2324 = vrot.slane %v2322, 4
      %v2325 = vshll.u32 %v2252, 16
      %v2327 = vrot.slane %v2325, 5
      %v2328 = vor.u32 %v2324, %v2327
      %v2329 = vrot.slane %v2328, 4
      %v2331 = vshll.u32 %v2253, 16
      %v2333 = vrot.slane %v2331, 5
      %v2334 = vsel %vm1250, %v2329, %v2333
      %v2335 = vshrl.u32 %v2253, 16
      %v2337 = vrot.slane %v2335, 4
      %v2338 = vor.u32 %v2337, %v2333
      %v2339 = vrot.slane %v2338, 4
      %v2341 = vshll.u32 %v2254, 16
      %v2343 = vrot.slane %v2341, 5
      %v2344 = vsel %vm1250, %v2339, %v2343
      %v2346 = vshrl.u32 %v2255, 16
      %v2348 = vrot.slane %v2346, 4
      %v2349 = vshll.u32 %v2255, 16
      %v2351 = vrot.slane %v2349, 5
      %v2352 = vor.u32 %v2348, %v2351
      %v2353 = vrot.slane %v2352, 4
      %v2355 = vshll.u32 %v2256, 16
      %v2357 = vrot.slane %v2355, 5
      %v2358 = vsel %vm1250, %v2353, %v2357
      %v2359 = vshrl.u32 %v2256, 16
      %v2361 = vrot.slane %v2359, 4
      %v2362 = vor.u32 %v2361, %v2357
      %v2363 = vrot.slane %v2362, 4
      %v2365 = vshll.u32 %v2257, 16
      %v2367 = vrot.slane %v2365, 5
      %v2368 = vsel %vm1250, %v2363, %v2367
      %v2370 = vshrl.u32 %v2258, 16
      %v2372 = vrot.slane %v2370, 4
      %v2373 = vshll.u32 %v2258, 16
      %v2375 = vrot.slane %v2373, 5
      %v2376 = vor.u32 %v2372, %v2375
      %v2377 = vrot.slane %v2376, 4
      %v2379 = vshll.u32 %v2259, 16
      %v2381 = vrot.slane %v2379, 5
      %v2382 = vsel %vm1250, %v2377, %v2381
      %v2383 = vshrl.u32 %v2259, 16
      %v2385 = vrot.slane %v2383, 4
      %v2386 = vor.u32 %v2385, %v2381
      %v2387 = vrot.slane %v2386, 4
      %v2389 = vshll.u32 %v2260, 16
      %v2391 = vrot.slane %v2389, 5
      %v2392 = vsel %vm1250, %v2387, %v2391
      %v2394 = vshrl.u32 %v2261, 16
      %v2396 = vrot.slane %v2394, 4
      %v2397 = vshll.u32 %v2261, 16
      %v2399 = vrot.slane %v2397, 5
      %v2400 = vor.u32 %v2396, %v2399
      %v2401 = vrot.slane %v2400, 4
      %v2403 = vshll.u32 %v2262, 16
      %v2405 = vrot.slane %v2403, 5
      %v2406 = vsel %vm1250, %v2401, %v2405
      %v2407 = vshrl.u32 %v2262, 16
      %v2409 = vrot.slane %v2407, 4
      %v2410 = vor.u32 %v2409, %v2405
      %v2411 = vrot.slane %v2410, 4
      %v2413 = vshll.u32 %v2263, 16
      %v2415 = vrot.slane %v2413, 5
      %v2416 = vsel %vm1250, %v2411, %v2415
      %v2418 = vshrl.u32 %v2264, 16
      %v2420 = vrot.slane %v2418, 4
      %v2421 = vshll.u32 %v2264, 16
      %v2423 = vrot.slane %v2421, 5
      %v2424 = vor.u32 %v2420, %v2423
      %v2425 = vrot.slane %v2424, 4
      %v2427 = vshll.u32 %v2265, 16
      %v2429 = vrot.slane %v2427, 5
      %v2430 = vsel %vm1250, %v2425, %v2429
      %v2431 = vshrl.u32 %v2265, 16
      %v2433 = vrot.slane %v2431, 4
      %v2434 = vor.u32 %v2433, %v2429
      %v2435 = vrot.slane %v2434, 4
      %v2437 = vshll.u32 %v2266, 16
      %v2439 = vrot.slane %v2437, 5
      %v2440 = vsel %vm1250, %v2435, %v2439
      %v2442 = vshrl.u32 %v2267, 16
      %v2444 = vrot.slane %v2442, 4
      %v2445 = vshll.u32 %v2267, 16
      %v2447 = vrot.slane %v2445, 5
      %v2448 = vor.u32 %v2444, %v2447
      %v2449 = vrot.slane %v2448, 4
      %v2451 = vshll.u32 %v2268, 16
      %v2453 = vrot.slane %v2451, 5
      %v2454 = vsel %vm1250, %v2449, %v2453
      %v2455 = vshrl.u32 %v2268, 16
      %v2457 = vrot.slane %v2455, 4
      %v2458 = vor.u32 %v2457, %v2453
      %v2459 = vrot.slane %v2458, 4
      %v2461 = vshll.u32 %v2269, 16
      %v2463 = vrot.slane %v2461, 5
      %v2464 = vsel %vm1250, %v2459, %v2463
      %v2466 = vshrl.u32 %v2270, 16
      %v2468 = vrot.slane %v2466, 4
      %v2469 = vshll.u32 %v2270, 16
      %v2471 = vrot.slane %v2469, 5
      %v2472 = vor.u32 %v2468, %v2471
      %v2473 = vrot.slane %v2472, 4
      %v2475 = vshll.u32 %v2271, 16
      %v2477 = vrot.slane %v2475, 5
      %v2478 = vsel %vm1250, %v2473, %v2477
      %v2479 = vshrl.u32 %v2271, 16
      %v2481 = vrot.slane %v2479, 4
      %v2482 = vor.u32 %v2481, %v2477
      %v2483 = vrot.slane %v2482, 4
      %v2485 = vshll.u32 %v2272, 16
      %v2487 = vrot.slane %v2485, 5
      %v2488 = vsel %vm1250, %v2483, %v2487
      %v2490 = vshrl.u32 %v2273, 16
      %v2492 = vrot.slane %v2490, 4
      %v2493 = vshll.u32 %v2273, 16
      %v2495 = vrot.slane %v2493, 5
      %v2496 = vor.u32 %v2492, %v2495
      %v2497 = vrot.slane %v2496, 4
      %v2499 = vshll.u32 %v2274, 16
      %v2501 = vrot.slane %v2499, 5
      %v2502 = vsel %vm1250, %v2497, %v2501
      %v2503 = vshrl.u32 %v2274, 16
      %v2505 = vrot.slane %v2503, 4
      %v2506 = vor.u32 %v2505, %v2501
      %v2507 = vrot.slane %v2506, 4
      %v2509 = vshll.u32 %v2275, 16
      %v2511 = vrot.slane %v2509, 5
      %v2512 = vsel %vm1250, %v2507, %v2511
      %v2514 = vshrl.u32 %v2276, 16
      %v2516 = vrot.slane %v2514, 4
      %v2517 = vshll.u32 %v2276, 16
      %v2519 = vrot.slane %v2517, 5
      %v2520 = vor.u32 %v2516, %v2519
      %v2521 = vrot.slane %v2520, 4
      %v2523 = vshll.u32 %v2277, 16
      %v2525 = vrot.slane %v2523, 5
      %v2526 = vsel %vm1250, %v2521, %v2525
      %v2527 = vshrl.u32 %v2277, 16
      %v2529 = vrot.slane %v2527, 4
      %v2530 = vor.u32 %v2529, %v2525
      %v2531 = vrot.slane %v2530, 4
      %v2533 = vshll.u32 %v2278, 16
      %v2535 = vrot.slane %v2533, 5
      %v2536 = vsel %vm1250, %v2531, %v2535
      %v2538 = vshrl.u32 %v2279, 16
      %v2540 = vrot.slane %v2538, 4
      %v2541 = vshll.u32 %v2279, 16
      %v2543 = vrot.slane %v2541, 5
      %v2544 = vor.u32 %v2540, %v2543
      %v2545 = vrot.slane %v2544, 4
      %v2547 = vshll.u32 %v2280, 16
      %v2549 = vrot.slane %v2547, 5
      %v2550 = vsel %vm1250, %v2545, %v2549
      %v2551 = vshrl.u32 %v2280, 16
      %v2553 = vrot.slane %v2551, 4
      %v2554 = vor.u32 %v2553, %v2549
      %v2555 = vrot.slane %v2554, 4
      %v2557 = vshll.u32 %v2281, 16
      %v2559 = vrot.slane %v2557, 5
      %v2560 = vsel %vm1250, %v2555, %v2559
      %v2562 = vshrl.u32 %v2282, 16
      %v2564 = vrot.slane %v2562, 4
      %v2565 = vshll.u32 %v2282, 16
      %v2567 = vrot.slane %v2565, 5
      %v2568 = vor.u32 %v2564, %v2567
      %v2569 = vrot.slane %v2568, 4
      %v2571 = vshll.u32 %v2283, 16
      %v2573 = vrot.slane %v2571, 5
      %v2574 = vsel %vm1250, %v2569, %v2573
      %v2575 = vshrl.u32 %v2283, 16
      %v2577 = vrot.slane %v2575, 4
      %v2578 = vor.u32 %v2577, %v2573
      %v2579 = vrot.slane %v2578, 4
      %v2581 = vshll.u32 %v2284, 16
      %v2583 = vrot.slane %v2581, 5
      %v2584 = vsel %vm1250, %v2579, %v2583
      %v2586 = vshrl.u32 %v2285, 16
      %v2588 = vrot.slane %v2586, 4
      %v2589 = vshll.u32 %v2285, 16
      %v2591 = vrot.slane %v2589, 5
      %v2592 = vor.u32 %v2588, %v2591
      %v2593 = vrot.slane %v2592, 4
      %v2595 = vshll.u32 %v2286, 16
      %v2597 = vrot.slane %v2595, 5
      %v2598 = vsel %vm1250, %v2593, %v2597
      %v2599 = vshrl.u32 %v2286, 16
      %v2601 = vrot.slane %v2599, 4
      %v2602 = vor.u32 %v2601, %v2597
      %v2603 = vrot.slane %v2602, 4
      %v2605 = vshll.u32 %v2287, 16
      %v2607 = vrot.slane %v2605, 5
      %v2608 = vsel %vm1250, %v2603, %v2607
      %v2610 = vshrl.u32 %v2288, 16
      %v2612 = vrot.slane %v2610, 4
      %v2613 = vshll.u32 %v2288, 16
      %v2615 = vrot.slane %v2613, 5
      %v2616 = vor.u32 %v2612, %v2615
      %v2617 = vrot.slane %v2616, 4
      %v2619 = vshll.u32 %v2289, 16
      %v2621 = vrot.slane %v2619, 5
      %v2622 = vsel %vm1250, %v2617, %v2621
      %v2623 = vshrl.u32 %v2289, 16
      %v2625 = vrot.slane %v2623, 4
      %v2626 = vor.u32 %v2625, %v2621
      %v2627 = vrot.slane %v2626, 4
      %v2629 = vshll.u32 %v2290, 16
      %v2631 = vrot.slane %v2629, 5
      %v2632 = vsel %vm1250, %v2627, %v2631
      %v2634 = vshrl.u32 %v2291, 16
      %v2636 = vrot.slane %v2634, 4
      %v2637 = vshll.u32 %v2291, 16
      %v2639 = vrot.slane %v2637, 5
      %v2640 = vor.u32 %v2636, %v2639
      %v2641 = vrot.slane %v2640, 4
      %v2643 = vshll.u32 %v2292, 16
      %v2645 = vrot.slane %v2643, 5
      %v2646 = vsel %vm1250, %v2641, %v2645
      %v2647 = vshrl.u32 %v2292, 16
      %v2649 = vrot.slane %v2647, 4
      %v2650 = vor.u32 %v2649, %v2645
      %v2651 = vrot.slane %v2650, 4
      %v2653 = vshll.u32 %v2293, 16
      %v2655 = vrot.slane %v2653, 5
      %v2656 = vsel %vm1250, %v2651, %v2655
      %v2658 = vshrl.u32 %v2294, 16
      %v2660 = vrot.slane %v2658, 4
      %v2661 = vshll.u32 %v2294, 16
      %v2663 = vrot.slane %v2661, 5
      %v2664 = vor.u32 %v2660, %v2663
      %v2665 = vrot.slane %v2664, 4
      %v2667 = vshll.u32 %v2295, 16
      %v2669 = vrot.slane %v2667, 5
      %v2670 = vsel %vm1250, %v2665, %v2669
      %v2671 = vshrl.u32 %v2295, 16
      %v2673 = vrot.slane %v2671, 4
      %v2674 = vor.u32 %v2673, %v2669
      %v2675 = vrot.slane %v2674, 4
      %v2677 = vshll.u32 %v2296, 16
      %v2679 = vrot.slane %v2677, 5
      %v2680 = vsel %vm1250, %v2675, %v2679
      %v2681 = vunpack.c.l.b16 %v2310
      %v2682 = vunpack.c.l.b16 %v2320
      %v2683 = vunpack.c.l.b16 %v2334
      %v2684 = vunpack.c.l.b16 %v2344
      %v2685 = vunpack.c.l.b16 %v2358
      %v2686 = vunpack.c.l.b16 %v2368
      %v2687 = vunpack.c.l.b16 %v2382
      %v2688 = vunpack.c.l.b16 %v2392
      %v2689 = vunpack.c.l.b16 %v2406
      %v2690 = vunpack.c.l.b16 %v2416
      %v2691 = vunpack.c.l.b16 %v2430
      %v2692 = vunpack.c.l.b16 %v2440
      %v2693 = vunpack.c.l.b16 %v2454
      %v2694 = vunpack.c.l.b16 %v2464
      %v2695 = vunpack.c.l.b16 %v2478
      %v2696 = vunpack.c.l.b16 %v2488
      %v2697 = vunpack.c.l.b16 %v2502
      %v2698 = vunpack.c.l.b16 %v2512
      %v2699 = vunpack.c.l.b16 %v2526
      %v2700 = vunpack.c.l.b16 %v2536
      %v2701 = vunpack.c.l.b16 %v2550
      %v2702 = vunpack.c.l.b16 %v2560
      %v2703 = vunpack.c.l.b16 %v2574
      %v2704 = vunpack.c.l.b16 %v2584
      %v2705 = vunpack.c.l.b16 %v2598
      %v2706 = vunpack.c.l.b16 %v2608
      %v2707 = vunpack.c.l.b16 %v2622
      %v2708 = vunpack.c.l.b16 %v2632
      %v2709 = vunpack.c.l.b16 %v2646
      %v2710 = vunpack.c.l.b16 %v2656
      %v2711 = vunpack.c.l.b16 %v2670
      %v2712 = vunpack.c.l.b16 %v2680
      %v2713 = vpack.c.b16 %v2682, %v2681
      %v2714 = vpack.c.b16 %v2684, %v2683
      %v2715 = vpack.c.b16 %v2686, %v2685
      %v2716 = vpack.c.b16 %v2688, %v2687
      %v2717 = vpack.c.b16 %v2690, %v2689
      %v2718 = vpack.c.b16 %v2692, %v2691
      %v2719 = vpack.c.b16 %v2694, %v2693
      %v2720 = vpack.c.b16 %v2696, %v2695
      %v2721 = vpack.c.b16 %v2698, %v2697
      %v2722 = vpack.c.b16 %v2700, %v2699
      %v2723 = vpack.c.b16 %v2702, %v2701
      %v2724 = vpack.c.b16 %v2704, %v2703
      %v2725 = vpack.c.b16 %v2706, %v2705
      %v2726 = vpack.c.b16 %v2708, %v2707
      %v2727 = vpack.c.b16 %v2710, %v2709
      %v2728 = vpack.c.b16 %v2712, %v2711
      %2729 = vrot.lane.b32.xlu0 %v2713, 32
      %v2730 = vpop.permute.xlu0 %2729
      %2731 = vrot.lane.b32.xlu0 %v2714, 32
      %v2732 = vpop.permute.xlu0 %2731
      %2733 = vrot.lane.b32.xlu0 %v2715, 32
      %v2734 = vpop.permute.xlu0 %2733
      %2735 = vrot.lane.b32.xlu0 %v2716, 32
      %v2736 = vpop.permute.xlu0 %2735
      %2737 = vrot.lane.b32.xlu0 %v2717, 32
      %v2738 = vpop.permute.xlu0 %2737
      %2739 = vrot.lane.b32.xlu0 %v2718, 32
      %v2740 = vpop.permute.xlu0 %2739
      %2741 = vrot.lane.b32.xlu0 %v2719, 32
      %v2742 = vpop.permute.xlu0 %2741
      %2743 = vrot.lane.b32.xlu0 %v2720, 32
      %v2744 = vpop.permute.xlu0 %2743
      %2745 = vrot.lane.b32.xlu0 %v2721, 32
      %v2746 = vpop.permute.xlu0 %2745
      %2747 = vrot.lane.b32.xlu0 %v2722, 32
      %v2748 = vpop.permute.xlu0 %2747
      %2749 = vrot.lane.b32.xlu0 %v2723, 32
      %v2750 = vpop.permute.xlu0 %2749
      %2751 = vrot.lane.b32.xlu0 %v2724, 32
      %v2752 = vpop.permute.xlu0 %2751
      %2753 = vrot.lane.b32.xlu0 %v2725, 32
      %v2754 = vpop.permute.xlu0 %2753
      %2755 = vrot.lane.b32.xlu0 %v2726, 32
      %v2756 = vpop.permute.xlu0 %2755
      %2757 = vrot.lane.b32.xlu0 %v2727, 32
      %v2758 = vpop.permute.xlu0 %2757
      %2759 = vrot.lane.b32.xlu0 %v2728, 32
      %v2760 = vpop.permute.xlu0 %2759
      %vm2777 = vcmask 326912
      %2778 = vst.msk [vmem:[#allocation3] sm:$0xff] %vm2777, %v2730
      %2779 = vst.msk [vmem:[#allocation3 + $0x8] sm:$0xff] %vm2777, %v2732
      %2780 = vst.msk [vmem:[#allocation3 + $0x10] sm:$0xff] %vm2777, %v2734
      %2781 = vst.msk [vmem:[#allocation3 + $0x18] sm:$0xff] %vm2777, %v2736
      %2782 = vst.msk [vmem:[#allocation3 + $0x20] sm:$0xff] %vm2777, %v2738
      %2783 = vst.msk [vmem:[#allocation3 + $0x28] sm:$0xff] %vm2777, %v2740
      %2784 = vst.msk [vmem:[#allocation3 + $0x30] sm:$0xff] %vm2777, %v2742
      %2785 = vst.msk [vmem:[#allocation3 + $0x38] sm:$0xff] %vm2777, %v2744
      %2786 = vst.msk [vmem:[#allocation3 + $0x40] sm:$0xff] %vm2777, %v2746
      %2787 = vst.msk [vmem:[#allocation3 + $0x48] sm:$0xff] %vm2777, %v2748
      %2788 = vst.msk [vmem:[#allocation3 + $0x50] sm:$0xff] %vm2777, %v2750
      %2789 = vst.msk [vmem:[#allocation3 + $0x58] sm:$0xff] %vm2777, %v2752
      %2790 = vst.msk [vmem:[#allocation3 + $0x60] sm:$0xff] %vm2777, %v2754
      %2791 = vst.msk [vmem:[#allocation3 + $0x68] sm:$0xff] %vm2777, %v2756
      %2792 = vst.msk [vmem:[#allocation3 + $0x70] sm:$0xff] %vm2777, %v2758
      %2793 = vst.msk [vmem:[#allocation3 + $0x78] sm:$0xff] %vm2777, %v2760
      %v2794 = vld [vmem:[%s437] sm:$0xe]
      %v2795 = vld [vmem:[%s437 + $0x4] sm:$0xf]
      %v2796 = vld [vmem:[%s437 + $0x8] sm:$0x1]
      %v2797 = vld [vmem:[%s437 + $0xc] sm:$0xe]
      %v2798 = vld [vmem:[%s437 + $0x10] sm:$0xf]
      %v2799 = vld [vmem:[%s437 + $0x14] sm:$0x1]
      %v2800 = vld [vmem:[%s437 + $0x18] sm:$0xe]
      %v2801 = vld [vmem:[%s437 + $0x1c] sm:$0xf]
      %v2802 = vld [vmem:[%s437 + $0x20] sm:$0x1]
      %v2803 = vld [vmem:[%s437 + $0x24] sm:$0xe]
      %v2804 = vld [vmem:[%s437 + $0x28] sm:$0xf]
      %v2805 = vld [vmem:[%s437 + $0x2c] sm:$0x1]
      %v2806 = vld [vmem:[%s437 + $0x30] sm:$0xe]
      %v2807 = vld [vmem:[%s437 + $0x34] sm:$0xf]
      %v2808 = vld [vmem:[%s437 + $0x38] sm:$0x1]
      %v2809 = vld [vmem:[%s437 + $0x3c] sm:$0xe]
      %v2810 = vld [vmem:[%s437 + $0x40] sm:$0xf]
      %v2811 = vld [vmem:[%s437 + $0x44] sm:$0x1]
      %v2812 = vld [vmem:[%s437 + $0x48] sm:$0xe]
      %v2813 = vld [vmem:[%s437 + $0x4c] sm:$0xf]
      %v2814 = vld [vmem:[%s437 + $0x50] sm:$0x1]
      %v2815 = vld [vmem:[%s437 + $0x54] sm:$0xe]
      %v2816 = vld [vmem:[%s437 + $0x58] sm:$0xf]
      %v2817 = vld [vmem:[%s437 + $0x5c] sm:$0x1]
      %v2818 = vld [vmem:[%s437 + $0x60] sm:$0xe]
      %v2819 = vld [vmem:[%s437 + $0x64] sm:$0xf]
      %v2820 = vld [vmem:[%s437 + $0x68] sm:$0x1]
      %v2821 = vld [vmem:[%s437 + $0x6c] sm:$0xe]
      %v2822 = vld [vmem:[%s437 + $0x70] sm:$0xf]
      %v2823 = vld [vmem:[%s437 + $0x74] sm:$0x1]
      %v2824 = vld [vmem:[%s437 + $0x78] sm:$0xe]
      %v2825 = vld [vmem:[%s437 + $0x7c] sm:$0xf]
      %v2826 = vld [vmem:[%s437 + $0x80] sm:$0x1]
      %v2827 = vld [vmem:[%s437 + $0x84] sm:$0xe]
      %v2828 = vld [vmem:[%s437 + $0x88] sm:$0xf]
      %v2829 = vld [vmem:[%s437 + $0x8c] sm:$0x1]
      %v2830 = vld [vmem:[%s437 + $0x90] sm:$0xe]
      %v2831 = vld [vmem:[%s437 + $0x94] sm:$0xf]
      %v2832 = vld [vmem:[%s437 + $0x98] sm:$0x1]
      %v2833 = vld [vmem:[%s437 + $0x9c] sm:$0xe]
      %v2834 = vld [vmem:[%s437 + $0xa0] sm:$0xf]
      %v2835 = vld [vmem:[%s437 + $0xa4] sm:$0x1]
      %v2836 = vld [vmem:[%s437 + $0xa8] sm:$0xe]
      %v2837 = vld [vmem:[%s437 + $0xac] sm:$0xf]
      %v2838 = vld [vmem:[%s437 + $0xb0] sm:$0x1]
      %v2839 = vld [vmem:[%s437 + $0xb4] sm:$0xe]
      %v2840 = vld [vmem:[%s437 + $0xb8] sm:$0xf]
      %v2841 = vld [vmem:[%s437 + $0xbc] sm:$0x1]
      %v2890 = vrot.slane %v2794, 5
      %v2891 = vrot.slane %v2890, 4
      %v2892 = vrot.slane %v2795, 5
      %v2893 = vsel %vm1846, %v2891, %v2892
      %v2894 = vrot.slane %v2892, 4
      %v2895 = vrot.slane %v2796, 5
      %v2896 = vsel %vm1846, %v2894, %v2895
      %v2897 = vrot.slane %v2797, 5
      %v2898 = vrot.slane %v2897, 4
      %v2899 = vrot.slane %v2798, 5
      %v2900 = vsel %vm1846, %v2898, %v2899
      %v2901 = vrot.slane %v2899, 4
      %v2902 = vrot.slane %v2799, 5
      %v2903 = vsel %vm1846, %v2901, %v2902
      %v2904 = vrot.slane %v2800, 5
      %v2905 = vrot.slane %v2904, 4
      %v2906 = vrot.slane %v2801, 5
      %v2907 = vsel %vm1846, %v2905, %v2906
      %v2908 = vrot.slane %v2906, 4
      %v2909 = vrot.slane %v2802, 5
      %v2910 = vsel %vm1846, %v2908, %v2909
      %v2911 = vrot.slane %v2803, 5
      %v2912 = vrot.slane %v2911, 4
      %v2913 = vrot.slane %v2804, 5
      %v2914 = vsel %vm1846, %v2912, %v2913
      %v2915 = vrot.slane %v2913, 4
      %v2916 = vrot.slane %v2805, 5
      %v2917 = vsel %vm1846, %v2915, %v2916
      %v2918 = vrot.slane %v2806, 5
      %v2919 = vrot.slane %v2918, 4
      %v2920 = vrot.slane %v2807, 5
      %v2921 = vsel %vm1846, %v2919, %v2920
      %v2922 = vrot.slane %v2920, 4
      %v2923 = vrot.slane %v2808, 5
      %v2924 = vsel %vm1846, %v2922, %v2923
      %v2925 = vrot.slane %v2809, 5
      %v2926 = vrot.slane %v2925, 4
      %v2927 = vrot.slane %v2810, 5
      %v2928 = vsel %vm1846, %v2926, %v2927
      %v2929 = vrot.slane %v2927, 4
      %v2930 = vrot.slane %v2811, 5
      %v2931 = vsel %vm1846, %v2929, %v2930
      %v2932 = vrot.slane %v2812, 5
      %v2933 = vrot.slane %v2932, 4
      %v2934 = vrot.slane %v2813, 5
      %v2935 = vsel %vm1846, %v2933, %v2934
      %v2936 = vrot.slane %v2934, 4
      %v2937 = vrot.slane %v2814, 5
      %v2938 = vsel %vm1846, %v2936, %v2937
      %v2939 = vrot.slane %v2815, 5
      %v2940 = vrot.slane %v2939, 4
      %v2941 = vrot.slane %v2816, 5
      %v2942 = vsel %vm1846, %v2940, %v2941
      %v2943 = vrot.slane %v2941, 4
      %v2944 = vrot.slane %v2817, 5
      %v2945 = vsel %vm1846, %v2943, %v2944
      %v2946 = vrot.slane %v2818, 5
      %v2947 = vrot.slane %v2946, 4
      %v2948 = vrot.slane %v2819, 5
      %v2949 = vsel %vm1846, %v2947, %v2948
      %v2950 = vrot.slane %v2948, 4
      %v2951 = vrot.slane %v2820, 5
      %v2952 = vsel %vm1846, %v2950, %v2951
      %v2953 = vrot.slane %v2821, 5
      %v2954 = vrot.slane %v2953, 4
      %v2955 = vrot.slane %v2822, 5
      %v2956 = vsel %vm1846, %v2954, %v2955
      %v2957 = vrot.slane %v2955, 4
      %v2958 = vrot.slane %v2823, 5
      %v2959 = vsel %vm1846, %v2957, %v2958
      %v2960 = vrot.slane %v2824, 5
      %v2961 = vrot.slane %v2960, 4
      %v2962 = vrot.slane %v2825, 5
      %v2963 = vsel %vm1846, %v2961, %v2962
      %v2964 = vrot.slane %v2962, 4
      %v2965 = vrot.slane %v2826, 5
      %v2966 = vsel %vm1846, %v2964, %v2965
      %v2967 = vrot.slane %v2827, 5
      %v2968 = vrot.slane %v2967, 4
      %v2969 = vrot.slane %v2828, 5
      %v2970 = vsel %vm1846, %v2968, %v2969
      %v2971 = vrot.slane %v2969, 4
      %v2972 = vrot.slane %v2829, 5
      %v2973 = vsel %vm1846, %v2971, %v2972
      %v2974 = vrot.slane %v2830, 5
      %v2975 = vrot.slane %v2974, 4
      %v2976 = vrot.slane %v2831, 5
      %v2977 = vsel %vm1846, %v2975, %v2976
      %v2978 = vrot.slane %v2976, 4
      %v2979 = vrot.slane %v2832, 5
      %v2980 = vsel %vm1846, %v2978, %v2979
      %v2981 = vrot.slane %v2833, 5
      %v2982 = vrot.slane %v2981, 4
      %v2983 = vrot.slane %v2834, 5
      %v2984 = vsel %vm1846, %v2982, %v2983
      %v2985 = vrot.slane %v2983, 4
      %v2986 = vrot.slane %v2835, 5
      %v2987 = vsel %vm1846, %v2985, %v2986
      %v2988 = vrot.slane %v2836, 5
      %v2989 = vrot.slane %v2988, 4
      %v2990 = vrot.slane %v2837, 5
      %v2991 = vsel %vm1846, %v2989, %v2990
      %v2992 = vrot.slane %v2990, 4
      %v2993 = vrot.slane %v2838, 5
      %v2994 = vsel %vm1846, %v2992, %v2993
      %v2995 = vrot.slane %v2839, 5
      %v2996 = vrot.slane %v2995, 4
      %v2997 = vrot.slane %v2840, 5
      %v2998 = vsel %vm1846, %v2996, %v2997
      %v2999 = vrot.slane %v2997, 4
      %v3000 = vrot.slane %v2841, 5
      %v3001 = vsel %vm1846, %v2999, %v3000
      %v3002 = vunpack.c.l.b16 %v2893
      %v3003 = vunpack.c.l.b16 %v2896
      %v3004 = vunpack.c.l.b16 %v2900
      %v3005 = vunpack.c.l.b16 %v2903
      %v3006 = vunpack.c.l.b16 %v2907
      %v3007 = vunpack.c.l.b16 %v2910
      %v3008 = vunpack.c.l.b16 %v2914
      %v3009 = vunpack.c.l.b16 %v2917
      %v3010 = vunpack.c.l.b16 %v2921
      %v3011 = vunpack.c.l.b16 %v2924
      %v3012 = vunpack.c.l.b16 %v2928
      %v3013 = vunpack.c.l.b16 %v2931
      %v3014 = vunpack.c.l.b16 %v2935
      %v3015 = vunpack.c.l.b16 %v2938
      %v3016 = vunpack.c.l.b16 %v2942
      %v3017 = vunpack.c.l.b16 %v2945
      %v3018 = vunpack.c.l.b16 %v2949
      %v3019 = vunpack.c.l.b16 %v2952
      %v3020 = vunpack.c.l.b16 %v2956
      %v3021 = vunpack.c.l.b16 %v2959
      %v3022 = vunpack.c.l.b16 %v2963
      %v3023 = vunpack.c.l.b16 %v2966
      %v3024 = vunpack.c.l.b16 %v2970
      %v3025 = vunpack.c.l.b16 %v2973
      %v3026 = vunpack.c.l.b16 %v2977
      %v3027 = vunpack.c.l.b16 %v2980
      %v3028 = vunpack.c.l.b16 %v2984
      %v3029 = vunpack.c.l.b16 %v2987
      %v3030 = vunpack.c.l.b16 %v2991
      %v3031 = vunpack.c.l.b16 %v2994
      %v3032 = vunpack.c.l.b16 %v2998
      %v3033 = vunpack.c.l.b16 %v3001
      %v3034 = vpack.c.b16 %v3003, %v3002
      %v3035 = vpack.c.b16 %v3005, %v3004
      %v3036 = vpack.c.b16 %v3007, %v3006
      %v3037 = vpack.c.b16 %v3009, %v3008
      %v3038 = vpack.c.b16 %v3011, %v3010
      %v3039 = vpack.c.b16 %v3013, %v3012
      %v3040 = vpack.c.b16 %v3015, %v3014
      %v3041 = vpack.c.b16 %v3017, %v3016
      %v3042 = vpack.c.b16 %v3019, %v3018
      %v3043 = vpack.c.b16 %v3021, %v3020
      %v3044 = vpack.c.b16 %v3023, %v3022
      %v3045 = vpack.c.b16 %v3025, %v3024
      %v3046 = vpack.c.b16 %v3027, %v3026
      %v3047 = vpack.c.b16 %v3029, %v3028
      %v3048 = vpack.c.b16 %v3031, %v3030
      %v3049 = vpack.c.b16 %v3033, %v3032
      %3050 = vrot.lane.b32.xlu0 %v3034, 40
      %v3051 = vpop.permute.xlu0 %3050
      %3052 = vrot.lane.b32.xlu0 %v3035, 40
      %v3053 = vpop.permute.xlu0 %3052
      %3054 = vrot.lane.b32.xlu0 %v3036, 40
      %v3055 = vpop.permute.xlu0 %3054
      %3056 = vrot.lane.b32.xlu0 %v3037, 40
      %v3057 = vpop.permute.xlu0 %3056
      %3058 = vrot.lane.b32.xlu0 %v3038, 40
      %v3059 = vpop.permute.xlu0 %3058
      %3060 = vrot.lane.b32.xlu0 %v3039, 40
      %v3061 = vpop.permute.xlu0 %3060
      %3062 = vrot.lane.b32.xlu0 %v3040, 40
      %v3063 = vpop.permute.xlu0 %3062
      %3064 = vrot.lane.b32.xlu0 %v3041, 40
      %v3065 = vpop.permute.xlu0 %3064
      %3066 = vrot.lane.b32.xlu0 %v3042, 40
      %v3067 = vpop.permute.xlu0 %3066
      %3068 = vrot.lane.b32.xlu0 %v3043, 40
      %v3069 = vpop.permute.xlu0 %3068
      %3070 = vrot.lane.b32.xlu0 %v3044, 40
      %v3071 = vpop.permute.xlu0 %3070
      %3072 = vrot.lane.b32.xlu0 %v3045, 40
      %v3073 = vpop.permute.xlu0 %3072
      %3074 = vrot.lane.b32.xlu0 %v3046, 40
      %v3075 = vpop.permute.xlu0 %3074
      %3076 = vrot.lane.b32.xlu0 %v3047, 40
      %v3077 = vpop.permute.xlu0 %3076
      %3078 = vrot.lane.b32.xlu0 %v3048, 40
      %v3079 = vpop.permute.xlu0 %3078
      %3080 = vrot.lane.b32.xlu0 %v3049, 40
      %v3081 = vpop.permute.xlu0 %3080
      %vm3098 = vcmask 392512
      %3099 = vst.msk [vmem:[#allocation3] sm:$0xff] %vm3098, %v3051
      %3100 = vst.msk [vmem:[#allocation3 + $0x8] sm:$0xff] %vm3098, %v3053
      %3101 = vst.msk [vmem:[#allocation3 + $0x10] sm:$0xff] %vm3098, %v3055
      %3102 = vst.msk [vmem:[#allocation3 + $0x18] sm:$0xff] %vm3098, %v3057
      %3103 = vst.msk [vmem:[#allocation3 + $0x20] sm:$0xff] %vm3098, %v3059
      %3104 = vst.msk [vmem:[#allocation3 + $0x28] sm:$0xff] %vm3098, %v3061
      %3105 = vst.msk [vmem:[#allocation3 + $0x30] sm:$0xff] %vm3098, %v3063
      %3106 = vst.msk [vmem:[#allocation3 + $0x38] sm:$0xff] %vm3098, %v3065
      %3107 = vst.msk [vmem:[#allocation3 + $0x40] sm:$0xff] %vm3098, %v3067
      %3108 = vst.msk [vmem:[#allocation3 + $0x48] sm:$0xff] %vm3098, %v3069
      %3109 = vst.msk [vmem:[#allocation3 + $0x50] sm:$0xff] %vm3098, %v3071
      %3110 = vst.msk [vmem:[#allocation3 + $0x58] sm:$0xff] %vm3098, %v3073
      %3111 = vst.msk [vmem:[#allocation3 + $0x60] sm:$0xff] %vm3098, %v3075
      %3112 = vst.msk [vmem:[#allocation3 + $0x68] sm:$0xff] %vm3098, %v3077
      %3113 = vst.msk [vmem:[#allocation3 + $0x70] sm:$0xff] %vm3098, %v3079
      %3114 = vst.msk [vmem:[#allocation3 + $0x78] sm:$0xff] %vm3098, %v3081
      %s3115 = scalar_lea.vmem [#allocation2], 24
      %v3116 = vld [vmem:[%s3115] sm:$0xf]
      %v3117 = vld [vmem:[%s3115 + $0x4] sm:$0xf]
      %v3118 = vld [vmem:[%s3115 + $0xc] sm:$0xf]
      %v3119 = vld [vmem:[%s3115 + $0x10] sm:$0xf]
      %v3120 = vld [vmem:[%s3115 + $0x18] sm:$0xf]
      %v3121 = vld [vmem:[%s3115 + $0x1c] sm:$0xf]
      %v3122 = vld [vmem:[%s3115 + $0x24] sm:$0xf]
      %v3123 = vld [vmem:[%s3115 + $0x28] sm:$0xf]
      %v3124 = vld [vmem:[%s3115 + $0x30] sm:$0xf]
      %v3125 = vld [vmem:[%s3115 + $0x34] sm:$0xf]
      %v3126 = vld [vmem:[%s3115 + $0x3c] sm:$0xf]
      %v3127 = vld [vmem:[%s3115 + $0x40] sm:$0xf]
      %v3128 = vld [vmem:[%s3115 + $0x48] sm:$0xf]
      %v3129 = vld [vmem:[%s3115 + $0x4c] sm:$0xf]
      %v3130 = vld [vmem:[%s3115 + $0x54] sm:$0xf]
      %v3131 = vld [vmem:[%s3115 + $0x58] sm:$0xf]
      %v3132 = vld [vmem:[%s3115 + $0x60] sm:$0xf]
      %v3133 = vld [vmem:[%s3115 + $0x64] sm:$0xf]
      %v3134 = vld [vmem:[%s3115 + $0x6c] sm:$0xf]
      %v3135 = vld [vmem:[%s3115 + $0x70] sm:$0xf]
      %v3136 = vld [vmem:[%s3115 + $0x78] sm:$0xf]
      %v3137 = vld [vmem:[%s3115 + $0x7c] sm:$0xf]
      %v3138 = vld [vmem:[%s3115 + $0x84] sm:$0xf]
      %v3139 = vld [vmem:[%s3115 + $0x88] sm:$0xf]
      %v3140 = vld [vmem:[%s3115 + $0x90] sm:$0xf]
      %v3141 = vld [vmem:[%s3115 + $0x94] sm:$0xf]
      %v3142 = vld [vmem:[%s3115 + $0x9c] sm:$0xf]
      %v3143 = vld [vmem:[%s3115 + $0xa0] sm:$0xf]
      %v3144 = vld [vmem:[%s3115 + $0xa8] sm:$0xf]
      %v3145 = vld [vmem:[%s3115 + $0xac] sm:$0xf]
      %v3146 = vld [vmem:[%s3115 + $0xb4] sm:$0xf]
      %v3147 = vld [vmem:[%s3115 + $0xb8] sm:$0xf]
      %v3180 = vunpack.c.l.b16 %v3116
      %v3181 = vunpack.c.l.b16 %v3117
      %v3182 = vunpack.c.l.b16 %v3118
      %v3183 = vunpack.c.l.b16 %v3119
      %v3184 = vunpack.c.l.b16 %v3120
      %v3185 = vunpack.c.l.b16 %v3121
      %v3186 = vunpack.c.l.b16 %v3122
      %v3187 = vunpack.c.l.b16 %v3123
      %v3188 = vunpack.c.l.b16 %v3124
      %v3189 = vunpack.c.l.b16 %v3125
      %v3190 = vunpack.c.l.b16 %v3126
      %v3191 = vunpack.c.l.b16 %v3127
      %v3192 = vunpack.c.l.b16 %v3128
      %v3193 = vunpack.c.l.b16 %v3129
      %v3194 = vunpack.c.l.b16 %v3130
      %v3195 = vunpack.c.l.b16 %v3131
      %v3196 = vunpack.c.l.b16 %v3132
      %v3197 = vunpack.c.l.b16 %v3133
      %v3198 = vunpack.c.l.b16 %v3134
      %v3199 = vunpack.c.l.b16 %v3135
      %v3200 = vunpack.c.l.b16 %v3136
      %v3201 = vunpack.c.l.b16 %v3137
      %v3202 = vunpack.c.l.b16 %v3138
      %v3203 = vunpack.c.l.b16 %v3139
      %v3204 = vunpack.c.l.b16 %v3140
      %v3205 = vunpack.c.l.b16 %v3141
      %v3206 = vunpack.c.l.b16 %v3142
      %v3207 = vunpack.c.l.b16 %v3143
      %v3208 = vunpack.c.l.b16 %v3144
      %v3209 = vunpack.c.l.b16 %v3145
      %v3210 = vunpack.c.l.b16 %v3146
      %v3211 = vunpack.c.l.b16 %v3147
      %v3212 = vpack.c.b16 %v3181, %v3180
      %v3213 = vpack.c.b16 %v3183, %v3182
      %v3214 = vpack.c.b16 %v3185, %v3184
      %v3215 = vpack.c.b16 %v3187, %v3186
      %v3216 = vpack.c.b16 %v3189, %v3188
      %v3217 = vpack.c.b16 %v3191, %v3190
      %v3218 = vpack.c.b16 %v3193, %v3192
      %v3219 = vpack.c.b16 %v3195, %v3194
      %v3220 = vpack.c.b16 %v3197, %v3196
      %v3221 = vpack.c.b16 %v3199, %v3198
      %v3222 = vpack.c.b16 %v3201, %v3200
      %v3223 = vpack.c.b16 %v3203, %v3202
      %v3224 = vpack.c.b16 %v3205, %v3204
      %v3225 = vpack.c.b16 %v3207, %v3206
      %v3226 = vpack.c.b16 %v3209, %v3208
      %v3227 = vpack.c.b16 %v3211, %v3210
      %3228 = vrot.lane.b32.xlu0 %v3212, 48
      %v3229 = vpop.permute.xlu0 %3228
      %3230 = vrot.lane.b32.xlu0 %v3213, 48
      %v3231 = vpop.permute.xlu0 %3230
      %3232 = vrot.lane.b32.xlu0 %v3214, 48
      %v3233 = vpop.permute.xlu0 %3232
      %3234 = vrot.lane.b32.xlu0 %v3215, 48
      %v3235 = vpop.permute.xlu0 %3234
      %3236 = vrot.lane.b32.xlu0 %v3216, 48
      %v3237 = vpop.permute.xlu0 %3236
      %3238 = vrot.lane.b32.xlu0 %v3217, 48
      %v3239 = vpop.permute.xlu0 %3238
      %3240 = vrot.lane.b32.xlu0 %v3218, 48
      %v3241 = vpop.permute.xlu0 %3240
      %3242 = vrot.lane.b32.xlu0 %v3219, 48
      %v3243 = vpop.permute.xlu0 %3242
      %3244 = vrot.lane.b32.xlu0 %v3220, 48
      %v3245 = vpop.permute.xlu0 %3244
      %3246 = vrot.lane.b32.xlu0 %v3221, 48
      %v3247 = vpop.permute.xlu0 %3246
      %3248 = vrot.lane.b32.xlu0 %v3222, 48
      %v3249 = vpop.permute.xlu0 %3248
      %3250 = vrot.lane.b32.xlu0 %v3223, 48
      %v3251 = vpop.permute.xlu0 %3250
      %3252 = vrot.lane.b32.xlu0 %v3224, 48
      %v3253 = vpop.permute.xlu0 %3252
      %3254 = vrot.lane.b32.xlu0 %v3225, 48
      %v3255 = vpop.permute.xlu0 %3254
      %3256 = vrot.lane.b32.xlu0 %v3226, 48
      %v3257 = vpop.permute.xlu0 %3256
      %3258 = vrot.lane.b32.xlu0 %v3227, 48
      %v3259 = vpop.permute.xlu0 %3258
      %vm3276 = vcmask 458112
      %3277 = vst.msk [vmem:[#allocation3] sm:$0xff] %vm3276, %v3229
      %3278 = vst.msk [vmem:[#allocation3 + $0x8] sm:$0xff] %vm3276, %v3231
      %3279 = vst.msk [vmem:[#allocation3 + $0x10] sm:$0xff] %vm3276, %v3233
      %3280 = vst.msk [vmem:[#allocation3 + $0x18] sm:$0xff] %vm3276, %v3235
      %3281 = vst.msk [vmem:[#allocation3 + $0x20] sm:$0xff] %vm3276, %v3237
      %3282 = vst.msk [vmem:[#allocation3 + $0x28] sm:$0xff] %vm3276, %v3239
      %3283 = vst.msk [vmem:[#allocation3 + $0x30] sm:$0xff] %vm3276, %v3241
      %3284 = vst.msk [vmem:[#allocation3 + $0x38] sm:$0xff] %vm3276, %v3243
      %3285 = vst.msk [vmem:[#allocation3 + $0x40] sm:$0xff] %vm3276, %v3245
      %3286 = vst.msk [vmem:[#allocation3 + $0x48] sm:$0xff] %vm3276, %v3247
      %3287 = vst.msk [vmem:[#allocation3 + $0x50] sm:$0xff] %vm3276, %v3249
      %3288 = vst.msk [vmem:[#allocation3 + $0x58] sm:$0xff] %vm3276, %v3251
      %3289 = vst.msk [vmem:[#allocation3 + $0x60] sm:$0xff] %vm3276, %v3253
      %3290 = vst.msk [vmem:[#allocation3 + $0x68] sm:$0xff] %vm3276, %v3255
      %3291 = vst.msk [vmem:[#allocation3 + $0x70] sm:$0xff] %vm3276, %v3257
      %3292 = vst.msk [vmem:[#allocation3 + $0x78] sm:$0xff] %vm3276, %v3259
      %v3293 = vld [vmem:[%s3115] sm:$0xf]
      %v3294 = vld [vmem:[%s3115 + $0x4] sm:$0xf]
      %v3295 = vld [vmem:[%s3115 + $0x8] sm:$0x1]
      %v3296 = vld [vmem:[%s3115 + $0xc] sm:$0xf]
      %v3297 = vld [vmem:[%s3115 + $0x10] sm:$0xf]
      %v3298 = vld [vmem:[%s3115 + $0x14] sm:$0x1]
      %v3299 = vld [vmem:[%s3115 + $0x18] sm:$0xf]
      %v3300 = vld [vmem:[%s3115 + $0x1c] sm:$0xf]
      %v3301 = vld [vmem:[%s3115 + $0x20] sm:$0x1]
      %v3302 = vld [vmem:[%s3115 + $0x24] sm:$0xf]
      %v3303 = vld [vmem:[%s3115 + $0x28] sm:$0xf]
      %v3304 = vld [vmem:[%s3115 + $0x2c] sm:$0x1]
      %v3305 = vld [vmem:[%s3115 + $0x30] sm:$0xf]
      %v3306 = vld [vmem:[%s3115 + $0x34] sm:$0xf]
      %v3307 = vld [vmem:[%s3115 + $0x38] sm:$0x1]
      %v3308 = vld [vmem:[%s3115 + $0x3c] sm:$0xf]
      %v3309 = vld [vmem:[%s3115 + $0x40] sm:$0xf]
      %v3310 = vld [vmem:[%s3115 + $0x44] sm:$0x1]
      %v3311 = vld [vmem:[%s3115 + $0x48] sm:$0xf]
      %v3312 = vld [vmem:[%s3115 + $0x4c] sm:$0xf]
      %v3313 = vld [vmem:[%s3115 + $0x50] sm:$0x1]
      %v3314 = vld [vmem:[%s3115 + $0x54] sm:$0xf]
      %v3315 = vld [vmem:[%s3115 + $0x58] sm:$0xf]
      %v3316 = vld [vmem:[%s3115 + $0x5c] sm:$0x1]
      %v3317 = vld [vmem:[%s3115 + $0x60] sm:$0xf]
      %v3318 = vld [vmem:[%s3115 + $0x64] sm:$0xf]
      %v3319 = vld [vmem:[%s3115 + $0x68] sm:$0x1]
      %v3320 = vld [vmem:[%s3115 + $0x6c] sm:$0xf]
      %v3321 = vld [vmem:[%s3115 + $0x70] sm:$0xf]
      %v3322 = vld [vmem:[%s3115 + $0x74] sm:$0x1]
      %v3323 = vld [vmem:[%s3115 + $0x78] sm:$0xf]
      %v3324 = vld [vmem:[%s3115 + $0x7c] sm:$0xf]
      %v3325 = vld [vmem:[%s3115 + $0x80] sm:$0x1]
      %v3326 = vld [vmem:[%s3115 + $0x84] sm:$0xf]
      %v3327 = vld [vmem:[%s3115 + $0x88] sm:$0xf]
      %v3328 = vld [vmem:[%s3115 + $0x8c] sm:$0x1]
      %v3329 = vld [vmem:[%s3115 + $0x90] sm:$0xf]
      %v3330 = vld [vmem:[%s3115 + $0x94] sm:$0xf]
      %v3331 = vld [vmem:[%s3115 + $0x98] sm:$0x1]
      %v3332 = vld [vmem:[%s3115 + $0x9c] sm:$0xf]
      %v3333 = vld [vmem:[%s3115 + $0xa0] sm:$0xf]
      %v3334 = vld [vmem:[%s3115 + $0xa4] sm:$0x1]
      %v3335 = vld [vmem:[%s3115 + $0xa8] sm:$0xf]
      %v3336 = vld [vmem:[%s3115 + $0xac] sm:$0xf]
      %v3337 = vld [vmem:[%s3115 + $0xb0] sm:$0x1]
      %v3338 = vld [vmem:[%s3115 + $0xb4] sm:$0xf]
      %v3339 = vld [vmem:[%s3115 + $0xb8] sm:$0xf]
      %v3340 = vld [vmem:[%s3115 + $0xbc] sm:$0x1]
      %v3342 = vshrl.u32 %v3293, 16
      %v3344 = vrot.slane %v3342, 4
      %v3345 = vshll.u32 %v3293, 16
      %v3347 = vrot.slane %v3345, 5
      %v3348 = vor.u32 %v3344, %v3347
      %v3349 = vrot.slane %v3348, 4
      %v3351 = vshll.u32 %v3294, 16
      %v3353 = vrot.slane %v3351, 5
      %v3354 = vsel %vm1250, %v3349, %v3353
      %v3355 = vshrl.u32 %v3294, 16
      %v3357 = vrot.slane %v3355, 4
      %v3358 = vor.u32 %v3357, %v3353
      %v3359 = vrot.slane %v3358, 4
      %v3361 = vshll.u32 %v3295, 16
      %v3363 = vrot.slane %v3361, 5
      %v3364 = vsel %vm1250, %v3359, %v3363
      %v3366 = vshrl.u32 %v3296, 16
      %v3368 = vrot.slane %v3366, 4
      %v3369 = vshll.u32 %v3296, 16
      %v3371 = vrot.slane %v3369, 5
      %v3372 = vor.u32 %v3368, %v3371
      %v3373 = vrot.slane %v3372, 4
      %v3375 = vshll.u32 %v3297, 16
      %v3377 = vrot.slane %v3375, 5
      %v3378 = vsel %vm1250, %v3373, %v3377
      %v3379 = vshrl.u32 %v3297, 16
      %v3381 = vrot.slane %v3379, 4
      %v3382 = vor.u32 %v3381, %v3377
      %v3383 = vrot.slane %v3382, 4
      %v3385 = vshll.u32 %v3298, 16
      %v3387 = vrot.slane %v3385, 5
      %v3388 = vsel %vm1250, %v3383, %v3387
      %v3390 = vshrl.u32 %v3299, 16
      %v3392 = vrot.slane %v3390, 4
      %v3393 = vshll.u32 %v3299, 16
      %v3395 = vrot.slane %v3393, 5
      %v3396 = vor.u32 %v3392, %v3395
      %v3397 = vrot.slane %v3396, 4
      %v3399 = vshll.u32 %v3300, 16
      %v3401 = vrot.slane %v3399, 5
      %v3402 = vsel %vm1250, %v3397, %v3401
      %v3403 = vshrl.u32 %v3300, 16
      %v3405 = vrot.slane %v3403, 4
      %v3406 = vor.u32 %v3405, %v3401
      %v3407 = vrot.slane %v3406, 4
      %v3409 = vshll.u32 %v3301, 16
      %v3411 = vrot.slane %v3409, 5
      %v3412 = vsel %vm1250, %v3407, %v3411
      %v3414 = vshrl.u32 %v3302, 16
      %v3416 = vrot.slane %v3414, 4
      %v3417 = vshll.u32 %v3302, 16
      %v3419 = vrot.slane %v3417, 5
      %v3420 = vor.u32 %v3416, %v3419
      %v3421 = vrot.slane %v3420, 4
      %v3423 = vshll.u32 %v3303, 16
      %v3425 = vrot.slane %v3423, 5
      %v3426 = vsel %vm1250, %v3421, %v3425
      %v3427 = vshrl.u32 %v3303, 16
      %v3429 = vrot.slane %v3427, 4
      %v3430 = vor.u32 %v3429, %v3425
      %v3431 = vrot.slane %v3430, 4
      %v3433 = vshll.u32 %v3304, 16
      %v3435 = vrot.slane %v3433, 5
      %v3436 = vsel %vm1250, %v3431, %v3435
      %v3438 = vshrl.u32 %v3305, 16
      %v3440 = vrot.slane %v3438, 4
      %v3441 = vshll.u32 %v3305, 16
      %v3443 = vrot.slane %v3441, 5
      %v3444 = vor.u32 %v3440, %v3443
      %v3445 = vrot.slane %v3444, 4
      %v3447 = vshll.u32 %v3306, 16
      %v3449 = vrot.slane %v3447, 5
      %v3450 = vsel %vm1250, %v3445, %v3449
      %v3451 = vshrl.u32 %v3306, 16
      %v3453 = vrot.slane %v3451, 4
      %v3454 = vor.u32 %v3453, %v3449
      %v3455 = vrot.slane %v3454, 4
      %v3457 = vshll.u32 %v3307, 16
      %v3459 = vrot.slane %v3457, 5
      %v3460 = vsel %vm1250, %v3455, %v3459
      %v3462 = vshrl.u32 %v3308, 16
      %v3464 = vrot.slane %v3462, 4
      %v3465 = vshll.u32 %v3308, 16
      %v3467 = vrot.slane %v3465, 5
      %v3468 = vor.u32 %v3464, %v3467
      %v3469 = vrot.slane %v3468, 4
      %v3471 = vshll.u32 %v3309, 16
      %v3473 = vrot.slane %v3471, 5
      %v3474 = vsel %vm1250, %v3469, %v3473
      %v3475 = vshrl.u32 %v3309, 16
      %v3477 = vrot.slane %v3475, 4
      %v3478 = vor.u32 %v3477, %v3473
      %v3479 = vrot.slane %v3478, 4
      %v3481 = vshll.u32 %v3310, 16
      %v3483 = vrot.slane %v3481, 5
      %v3484 = vsel %vm1250, %v3479, %v3483
      %v3486 = vshrl.u32 %v3311, 16
      %v3488 = vrot.slane %v3486, 4
      %v3489 = vshll.u32 %v3311, 16
      %v3491 = vrot.slane %v3489, 5
      %v3492 = vor.u32 %v3488, %v3491
      %v3493 = vrot.slane %v3492, 4
      %v3495 = vshll.u32 %v3312, 16
      %v3497 = vrot.slane %v3495, 5
      %v3498 = vsel %vm1250, %v3493, %v3497
      %v3499 = vshrl.u32 %v3312, 16
      %v3501 = vrot.slane %v3499, 4
      %v3502 = vor.u32 %v3501, %v3497
      %v3503 = vrot.slane %v3502, 4
      %v3505 = vshll.u32 %v3313, 16
      %v3507 = vrot.slane %v3505, 5
      %v3508 = vsel %vm1250, %v3503, %v3507
      %v3510 = vshrl.u32 %v3314, 16
      %v3512 = vrot.slane %v3510, 4
      %v3513 = vshll.u32 %v3314, 16
      %v3515 = vrot.slane %v3513, 5
      %v3516 = vor.u32 %v3512, %v3515
      %v3517 = vrot.slane %v3516, 4
      %v3519 = vshll.u32 %v3315, 16
      %v3521 = vrot.slane %v3519, 5
      %v3522 = vsel %vm1250, %v3517, %v3521
      %v3523 = vshrl.u32 %v3315, 16
      %v3525 = vrot.slane %v3523, 4
      %v3526 = vor.u32 %v3525, %v3521
      %v3527 = vrot.slane %v3526, 4
      %v3529 = vshll.u32 %v3316, 16
      %v3531 = vrot.slane %v3529, 5
      %v3532 = vsel %vm1250, %v3527, %v3531
      %v3534 = vshrl.u32 %v3317, 16
      %v3536 = vrot.slane %v3534, 4
      %v3537 = vshll.u32 %v3317, 16
      %v3539 = vrot.slane %v3537, 5
      %v3540 = vor.u32 %v3536, %v3539
      %v3541 = vrot.slane %v3540, 4
      %v3543 = vshll.u32 %v3318, 16
      %v3545 = vrot.slane %v3543, 5
      %v3546 = vsel %vm1250, %v3541, %v3545
      %v3547 = vshrl.u32 %v3318, 16
      %v3549 = vrot.slane %v3547, 4
      %v3550 = vor.u32 %v3549, %v3545
      %v3551 = vrot.slane %v3550, 4
      %v3553 = vshll.u32 %v3319, 16
      %v3555 = vrot.slane %v3553, 5
      %v3556 = vsel %vm1250, %v3551, %v3555
      %v3558 = vshrl.u32 %v3320, 16
      %v3560 = vrot.slane %v3558, 4
      %v3561 = vshll.u32 %v3320, 16
      %v3563 = vrot.slane %v3561, 5
      %v3564 = vor.u32 %v3560, %v3563
      %v3565 = vrot.slane %v3564, 4
      %v3567 = vshll.u32 %v3321, 16
      %v3569 = vrot.slane %v3567, 5
      %v3570 = vsel %vm1250, %v3565, %v3569
      %v3571 = vshrl.u32 %v3321, 16
      %v3573 = vrot.slane %v3571, 4
      %v3574 = vor.u32 %v3573, %v3569
      %v3575 = vrot.slane %v3574, 4
      %v3577 = vshll.u32 %v3322, 16
      %v3579 = vrot.slane %v3577, 5
      %v3580 = vsel %vm1250, %v3575, %v3579
      %v3582 = vshrl.u32 %v3323, 16
      %v3584 = vrot.slane %v3582, 4
      %v3585 = vshll.u32 %v3323, 16
      %v3587 = vrot.slane %v3585, 5
      %v3588 = vor.u32 %v3584, %v3587
      %v3589 = vrot.slane %v3588, 4
      %v3591 = vshll.u32 %v3324, 16
      %v3593 = vrot.slane %v3591, 5
      %v3594 = vsel %vm1250, %v3589, %v3593
      %v3595 = vshrl.u32 %v3324, 16
      %v3597 = vrot.slane %v3595, 4
      %v3598 = vor.u32 %v3597, %v3593
      %v3599 = vrot.slane %v3598, 4
      %v3601 = vshll.u32 %v3325, 16
      %v3603 = vrot.slane %v3601, 5
      %v3604 = vsel %vm1250, %v3599, %v3603
      %v3606 = vshrl.u32 %v3326, 16
      %v3608 = vrot.slane %v3606, 4
      %v3609 = vshll.u32 %v3326, 16
      %v3611 = vrot.slane %v3609, 5
      %v3612 = vor.u32 %v3608, %v3611
      %v3613 = vrot.slane %v3612, 4
      %v3615 = vshll.u32 %v3327, 16
      %v3617 = vrot.slane %v3615, 5
      %v3618 = vsel %vm1250, %v3613, %v3617
      %v3619 = vshrl.u32 %v3327, 16
      %v3621 = vrot.slane %v3619, 4
      %v3622 = vor.u32 %v3621, %v3617
      %v3623 = vrot.slane %v3622, 4
      %v3625 = vshll.u32 %v3328, 16
      %v3627 = vrot.slane %v3625, 5
      %v3628 = vsel %vm1250, %v3623, %v3627
      %v3630 = vshrl.u32 %v3329, 16
      %v3632 = vrot.slane %v3630, 4
      %v3633 = vshll.u32 %v3329, 16
      %v3635 = vrot.slane %v3633, 5
      %v3636 = vor.u32 %v3632, %v3635
      %v3637 = vrot.slane %v3636, 4
      %v3639 = vshll.u32 %v3330, 16
      %v3641 = vrot.slane %v3639, 5
      %v3642 = vsel %vm1250, %v3637, %v3641
      %v3643 = vshrl.u32 %v3330, 16
      %v3645 = vrot.slane %v3643, 4
      %v3646 = vor.u32 %v3645, %v3641
      %v3647 = vrot.slane %v3646, 4
      %v3649 = vshll.u32 %v3331, 16
      %v3651 = vrot.slane %v3649, 5
      %v3652 = vsel %vm1250, %v3647, %v3651
      %v3654 = vshrl.u32 %v3332, 16
      %v3656 = vrot.slane %v3654, 4
      %v3657 = vshll.u32 %v3332, 16
      %v3659 = vrot.slane %v3657, 5
      %v3660 = vor.u32 %v3656, %v3659
      %v3661 = vrot.slane %v3660, 4
      %v3663 = vshll.u32 %v3333, 16
      %v3665 = vrot.slane %v3663, 5
      %v3666 = vsel %vm1250, %v3661, %v3665
      %v3667 = vshrl.u32 %v3333, 16
      %v3669 = vrot.slane %v3667, 4
      %v3670 = vor.u32 %v3669, %v3665
      %v3671 = vrot.slane %v3670, 4
      %v3673 = vshll.u32 %v3334, 16
      %v3675 = vrot.slane %v3673, 5
      %v3676 = vsel %vm1250, %v3671, %v3675
      %v3678 = vshrl.u32 %v3335, 16
      %v3680 = vrot.slane %v3678, 4
      %v3681 = vshll.u32 %v3335, 16
      %v3683 = vrot.slane %v3681, 5
      %v3684 = vor.u32 %v3680, %v3683
      %v3685 = vrot.slane %v3684, 4
      %v3687 = vshll.u32 %v3336, 16
      %v3689 = vrot.slane %v3687, 5
      %v3690 = vsel %vm1250, %v3685, %v3689
      %v3691 = vshrl.u32 %v3336, 16
      %v3693 = vrot.slane %v3691, 4
      %v3694 = vor.u32 %v3693, %v3689
      %v3695 = vrot.slane %v3694, 4
      %v3697 = vshll.u32 %v3337, 16
      %v3699 = vrot.slane %v3697, 5
      %v3700 = vsel %vm1250, %v3695, %v3699
      %v3702 = vshrl.u32 %v3338, 16
      %v3704 = vrot.slane %v3702, 4
      %v3705 = vshll.u32 %v3338, 16
      %v3707 = vrot.slane %v3705, 5
      %v3708 = vor.u32 %v3704, %v3707
      %v3709 = vrot.slane %v3708, 4
      %v3711 = vshll.u32 %v3339, 16
      %v3713 = vrot.slane %v3711, 5
      %v3714 = vsel %vm1250, %v3709, %v3713
      %v3715 = vshrl.u32 %v3339, 16
      %v3717 = vrot.slane %v3715, 4
      %v3718 = vor.u32 %v3717, %v3713
      %v3719 = vrot.slane %v3718, 4
      %v3721 = vshll.u32 %v3340, 16
      %v3723 = vrot.slane %v3721, 5
      %v3724 = vsel %vm1250, %v3719, %v3723
      %v3725 = vunpack.c.l.b16 %v3354
      %v3726 = vunpack.c.l.b16 %v3364
      %v3727 = vunpack.c.l.b16 %v3378
      %v3728 = vunpack.c.l.b16 %v3388
      %v3729 = vunpack.c.l.b16 %v3402
      %v3730 = vunpack.c.l.b16 %v3412
      %v3731 = vunpack.c.l.b16 %v3426
      %v3732 = vunpack.c.l.b16 %v3436
      %v3733 = vunpack.c.l.b16 %v3450
      %v3734 = vunpack.c.l.b16 %v3460
      %v3735 = vunpack.c.l.b16 %v3474
      %v3736 = vunpack.c.l.b16 %v3484
      %v3737 = vunpack.c.l.b16 %v3498
      %v3738 = vunpack.c.l.b16 %v3508
      %v3739 = vunpack.c.l.b16 %v3522
      %v3740 = vunpack.c.l.b16 %v3532
      %v3741 = vunpack.c.l.b16 %v3546
      %v3742 = vunpack.c.l.b16 %v3556
      %v3743 = vunpack.c.l.b16 %v3570
      %v3744 = vunpack.c.l.b16 %v3580
      %v3745 = vunpack.c.l.b16 %v3594
      %v3746 = vunpack.c.l.b16 %v3604
      %v3747 = vunpack.c.l.b16 %v3618
      %v3748 = vunpack.c.l.b16 %v3628
      %v3749 = vunpack.c.l.b16 %v3642
      %v3750 = vunpack.c.l.b16 %v3652
      %v3751 = vunpack.c.l.b16 %v3666
      %v3752 = vunpack.c.l.b16 %v3676
      %v3753 = vunpack.c.l.b16 %v3690
      %v3754 = vunpack.c.l.b16 %v3700
      %v3755 = vunpack.c.l.b16 %v3714
      %v3756 = vunpack.c.l.b16 %v3724
      %v3757 = vpack.c.b16 %v3726, %v3725
      %v3758 = vpack.c.b16 %v3728, %v3727
      %v3759 = vpack.c.b16 %v3730, %v3729
      %v3760 = vpack.c.b16 %v3732, %v3731
      %v3761 = vpack.c.b16 %v3734, %v3733
      %v3762 = vpack.c.b16 %v3736, %v3735
      %v3763 = vpack.c.b16 %v3738, %v3737
      %v3764 = vpack.c.b16 %v3740, %v3739
      %v3765 = vpack.c.b16 %v3742, %v3741
      %v3766 = vpack.c.b16 %v3744, %v3743
      %v3767 = vpack.c.b16 %v3746, %v3745
      %v3768 = vpack.c.b16 %v3748, %v3747
      %v3769 = vpack.c.b16 %v3750, %v3749
      %v3770 = vpack.c.b16 %v3752, %v3751
      %v3771 = vpack.c.b16 %v3754, %v3753
      %v3772 = vpack.c.b16 %v3756, %v3755
      %3773 = vrot.lane.b32.xlu0 %v3757, 56
      %v3774 = vpop.permute.xlu0 %3773
      %3775 = vrot.lane.b32.xlu0 %v3758, 56
      %v3776 = vpop.permute.xlu0 %3775
      %3777 = vrot.lane.b32.xlu0 %v3759, 56
      %v3778 = vpop.permute.xlu0 %3777
      %3779 = vrot.lane.b32.xlu0 %v3760, 56
      %v3780 = vpop.permute.xlu0 %3779
      %3781 = vrot.lane.b32.xlu0 %v3761, 56
      %v3782 = vpop.permute.xlu0 %3781
      %3783 = vrot.lane.b32.xlu0 %v3762, 56
      %v3784 = vpop.permute.xlu0 %3783
      %3785 = vrot.lane.b32.xlu0 %v3763, 56
      %v3786 = vpop.permute.xlu0 %3785
      %3787 = vrot.lane.b32.xlu0 %v3764, 56
      %v3788 = vpop.permute.xlu0 %3787
      %3789 = vrot.lane.b32.xlu0 %v3765, 56
      %v3790 = vpop.permute.xlu0 %3789
      %3791 = vrot.lane.b32.xlu0 %v3766, 56
      %v3792 = vpop.permute.xlu0 %3791
      %3793 = vrot.lane.b32.xlu0 %v3767, 56
      %v3794 = vpop.permute.xlu0 %3793
      %3795 = vrot.lane.b32.xlu0 %v3768, 56
      %v3796 = vpop.permute.xlu0 %3795
      %3797 = vrot.lane.b32.xlu0 %v3769, 56
      %v3798 = vpop.permute.xlu0 %3797
      %3799 = vrot.lane.b32.xlu0 %v3770, 56
      %v3800 = vpop.permute.xlu0 %3799
      %3801 = vrot.lane.b32.xlu0 %v3771, 56
      %v3802 = vpop.permute.xlu0 %3801
      %3803 = vrot.lane.b32.xlu0 %v3772, 56
      %v3804 = vpop.permute.xlu0 %3803
      %vm3821 = vcmask 523712
      %3822 = vst.msk [vmem:[#allocation3] sm:$0xff] %vm3821, %v3774
      %3823 = vst.msk [vmem:[#allocation3 + $0x8] sm:$0xff] %vm3821, %v3776
      %3824 = vst.msk [vmem:[#allocation3 + $0x10] sm:$0xff] %vm3821, %v3778
      %3825 = vst.msk [vmem:[#allocation3 + $0x18] sm:$0xff] %vm3821, %v3780
      %3826 = vst.msk [vmem:[#allocation3 + $0x20] sm:$0xff] %vm3821, %v3782
      %3827 = vst.msk [vmem:[#allocation3 + $0x28] sm:$0xff] %vm3821, %v3784
      %3828 = vst.msk [vmem:[#allocation3 + $0x30] sm:$0xff] %vm3821, %v3786
      %3829 = vst.msk [vmem:[#allocation3 + $0x38] sm:$0xff] %vm3821, %v3788
      %3830 = vst.msk [vmem:[#allocation3 + $0x40] sm:$0xff] %vm3821, %v3790
      %3831 = vst.msk [vmem:[#allocation3 + $0x48] sm:$0xff] %vm3821, %v3792
      %3832 = vst.msk [vmem:[#allocation3 + $0x50] sm:$0xff] %vm3821, %v3794
      %3833 = vst.msk [vmem:[#allocation3 + $0x58] sm:$0xff] %vm3821, %v3796
      %3834 = vst.msk [vmem:[#allocation3 + $0x60] sm:$0xff] %vm3821, %v3798
      %3835 = vst.msk [vmem:[#allocation3 + $0x68] sm:$0xff] %vm3821, %v3800
      %3836 = vst.msk [vmem:[#allocation3 + $0x70] sm:$0xff] %vm3821, %v3802
      %3837 = vst.msk [vmem:[#allocation3 + $0x78] sm:$0xff] %vm3821, %v3804
      %v3838 = vld [vmem:[%s3115] sm:$0xe]
      %v3839 = vld [vmem:[%s3115 + $0x4] sm:$0xf]
      %v3840 = vld [vmem:[%s3115 + $0x8] sm:$0x1]
      %v3841 = vld [vmem:[%s3115 + $0xc] sm:$0xe]
      %v3842 = vld [vmem:[%s3115 + $0x10] sm:$0xf]
      %v3843 = vld [vmem:[%s3115 + $0x14] sm:$0x1]
      %v3844 = vld [vmem:[%s3115 + $0x18] sm:$0xe]
      %v3845 = vld [vmem:[%s3115 + $0x1c] sm:$0xf]
      %v3846 = vld [vmem:[%s3115 + $0x20] sm:$0x1]
      %v3847 = vld [vmem:[%s3115 + $0x24] sm:$0xe]
      %v3848 = vld [vmem:[%s3115 + $0x28] sm:$0xf]
      %v3849 = vld [vmem:[%s3115 + $0x2c] sm:$0x1]
      %v3850 = vld [vmem:[%s3115 + $0x30] sm:$0xe]
      %v3851 = vld [vmem:[%s3115 + $0x34] sm:$0xf]
      %v3852 = vld [vmem:[%s3115 + $0x38] sm:$0x1]
      %v3853 = vld [vmem:[%s3115 + $0x3c] sm:$0xe]
      %v3854 = vld [vmem:[%s3115 + $0x40] sm:$0xf]
      %v3855 = vld [vmem:[%s3115 + $0x44] sm:$0x1]
      %v3856 = vld [vmem:[%s3115 + $0x48] sm:$0xe]
      %v3857 = vld [vmem:[%s3115 + $0x4c] sm:$0xf]
      %v3858 = vld [vmem:[%s3115 + $0x50] sm:$0x1]
      %v3859 = vld [vmem:[%s3115 + $0x54] sm:$0xe]
      %v3860 = vld [vmem:[%s3115 + $0x58] sm:$0xf]
      %v3861 = vld [vmem:[%s3115 + $0x5c] sm:$0x1]
      %v3862 = vld [vmem:[%s3115 + $0x60] sm:$0xe]
      %v3863 = vld [vmem:[%s3115 + $0x64] sm:$0xf]
      %v3864 = vld [vmem:[%s3115 + $0x68] sm:$0x1]
      %v3865 = vld [vmem:[%s3115 + $0x6c] sm:$0xe]
      %v3866 = vld [vmem:[%s3115 + $0x70] sm:$0xf]
      %v3867 = vld [vmem:[%s3115 + $0x74] sm:$0x1]
      %v3868 = vld [vmem:[%s3115 + $0x78] sm:$0xe]
      %v3869 = vld [vmem:[%s3115 + $0x7c] sm:$0xf]
      %v3870 = vld [vmem:[%s3115 + $0x80] sm:$0x1]
      %v3871 = vld [vmem:[%s3115 + $0x84] sm:$0xe]
      %v3872 = vld [vmem:[%s3115 + $0x88] sm:$0xf]
      %v3873 = vld [vmem:[%s3115 + $0x8c] sm:$0x1]
      %v3874 = vld [vmem:[%s3115 + $0x90] sm:$0xe]
      %v3875 = vld [vmem:[%s3115 + $0x94] sm:$0xf]
      %v3876 = vld [vmem:[%s3115 + $0x98] sm:$0x1]
      %v3877 = vld [vmem:[%s3115 + $0x9c] sm:$0xe]
      %v3878 = vld [vmem:[%s3115 + $0xa0] sm:$0xf]
      %v3879 = vld [vmem:[%s3115 + $0xa4] sm:$0x1]
      %v3880 = vld [vmem:[%s3115 + $0xa8] sm:$0xe]
      %v3881 = vld [vmem:[%s3115 + $0xac] sm:$0xf]
      %v3882 = vld [vmem:[%s3115 + $0xb0] sm:$0x1]
      %v3883 = vld [vmem:[%s3115 + $0xb4] sm:$0xe]
      %v3884 = vld [vmem:[%s3115 + $0xb8] sm:$0xf]
      %v3885 = vld [vmem:[%s3115 + $0xbc] sm:$0x1]
      %v3934 = vrot.slane %v3838, 5
      %v3935 = vrot.slane %v3934, 4
      %v3936 = vrot.slane %v3839, 5
      %v3937 = vsel %vm1846, %v3935, %v3936
      %v3938 = vrot.slane %v3936, 4
      %v3939 = vrot.slane %v3840, 5
      %v3940 = vsel %vm1846, %v3938, %v3939
      %v3941 = vrot.slane %v3841, 5
      %v3942 = vrot.slane %v3941, 4
      %v3943 = vrot.slane %v3842, 5
      %v3944 = vsel %vm1846, %v3942, %v3943
      %v3945 = vrot.slane %v3943, 4
      %v3946 = vrot.slane %v3843, 5
      %v3947 = vsel %vm1846, %v3945, %v3946
      %v3948 = vrot.slane %v3844, 5
      %v3949 = vrot.slane %v3948, 4
      %v3950 = vrot.slane %v3845, 5
      %v3951 = vsel %vm1846, %v3949, %v3950
      %v3952 = vrot.slane %v3950, 4
      %v3953 = vrot.slane %v3846, 5
      %v3954 = vsel %vm1846, %v3952, %v3953
      %v3955 = vrot.slane %v3847, 5
      %v3956 = vrot.slane %v3955, 4
      %v3957 = vrot.slane %v3848, 5
      %v3958 = vsel %vm1846, %v3956, %v3957
      %v3959 = vrot.slane %v3957, 4
      %v3960 = vrot.slane %v3849, 5
      %v3961 = vsel %vm1846, %v3959, %v3960
      %v3962 = vrot.slane %v3850, 5
      %v3963 = vrot.slane %v3962, 4
      %v3964 = vrot.slane %v3851, 5
      %v3965 = vsel %vm1846, %v3963, %v3964
      %v3966 = vrot.slane %v3964, 4
      %v3967 = vrot.slane %v3852, 5
      %v3968 = vsel %vm1846, %v3966, %v3967
      %v3969 = vrot.slane %v3853, 5
      %v3970 = vrot.slane %v3969, 4
      %v3971 = vrot.slane %v3854, 5
      %v3972 = vsel %vm1846, %v3970, %v3971
      %v3973 = vrot.slane %v3971, 4
      %v3974 = vrot.slane %v3855, 5
      %v3975 = vsel %vm1846, %v3973, %v3974
      %v3976 = vrot.slane %v3856, 5
      %v3977 = vrot.slane %v3976, 4
      %v3978 = vrot.slane %v3857, 5
      %v3979 = vsel %vm1846, %v3977, %v3978
      %v3980 = vrot.slane %v3978, 4
      %v3981 = vrot.slane %v3858, 5
      %v3982 = vsel %vm1846, %v3980, %v3981
      %v3983 = vrot.slane %v3859, 5
      %v3984 = vrot.slane %v3983, 4
      %v3985 = vrot.slane %v3860, 5
      %v3986 = vsel %vm1846, %v3984, %v3985
      %v3987 = vrot.slane %v3985, 4
      %v3988 = vrot.slane %v3861, 5
      %v3989 = vsel %vm1846, %v3987, %v3988
      %v3990 = vrot.slane %v3862, 5
      %v3991 = vrot.slane %v3990, 4
      %v3992 = vrot.slane %v3863, 5
      %v3993 = vsel %vm1846, %v3991, %v3992
      %v3994 = vrot.slane %v3992, 4
      %v3995 = vrot.slane %v3864, 5
      %v3996 = vsel %vm1846, %v3994, %v3995
      %v3997 = vrot.slane %v3865, 5
      %v3998 = vrot.slane %v3997, 4
      %v3999 = vrot.slane %v3866, 5
      %v4000 = vsel %vm1846, %v3998, %v3999
      %v4001 = vrot.slane %v3999, 4
      %v4002 = vrot.slane %v3867, 5
      %v4003 = vsel %vm1846, %v4001, %v4002
      %v4004 = vrot.slane %v3868, 5
      %v4005 = vrot.slane %v4004, 4
      %v4006 = vrot.slane %v3869, 5
      %v4007 = vsel %vm1846, %v4005, %v4006
      %v4008 = vrot.slane %v4006, 4
      %v4009 = vrot.slane %v3870, 5
      %v4010 = vsel %vm1846, %v4008, %v4009
      %v4011 = vrot.slane %v3871, 5
      %v4012 = vrot.slane %v4011, 4
      %v4013 = vrot.slane %v3872, 5
      %v4014 = vsel %vm1846, %v4012, %v4013
      %v4015 = vrot.slane %v4013, 4
      %v4016 = vrot.slane %v3873, 5
      %v4017 = vsel %vm1846, %v4015, %v4016
      %v4018 = vrot.slane %v3874, 5
      %v4019 = vrot.slane %v4018, 4
      %v4020 = vrot.slane %v3875, 5
      %v4021 = vsel %vm1846, %v4019, %v4020
      %v4022 = vrot.slane %v4020, 4
      %v4023 = vrot.slane %v3876, 5
      %v4024 = vsel %vm1846, %v4022, %v4023
      %v4025 = vrot.slane %v3877, 5
      %v4026 = vrot.slane %v4025, 4
      %v4027 = vrot.slane %v3878, 5
      %v4028 = vsel %vm1846, %v4026, %v4027
      %v4029 = vrot.slane %v4027, 4
      %v4030 = vrot.slane %v3879, 5
      %v4031 = vsel %vm1846, %v4029, %v4030
      %v4032 = vrot.slane %v3880, 5
      %v4033 = vrot.slane %v4032, 4
      %v4034 = vrot.slane %v3881, 5
      %v4035 = vsel %vm1846, %v4033, %v4034
      %v4036 = vrot.slane %v4034, 4
      %v4037 = vrot.slane %v3882, 5
      %v4038 = vsel %vm1846, %v4036, %v4037
      %v4039 = vrot.slane %v3883, 5
      %v4040 = vrot.slane %v4039, 4
      %v4041 = vrot.slane %v3884, 5
      %v4042 = vsel %vm1846, %v4040, %v4041
      %v4043 = vrot.slane %v4041, 4
      %v4044 = vrot.slane %v3885, 5
      %v4045 = vsel %vm1846, %v4043, %v4044
      %v4046 = vunpack.c.l.b16 %v3937
      %v4047 = vunpack.c.l.b16 %v3940
      %v4048 = vunpack.c.l.b16 %v3944
      %v4049 = vunpack.c.l.b16 %v3947
      %v4050 = vunpack.c.l.b16 %v3951
      %v4051 = vunpack.c.l.b16 %v3954
      %v4052 = vunpack.c.l.b16 %v3958
      %v4053 = vunpack.c.l.b16 %v3961
      %v4054 = vunpack.c.l.b16 %v3965
      %v4055 = vunpack.c.l.b16 %v3968
      %v4056 = vunpack.c.l.b16 %v3972
      %v4057 = vunpack.c.l.b16 %v3975
      %v4058 = vunpack.c.l.b16 %v3979
      %v4059 = vunpack.c.l.b16 %v3982
      %v4060 = vunpack.c.l.b16 %v3986
      %v4061 = vunpack.c.l.b16 %v3989
      %v4062 = vunpack.c.l.b16 %v3993
      %v4063 = vunpack.c.l.b16 %v3996
      %v4064 = vunpack.c.l.b16 %v4000
      %v4065 = vunpack.c.l.b16 %v4003
      %v4066 = vunpack.c.l.b16 %v4007
      %v4067 = vunpack.c.l.b16 %v4010
      %v4068 = vunpack.c.l.b16 %v4014
      %v4069 = vunpack.c.l.b16 %v4017
      %v4070 = vunpack.c.l.b16 %v4021
      %v4071 = vunpack.c.l.b16 %v4024
      %v4072 = vunpack.c.l.b16 %v4028
      %v4073 = vunpack.c.l.b16 %v4031
      %v4074 = vunpack.c.l.b16 %v4035
      %v4075 = vunpack.c.l.b16 %v4038
      %v4076 = vunpack.c.l.b16 %v4042
      %v4077 = vunpack.c.l.b16 %v4045
      %v4078 = vpack.c.b16 %v4047, %v4046
      %v4079 = vpack.c.b16 %v4049, %v4048
      %v4080 = vpack.c.b16 %v4051, %v4050
      %v4081 = vpack.c.b16 %v4053, %v4052
      %v4082 = vpack.c.b16 %v4055, %v4054
      %v4083 = vpack.c.b16 %v4057, %v4056
      %v4084 = vpack.c.b16 %v4059, %v4058
      %v4085 = vpack.c.b16 %v4061, %v4060
      %v4086 = vpack.c.b16 %v4063, %v4062
      %v4087 = vpack.c.b16 %v4065, %v4064
      %v4088 = vpack.c.b16 %v4067, %v4066
      %v4089 = vpack.c.b16 %v4069, %v4068
      %v4090 = vpack.c.b16 %v4071, %v4070
      %v4091 = vpack.c.b16 %v4073, %v4072
      %v4092 = vpack.c.b16 %v4075, %v4074
      %v4093 = vpack.c.b16 %v4077, %v4076
      %4094 = vrot.lane.b32.xlu0 %v4078, 64
      %v4095 = vpop.permute.xlu0 %4094
      %4096 = vrot.lane.b32.xlu0 %v4079, 64
      %v4097 = vpop.permute.xlu0 %4096
      %4098 = vrot.lane.b32.xlu0 %v4080, 64
      %v4099 = vpop.permute.xlu0 %4098
      %4100 = vrot.lane.b32.xlu0 %v4081, 64
      %v4101 = vpop.permute.xlu0 %4100
      %4102 = vrot.lane.b32.xlu0 %v4082, 64
      %v4103 = vpop.permute.xlu0 %4102
      %4104 = vrot.lane.b32.xlu0 %v4083, 64
      %v4105 = vpop.permute.xlu0 %4104
      %4106 = vrot.lane.b32.xlu0 %v4084, 64
      %v4107 = vpop.permute.xlu0 %4106
      %4108 = vrot.lane.b32.xlu0 %v4085, 64
      %v4109 = vpop.permute.xlu0 %4108
      %4110 = vrot.lane.b32.xlu0 %v4086, 64
      %v4111 = vpop.permute.xlu0 %4110
      %4112 = vrot.lane.b32.xlu0 %v4087, 64
      %v4113 = vpop.permute.xlu0 %4112
      %4114 = vrot.lane.b32.xlu0 %v4088, 64
      %v4115 = vpop.permute.xlu0 %4114
      %4116 = vrot.lane.b32.xlu0 %v4089, 64
      %v4117 = vpop.permute.xlu0 %4116
      %4118 = vrot.lane.b32.xlu0 %v4090, 64
      %v4119 = vpop.permute.xlu0 %4118
      %4120 = vrot.lane.b32.xlu0 %v4091, 64
      %v4121 = vpop.permute.xlu0 %4120
      %4122 = vrot.lane.b32.xlu0 %v4092, 64
      %v4123 = vpop.permute.xlu0 %4122
      %4124 = vrot.lane.b32.xlu0 %v4093, 64
      %v4125 = vpop.permute.xlu0 %4124
      %vm4142 = vcmask 589312
      %4143 = vst.msk [vmem:[#allocation3] sm:$0xff] %vm4142, %v4095
      %4144 = vst.msk [vmem:[#allocation3 + $0x8] sm:$0xff] %vm4142, %v4097
      %4145 = vst.msk [vmem:[#allocation3 + $0x10] sm:$0xff] %vm4142, %v4099
      %4146 = vst.msk [vmem:[#allocation3 + $0x18] sm:$0xff] %vm4142, %v4101
      %4147 = vst.msk [vmem:[#allocation3 + $0x20] sm:$0xff] %vm4142, %v4103
      %4148 = vst.msk [vmem:[#allocation3 + $0x28] sm:$0xff] %vm4142, %v4105
      %4149 = vst.msk [vmem:[#allocation3 + $0x30] sm:$0xff] %vm4142, %v4107
      %4150 = vst.msk [vmem:[#allocation3 + $0x38] sm:$0xff] %vm4142, %v4109
      %4151 = vst.msk [vmem:[#allocation3 + $0x40] sm:$0xff] %vm4142, %v4111
      %4152 = vst.msk [vmem:[#allocation3 + $0x48] sm:$0xff] %vm4142, %v4113
      %4153 = vst.msk [vmem:[#allocation3 + $0x50] sm:$0xff] %vm4142, %v4115
      %4154 = vst.msk [vmem:[#allocation3 + $0x58] sm:$0xff] %vm4142, %v4117
      %4155 = vst.msk [vmem:[#allocation3 + $0x60] sm:$0xff] %vm4142, %v4119
      %4156 = vst.msk [vmem:[#allocation3 + $0x68] sm:$0xff] %vm4142, %v4121
      %4157 = vst.msk [vmem:[#allocation3 + $0x70] sm:$0xff] %vm4142, %v4123
      %4158 = vst.msk [vmem:[#allocation3 + $0x78] sm:$0xff] %vm4142, %v4125
      %v4159 = vld [vmem:[#allocation3] sm:$0xff]
      %v4160 = vld [vmem:[#allocation3 + $0x8] sm:$0xff]
      %v4161 = vld [vmem:[#allocation3 + $0x10] sm:$0xff]
      %v4162 = vld [vmem:[#allocation3 + $0x18] sm:$0xff]
      %v4163 = vld [vmem:[#allocation3 + $0x20] sm:$0xff]
      %v4164 = vld [vmem:[#allocation3 + $0x28] sm:$0xff]
      %v4165 = vld [vmem:[#allocation3 + $0x30] sm:$0xff]
      %v4166 = vld [vmem:[#allocation3 + $0x38] sm:$0xff]
      %v4167 = vld [vmem:[#allocation3 + $0x40] sm:$0xff]
      %v4168 = vld [vmem:[#allocation3 + $0x48] sm:$0xff]
      %v4169 = vld [vmem:[#allocation3 + $0x50] sm:$0xff]
      %v4170 = vld [vmem:[#allocation3 + $0x58] sm:$0xff]
      %v4171 = vld [vmem:[#allocation3 + $0x60] sm:$0xff]
      %v4172 = vld [vmem:[#allocation3 + $0x68] sm:$0xff]
      %v4173 = vld [vmem:[#allocation3 + $0x70] sm:$0xff]
      %v4174 = vld [vmem:[#allocation3 + $0x78] sm:$0xff]
      %v4175 = vld [vmem:[%s3] sm:$0xf]
      %v4176 = vld [vmem:[%s3 + $0x4] sm:$0xf]
      %v4177 = vld [vmem:[%s3 + $0x8] sm:$0xf]
      %v4178 = vld [vmem:[%s3 + $0xc] sm:$0xf]
      %v4179 = vld [vmem:[%s3 + $0x10] sm:$0xf]
      %v4180 = vld [vmem:[%s3 + $0x14] sm:$0xf]
      %v4181 = vld [vmem:[%s3 + $0x18] sm:$0xf]
      %v4182 = vld [vmem:[%s3 + $0x1c] sm:$0xf]
      %v4183 = vld [vmem:[%s3 + $0x20] sm:$0xf]
      %v4193 = vunpack.c.l.b16 %v4175
      %v4194 = vunpack.c.l.b16 %v4176
      %v4195 = vunpack.c.l.b16 %v4177
      %v4196 = vunpack.c.l.b16 %v4178
      %v4197 = vunpack.c.l.b16 %v4179
      %v4198 = vunpack.c.l.b16 %v4180
      %v4199 = vunpack.c.l.b16 %v4181
      %v4200 = vunpack.c.l.b16 %v4182
      %v4201 = vunpack.c.l.b16 %v4183
      %v4202 = vpack.c.b16 %v4194, %v4193
      %v4203 = vpack.c.b16 %v4196, %v4195
      %v4204 = vpack.c.b16 %v4198, %v4197
      %v4205 = vpack.c.b16 %v4200, %v4199
      %v4206 = vpack.c.b16 %v4201, %v4201
      %vm4211 = vcmask 588800
      %v4213 = vsel %vm4211, %v4159, 0
      %v4216 = vsel %vm4211, %v4160, 0
      %v4219 = vsel %vm4211, %v4161, 0
      %v4222 = vsel %vm4211, %v4162, 0
      %v4225 = vsel %vm4211, %v4163, 0
      %v4228 = vsel %vm4211, %v4164, 0
      %v4231 = vsel %vm4211, %v4165, 0
      %v4234 = vsel %vm4211, %v4166, 0
      %v4237 = vsel %vm4211, %v4167, 0
      %v4240 = vsel %vm4211, %v4168, 0
      %v4243 = vsel %vm4211, %v4169, 0
      %v4246 = vsel %vm4211, %v4170, 0
      %v4249 = vsel %vm4211, %v4171, 0
      %v4252 = vsel %vm4211, %v4172, 0
      %v4255 = vsel %vm4211, %v4173, 0
      %v4258 = vsel %vm4211, %v4174, 0
      %vm4260 = vcmask 1043456
      %v4262 = vsel %vm4260, %v4206, 0
      %4264 = vmatprep.subr.bf16.mxu0 0
      %4265 = vmatpush1.bf16.msra.mxu0 %v4202
      %4266 = vmatprep.subr.bf16.mxu0 0
      %4267 = vmatpush1.bf16.msra.mxu0 %v4203
      %4268 = vmatprep.subr.bf16.mxu0 0
      %4269 = vmatpush1.bf16.msra.mxu0 %v4204
      %4270 = vmatprep.subr.bf16.mxu0 0
      %4271 = vmatpush1.bf16.msra.mxu0 %v4205
      %4272 = vmatprep.subr.bf16.mxu0 0
      %4273 = vmatpush1.bf16.msra.mxu0 %v4262
      %4274 = vmatprep.subr.bf16.mxu0 0
      %4275 = vmatpush1.bf16.msra.mxu0 0
      %4276 = vmatprep.subr.bf16.mxu0 0
      %4277 = vmatpush1.bf16.msra.mxu0 0
      %4278 = vmatprep.subr.bf16.mxu0 0
      %4279 = vmatpush1.bf16.msra.mxu0 0
      %4280 = vmatprep.subr.bf16.mxu0 0
      %4281 = vmatpush1.bf16.msra.mxu0 0
      %4282 = vmatprep.subr.bf16.mxu0 0
      %4283 = vmatpush1.bf16.msra.mxu0 0
      %4284 = vmatprep.subr.bf16.mxu0 0
      %4285 = vmatpush1.bf16.msra.mxu0 0
      %4286 = vmatprep.subr.bf16.mxu0 0
      %4287 = vmatpush1.bf16.msra.mxu0 0
      %4288 = vmatprep.subr.bf16.mxu0 0
      %4289 = vmatpush1.bf16.msra.mxu0 0
      %4290 = vmatprep.subr.bf16.mxu0 0
      %4291 = vmatpush1.bf16.msra.mxu0 0
      %4292 = vmatprep.subr.bf16.mxu0 0
      %4293 = vmatpush1.bf16.msra.mxu0 0
      %4294 = vmatprep.subr.bf16.mxu0 0
      %4295 = vmatpush1.bf16.msra.mxu0 0
      %4296 = vmatprep.mubr.bf16.mxu0 0
      %4297 = vmatmul.mubr.bf16.gmra.mrb[0].mxu0 %v4213
      %v4298 = vpop.f32.mrb[0].mxu0
      %v4299 = vadd.f32 0.0, %v4298
      %v4300 = vpop.f32.mrb[0].mxu0
      %v4301 = vpop.f32.mrb[0].mxu0
      %v4302 = vadd.f32 0.0, %v4301
      %v4303 = vpop.f32.mrb[0].mxu0
      %4304 = vmatprep.mubr.bf16.mxu0 0
      %4305 = vmatmul.mubr.bf16.gmra.mrb[0].mxu0 %v4216
      %v4306 = vpop.f32.mrb[0].mxu0
      %v4307 = vadd.f32 0.0, %v4306
      %v4308 = vpop.f32.mrb[0].mxu0
      %v4309 = vpop.f32.mrb[0].mxu0
      %v4310 = vadd.f32 0.0, %v4309
      %v4311 = vpop.f32.mrb[0].mxu0
      %4312 = vmatprep.mubr.bf16.mxu0 0
      %4313 = vmatmul.mubr.bf16.gmra.mrb[0].mxu0 %v4219
      %v4314 = vpop.f32.mrb[0].mxu0
      %v4315 = vadd.f32 0.0, %v4314
      %v4316 = vpop.f32.mrb[0].mxu0
      %v4317 = vpop.f32.mrb[0].mxu0
      %v4318 = vadd.f32 0.0, %v4317
      %v4319 = vpop.f32.mrb[0].mxu0
      %4320 = vmatprep.mubr.bf16.mxu0 0
      %4321 = vmatmul.mubr.bf16.gmra.mrb[0].mxu0 %v4222
      %v4322 = vpop.f32.mrb[0].mxu0
      %v4323 = vadd.f32 0.0, %v4322
      %v4324 = vpop.f32.mrb[0].mxu0
      %v4325 = vpop.f32.mrb[0].mxu0
      %v4326 = vadd.f32 0.0, %v4325
      %v4327 = vpop.f32.mrb[0].mxu0
      %4328 = vmatprep.mubr.bf16.mxu0 0
      %4329 = vmatmul.mubr.bf16.gmra.mrb[0].mxu0 %v4225
      %v4330 = vpop.f32.mrb[0].mxu0
      %v4331 = vadd.f32 0.0, %v4330
      %v4332 = vpop.f32.mrb[0].mxu0
      %v4333 = vpop.f32.mrb[0].mxu0
      %v4334 = vadd.f32 0.0, %v4333
      %v4335 = vpop.f32.mrb[0].mxu0
      %4336 = vmatprep.mubr.bf16.mxu0 0
      %4337 = vmatmul.mubr.bf16.gmra.mrb[0].mxu0 %v4228
      %v4338 = vpop.f32.mrb[0].mxu0
      %v4339 = vadd.f32 0.0, %v4338
      %v4340 = vpop.f32.mrb[0].mxu0
      %v4341 = vpop.f32.mrb[0].mxu0
      %v4342 = vadd.f32 0.0, %v4341
      %v4343 = vpop.f32.mrb[0].mxu0
      %4344 = vmatprep.mubr.bf16.mxu0 0
      %4345 = vmatmul.mubr.bf16.gmra.mrb[0].mxu0 %v4231
      %v4346 = vpop.f32.mrb[0].mxu0
      %v4347 = vadd.f32 0.0, %v4346
      %v4348 = vpop.f32.mrb[0].mxu0
      %v4349 = vpop.f32.mrb[0].mxu0
      %v4350 = vadd.f32 0.0, %v4349
      %v4351 = vpop.f32.mrb[0].mxu0
      %4352 = vmatprep.mubr.bf16.mxu0 0
      %4353 = vmatmul.mubr.bf16.gmra.mrb[0].mxu0 %v4234
      %v4354 = vpop.f32.mrb[0].mxu0
      %v4355 = vadd.f32 0.0, %v4354
      %v4356 = vpop.f32.mrb[0].mxu0
      %v4357 = vpop.f32.mrb[0].mxu0
      %v4358 = vadd.f32 0.0, %v4357
      %v4359 = vpop.f32.mrb[0].mxu0
      %4360 = vmatprep.mubr.bf16.mxu0 0
      %4361 = vmatmul.mubr.bf16.gmra.mrb[0].mxu0 %v4237
      %v4362 = vpop.f32.mrb[0].mxu0
      %v4363 = vadd.f32 0.0, %v4362
      %v4364 = vpop.f32.mrb[0].mxu0
      %v4365 = vpop.f32.mrb[0].mxu0
      %v4366 = vadd.f32 0.0, %v4365
      %v4367 = vpop.f32.mrb[0].mxu0
      %4368 = vmatprep.mubr.bf16.mxu0 0
      %4369 = vmatmul.mubr.bf16.gmra.mrb[0].mxu0 %v4240
      %v4370 = vpop.f32.mrb[0].mxu0
      %v4371 = vadd.f32 0.0, %v4370
      %v4372 = vpop.f32.mrb[0].mxu0
      %v4373 = vpop.f32.mrb[0].mxu0
      %v4374 = vadd.f32 0.0, %v4373
      %v4375 = vpop.f32.mrb[0].mxu0
      %4376 = vmatprep.mubr.bf16.mxu0 0
      %4377 = vmatmul.mubr.bf16.gmra.mrb[0].mxu0 %v4243
      %v4378 = vpop.f32.mrb[0].mxu0
      %v4379 = vadd.f32 0.0, %v4378
      %v4380 = vpop.f32.mrb[0].mxu0
      %v4381 = vpop.f32.mrb[0].mxu0
      %v4382 = vadd.f32 0.0, %v4381
      %v4383 = vpop.f32.mrb[0].mxu0
      %4384 = vmatprep.mubr.bf16.mxu0 0
      %4385 = vmatmul.mubr.bf16.gmra.mrb[0].mxu0 %v4246
      %v4386 = vpop.f32.mrb[0].mxu0
      %v4387 = vadd.f32 0.0, %v4386
      %v4388 = vpop.f32.mrb[0].mxu0
      %v4389 = vpop.f32.mrb[0].mxu0
      %v4390 = vadd.f32 0.0, %v4389
      %v4391 = vpop.f32.mrb[0].mxu0
      %4392 = vmatprep.mubr.bf16.mxu0 0
      %4393 = vmatmul.mubr.bf16.gmra.mrb[0].mxu0 %v4249
      %v4394 = vpop.f32.mrb[0].mxu0
      %v4395 = vadd.f32 0.0, %v4394
      %v4396 = vpop.f32.mrb[0].mxu0
      %v4397 = vpop.f32.mrb[0].mxu0
      %v4398 = vadd.f32 0.0, %v4397
      %v4399 = vpop.f32.mrb[0].mxu0
      %4400 = vmatprep.mubr.bf16.mxu0 0
      %4401 = vmatmul.mubr.bf16.gmra.mrb[0].mxu0 %v4252
      %v4402 = vpop.f32.mrb[0].mxu0
      %v4403 = vadd.f32 0.0, %v4402
      %v4404 = vpop.f32.mrb[0].mxu0
      %v4405 = vpop.f32.mrb[0].mxu0
      %v4406 = vadd.f32 0.0, %v4405
      %v4407 = vpop.f32.mrb[0].mxu0
      %4408 = vmatprep.mubr.bf16.mxu0 0
      %4409 = vmatmul.mubr.bf16.gmra.mrb[0].mxu0 %v4255
      %v4410 = vpop.f32.mrb[0].mxu0
      %v4411 = vadd.f32 0.0, %v4410
      %v4412 = vpop.f32.mrb[0].mxu0
      %v4413 = vpop.f32.mrb[0].mxu0
      %v4414 = vadd.f32 0.0, %v4413
      %v4415 = vpop.f32.mrb[0].mxu0
      %4416 = vmatprep.mubr.bf16.mxu0 0
      %4417 = vmatmul.mubr.bf16.gmra.mrb[0].mxu0 %v4258
      %v4418 = vpop.f32.mrb[0].mxu0
      %v4419 = vadd.f32 0.0, %v4418
      %v4420 = vpop.f32.mrb[0].mxu0
      %v4421 = vpop.f32.mrb[0].mxu0
      %v4422 = vadd.f32 0.0, %v4421
      %v4423 = vpop.f32.mrb[0].mxu0
      %4424 = vdwg.mxu0
      %4425 = vst.msk [vmem:[%s262] sm:$0xff] %vm1183, %v4299
      %4426 = vst.msk [vmem:[%s262 + $0x8] sm:$0xff] %vm1183, %v4302
      %4427 = vst.msk [vmem:[%s262 + $0x10] sm:$0xff] %vm1183, %v4307
      %4428 = vst.msk [vmem:[%s262 + $0x18] sm:$0xff] %vm1183, %v4310
      %4429 = vst.msk [vmem:[%s262 + $0x20] sm:$0xff] %vm1183, %v4315
      %4430 = vst.msk [vmem:[%s262 + $0x28] sm:$0xff] %vm1183, %v4318
      %4431 = vst.msk [vmem:[%s262 + $0x30] sm:$0xff] %vm1183, %v4323
      %4432 = vst.msk [vmem:[%s262 + $0x38] sm:$0xff] %vm1183, %v4326
      %4433 = vst.msk [vmem:[%s262 + $0x40] sm:$0xff] %vm1183, %v4331
      %4434 = vst.msk [vmem:[%s262 + $0x48] sm:$0xff] %vm1183, %v4334
      %4435 = vst.msk [vmem:[%s262 + $0x50] sm:$0xff] %vm1183, %v4339
      %4436 = vst.msk [vmem:[%s262 + $0x58] sm:$0xff] %vm1183, %v4342
      %4437 = vst.msk [vmem:[%s262 + $0x60] sm:$0xff] %vm1183, %v4347
      %4438 = vst.msk [vmem:[%s262 + $0x68] sm:$0xff] %vm1183, %v4350
      %4439 = vst.msk [vmem:[%s262 + $0x70] sm:$0xff] %vm1183, %v4355
      %4440 = vst.msk [vmem:[%s262 + $0x78] sm:$0xff] %vm1183, %v4358
      %4441 = vst.msk [vmem:[%s262 + $0x80] sm:$0xff] %vm1183, %v4363
      %4442 = vst.msk [vmem:[%s262 + $0x88] sm:$0xff] %vm1183, %v4366
      %4443 = vst.msk [vmem:[%s262 + $0x90] sm:$0xff] %vm1183, %v4371
      %4444 = vst.msk [vmem:[%s262 + $0x98] sm:$0xff] %vm1183, %v4374
      %4445 = vst.msk [vmem:[%s262 + $0xa0] sm:$0xff] %vm1183, %v4379
      %4446 = vst.msk [vmem:[%s262 + $0xa8] sm:$0xff] %vm1183, %v4382
      %4447 = vst.msk [vmem:[%s262 + $0xb0] sm:$0xff] %vm1183, %v4387
      %4448 = vst.msk [vmem:[%s262 + $0xb8] sm:$0xff] %vm1183, %v4390
      %4449 = vst.msk [vmem:[%s262 + $0xc0] sm:$0xff] %vm1183, %v4395
      %4450 = vst.msk [vmem:[%s262 + $0xc8] sm:$0xff] %vm1183, %v4398
      %4451 = vst.msk [vmem:[%s262 + $0xd0] sm:$0xff] %vm1183, %v4403
      %4452 = vst.msk [vmem:[%s262 + $0xd8] sm:$0xff] %vm1183, %v4406
      %4453 = vst.msk [vmem:[%s262 + $0xe0] sm:$0xff] %vm1183, %v4411
      %4454 = vst.msk [vmem:[%s262 + $0xe8] sm:$0xff] %vm1183, %v4414
      %4455 = vst.msk [vmem:[%s262 + $0xf0] sm:$0xff] %vm1183, %v4419
      %4456 = vst.msk [vmem:[%s262 + $0xf8] sm:$0xff] %vm1183, %v4422
      %v4457 = vsel %vm1183, %v4299, 0.0
      %v4458 = vsel %vm1183, %v4302, 0.0
      %v4459 = vadd.f32 %v4457, %v4458
      %v4460 = vsel %vm1183, %v4307, 0.0
      %v4461 = vadd.f32 %v4459, %v4460
      %v4462 = vsel %vm1183, %v4310, 0.0
      %v4463 = vadd.f32 %v4461, %v4462
      %v4464 = vsel %vm1183, %v4315, 0.0
      %v4465 = vadd.f32 %v4463, %v4464
      %v4466 = vsel %vm1183, %v4318, 0.0
      %v4467 = vadd.f32 %v4465, %v4466
      %v4468 = vsel %vm1183, %v4323, 0.0
      %v4469 = vadd.f32 %v4467, %v4468
      %v4470 = vsel %vm1183, %v4326, 0.0
      %v4471 = vadd.f32 %v4469, %v4470
      %v4472 = vsel %vm1183, %v4331, 0.0
      %v4473 = vadd.f32 %v4471, %v4472
      %v4474 = vsel %vm1183, %v4334, 0.0
      %v4475 = vadd.f32 %v4473, %v4474
      %v4476 = vsel %vm1183, %v4339, 0.0
      %v4477 = vadd.f32 %v4475, %v4476
      %v4478 = vsel %vm1183, %v4342, 0.0
      %v4479 = vadd.f32 %v4477, %v4478
      %v4480 = vsel %vm1183, %v4347, 0.0
      %v4481 = vadd.f32 %v4479, %v4480
      %v4482 = vsel %vm1183, %v4350, 0.0
      %v4483 = vadd.f32 %v4481, %v4482
      %v4484 = vsel %vm1183, %v4355, 0.0
      %v4485 = vadd.f32 %v4483, %v4484
      %v4486 = vsel %vm1183, %v4358, 0.0
      %v4487 = vadd.f32 %v4485, %v4486
      %v4488 = vsel %vm1183, %v4363, 0.0
      %v4489 = vadd.f32 %v4487, %v4488
      %v4490 = vsel %vm1183, %v4366, 0.0
      %v4491 = vadd.f32 %v4489, %v4490
      %v4492 = vsel %vm1183, %v4371, 0.0
      %v4493 = vadd.f32 %v4491, %v4492
      %v4494 = vsel %vm1183, %v4374, 0.0
      %v4495 = vadd.f32 %v4493, %v4494
      %v4496 = vsel %vm1183, %v4379, 0.0
      %v4497 = vadd.f32 %v4495, %v4496
      %v4498 = vsel %vm1183, %v4382, 0.0
      %v4499 = vadd.f32 %v4497, %v4498
      %v4500 = vsel %vm1183, %v4387, 0.0
      %v4501 = vadd.f32 %v4499, %v4500
      %v4502 = vsel %vm1183, %v4390, 0.0
      %v4503 = vadd.f32 %v4501, %v4502
      %v4504 = vsel %vm1183, %v4395, 0.0
      %v4505 = vadd.f32 %v4503, %v4504
      %v4506 = vsel %vm1183, %v4398, 0.0
      %v4507 = vadd.f32 %v4505, %v4506
      %v4508 = vsel %vm1183, %v4403, 0.0
      %v4509 = vadd.f32 %v4507, %v4508
      %v4510 = vsel %vm1183, %v4406, 0.0
      %v4511 = vadd.f32 %v4509, %v4510
      %v4512 = vsel %vm1183, %v4411, 0.0
      %v4513 = vadd.f32 %v4511, %v4512
      %v4514 = vsel %vm1183, %v4414, 0.0
      %v4515 = vadd.f32 %v4513, %v4514
      %v4516 = vsel %vm1183, %v4419, 0.0
      %v4517 = vadd.f32 %v4515, %v4516
      %v4518 = vsel %vm1183, %v4422, 0.0
      %v4519 = vadd.f32 %v4517, %v4518
      %v4520 = vrot.slane %v4519, 4
      %v4521 = vadd.f32 %v4519, %v4520
      %v4522 = vrot.slane %v4521, 2
      %v4523 = vadd.f32 %v4521, %v4522
      %v4524 = vrot.slane %v4523, 1
      %v4525 = vadd.f32 %v4523, %v4524
      %4526 = vst.msk [vmem:[%s265] sm:$0x1] %vm431, %v4525
      %v4527 = vmul.f32 %v4299, %v4299
      %v4528 = vmul.f32 %v4302, %v4302
      %v4529 = vmul.f32 %v4307, %v4307
      %v4530 = vmul.f32 %v4310, %v4310
      %v4531 = vmul.f32 %v4315, %v4315
      %v4532 = vmul.f32 %v4318, %v4318
      %v4533 = vmul.f32 %v4323, %v4323
      %v4534 = vmul.f32 %v4326, %v4326
      %v4535 = vmul.f32 %v4331, %v4331
      %v4536 = vmul.f32 %v4334, %v4334
      %v4537 = vmul.f32 %v4339, %v4339
      %v4538 = vmul.f32 %v4342, %v4342
      %v4539 = vmul.f32 %v4347, %v4347
      %v4540 = vmul.f32 %v4350, %v4350
      %v4541 = vmul.f32 %v4355, %v4355
      %v4542 = vmul.f32 %v4358, %v4358
      %v4543 = vmul.f32 %v4363, %v4363
      %v4544 = vmul.f32 %v4366, %v4366
      %v4545 = vmul.f32 %v4371, %v4371
      %v4546 = vmul.f32 %v4374, %v4374
      %v4547 = vmul.f32 %v4379, %v4379
      %v4548 = vmul.f32 %v4382, %v4382
      %v4549 = vmul.f32 %v4387, %v4387
      %v4550 = vmul.f32 %v4390, %v4390
      %v4551 = vmul.f32 %v4395, %v4395
      %v4552 = vmul.f32 %v4398, %v4398
      %v4553 = vmul.f32 %v4403, %v4403
      %v4554 = vmul.f32 %v4406, %v4406
      %v4555 = vmul.f32 %v4411, %v4411
      %v4556 = vmul.f32 %v4414, %v4414
      %v4557 = vmul.f32 %v4419, %v4419
      %v4558 = vmul.f32 %v4422, %v4422
      %v4559 = vsel %vm1183, %v4527, 0.0
      %v4560 = vsel %vm1183, %v4528, 0.0
      %v4561 = vadd.f32 %v4559, %v4560
      %v4562 = vsel %vm1183, %v4529, 0.0
      %v4563 = vadd.f32 %v4561, %v4562
      %v4564 = vsel %vm1183, %v4530, 0.0
      %v4565 = vadd.f32 %v4563, %v4564
      %v4566 = vsel %vm1183, %v4531, 0.0
      %v4567 = vadd.f32 %v4565, %v4566
      %v4568 = vsel %vm1183, %v4532, 0.0
      %v4569 = vadd.f32 %v4567, %v4568
      %v4570 = vsel %vm1183, %v4533, 0.0
      %v4571 = vadd.f32 %v4569, %v4570
      %v4572 = vsel %vm1183, %v4534, 0.0
      %v4573 = vadd.f32 %v4571, %v4572
      %v4574 = vsel %vm1183, %v4535, 0.0
      %v4575 = vadd.f32 %v4573, %v4574
      %v4576 = vsel %vm1183, %v4536, 0.0
      %v4577 = vadd.f32 %v4575, %v4576
      %v4578 = vsel %vm1183, %v4537, 0.0
      %v4579 = vadd.f32 %v4577, %v4578
      %v4580 = vsel %vm1183, %v4538, 0.0
      %v4581 = vadd.f32 %v4579, %v4580
      %v4582 = vsel %vm1183, %v4539, 0.0
      %v4583 = vadd.f32 %v4581, %v4582
      %v4584 = vsel %vm1183, %v4540, 0.0
      %v4585 = vadd.f32 %v4583, %v4584
      %v4586 = vsel %vm1183, %v4541, 0.0
      %v4587 = vadd.f32 %v4585, %v4586
      %v4588 = vsel %vm1183, %v4542, 0.0
      %v4589 = vadd.f32 %v4587, %v4588
      %v4590 = vsel %vm1183, %v4543, 0.0
      %v4591 = vadd.f32 %v4589, %v4590
      %v4592 = vsel %vm1183, %v4544, 0.0
      %v4593 = vadd.f32 %v4591, %v4592
      %v4594 = vsel %vm1183, %v4545, 0.0
      %v4595 = vadd.f32 %v4593, %v4594
      %v4596 = vsel %vm1183, %v4546, 0.0
      %v4597 = vadd.f32 %v4595, %v4596
      %v4598 = vsel %vm1183, %v4547, 0.0
      %v4599 = vadd.f32 %v4597, %v4598
      %v4600 = vsel %vm1183, %v4548, 0.0
      %v4601 = vadd.f32 %v4599, %v4600
      %v4602 = vsel %vm1183, %v4549, 0.0
      %v4603 = vadd.f32 %v4601, %v4602
      %v4604 = vsel %vm1183, %v4550, 0.0
      %v4605 = vadd.f32 %v4603, %v4604
      %v4606 = vsel %vm1183, %v4551, 0.0
      %v4607 = vadd.f32 %v4605, %v4606
      %v4608 = vsel %vm1183, %v4552, 0.0
      %v4609 = vadd.f32 %v4607, %v4608
      %v4610 = vsel %vm1183, %v4553, 0.0
      %v4611 = vadd.f32 %v4609, %v4610
      %v4612 = vsel %vm1183, %v4554, 0.0
      %v4613 = vadd.f32 %v4611, %v4612
      %v4614 = vsel %vm1183, %v4555, 0.0
      %v4615 = vadd.f32 %v4613, %v4614
      %v4616 = vsel %vm1183, %v4556, 0.0
      %v4617 = vadd.f32 %v4615, %v4616
      %v4618 = vsel %vm1183, %v4557, 0.0
      %v4619 = vadd.f32 %v4617, %v4618
      %v4620 = vsel %vm1183, %v4558, 0.0
      %v4621 = vadd.f32 %v4619, %v4620
      %v4622 = vrot.slane %v4621, 4
      %v4623 = vadd.f32 %v4621, %v4622
      %v4624 = vrot.slane %v4623, 2
      %v4625 = vadd.f32 %v4623, %v4624
      %v4626 = vrot.slane %v4625, 1
      %v4627 = vadd.f32 %v4625, %v4626
      %4628 = vst.msk [vmem:[%s268] sm:$0x1] %vm431, %v4627
      %p4629 = scmp.lt.s32.totalorder %s18, 1
      %s4630 = scalar_select %p4629, %s18, 1
      %s4631 = smul.addr %s4630, 32
      %s4632 = smul.addr %s4631, 8
      %s4633 = scalar_lea.vmem %s4, %s4632
      %p4634 = scmp.lt.s32.totalorder %s18, 1
      %s4635 = scalar_select %p4634, %s18, 1
      %s4636 = scalar_lea.vmem %s5, %s4635
      %p4637 = scmp.lt.s32.totalorder %s18, 1
      %s4638 = scalar_select %p4637, %s18, 1
      %s4639 = scalar_lea.vmem %s6, %s4638
      // Predicated region
      $region37: #{double_conv.4} parent=35 // pred_check
        %p4640 = pneg %p125
      $region38: #{double_conv.4} parent=35 // pred_check_branch
        %4642 = sbr.rel (%p4640) target = $region40
      $region39: #{double_conv.4} parent=35 // pred_region
        _
      $region40: #{double_conv.4} parent=35 // pred_fallthru
        _
      // Predicated region
      $region41: #{double_conv.4} parent=35 // pred_check
        %p4643 = pneg %p151
      $region42: #{double_conv.4} parent=35 // pred_check_branch
        %4645 = sbr.rel (%p4643) target = $region44
      $region43: #{double_conv.4} parent=35 // pred_region
        _
      $region44: #{double_conv.4} parent=35 // pred_fallthru
        _
      // Predicated region
      $region45: #{double_conv.4} parent=35 // pred_check
        %p4646 = pneg %p177
      $region46: #{double_conv.4} parent=35 // pred_check_branch
        %4648 = sbr.rel (%p4646) target = $region48
      $region47: #{double_conv.4} parent=35 // pred_region
        _
      $region48: #{double_conv.4} parent=35 // pred_fallthru
        _
    $region36: #{double_conv.4} parent=5 // pred_fallthru
      _
    %p4649 = scmp.le.s32.totalorder 2, %s13
    // Predicated region
    $region49: #{double_conv.4} parent=5 // pred_check
      %p4650 = pneg %p4649
    $region50: #{double_conv.4} parent=5 // pred_check_branch
      %4652 = sbr.rel (%p4650) target = $region52
    $region51: #{double_conv.4} parent=5 // pred_region
      %s4653 = ssub.s32 %s13, 2
      // Predicated region
      $region53: #{double_conv.4} parent=51 // pred_check
        %p4654 = pneg %p131
      $region54: #{double_conv.4} parent=51 // pred_check_branch
        %4656 = sbr.rel (%p4654) target = $region56
      $region55: #{double_conv.4} parent=51 // pred_region
        %p4657 = scmp.lt.s32.totalorder %s19, 1
        %s4658 = scalar_select %p4657, %s19, 1
        %s4659 = smul.addr %s4658, 32
        %s4660 = smul.addr %s4659, 8
        %s4661 = scalar_lea.vmem %s4, %s4660
      $region56: #{double_conv.4} parent=51 // pred_fallthru
        _
      // Predicated region
      $region57: #{double_conv.4} parent=51 // pred_check
        %p4662 = pneg %p157
      $region58: #{double_conv.4} parent=51 // pred_check_branch
        %4664 = sbr.rel (%p4662) target = $region60
      $region59: #{double_conv.4} parent=51 // pred_region
        %p4665 = scmp.lt.s32.totalorder %s19, 1
        %s4666 = scalar_select %p4665, %s19, 1
        %s4667 = scalar_lea.vmem %s5, %s4666
      $region60: #{double_conv.4} parent=51 // pred_fallthru
        _
      // Predicated region
      $region61: #{double_conv.4} parent=51 // pred_check
        %p4668 = pneg %p183
      $region62: #{double_conv.4} parent=51 // pred_check_branch
        %4670 = sbr.rel (%p4668) target = $region64
      $region63: #{double_conv.4} parent=51 // pred_region
        %p4671 = scmp.lt.s32.totalorder %s19, 1
        %s4672 = scalar_select %p4671, %s19, 1
        %s4673 = scalar_lea.vmem %s6, %s4672
      $region64: #{double_conv.4} parent=51 // pred_fallthru
        _
    $region52: #{double_conv.4} parent=5 // pred_fallthru
      _
  $region6: #{double_conv.4} parent=0 // loop_footer
    %s17 = sadd.s32 1, %s13
  $region7: #{double_conv.4} parent=0 // loop_footer_branch
    %12 = sbr.rel target = $region3
  $region8: #{double_conv.4} parent=0 // loop_exit
    _

</llo_original>
